<compile_context>
chip_gen: v5e
topology: v5e:2x2
jax: 0.10.0
libtpu: 0.0.40
codegen_flags: <defaults>
</compile_context>

<pallas_src>
import functools

import jax
import jax.numpy as jnp
from jax.experimental import pallas as pl
from jax.experimental.pallas import tpu as pltpu


def _round_up(n, m):
    return ((n + m - 1) // m) * m


def _choose_block_m(batch):
    """Bigger tiles = fewer 0.35us grid steps, but keep >=2 steps (v7x megacore)."""
    if batch >= 1024:
        return 512
    if batch >= 512:
        return 256
    return 128


def _mlp_kernel(z_ref, w1_ref, w2_ref, w3_ref, w4_ref, b_ref, o_ref):
    """Fused MLP hot path for one batch tile: 4 MXU matmuls + ReLU/Sigmoid.

    z and weights are bf16 (native MXU rate); accumulation and all elementwise
    work (bias add, ReLU, sigmoid) are f32. Biases live in one (4, H) array and
    are taken with static ref slices (zero runtime cost).
    """
    f32 = jnp.float32
    bf = jnp.bfloat16
    xp = o_ref.shape[1]  # lane-padded output width (128)

    h = jnp.dot(z_ref[...], w1_ref[...], preferred_element_type=f32) + b_ref[0:1, :]
    h = jnp.maximum(h, 0.0)

    h = jnp.dot(h.astype(bf), w2_ref[...], preferred_element_type=f32) + b_ref[1:2, :]
    h = jnp.maximum(h, 0.0)

    h = jnp.dot(h.astype(bf), w3_ref[...], preferred_element_type=f32) + b_ref[2:3, :]
    h = jnp.maximum(h, 0.0)

    h = jnp.dot(h.astype(bf), w4_ref[...], preferred_element_type=f32) + b_ref[3:4, :xp]
    o_ref[...] = jax.nn.sigmoid(h).astype(o_ref.dtype)


def init_params(key, z_dim, x_dim, hidden=400):
    """PyTorch-style nn.Linear init (U[-1/sqrt(fan_in), +]); weights stored [in, out]."""
    dims = [(z_dim, hidden), (hidden, hidden), (hidden, hidden), (hidden, x_dim)]
    params = []
    for fan_in, fan_out in dims:
        key, kw, kb = jax.random.split(key, 3)
        bound = 1.0 / jnp.sqrt(float(fan_in))
        w = jax.random.uniform(kw, (fan_in, fan_out), jnp.float32, -bound, bound)
        b = jax.random.uniform(kb, (1, fan_out), jnp.float32, -bound, bound)
        params.append((w, b))
    return params


def prepare_params(params):
    """Pad all feature widths (incl. Z_dim) to multiples of 128, cast weights to
    bf16, and stack the 4 bias rows into a single (4, H) f32 array.

    Zero padding is exact for the hidden layers: padded output columns get bias
    0 (ReLU(0)=0) and the corresponding padded input rows of the next layer's
    weight are zero. Padded columns of the *final* layer produce sigmoid(0)=0.5
    and are sliced away by the wrapper.
    """
    (w1, b1), (w2, b2), (w3, b3), (w4, b4) = params
    z_dim, hidden = w1.shape
    x_dim = w4.shape[1]
    Kp = _round_up(z_dim, 128)
    H = _round_up(hidden, 128)
    Xp = _round_up(x_dim, 128)

    def pad_w(w, rows, cols):
        return jnp.pad(w, ((0, rows - w.shape[0]), (0, cols - w.shape[1]))).astype(jnp.bfloat16)

    w1p = pad_w(w1, Kp, H)
    w2p = pad_w(w2, H, H)
    w3p = pad_w(w3, H, H)
    w4p = pad_w(w4, H, Xp)

    b = jnp.zeros((4, H), jnp.float32)
    b = b.at[0, : b1.shape[1]].set(b1[0])
    b = b.at[1, : b2.shape[1]].set(b2[0])
    b = b.at[2, : b3.shape[1]].set(b3[0])
    b = b.at[3, : b4.shape[1]].set(b4[0])
    return (w1p, w2p, w3p, w4p, b)


@functools.partial(jax.jit, static_argnames=("x_dim", "block_m"))
def conditional_generator_forward(z, c, prepared_params, *, x_dim, block_m=None):
    """Pallas-backed forward pass. `c` is accepted but unused (matches PyTorch)."""
    del c  # reference forward() ignores the condition vector
    w1, w2, w3, w4, b = prepared_params

    B, Zd = z.shape
    Kp = w1.shape[0]                      # lane-padded latent dim (128)
    H = w1.shape[1]                       # lane-padded hidden (512)
    Xp = w4.shape[1]                      # lane-padded output width (128)

    if block_m is None:
        block_m = _choose_block_m(B)
    Bp = _round_up(B, block_m)

    # Pad batch + latent dim and cast to bf16 outside the kernel: lane-dense
    # z tile, half the z DMA, and layer 1 becomes a single aligned K=128 pass.
    z_p = jnp.pad(z, ((0, Bp - B), (0, Kp - Zd))).astype(jnp.bfloat16)

    grid = (Bp // block_m,)

    def const_spec(shape):
        # Whole array as one block, same block at every grid step, and a single
        # buffer: weights/biases stay VMEM-resident with no per-step re-DMA or
        # buffer-swap bookkeeping.
        return pl.BlockSpec(shape, lambda i: (0, 0), pipeline_mode=pl.Buffered(1))

    flops = 2 * Bp * (Kp * H + H * H + H * H + H * Xp)
    bytes_accessed = (
        z_p.size * z_p.dtype.itemsize
        + sum(a.size * a.dtype.itemsize for a in (w1, w2, w3, w4, b))
        + Bp * Xp * 4
    )
    transcendentals = Bp * Xp  # sigmoid -> one exp per output element

    out = pl.pallas_call(
        _mlp_kernel,
        out_shape=jax.ShapeDtypeStruct((Bp, Xp), jnp.float32),
        grid_spec=pltpu.PrefetchScalarGridSpec(
            num_scalar_prefetch=0,
            grid=grid,
            in_specs=[
                pl.BlockSpec((block_m, Kp), lambda i: (i, 0)),   # z tile
                const_spec(w1.shape),
                const_spec(w2.shape),
                const_spec(w3.shape),
                const_spec(w4.shape),
                const_spec(b.shape),
            ],
            out_specs=pl.BlockSpec((block_m, Xp), lambda i: (i, 0)),
        ),
        compiler_params=pltpu.CompilerParams(
            dimension_semantics=("parallel",),   # shards batch tiles across TCs on v7x
            vmem_limit_bytes=16 << 20,           # footprint is a few MiB even at block_m=512
        ),
        cost_estimate=pl.CostEstimate(
            flops=flops,
            transcendentals=transcendentals,
            bytes_accessed=bytes_accessed,
        ),
    )(z_p, w1, w2, w3, w4, b)

    # TODO(synk): if single-call latency on v5e matters, overlap the layer-2..4
    # weight DMA with layer-1 compute via memory_space=pl.ANY + make_async_copy.
    return out[:B, :x_dim]


def reference_forward_f32(z, params):
    """Plain-JAX f32 reference matching the original PyTorch module."""
    (w1, b1), (w2, b2), (w3, b3), (w4, b4) = params
    h = jnp.maximum(z @ w1 + b1, 0.0)
    h = jnp.maximum(h @ w2 + b2, 0.0)
    h = jnp.maximum(h @ w3 + b3, 0.0)
    return jax.nn.sigmoid(h @ w4 + b4)


def reference_forward_bf16(z, prepared_params, x_dim):
    """Plain-JAX reference using the same padded bf16 operands as the kernel."""
    w1, w2, w3, w4, b = prepared_params
    bf = jnp.bfloat16
    f32 = jnp.float32
    Kp = w1.shape[0]
    Xp = w4.shape[1]
    z_p = jnp.pad(z, ((0, 0), (0, Kp - z.shape[1]))).astype(bf)
    h = jnp.maximum(jnp.dot(z_p, w1, preferred_element_type=f32) + b[0:1, :], 0.0)
    h = jnp.maximum(jnp.dot(h.astype(bf), w2, preferred_element_type=f32) + b[1:2, :], 0.0)
    h = jnp.maximum(jnp.dot(h.astype(bf), w3, preferred_element_type=f32) + b[2:3, :], 0.0)
    h = jnp.dot(h.astype(bf), w4, preferred_element_type=f32) + b[3:4, :Xp]
    return jax.nn.sigmoid(h)[:, :x_dim]


if __name__ == "__main__":
    key = jax.random.PRNGKey(0)
    k_z, k_c, k_p = jax.random.split(key, 3)

    Z_dim = 32     # latent size (opt.Z_dim)
    X_dim = 64     # output size (opt.X_dim)
    C_dim = 10     # condition size (unused by forward, as in the reference)
    B = 512        # auto block_m=256 -> 2 grid steps (keeps both v7x TCs busy)

    z = jax.random.normal(k_z, (B, Z_dim), jnp.float32)
    c = jax.random.normal(k_c, (B, C_dim), jnp.float32)

    params = init_params(k_p, Z_dim, X_dim)          # logical f32 400-wide params
    prepared = prepare_params(params)                # padded (128/512/128) bf16 params

    out = conditional_generator_forward(z, c, prepared, x_dim=X_dim)
    out = jax.block_until_ready(out)
    assert out.shape == (B, X_dim), out.shape

    # Tight check against a JAX reference using identical bf16 operands.
    ref_bf16 = reference_forward_bf16(z, prepared, X_dim)
    assert jnp.allclose(out, ref_bf16, atol=2e-3, rtol=2e-3), \
        float(jnp.max(jnp.abs(out - ref_bf16)))

    # Looser check against the original full-f32 module semantics
    # (bf16 matmul operands cost a little precision; sigmoid output is in [0,1]).
    ref_f32 = reference_forward_f32(z, params)
    assert jnp.allclose(out, ref_f32, atol=2e-2, rtol=2e-2), \
        float(jnp.max(jnp.abs(out - ref_f32)))

    # Exercise the batch-padding path (B not a multiple of block_m).
    B2 = 130
    z2 = jax.random.normal(k_z, (B2, Z_dim), jnp.float32)
    c2 = jax.random.normal(k_c, (B2, C_dim), jnp.float32)
    out2 = jax.block_until_ready(
        conditional_generator_forward(z2, c2, prepared, x_dim=X_dim))
    assert out2.shape == (B2, X_dim), out2.shape
    ref2 = reference_forward_bf16(z2, prepared, X_dim)
    assert jnp.allclose(out2, ref2, atol=2e-3, rtol=2e-3), \
        float(jnp.max(jnp.abs(out2 - ref2)))

    print("KERNEL_OK")
</pallas_src>

<mosaic_0001>
module attributes {stable_mosaic.version = 11 : i64} {
  func.func @_mlp_kernel(%arg0: i32, %arg1: memref<256x128xbf16, #tpu.memory_space<vmem>>, %arg2: memref<128x512xbf16, #tpu.memory_space<vmem>>, %arg3: memref<512x512xbf16, #tpu.memory_space<vmem>>, %arg4: memref<512x512xbf16, #tpu.memory_space<vmem>>, %arg5: memref<512x128xbf16, #tpu.memory_space<vmem>>, %arg6: memref<4x512xf32, #tpu.memory_space<vmem>>, %arg7: memref<256x128xf32, #tpu.memory_space<vmem>>) attributes {dimension_semantics = [#tpu.dimension_semantics<parallel>], iteration_bounds = array<i64: 2>, scalar_prefetch = 0 : i64, scratch_operands = 0 : i64, tpu.core_type = #tpu.core_type<tc>, window_params = [{transform_indices = @transform_0, window_bounds = array<i64: 256, 128>}, {pipeline_mode = #tpu.pipeline_mode<synchronous>, transform_indices = @transform_1, window_bounds = array<i64: 128, 512>}, {pipeline_mode = #tpu.pipeline_mode<synchronous>, transform_indices = @transform_2, window_bounds = array<i64: 512, 512>}, {pipeline_mode = #tpu.pipeline_mode<synchronous>, transform_indices = @transform_3, window_bounds = array<i64: 512, 512>}, {pipeline_mode = #tpu.pipeline_mode<synchronous>, transform_indices = @transform_4, window_bounds = array<i64: 512, 128>}, {pipeline_mode = #tpu.pipeline_mode<synchronous>, transform_indices = @transform_5, window_bounds = array<i64: 4, 512>}, {transform_indices = @transform_6, window_bounds = array<i64: 256, 128>}]} {
    %c0 = arith.constant 0 : index
    %c0_0 = arith.constant 0 : index
    %0 = vector.load %arg1[%c0, %c0_0] : memref<256x128xbf16, #tpu.memory_space<vmem>>, vector<256x128xbf16>
    %c0_1 = arith.constant 0 : index
    %c0_2 = arith.constant 0 : index
    %1 = vector.load %arg2[%c0_1, %c0_2] : memref<128x512xbf16, #tpu.memory_space<vmem>>, vector<128x512xbf16>
    %cst = arith.constant dense<0.000000e+00> : vector<256x512xf32>
    %2 = tpu.matmul %0, %1, %cst {dimension_numbers = #tpu.dot_dimension_numbers<[1], [0], [0], [1], [0, 0, 1, 1], [], []>} : vector<256x128xbf16>, vector<128x512xbf16>, vector<256x512xf32> -> vector<256x512xf32>
    %c0_3 = arith.constant 0 : index
    %c0_4 = arith.constant 0 : index
    %3 = vector.load %arg6[%c0_3, %c0_4] : memref<4x512xf32, #tpu.memory_space<vmem>>, vector<1x512xf32>
    %4 = vector.broadcast %3 : vector<1x512xf32> to vector<256x512xf32>
    %5 = arith.addf %2, %4 : vector<256x512xf32>
    %cst_5 = arith.constant 0.000000e+00 : f32
    %6 = vector.broadcast %cst_5 : f32 to vector<256x512xf32>
    %7 = arith.maximumf %5, %6 : vector<256x512xf32>
    %8 = arith.truncf %7 : vector<256x512xf32> to vector<256x512xbf16>
    %c0_6 = arith.constant 0 : index
    %c0_7 = arith.constant 0 : index
    %9 = vector.load %arg3[%c0_6, %c0_7] : memref<512x512xbf16, #tpu.memory_space<vmem>>, vector<512x512xbf16>
    %cst_8 = arith.constant dense<0.000000e+00> : vector<256x512xf32>
    %10 = tpu.matmul %8, %9, %cst_8 {dimension_numbers = #tpu.dot_dimension_numbers<[1], [0], [0], [1], [0, 0, 1, 1], [], []>} : vector<256x512xbf16>, vector<512x512xbf16>, vector<256x512xf32> -> vector<256x512xf32>
    %c1 = arith.constant 1 : index
    %c0_9 = arith.constant 0 : index
    %11 = vector.load %arg6[%c1, %c0_9] : memref<4x512xf32, #tpu.memory_space<vmem>>, vector<1x512xf32>
    %12 = vector.broadcast %11 : vector<1x512xf32> to vector<256x512xf32>
    %13 = arith.addf %10, %12 : vector<256x512xf32>
    %cst_10 = arith.constant 0.000000e+00 : f32
    %14 = vector.broadcast %cst_10 : f32 to vector<256x512xf32>
    %15 = arith.maximumf %13, %14 : vector<256x512xf32>
    %16 = arith.truncf %15 : vector<256x512xf32> to vector<256x512xbf16>
    %c0_11 = arith.constant 0 : index
    %c0_12 = arith.constant 0 : index
    %17 = vector.load %arg4[%c0_11, %c0_12] : memref<512x512xbf16, #tpu.memory_space<vmem>>, vector<512x512xbf16>
    %cst_13 = arith.constant dense<0.000000e+00> : vector<256x512xf32>
    %18 = tpu.matmul %16, %17, %cst_13 {dimension_numbers = #tpu.dot_dimension_numbers<[1], [0], [0], [1], [0, 0, 1, 1], [], []>} : vector<256x512xbf16>, vector<512x512xbf16>, vector<256x512xf32> -> vector<256x512xf32>
    %c2 = arith.constant 2 : index
    %c0_14 = arith.constant 0 : index
    %19 = vector.load %arg6[%c2, %c0_14] : memref<4x512xf32, #tpu.memory_space<vmem>>, vector<1x512xf32>
    %20 = vector.broadcast %19 : vector<1x512xf32> to vector<256x512xf32>
    %21 = arith.addf %18, %20 : vector<256x512xf32>
    %cst_15 = arith.constant 0.000000e+00 : f32
    %22 = vector.broadcast %cst_15 : f32 to vector<256x512xf32>
    %23 = arith.maximumf %21, %22 : vector<256x512xf32>
    %24 = arith.truncf %23 : vector<256x512xf32> to vector<256x512xbf16>
    %c0_16 = arith.constant 0 : index
    %c0_17 = arith.constant 0 : index
    %25 = vector.load %arg5[%c0_16, %c0_17] : memref<512x128xbf16, #tpu.memory_space<vmem>>, vector<512x128xbf16>
    %cst_18 = arith.constant dense<0.000000e+00> : vector<256x128xf32>
    %26 = tpu.matmul %24, %25, %cst_18 {dimension_numbers = #tpu.dot_dimension_numbers<[1], [0], [0], [1], [0, 0, 1, 1], [], []>} : vector<256x512xbf16>, vector<512x128xbf16>, vector<256x128xf32> -> vector<256x128xf32>
    %c3 = arith.constant 3 : index
    %c0_19 = arith.constant 0 : index
    %27 = vector.load %arg6[%c3, %c0_19] : memref<4x512xf32, #tpu.memory_space<vmem>>, vector<1x128xf32>
    %28 = vector.broadcast %27 : vector<1x128xf32> to vector<256x128xf32>
    %29 = arith.addf %26, %28 : vector<256x128xf32>
    %30 = arith.negf %29 : vector<256x128xf32>
    %31 = math.exp %30 : vector<256x128xf32>
    %cst_20 = arith.constant 1.000000e+00 : f32
    %32 = vector.broadcast %cst_20 : f32 to vector<256x128xf32>
    %33 = arith.addf %32, %31 : vector<256x128xf32>
    %34 = arith.divf %32, %33 : vector<256x128xf32>
    %c0_21 = arith.constant 0 : index
    %c0_22 = arith.constant 0 : index
    %35 = vector.load %arg7[%c0_21, %c0_22] : memref<256x128xf32, #tpu.memory_space<vmem>>, vector<256x128xf32>
    tpu.vector_store %arg7[%c0_21, %c0_22], %34 {strides = array<i32>} : memref<256x128xf32, #tpu.memory_space<vmem>>, vector<256x128xf32>,
    return
  }
  func.func @transform_0(%arg0: i32) -> (i32, i32) {
    %c0_i32 = arith.constant 0 : i32
    %c0_i32_0 = arith.constant 0 : i32
    return %arg0, %c0_i32 : i32, i32
  }
  func.func @transform_1(%arg0: i32) -> (i32, i32) {
    %c0_i32 = arith.constant 0 : i32
    %c0_i32_0 = arith.constant 0 : i32
    %c0_i32_1 = arith.constant 0 : i32
    return %c0_i32, %c0_i32_0 : i32, i32
  }
  func.func @transform_2(%arg0: i32) -> (i32, i32) {
    %c0_i32 = arith.constant 0 : i32
    %c0_i32_0 = arith.constant 0 : i32
    %c0_i32_1 = arith.constant 0 : i32
    return %c0_i32, %c0_i32_0 : i32, i32
  }
  func.func @transform_3(%arg0: i32) -> (i32, i32) {
    %c0_i32 = arith.constant 0 : i32
    %c0_i32_0 = arith.constant 0 : i32
    %c0_i32_1 = arith.constant 0 : i32
    return %c0_i32, %c0_i32_0 : i32, i32
  }
  func.func @transform_4(%arg0: i32) -> (i32, i32) {
    %c0_i32 = arith.constant 0 : i32
    %c0_i32_0 = arith.constant 0 : i32
    %c0_i32_1 = arith.constant 0 : i32
    return %c0_i32, %c0_i32_0 : i32, i32
  }
  func.func @transform_5(%arg0: i32) -> (i32, i32) {
    %c0_i32 = arith.constant 0 : i32
    %c0_i32_0 = arith.constant 0 : i32
    %c0_i32_1 = arith.constant 0 : i32
    return %c0_i32, %c0_i32_0 : i32, i32
  }
  func.func @transform_6(%arg0: i32) -> (i32, i32) {
    %c0_i32 = arith.constant 0 : i32
    %c0_i32_0 = arith.constant 0 : i32
    return %arg0, %c0_i32 : i32, i32
  }
}

</mosaic_0001>

<llo_original>
// kernel: conditional_generator_forward.1
$region0: #{conditional_generator_forward.1}
  #allocation0 [shape = 'u32[]', space=smem, size = 0x4, offset = 0x4, fixed_abs, tag = 'smem constant byte address 0x4 - core index']
  #allocation1 [shape = 'u32[72,128]{1,0:T(1,128)}', space=vmem, size = 0x9000, scoped, tag = 'internal scratch']
  %s0 = inlined_call_operand.vmem [shape: bf16[512,128], index: 0, kind: input, shape index: {}]
  %s1 = inlined_call_operand.hbm [shape: bf16[128,512], index: 1, kind: input, shape index: {}]
  %s2 = inlined_call_operand.vmem [shape: bf16[512,512], index: 2, kind: input, shape index: {}]
  %s3 = inlined_call_operand.hbm [shape: bf16[512,512], index: 3, kind: input, shape index: {}]
  %s4 = inlined_call_operand.hbm [shape: bf16[512,128], index: 4, kind: input, shape index: {}]
  %s5 = inlined_call_operand.hbm [shape: f32[4,512], index: 5, kind: input, shape index: {}]
  %s6 = inlined_call_operand.vmem [shape: f32[512,128], index: 6, kind: output, shape index: {}]
  %s7 = sld [smem:[#allocation0]]
  $region73: #{conditional_generator_forward.1} parent=0
    _
  %s9 = ssub.s32 1, %s7
  %s10 = scalar_select 0, %s9, %s7
  $region1: #{conditional_generator_forward.1} parent=0
    #allocation2 [shape = 'u8[131072]{0}', space=vmem, size = 0x20000, scoped, tag = 'input window, operand 1, single buffered']
    #allocation3 [shape = 's32[2]{0}', space=sflag, size = 0x8, scoped, tag = 'scoped memory for conditional_generator_forward.1']
    #allocation4 [shape = 'u8[524288]{0}', space=vmem, size = 0x80000, scoped, tag = 'input window, operand 3, single buffered']
    #allocation5 [shape = 's32[1]{0}', space=sflag, size = 0x4, scoped, tag = 'scoped memory for conditional_generator_forward.1']
    #allocation6 [shape = 'u8[131072]{0}', space=vmem, size = 0x20000, scoped, tag = 'input window, operand 4, single buffered']
    #allocation7 [shape = 'u8[8192]{0}', space=vmem, size = 0x2000, scoped, tag = 'input window, operand 5, single buffered']
    #allocation8 [shape = 's32[1]{0}', space=sflag, size = 0x4, scoped, tag = 'scoped memory for conditional_generator_forward.1']
    %11 = vsyncpa [#allocation3], 0
    %12 = vsyncpa [#allocation5], 0
    %13 = vsyncpa [#allocation8], 0
    loop: start=0, step=1, limit=4
    $region2: #{conditional_generator_forward.1} parent=1 // loop_pre_header
      _
    $region3: #{conditional_generator_forward.1} parent=1 // loop_header
      %s15 = sphi 0, %s19
      %p16 = scmp.ge.s32.totalorder %s15, 4
      %s25 = sphi 0, %s27
      %s28 = sphi 0, %s25
      %s29 = sphi 0, %s28
      %s45 = sphi 0, %s29
      %s49 = sphi 0, %s49
      %s51 = sphi 0, %s49
      %s52 = sphi 0, %s51
      %s66 = sphi 0, %s52
      %s70 = sphi 0, %s70
      %s72 = sphi 0, %s70
      %s73 = sphi 0, %s72
      %s87 = sphi 0, %s73
      %s91 = sphi 0, %s91
      %s93 = sphi 0, %s91
      %s94 = sphi 0, %s93
      %s108 = sphi 0, %s94
      %s112 = sphi 0, %s112
      %s114 = sphi 0, %s112
      %s115 = sphi 0, %s114
      %s129 = sphi 0, %s115
      %s133 = sphi 0, %s133
      %s135 = sphi 0, %s133
      %s136 = sphi 0, %s135
      %s150 = sphi 0, %s136
      %s156 = sphi 0, %s158
      %s159 = sphi 0, %s156
      %s160 = sphi 0, %s159
      %s176 = sphi 0, %s160
    $region4: #{conditional_generator_forward.1} parent=1 // loop_header_branch
      %18 = sbr.rel (%p16) target = $region8
    $region5: #{conditional_generator_forward.1} parent=1 // loop_body
      %s20 = ssub.s32 %s15, 1
      %s21 = ssub.s32 %s15, 2
      %s22 = sadd.s32 %s15, 1
      %s23 = ssub.s32 %s15, %s22
      %p24 = scmp.eq.s32.totalorder %s23, 0
      %s26 = sadd.s32 %s25, 1
      %s27 = scalar_select %p24, %s25, %s26
      %p30 = pneg %p24
      %p31 = scmp.eq.s32.totalorder %s15, 1
      %p32 = por %p30, %p31
      %p33 = scmp.ne.s32.totalorder %s25, %s28
      %p34 = scmp.eq.s32.totalorder %s15, 0
      %p35 = por %p33, %p34
      %p36 = scmp.ne.s32.totalorder %s25, %s28
      %p37 = scmp.eq.s32.totalorder %s20, 1
      %p38 = por %p36, %p37
      %p39 = scmp.ne.s32.totalorder %s28, %s29
      %p40 = scmp.eq.s32.totalorder %s20, 0
      %p41 = por %p39, %p40
      %p42 = scmp.ne.s32.totalorder %s28, %s29
      %p43 = scmp.eq.s32.totalorder %s21, 1
      %p44 = por %p42, %p43
      %p46 = scmp.ne.s32.totalorder %s29, %s45
      %p47 = scmp.eq.s32.totalorder %s21, 0
      %p48 = por %p46, %p47
      %s50 = sadd.s32 %s49, 1
      %p53 = scmp.eq.s32.totalorder %s15, 1
      %p54 = scmp.ne.s32.totalorder %s49, %s51
      %p55 = scmp.eq.s32.totalorder %s15, 0
      %p56 = por %p54, %p55
      %p57 = scmp.ne.s32.totalorder %s49, %s51
      %p58 = scmp.eq.s32.totalorder %s20, 1
      %p59 = por %p57, %p58
      %p60 = scmp.ne.s32.totalorder %s51, %s52
      %p61 = scmp.eq.s32.totalorder %s20, 0
      %p62 = por %p60, %p61
      %p63 = scmp.ne.s32.totalorder %s51, %s52
      %p64 = scmp.eq.s32.totalorder %s21, 1
      %p65 = por %p63, %p64
      %p67 = scmp.ne.s32.totalorder %s52, %s66
      %p68 = scmp.eq.s32.totalorder %s21, 0
      %p69 = por %p67, %p68
      %s71 = sadd.s32 %s70, 1
      %p74 = scmp.eq.s32.totalorder %s15, 1
      %p75 = scmp.ne.s32.totalorder %s70, %s72
      %p76 = scmp.eq.s32.totalorder %s15, 0
      %p77 = por %p75, %p76
      %p78 = scmp.ne.s32.totalorder %s70, %s72
      %p79 = scmp.eq.s32.totalorder %s20, 1
      %p80 = por %p78, %p79
      %p81 = scmp.ne.s32.totalorder %s72, %s73
      %p82 = scmp.eq.s32.totalorder %s20, 0
      %p83 = por %p81, %p82
      %p84 = scmp.ne.s32.totalorder %s72, %s73
      %p85 = scmp.eq.s32.totalorder %s21, 1
      %p86 = por %p84, %p85
      %p88 = scmp.ne.s32.totalorder %s73, %s87
      %p89 = scmp.eq.s32.totalorder %s21, 0
      %p90 = por %p88, %p89
      %s92 = sadd.s32 %s91, 1
      %p95 = scmp.eq.s32.totalorder %s15, 1
      %p96 = scmp.ne.s32.totalorder %s91, %s93
      %p97 = scmp.eq.s32.totalorder %s15, 0
      %p98 = por %p96, %p97
      %p99 = scmp.ne.s32.totalorder %s91, %s93
      %p100 = scmp.eq.s32.totalorder %s20, 1
      %p101 = por %p99, %p100
      %p102 = scmp.ne.s32.totalorder %s93, %s94
      %p103 = scmp.eq.s32.totalorder %s20, 0
      %p104 = por %p102, %p103
      %p105 = scmp.ne.s32.totalorder %s93, %s94
      %p106 = scmp.eq.s32.totalorder %s21, 1
      %p107 = por %p105, %p106
      %p109 = scmp.ne.s32.totalorder %s94, %s108
      %p110 = scmp.eq.s32.totalorder %s21, 0
      %p111 = por %p109, %p110
      %s113 = sadd.s32 %s112, 1
      %p116 = scmp.eq.s32.totalorder %s15, 1
      %p117 = scmp.ne.s32.totalorder %s112, %s114
      %p118 = scmp.eq.s32.totalorder %s15, 0
      %p119 = por %p117, %p118
      %p120 = scmp.ne.s32.totalorder %s112, %s114
      %p121 = scmp.eq.s32.totalorder %s20, 1
      %p122 = por %p120, %p121
      %p123 = scmp.ne.s32.totalorder %s114, %s115
      %p124 = scmp.eq.s32.totalorder %s20, 0
      %p125 = por %p123, %p124
      %p126 = scmp.ne.s32.totalorder %s114, %s115
      %p127 = scmp.eq.s32.totalorder %s21, 1
      %p128 = por %p126, %p127
      %p130 = scmp.ne.s32.totalorder %s115, %s129
      %p131 = scmp.eq.s32.totalorder %s21, 0
      %p132 = por %p130, %p131
      %s134 = sadd.s32 %s133, 1
      %p137 = scmp.eq.s32.totalorder %s15, 1
      %p138 = scmp.ne.s32.totalorder %s133, %s135
      %p139 = scmp.eq.s32.totalorder %s15, 0
      %p140 = por %p138, %p139
      %p141 = scmp.ne.s32.totalorder %s133, %s135
      %p142 = scmp.eq.s32.totalorder %s20, 1
      %p143 = por %p141, %p142
      %p144 = scmp.ne.s32.totalorder %s135, %s136
      %p145 = scmp.eq.s32.totalorder %s20, 0
      %p146 = por %p144, %p145
      %p147 = scmp.ne.s32.totalorder %s135, %s136
      %p148 = scmp.eq.s32.totalorder %s21, 1
      %p149 = por %p147, %p148
      %p151 = scmp.ne.s32.totalorder %s136, %s150
      %p152 = scmp.eq.s32.totalorder %s21, 0
      %p153 = por %p151, %p152
      %s154 = ssub.s32 %s15, %s22
      %p155 = scmp.eq.s32.totalorder %s154, 0
      %s157 = sadd.s32 %s156, 1
      %s158 = scalar_select %p155, %s156, %s157
      %p161 = pneg %p155
      %p162 = scmp.eq.s32.totalorder %s15, 1
      %p163 = por %p161, %p162
      %p164 = scmp.ne.s32.totalorder %s156, %s159
      %p165 = scmp.eq.s32.totalorder %s15, 0
      %p166 = por %p164, %p165
      %p167 = scmp.ne.s32.totalorder %s156, %s159
      %p168 = scmp.eq.s32.totalorder %s20, 1
      %p169 = por %p167, %p168
      %p170 = scmp.ne.s32.totalorder %s159, %s160
      %p171 = scmp.eq.s32.totalorder %s20, 0
      %p172 = por %p170, %p171
      %p173 = scmp.ne.s32.totalorder %s159, %s160
      %p174 = scmp.eq.s32.totalorder %s21, 1
      %p175 = por %p173, %p174
      %p177 = scmp.ne.s32.totalorder %s160, %s176
      %p178 = scmp.eq.s32.totalorder %s21, 0
      %p179 = por %p177, %p178
      %p180 = scmp.le.s32.totalorder 1, %s15
      %p181 = scmp.lt.s32.totalorder %s15, 3
      %p182 = pnand %p180, %p181
      %p183 = pneg %p182
      // Predicated region
      $region9: #{conditional_generator_forward.1} parent=5 // pred_check
        _
      $region10: #{conditional_generator_forward.1} parent=5 // pred_check_branch
        %185 = sbr.rel (%p182) target = $region12
      $region11: #{conditional_generator_forward.1} parent=5 // pred_region
        %s186 = ssub.s32 %s15, 1
        // Predicated region
        $region13: #{conditional_generator_forward.1} parent=11 // pred_check
          %p187 = pneg %p62
        $region14: #{conditional_generator_forward.1} parent=11 // pred_check_branch
          %189 = sbr.rel (%p187) target = $region16
        $region15: #{conditional_generator_forward.1} parent=11 // pred_region
          %191 = vsyncadd [#allocation3], 0
          %s192 = sshll.u32 %s1, 4
          %s193 = int_to_ptr.hbm [resolvable:$true] %s192
          %s194 = sshll.u32 [#allocation2], 4
          %s195 = int_to_ptr.vmem [resolvable:$true] %s194
          %200 = dma.hbm_to_vmem [thread:$0]  %s193, 4096, %s195, [#allocation3], 256, 256, 16
        $region16: #{conditional_generator_forward.1} parent=11 // pred_fallthru
          _
        // Predicated region
        $region17: #{conditional_generator_forward.1} parent=11 // pred_check
          %p201 = pneg %p83
        $region18: #{conditional_generator_forward.1} parent=11 // pred_check_branch
          %203 = sbr.rel (%p201) target = $region20
        $region19: #{conditional_generator_forward.1} parent=11 // pred_region
          _
        $region20: #{conditional_generator_forward.1} parent=11 // pred_fallthru
          _
        // Predicated region
        $region21: #{conditional_generator_forward.1} parent=11 // pred_check
          %p204 = pneg %p104
        $region22: #{conditional_generator_forward.1} parent=11 // pred_check_branch
          %206 = sbr.rel (%p204) target = $region24
        $region23: #{conditional_generator_forward.1} parent=11 // pred_region
          %208 = vsyncadd [#allocation5], 0
          %s209 = sshll.u32 %s3, 4
          %s210 = int_to_ptr.hbm [resolvable:$true] %s209
          %s211 = sshll.u32 [#allocation4], 4
          %s212 = int_to_ptr.vmem [resolvable:$true] %s211
          %217 = dma.hbm_to_vmem [thread:$0]  %s210, 16384, %s212, [#allocation5], 256, 256, 16
        $region24: #{conditional_generator_forward.1} parent=11 // pred_fallthru
          _
        // Predicated region
        $region25: #{conditional_generator_forward.1} parent=11 // pred_check
          %p218 = pneg %p125
        $region26: #{conditional_generator_forward.1} parent=11 // pred_check_branch
          %220 = sbr.rel (%p218) target = $region28
        $region27: #{conditional_generator_forward.1} parent=11 // pred_region
          %222 = vsyncadd [#allocation5], 0
          %s223 = sshll.u32 %s4, 4
          %s224 = int_to_ptr.hbm [resolvable:$true] %s223
          %s225 = sshll.u32 [#allocation6], 4
          %s226 = int_to_ptr.vmem [resolvable:$true] %s225
          %231 = dma.hbm_to_vmem [thread:$0]  %s224, 4096, %s226, [#allocation5], 64, 64, 4
        $region28: #{conditional_generator_forward.1} parent=11 // pred_fallthru
          _
        // Predicated region
        $region29: #{conditional_generator_forward.1} parent=11 // pred_check
          %p232 = pneg %p146
        $region30: #{conditional_generator_forward.1} parent=11 // pred_check_branch
          %234 = sbr.rel (%p232) target = $region32
        $region31: #{conditional_generator_forward.1} parent=11 // pred_region
          %236 = vsyncadd [#allocation8], 0
          %s238 = sshll.u32 %s5, 4
          %s239 = int_to_ptr.hbm [resolvable:$true] %s238
          %s240 = sshll.u32 [#allocation7], 4
          %s241 = int_to_ptr.vmem [resolvable:$true] %s240
          %243 = dma.hbm_to_vmem [thread:$0]  %s239, 256, %s241, [#allocation8]
        $region32: #{conditional_generator_forward.1} parent=11 // pred_fallthru
          _
      $region12: #{conditional_generator_forward.1} parent=5 // pred_fallthru
        _
      %p244 = scmp.lt.s32.totalorder %s15, 2
      // Predicated region
      $region33: #{conditional_generator_forward.1} parent=5 // pred_check
        %p245 = pneg %p244
      $region34: #{conditional_generator_forward.1} parent=5 // pred_check_branch
        %247 = sbr.rel (%p245) target = $region36
      $region35: #{conditional_generator_forward.1} parent=5 // pred_region
        // Predicated region
        $region37: #{conditional_generator_forward.1} parent=35 // pred_check
          %p248 = pneg %p35
        $region38: #{conditional_generator_forward.1} parent=35 // pred_check_branch
          %250 = sbr.rel (%p248) target = $region40
        $region39: #{conditional_generator_forward.1} parent=35 // pred_region
          %s251 = smul.u32 32, %s15
          %p252 = scmp.lt.s32.totalorder %s251, 63
          %s253 = scalar_select %p252, %s251, 63
          %s254 = smul.addr %s253, 4
          %s255 = scalar_lea.vmem %s0, %s254
          %s256 = smul.u32 32, %s15
        $region40: #{conditional_generator_forward.1} parent=35 // pred_fallthru
          _
      $region36: #{conditional_generator_forward.1} parent=5 // pred_fallthru
        _
      %p257 = scmp.le.s32.totalorder 1, %s15
      %p258 = scmp.lt.s32.totalorder %s15, 3
      %p259 = pnand %p257, %p258
      %p260 = pneg %p259
      // Predicated region
      $region41: #{conditional_generator_forward.1} parent=5 // pred_check
        _
      $region42: #{conditional_generator_forward.1} parent=5 // pred_check_branch
        %262 = sbr.rel (%p259) target = $region44
      $region43: #{conditional_generator_forward.1} parent=5 // pred_region
        %s263 = ssub.s32 %s15, 1
        // Predicated region
        $region45: #{conditional_generator_forward.1} parent=43 // pred_check
          %p264 = pneg %p62
        $region46: #{conditional_generator_forward.1} parent=43 // pred_check_branch
          %266 = sbr.rel (%p264) target = $region48
        $region47: #{conditional_generator_forward.1} parent=43 // pred_region
          %268 = dma.done [#allocation3], 4096
        $region48: #{conditional_generator_forward.1} parent=43 // pred_fallthru
          _
        // Predicated region
        $region49: #{conditional_generator_forward.1} parent=43 // pred_check
          %p269 = pneg %p104
        $region50: #{conditional_generator_forward.1} parent=43 // pred_check_branch
          %271 = sbr.rel (%p269) target = $region52
        $region51: #{conditional_generator_forward.1} parent=43 // pred_region
          %273 = dma.done [#allocation5], 16384
        $region52: #{conditional_generator_forward.1} parent=43 // pred_fallthru
          _
        // Predicated region
        $region53: #{conditional_generator_forward.1} parent=43 // pred_check
          %p274 = pneg %p125
        $region54: #{conditional_generator_forward.1} parent=43 // pred_check_branch
          %276 = sbr.rel (%p274) target = $region56
        $region55: #{conditional_generator_forward.1} parent=43 // pred_region
          %278 = dma.done [#allocation5], 4096
        $region56: #{conditional_generator_forward.1} parent=43 // pred_fallthru
          _
        // Predicated region
        $region57: #{conditional_generator_forward.1} parent=43 // pred_check
          %p279 = pneg %p146
        $region58: #{conditional_generator_forward.1} parent=43 // pred_check_branch
          %281 = sbr.rel (%p279) target = $region60
        $region59: #{conditional_generator_forward.1} parent=43 // pred_region
          %283 = dma.done [#allocation8], 256
        $region60: #{conditional_generator_forward.1} parent=43 // pred_fallthru
          _
        %s284 = smul.u32 32, %s20
        %p285 = scmp.lt.s32.totalorder %s284, 63
        %s286 = scalar_select %p285, %s284, 63
        %s287 = smul.addr %s286, 4
        %s288 = scalar_lea.vmem %s0, %s287
        %p289 = pneg %p41
        %p290 = pneg %p38
        %p291 = pneg %p62
        %p292 = pneg %p59
        %p293 = pneg %p83
        %p294 = pneg %p80
        %p295 = pneg %p104
        %p296 = pneg %p101
        %p297 = pneg %p125
        %p298 = pneg %p122
        %p299 = pneg %p146
        %p300 = pneg %p143
        %p301 = pneg %p172
        %p302 = pneg %p169
        %s303 = smul.u32 32, %s20
        %p304 = scmp.lt.s32.totalorder %s303, 63
        %s305 = scalar_select %p304, %s303, 63
        %s306 = smul.addr %s305, 8
        %s307 = scalar_lea.vmem %s6, %s306
        %s308 = smul.u32 32, %s20
        %p309 = scmp.lt.s32.totalorder %s308, 63
        %s310 = scalar_select %p309, %s308, 63
        %s311 = smul.addr %s310, 4
        %s312 = scalar_lea.vmem %s0, %s311
        %s313 = smul.u32 32, %s20
        %s314 = smul.u32 32, %s20
        %p315 = scmp.lt.s32.totalorder %s314, 63
        %s316 = scalar_select %p315, %s314, 63
        %s317 = smul.addr %s316, 8
        %s318 = scalar_lea.vmem %s6, %s317
        %s319 = smul.u32 32, %s20
        %v320 = vld [vmem:[%s312] sm:$0xf]
        %v321 = vld [vmem:[%s312 + $0x4] sm:$0xf]
        %v322 = vld [vmem:[%s312 + $0x8] sm:$0xf]
        %v323 = vld [vmem:[%s312 + $0xc] sm:$0xf]
        %v324 = vld [vmem:[%s312 + $0x10] sm:$0xf]
        %v325 = vld [vmem:[%s312 + $0x14] sm:$0xf]
        %v326 = vld [vmem:[%s312 + $0x18] sm:$0xf]
        %v327 = vld [vmem:[%s312 + $0x1c] sm:$0xf]
        %v328 = vld [vmem:[%s312 + $0x20] sm:$0xf]
        %v329 = vld [vmem:[%s312 + $0x24] sm:$0xf]
        %v330 = vld [vmem:[%s312 + $0x28] sm:$0xf]
        %v331 = vld [vmem:[%s312 + $0x2c] sm:$0xf]
        %v332 = vld [vmem:[%s312 + $0x30] sm:$0xf]
        %v333 = vld [vmem:[%s312 + $0x34] sm:$0xf]
        %v334 = vld [vmem:[%s312 + $0x38] sm:$0xf]
        %v335 = vld [vmem:[%s312 + $0x3c] sm:$0xf]
        %v336 = vld [vmem:[%s312 + $0x40] sm:$0xf]
        %v337 = vld [vmem:[%s312 + $0x44] sm:$0xf]
        %v338 = vld [vmem:[%s312 + $0x48] sm:$0xf]
        %v339 = vld [vmem:[%s312 + $0x4c] sm:$0xf]
        %v340 = vld [vmem:[%s312 + $0x50] sm:$0xf]
        %v341 = vld [vmem:[%s312 + $0x54] sm:$0xf]
        %v342 = vld [vmem:[%s312 + $0x58] sm:$0xf]
        %v343 = vld [vmem:[%s312 + $0x5c] sm:$0xf]
        %v344 = vld [vmem:[%s312 + $0x60] sm:$0xf]
        %v345 = vld [vmem:[%s312 + $0x64] sm:$0xf]
        %v346 = vld [vmem:[%s312 + $0x68] sm:$0xf]
        %v347 = vld [vmem:[%s312 + $0x6c] sm:$0xf]
        %v348 = vld [vmem:[%s312 + $0x70] sm:$0xf]
        %v349 = vld [vmem:[%s312 + $0x74] sm:$0xf]
        %v350 = vld [vmem:[%s312 + $0x78] sm:$0xf]
        %v351 = vld [vmem:[%s312 + $0x7c] sm:$0xf]
        %v352 = vld [vmem:[#allocation2] sm:$0xff]
        %v353 = vld [vmem:[#allocation2 + $0x8] sm:$0xff]
        %v354 = vld [vmem:[#allocation2 + $0x10] sm:$0xff]
        %v355 = vld [vmem:[#allocation2 + $0x18] sm:$0xff]
        %v356 = vld [vmem:[#allocation2 + $0x20] sm:$0xff]
        %v357 = vld [vmem:[#allocation2 + $0x28] sm:$0xff]
        %v358 = vld [vmem:[#allocation2 + $0x30] sm:$0xff]
        %v359 = vld [vmem:[#allocation2 + $0x38] sm:$0xff]
        %v360 = vld [vmem:[#allocation2 + $0x40] sm:$0xff]
        %v361 = vld [vmem:[#allocation2 + $0x48] sm:$0xff]
        %v362 = vld [vmem:[#allocation2 + $0x50] sm:$0xff]
        %v363 = vld [vmem:[#allocation2 + $0x58] sm:$0xff]
        %v364 = vld [vmem:[#allocation2 + $0x60] sm:$0xff]
        %v365 = vld [vmem:[#allocation2 + $0x68] sm:$0xff]
        %v366 = vld [vmem:[#allocation2 + $0x70] sm:$0xff]
        %v367 = vld [vmem:[#allocation2 + $0x78] sm:$0xff]
        %v368 = vld [vmem:[#allocation2 + $0x80] sm:$0xff]
        %v369 = vld [vmem:[#allocation2 + $0x88] sm:$0xff]
        %v370 = vld [vmem:[#allocation2 + $0x90] sm:$0xff]
        %v371 = vld [vmem:[#allocation2 + $0x98] sm:$0xff]
        %v372 = vld [vmem:[#allocation2 + $0xa0] sm:$0xff]
        %v373 = vld [vmem:[#allocation2 + $0xa8] sm:$0xff]
        %v374 = vld [vmem:[#allocation2 + $0xb0] sm:$0xff]
        %v375 = vld [vmem:[#allocation2 + $0xb8] sm:$0xff]
        %v376 = vld [vmem:[#allocation2 + $0xc0] sm:$0xff]
        %v377 = vld [vmem:[#allocation2 + $0xc8] sm:$0xff]
        %v378 = vld [vmem:[#allocation2 + $0xd0] sm:$0xff]
        %v379 = vld [vmem:[#allocation2 + $0xd8] sm:$0xff]
        %v380 = vld [vmem:[#allocation2 + $0xe0] sm:$0xff]
        %v381 = vld [vmem:[#allocation2 + $0xe8] sm:$0xff]
        %v382 = vld [vmem:[#allocation2 + $0xf0] sm:$0xff]
        %v383 = vld [vmem:[#allocation2 + $0xf8] sm:$0xff]
        %v384 = vld [vmem:[#allocation7] ss:$4 sm:$0xf]
        %v386 = vperm.slane %v384, 0
        %v387 = vperm.slane %v384, 1
        %v388 = vperm.slane %v384, 2
        %v389 = vperm.slane %v384, 3
        %v426 = vunpack.c.l.b16 %v320
        %v427 = vunpack.c.l.b16 %v321
        %v428 = vunpack.c.l.b16 %v322
        %v429 = vunpack.c.l.b16 %v323
        %v430 = vunpack.c.l.b16 %v324
        %v431 = vunpack.c.l.b16 %v325
        %v432 = vunpack.c.l.b16 %v326
        %v433 = vunpack.c.l.b16 %v327
        %v434 = vunpack.c.l.b16 %v328
        %v435 = vunpack.c.l.b16 %v329
        %v436 = vunpack.c.l.b16 %v330
        %v437 = vunpack.c.l.b16 %v331
        %v438 = vunpack.c.l.b16 %v332
        %v439 = vunpack.c.l.b16 %v333
        %v440 = vunpack.c.l.b16 %v334
        %v441 = vunpack.c.l.b16 %v335
        %v442 = vunpack.c.l.b16 %v336
        %v443 = vunpack.c.l.b16 %v337
        %v444 = vunpack.c.l.b16 %v338
        %v445 = vunpack.c.l.b16 %v339
        %v446 = vunpack.c.l.b16 %v340
        %v447 = vunpack.c.l.b16 %v341
        %v448 = vunpack.c.l.b16 %v342
        %v449 = vunpack.c.l.b16 %v343
        %v450 = vunpack.c.l.b16 %v344
        %v451 = vunpack.c.l.b16 %v345
        %v452 = vunpack.c.l.b16 %v346
        %v453 = vunpack.c.l.b16 %v347
        %v454 = vunpack.c.l.b16 %v348
        %v455 = vunpack.c.l.b16 %v349
        %v456 = vunpack.c.l.b16 %v350
        %v457 = vunpack.c.l.b16 %v351
        %v458 = vpack.c.b16 %v427, %v426
        %v459 = vpack.c.b16 %v429, %v428
        %v460 = vpack.c.b16 %v431, %v430
        %v461 = vpack.c.b16 %v433, %v432
        %v462 = vpack.c.b16 %v435, %v434
        %v463 = vpack.c.b16 %v437, %v436
        %v464 = vpack.c.b16 %v439, %v438
        %v465 = vpack.c.b16 %v441, %v440
        %v466 = vpack.c.b16 %v443, %v442
        %v467 = vpack.c.b16 %v445, %v444
        %v468 = vpack.c.b16 %v447, %v446
        %v469 = vpack.c.b16 %v449, %v448
        %v470 = vpack.c.b16 %v451, %v450
        %v471 = vpack.c.b16 %v453, %v452
        %v472 = vpack.c.b16 %v455, %v454
        %v473 = vpack.c.b16 %v457, %v456
        %v522 = vunpack.c.l.b16 %v352
        %v523 = vunpack.c.h.b16 %v352
        %v524 = vunpack.c.l.b16 %v353
        %v525 = vunpack.c.h.b16 %v353
        %v526 = vunpack.c.l.b16 %v354
        %v527 = vunpack.c.h.b16 %v354
        %v528 = vunpack.c.l.b16 %v355
        %v529 = vunpack.c.h.b16 %v355
        %v530 = vunpack.c.l.b16 %v356
        %v531 = vunpack.c.h.b16 %v356
        %v532 = vunpack.c.l.b16 %v357
        %v533 = vunpack.c.h.b16 %v357
        %v534 = vunpack.c.l.b16 %v358
        %v535 = vunpack.c.h.b16 %v358
        %v536 = vunpack.c.l.b16 %v359
        %v537 = vunpack.c.h.b16 %v359
        %v538 = vunpack.c.l.b16 %v360
        %v539 = vunpack.c.h.b16 %v360
        %v540 = vunpack.c.l.b16 %v361
        %v541 = vunpack.c.h.b16 %v361
        %v542 = vunpack.c.l.b16 %v362
        %v543 = vunpack.c.h.b16 %v362
        %v544 = vunpack.c.l.b16 %v363
        %v545 = vunpack.c.h.b16 %v363
        %v546 = vunpack.c.l.b16 %v364
        %v547 = vunpack.c.h.b16 %v364
        %v548 = vunpack.c.l.b16 %v365
        %v549 = vunpack.c.h.b16 %v365
        %v550 = vunpack.c.l.b16 %v366
        %v551 = vunpack.c.h.b16 %v366
        %v552 = vunpack.c.l.b16 %v367
        %v553 = vunpack.c.h.b16 %v367
        %v554 = vunpack.c.l.b16 %v368
        %v555 = vunpack.c.h.b16 %v368
        %v556 = vunpack.c.l.b16 %v369
        %v557 = vunpack.c.h.b16 %v369
        %v558 = vunpack.c.l.b16 %v370
        %v559 = vunpack.c.h.b16 %v370
        %v560 = vunpack.c.l.b16 %v371
        %v561 = vunpack.c.h.b16 %v371
        %v562 = vunpack.c.l.b16 %v372
        %v563 = vunpack.c.h.b16 %v372
        %v564 = vunpack.c.l.b16 %v373
        %v565 = vunpack.c.h.b16 %v373
        %v566 = vunpack.c.l.b16 %v374
        %v567 = vunpack.c.h.b16 %v374
        %v568 = vunpack.c.l.b16 %v375
        %v569 = vunpack.c.h.b16 %v375
        %v570 = vunpack.c.l.b16 %v376
        %v571 = vunpack.c.h.b16 %v376
        %v572 = vunpack.c.l.b16 %v377
        %v573 = vunpack.c.h.b16 %v377
        %v574 = vunpack.c.l.b16 %v378
        %v575 = vunpack.c.h.b16 %v378
        %v576 = vunpack.c.l.b16 %v379
        %v577 = vunpack.c.h.b16 %v379
        %v578 = vunpack.c.l.b16 %v380
        %v579 = vunpack.c.h.b16 %v380
        %v580 = vunpack.c.l.b16 %v381
        %v581 = vunpack.c.h.b16 %v381
        %v582 = vunpack.c.l.b16 %v382
        %v583 = vunpack.c.h.b16 %v382
        %v584 = vunpack.c.l.b16 %v383
        %v585 = vunpack.c.h.b16 %v383
        %v586 = vpack.c.b16 %v526, %v522
        %v587 = vpack.c.b16 %v527, %v523
        %v588 = vpack.c.b16 %v528, %v524
        %v589 = vpack.c.b16 %v529, %v525
        %v590 = vpack.c.b16 %v534, %v530
        %v591 = vpack.c.b16 %v535, %v531
        %v592 = vpack.c.b16 %v536, %v532
        %v593 = vpack.c.b16 %v537, %v533
        %v594 = vpack.c.b16 %v542, %v538
        %v595 = vpack.c.b16 %v543, %v539
        %v596 = vpack.c.b16 %v544, %v540
        %v597 = vpack.c.b16 %v545, %v541
        %v598 = vpack.c.b16 %v550, %v546
        %v599 = vpack.c.b16 %v551, %v547
        %v600 = vpack.c.b16 %v552, %v548
        %v601 = vpack.c.b16 %v553, %v549
        %v602 = vpack.c.b16 %v558, %v554
        %v603 = vpack.c.b16 %v559, %v555
        %v604 = vpack.c.b16 %v560, %v556
        %v605 = vpack.c.b16 %v561, %v557
        %v606 = vpack.c.b16 %v566, %v562
        %v607 = vpack.c.b16 %v567, %v563
        %v608 = vpack.c.b16 %v568, %v564
        %v609 = vpack.c.b16 %v569, %v565
        %v610 = vpack.c.b16 %v574, %v570
        %v611 = vpack.c.b16 %v575, %v571
        %v612 = vpack.c.b16 %v576, %v572
        %v613 = vpack.c.b16 %v577, %v573
        %v614 = vpack.c.b16 %v582, %v578
        %v615 = vpack.c.b16 %v583, %v579
        %v616 = vpack.c.b16 %v584, %v580
        %v617 = vpack.c.b16 %v585, %v581
        %650 = vmatpush.bf16.msra.mxu0 %v614
        %651 = vmatpush.bf16.msra.mxu0 %v610
        %652 = vmatpush.bf16.msra.mxu0 %v606
        %653 = vmatpush.bf16.msra.mxu0 %v602
        %654 = vmatpush.bf16.msra.mxu0 %v598
        %655 = vmatpush.bf16.msra.mxu0 %v594
        %656 = vmatpush.bf16.msra.mxu0 %v590
        %657 = vmatpush.bf16.msra.mxu0 %v586
        %658 = vmatmul.bf16.gmra.mxu0 %v458
        %v659 = vpop.f32.mrf.mxu0
        %v660 = vadd.f32 %v386, %v659
        %v661 = vpop.f32.mrf.mxu0
        %v662 = vadd.f32 %v386, %v661
        %663 = vmatmul.bf16.gmra.mxu0 %v459
        %v664 = vpop.f32.mrf.mxu0
        %v665 = vadd.f32 %v386, %v664
        %v666 = vpop.f32.mrf.mxu0
        %v667 = vadd.f32 %v386, %v666
        %668 = vmatmul.bf16.gmra.mxu0 %v460
        %v669 = vpop.f32.mrf.mxu0
        %v670 = vadd.f32 %v386, %v669
        %v671 = vpop.f32.mrf.mxu0
        %v672 = vadd.f32 %v386, %v671
        %673 = vmatmul.bf16.gmra.mxu0 %v461
        %v674 = vpop.f32.mrf.mxu0
        %v675 = vadd.f32 %v386, %v674
        %v676 = vpop.f32.mrf.mxu0
        %v677 = vadd.f32 %v386, %v676
        %678 = vmatmul.bf16.gmra.mxu0 %v462
        %v679 = vpop.f32.mrf.mxu0
        %v680 = vadd.f32 %v386, %v679
        %v681 = vpop.f32.mrf.mxu0
        %v682 = vadd.f32 %v386, %v681
        %683 = vmatmul.bf16.gmra.mxu0 %v463
        %v684 = vpop.f32.mrf.mxu0
        %v685 = vadd.f32 %v386, %v684
        %v686 = vpop.f32.mrf.mxu0
        %v687 = vadd.f32 %v386, %v686
        %688 = vmatmul.bf16.gmra.mxu0 %v464
        %v689 = vpop.f32.mrf.mxu0
        %v690 = vadd.f32 %v386, %v689
        %v691 = vpop.f32.mrf.mxu0
        %v692 = vadd.f32 %v386, %v691
        %693 = vmatmul.bf16.gmra.mxu0 %v465
        %v694 = vpop.f32.mrf.mxu0
        %v695 = vadd.f32 %v386, %v694
        %v696 = vpop.f32.mrf.mxu0
        %v697 = vadd.f32 %v386, %v696
        %698 = vmatmul.bf16.gmra.mxu0 %v466
        %v699 = vpop.f32.mrf.mxu0
        %v700 = vadd.f32 %v386, %v699
        %v701 = vpop.f32.mrf.mxu0
        %v702 = vadd.f32 %v386, %v701
        %703 = vmatmul.bf16.gmra.mxu0 %v467
        %v704 = vpop.f32.mrf.mxu0
        %v705 = vadd.f32 %v386, %v704
        %v706 = vpop.f32.mrf.mxu0
        %v707 = vadd.f32 %v386, %v706
        %708 = vmatmul.bf16.gmra.mxu0 %v468
        %v709 = vpop.f32.mrf.mxu0
        %v710 = vadd.f32 %v386, %v709
        %v711 = vpop.f32.mrf.mxu0
        %v712 = vadd.f32 %v386, %v711
        %713 = vmatmul.bf16.gmra.mxu0 %v469
        %v714 = vpop.f32.mrf.mxu0
        %v715 = vadd.f32 %v386, %v714
        %v716 = vpop.f32.mrf.mxu0
        %v717 = vadd.f32 %v386, %v716
        %718 = vmatmul.bf16.gmra.mxu0 %v470
        %v719 = vpop.f32.mrf.mxu0
        %v720 = vadd.f32 %v386, %v719
        %v721 = vpop.f32.mrf.mxu0
        %v722 = vadd.f32 %v386, %v721
        %723 = vmatmul.bf16.gmra.mxu0 %v471
        %v724 = vpop.f32.mrf.mxu0
        %v725 = vadd.f32 %v386, %v724
        %v726 = vpop.f32.mrf.mxu0
        %v727 = vadd.f32 %v386, %v726
        %728 = vmatmul.bf16.gmra.mxu0 %v472
        %v729 = vpop.f32.mrf.mxu0
        %v730 = vadd.f32 %v386, %v729
        %v731 = vpop.f32.mrf.mxu0
        %v732 = vadd.f32 %v386, %v731
        %733 = vmatmul.bf16.gmra.mxu0 %v473
        %v734 = vpop.f32.mrf.mxu0
        %v735 = vadd.f32 %v386, %v734
        %v736 = vpop.f32.mrf.mxu0
        %v737 = vadd.f32 %v386, %v736
        %738 = vdwg.mxu0
        %739 = vmatpush.bf16.msra.mxu0 %v615
        %740 = vmatpush.bf16.msra.mxu0 %v611
        %741 = vmatpush.bf16.msra.mxu0 %v607
        %742 = vmatpush.bf16.msra.mxu0 %v603
        %743 = vmatpush.bf16.msra.mxu0 %v599
        %744 = vmatpush.bf16.msra.mxu0 %v595
        %745 = vmatpush.bf16.msra.mxu0 %v591
        %746 = vmatpush.bf16.msra.mxu0 %v587
        %747 = vmatmul.bf16.gmra.mxu0 %v458
        %v748 = vpop.f32.mrf.mxu0
        %v749 = vadd.f32 %v387, %v748
        %v750 = vpop.f32.mrf.mxu0
        %v751 = vadd.f32 %v387, %v750
        %752 = vmatmul.bf16.gmra.mxu0 %v459
        %v753 = vpop.f32.mrf.mxu0
        %v754 = vadd.f32 %v387, %v753
        %v755 = vpop.f32.mrf.mxu0
        %v756 = vadd.f32 %v387, %v755
        %757 = vmatmul.bf16.gmra.mxu0 %v460
        %v758 = vpop.f32.mrf.mxu0
        %v759 = vadd.f32 %v387, %v758
        %v760 = vpop.f32.mrf.mxu0
        %v761 = vadd.f32 %v387, %v760
        %762 = vmatmul.bf16.gmra.mxu0 %v461
        %v763 = vpop.f32.mrf.mxu0
        %v764 = vadd.f32 %v387, %v763
        %v765 = vpop.f32.mrf.mxu0
        %v766 = vadd.f32 %v387, %v765
        %767 = vmatmul.bf16.gmra.mxu0 %v462
        %v768 = vpop.f32.mrf.mxu0
        %v769 = vadd.f32 %v387, %v768
        %v770 = vpop.f32.mrf.mxu0
        %v771 = vadd.f32 %v387, %v770
        %772 = vmatmul.bf16.gmra.mxu0 %v463
        %v773 = vpop.f32.mrf.mxu0
        %v774 = vadd.f32 %v387, %v773
        %v775 = vpop.f32.mrf.mxu0
        %v776 = vadd.f32 %v387, %v775
        %777 = vmatmul.bf16.gmra.mxu0 %v464
        %v778 = vpop.f32.mrf.mxu0
        %v779 = vadd.f32 %v387, %v778
        %v780 = vpop.f32.mrf.mxu0
        %v781 = vadd.f32 %v387, %v780
        %782 = vmatmul.bf16.gmra.mxu0 %v465
        %v783 = vpop.f32.mrf.mxu0
        %v784 = vadd.f32 %v387, %v783
        %v785 = vpop.f32.mrf.mxu0
        %v786 = vadd.f32 %v387, %v785
        %787 = vmatmul.bf16.gmra.mxu0 %v466
        %v788 = vpop.f32.mrf.mxu0
        %v789 = vadd.f32 %v387, %v788
        %v790 = vpop.f32.mrf.mxu0
        %v791 = vadd.f32 %v387, %v790
        %792 = vmatmul.bf16.gmra.mxu0 %v467
        %v793 = vpop.f32.mrf.mxu0
        %v794 = vadd.f32 %v387, %v793
        %v795 = vpop.f32.mrf.mxu0
        %v796 = vadd.f32 %v387, %v795
        %797 = vmatmul.bf16.gmra.mxu0 %v468
        %v798 = vpop.f32.mrf.mxu0
        %v799 = vadd.f32 %v387, %v798
        %v800 = vpop.f32.mrf.mxu0
        %v801 = vadd.f32 %v387, %v800
        %802 = vmatmul.bf16.gmra.mxu0 %v469
        %v803 = vpop.f32.mrf.mxu0
        %v804 = vadd.f32 %v387, %v803
        %v805 = vpop.f32.mrf.mxu0
        %v806 = vadd.f32 %v387, %v805
        %807 = vmatmul.bf16.gmra.mxu0 %v470
        %v808 = vpop.f32.mrf.mxu0
        %v809 = vadd.f32 %v387, %v808
        %v810 = vpop.f32.mrf.mxu0
        %v811 = vadd.f32 %v387, %v810
        %812 = vmatmul.bf16.gmra.mxu0 %v471
        %v813 = vpop.f32.mrf.mxu0
        %v814 = vadd.f32 %v387, %v813
        %v815 = vpop.f32.mrf.mxu0
        %v816 = vadd.f32 %v387, %v815
        %817 = vmatmul.bf16.gmra.mxu0 %v472
        %v818 = vpop.f32.mrf.mxu0
        %v819 = vadd.f32 %v387, %v818
        %v820 = vpop.f32.mrf.mxu0
        %v821 = vadd.f32 %v387, %v820
        %822 = vmatmul.bf16.gmra.mxu0 %v473
        %v823 = vpop.f32.mrf.mxu0
        %v824 = vadd.f32 %v387, %v823
        %v825 = vpop.f32.mrf.mxu0
        %v826 = vadd.f32 %v387, %v825
        %827 = vdwg.mxu0
        %828 = vmatpush.bf16.msra.mxu0 %v616
        %829 = vmatpush.bf16.msra.mxu0 %v612
        %830 = vmatpush.bf16.msra.mxu0 %v608
        %831 = vmatpush.bf16.msra.mxu0 %v604
        %832 = vmatpush.bf16.msra.mxu0 %v600
        %833 = vmatpush.bf16.msra.mxu0 %v596
        %834 = vmatpush.bf16.msra.mxu0 %v592
        %835 = vmatpush.bf16.msra.mxu0 %v588
        %836 = vmatmul.bf16.gmra.mxu0 %v458
        %v837 = vpop.f32.mrf.mxu0
        %v838 = vadd.f32 %v388, %v837
        %v839 = vpop.f32.mrf.mxu0
        %v840 = vadd.f32 %v388, %v839
        %841 = vmatmul.bf16.gmra.mxu0 %v459
        %v842 = vpop.f32.mrf.mxu0
        %v843 = vadd.f32 %v388, %v842
        %v844 = vpop.f32.mrf.mxu0
        %v845 = vadd.f32 %v388, %v844
        %846 = vmatmul.bf16.gmra.mxu0 %v460
        %v847 = vpop.f32.mrf.mxu0
        %v848 = vadd.f32 %v388, %v847
        %v849 = vpop.f32.mrf.mxu0
        %v850 = vadd.f32 %v388, %v849
        %851 = vmatmul.bf16.gmra.mxu0 %v461
        %v852 = vpop.f32.mrf.mxu0
        %v853 = vadd.f32 %v388, %v852
        %v854 = vpop.f32.mrf.mxu0
        %v855 = vadd.f32 %v388, %v854
        %856 = vmatmul.bf16.gmra.mxu0 %v462
        %v857 = vpop.f32.mrf.mxu0
        %v858 = vadd.f32 %v388, %v857
        %v859 = vpop.f32.mrf.mxu0
        %v860 = vadd.f32 %v388, %v859
        %861 = vmatmul.bf16.gmra.mxu0 %v463
        %v862 = vpop.f32.mrf.mxu0
        %v863 = vadd.f32 %v388, %v862
        %v864 = vpop.f32.mrf.mxu0
        %v865 = vadd.f32 %v388, %v864
        %866 = vmatmul.bf16.gmra.mxu0 %v464
        %v867 = vpop.f32.mrf.mxu0
        %v868 = vadd.f32 %v388, %v867
        %v869 = vpop.f32.mrf.mxu0
        %v870 = vadd.f32 %v388, %v869
        %871 = vmatmul.bf16.gmra.mxu0 %v465
        %v872 = vpop.f32.mrf.mxu0
        %v873 = vadd.f32 %v388, %v872
        %v874 = vpop.f32.mrf.mxu0
        %v875 = vadd.f32 %v388, %v874
        %876 = vmatmul.bf16.gmra.mxu0 %v466
        %v877 = vpop.f32.mrf.mxu0
        %v878 = vadd.f32 %v388, %v877
        %v879 = vpop.f32.mrf.mxu0
        %v880 = vadd.f32 %v388, %v879
        %881 = vmatmul.bf16.gmra.mxu0 %v467
        %v882 = vpop.f32.mrf.mxu0
        %v883 = vadd.f32 %v388, %v882
        %v884 = vpop.f32.mrf.mxu0
        %v885 = vadd.f32 %v388, %v884
        %886 = vmatmul.bf16.gmra.mxu0 %v468
        %v887 = vpop.f32.mrf.mxu0
        %v888 = vadd.f32 %v388, %v887
        %v889 = vpop.f32.mrf.mxu0
        %v890 = vadd.f32 %v388, %v889
        %891 = vmatmul.bf16.gmra.mxu0 %v469
        %v892 = vpop.f32.mrf.mxu0
        %v893 = vadd.f32 %v388, %v892
        %v894 = vpop.f32.mrf.mxu0
        %v895 = vadd.f32 %v388, %v894
        %896 = vmatmul.bf16.gmra.mxu0 %v470
        %v897 = vpop.f32.mrf.mxu0
        %v898 = vadd.f32 %v388, %v897
        %v899 = vpop.f32.mrf.mxu0
        %v900 = vadd.f32 %v388, %v899
        %901 = vmatmul.bf16.gmra.mxu0 %v471
        %v902 = vpop.f32.mrf.mxu0
        %v903 = vadd.f32 %v388, %v902
        %v904 = vpop.f32.mrf.mxu0
        %v905 = vadd.f32 %v388, %v904
        %906 = vmatmul.bf16.gmra.mxu0 %v472
        %v907 = vpop.f32.mrf.mxu0
        %v908 = vadd.f32 %v388, %v907
        %v909 = vpop.f32.mrf.mxu0
        %v910 = vadd.f32 %v388, %v909
        %911 = vmatmul.bf16.gmra.mxu0 %v473
        %v912 = vpop.f32.mrf.mxu0
        %v913 = vadd.f32 %v388, %v912
        %v914 = vpop.f32.mrf.mxu0
        %v915 = vadd.f32 %v388, %v914
        %916 = vdwg.mxu0
        %917 = vmatpush.bf16.msra.mxu0 %v617
        %918 = vmatpush.bf16.msra.mxu0 %v613
        %919 = vmatpush.bf16.msra.mxu0 %v609
        %920 = vmatpush.bf16.msra.mxu0 %v605
        %921 = vmatpush.bf16.msra.mxu0 %v601
        %922 = vmatpush.bf16.msra.mxu0 %v597
        %923 = vmatpush.bf16.msra.mxu0 %v593
        %924 = vmatpush.bf16.msra.mxu0 %v589
        %925 = vmatmul.bf16.gmra.mxu0 %v458
        %v926 = vpop.f32.mrf.mxu0
        %v927 = vadd.f32 %v389, %v926
        %v928 = vpop.f32.mrf.mxu0
        %v929 = vadd.f32 %v389, %v928
        %930 = vmatmul.bf16.gmra.mxu0 %v459
        %v931 = vpop.f32.mrf.mxu0
        %v932 = vadd.f32 %v389, %v931
        %v933 = vpop.f32.mrf.mxu0
        %v934 = vadd.f32 %v389, %v933
        %935 = vmatmul.bf16.gmra.mxu0 %v460
        %v936 = vpop.f32.mrf.mxu0
        %v937 = vadd.f32 %v389, %v936
        %v938 = vpop.f32.mrf.mxu0
        %v939 = vadd.f32 %v389, %v938
        %940 = vmatmul.bf16.gmra.mxu0 %v461
        %v941 = vpop.f32.mrf.mxu0
        %v942 = vadd.f32 %v389, %v941
        %v943 = vpop.f32.mrf.mxu0
        %v944 = vadd.f32 %v389, %v943
        %945 = vmatmul.bf16.gmra.mxu0 %v462
        %v946 = vpop.f32.mrf.mxu0
        %v947 = vadd.f32 %v389, %v946
        %v948 = vpop.f32.mrf.mxu0
        %v949 = vadd.f32 %v389, %v948
        %950 = vmatmul.bf16.gmra.mxu0 %v463
        %v951 = vpop.f32.mrf.mxu0
        %v952 = vadd.f32 %v389, %v951
        %v953 = vpop.f32.mrf.mxu0
        %v954 = vadd.f32 %v389, %v953
        %955 = vmatmul.bf16.gmra.mxu0 %v464
        %v956 = vpop.f32.mrf.mxu0
        %v957 = vadd.f32 %v389, %v956
        %v958 = vpop.f32.mrf.mxu0
        %v959 = vadd.f32 %v389, %v958
        %960 = vmatmul.bf16.gmra.mxu0 %v465
        %v961 = vpop.f32.mrf.mxu0
        %v962 = vadd.f32 %v389, %v961
        %v963 = vpop.f32.mrf.mxu0
        %v964 = vadd.f32 %v389, %v963
        %965 = vmatmul.bf16.gmra.mxu0 %v466
        %v966 = vpop.f32.mrf.mxu0
        %v967 = vadd.f32 %v389, %v966
        %v968 = vpop.f32.mrf.mxu0
        %v969 = vadd.f32 %v389, %v968
        %970 = vmatmul.bf16.gmra.mxu0 %v467
        %v971 = vpop.f32.mrf.mxu0
        %v972 = vadd.f32 %v389, %v971
        %v973 = vpop.f32.mrf.mxu0
        %v974 = vadd.f32 %v389, %v973
        %975 = vmatmul.bf16.gmra.mxu0 %v468
        %v976 = vpop.f32.mrf.mxu0
        %v977 = vadd.f32 %v389, %v976
        %v978 = vpop.f32.mrf.mxu0
        %v979 = vadd.f32 %v389, %v978
        %980 = vmatmul.bf16.gmra.mxu0 %v469
        %v981 = vpop.f32.mrf.mxu0
        %v982 = vadd.f32 %v389, %v981
        %v983 = vpop.f32.mrf.mxu0
        %v984 = vadd.f32 %v389, %v983
        %985 = vmatmul.bf16.gmra.mxu0 %v470
        %v986 = vpop.f32.mrf.mxu0
        %v987 = vadd.f32 %v389, %v986
        %v988 = vpop.f32.mrf.mxu0
        %v989 = vadd.f32 %v389, %v988
        %990 = vmatmul.bf16.gmra.mxu0 %v471
        %v991 = vpop.f32.mrf.mxu0
        %v992 = vadd.f32 %v389, %v991
        %v993 = vpop.f32.mrf.mxu0
        %v994 = vadd.f32 %v389, %v993
        %995 = vmatmul.bf16.gmra.mxu0 %v472
        %v996 = vpop.f32.mrf.mxu0
        %v997 = vadd.f32 %v389, %v996
        %v998 = vpop.f32.mrf.mxu0
        %v999 = vadd.f32 %v389, %v998
        %1000 = vmatmul.bf16.gmra.mxu0 %v473
        %v1001 = vpop.f32.mrf.mxu0
        %v1002 = vadd.f32 %v389, %v1001
        %v1003 = vpop.f32.mrf.mxu0
        %v1004 = vadd.f32 %v389, %v1003
        %1005 = vdwg.mxu0
        %v1006 = vmax.f32 %v660, 0.0
        %v1007 = vmax.f32 %v749, 0.0
        %v1008 = vmax.f32 %v838, 0.0
        %v1009 = vmax.f32 %v927, 0.0
        %v1010 = vmax.f32 %v662, 0.0
        %v1011 = vmax.f32 %v751, 0.0
        %v1012 = vmax.f32 %v840, 0.0
        %v1013 = vmax.f32 %v929, 0.0
        %v1014 = vmax.f32 %v665, 0.0
        %v1015 = vmax.f32 %v754, 0.0
        %v1016 = vmax.f32 %v843, 0.0
        %v1017 = vmax.f32 %v932, 0.0
        %v1018 = vmax.f32 %v667, 0.0
        %v1019 = vmax.f32 %v756, 0.0
        %v1020 = vmax.f32 %v845, 0.0
        %v1021 = vmax.f32 %v934, 0.0
        %v1022 = vmax.f32 %v670, 0.0
        %v1023 = vmax.f32 %v759, 0.0
        %v1024 = vmax.f32 %v848, 0.0
        %v1025 = vmax.f32 %v937, 0.0
        %v1026 = vmax.f32 %v672, 0.0
        %v1027 = vmax.f32 %v761, 0.0
        %v1028 = vmax.f32 %v850, 0.0
        %v1029 = vmax.f32 %v939, 0.0
        %v1030 = vmax.f32 %v675, 0.0
        %v1031 = vmax.f32 %v764, 0.0
        %v1032 = vmax.f32 %v853, 0.0
        %v1033 = vmax.f32 %v942, 0.0
        %v1034 = vmax.f32 %v677, 0.0
        %v1035 = vmax.f32 %v766, 0.0
        %v1036 = vmax.f32 %v855, 0.0
        %v1037 = vmax.f32 %v944, 0.0
        %v1038 = vmax.f32 %v680, 0.0
        %v1039 = vmax.f32 %v769, 0.0
        %v1040 = vmax.f32 %v858, 0.0
        %v1041 = vmax.f32 %v947, 0.0
        %v1042 = vmax.f32 %v682, 0.0
        %v1043 = vmax.f32 %v771, 0.0
        %v1044 = vmax.f32 %v860, 0.0
        %v1045 = vmax.f32 %v949, 0.0
        %v1046 = vmax.f32 %v685, 0.0
        %v1047 = vmax.f32 %v774, 0.0
        %v1048 = vmax.f32 %v863, 0.0
        %v1049 = vmax.f32 %v952, 0.0
        %v1050 = vmax.f32 %v687, 0.0
        %v1051 = vmax.f32 %v776, 0.0
        %v1052 = vmax.f32 %v865, 0.0
        %v1053 = vmax.f32 %v954, 0.0
        %v1054 = vmax.f32 %v690, 0.0
        %v1055 = vmax.f32 %v779, 0.0
        %v1056 = vmax.f32 %v868, 0.0
        %v1057 = vmax.f32 %v957, 0.0
        %v1058 = vmax.f32 %v692, 0.0
        %v1059 = vmax.f32 %v781, 0.0
        %v1060 = vmax.f32 %v870, 0.0
        %v1061 = vmax.f32 %v959, 0.0
        %v1062 = vmax.f32 %v695, 0.0
        %v1063 = vmax.f32 %v784, 0.0
        %v1064 = vmax.f32 %v873, 0.0
        %v1065 = vmax.f32 %v962, 0.0
        %v1066 = vmax.f32 %v697, 0.0
        %v1067 = vmax.f32 %v786, 0.0
        %v1068 = vmax.f32 %v875, 0.0
        %v1069 = vmax.f32 %v964, 0.0
        %v1070 = vmax.f32 %v700, 0.0
        %v1071 = vmax.f32 %v789, 0.0
        %v1072 = vmax.f32 %v878, 0.0
        %v1073 = vmax.f32 %v967, 0.0
        %v1074 = vmax.f32 %v702, 0.0
        %v1075 = vmax.f32 %v791, 0.0
        %v1076 = vmax.f32 %v880, 0.0
        %v1077 = vmax.f32 %v969, 0.0
        %v1078 = vmax.f32 %v705, 0.0
        %v1079 = vmax.f32 %v794, 0.0
        %v1080 = vmax.f32 %v883, 0.0
        %v1081 = vmax.f32 %v972, 0.0
        %v1082 = vmax.f32 %v707, 0.0
        %v1083 = vmax.f32 %v796, 0.0
        %v1084 = vmax.f32 %v885, 0.0
        %v1085 = vmax.f32 %v974, 0.0
        %v1086 = vmax.f32 %v710, 0.0
        %v1087 = vmax.f32 %v799, 0.0
        %v1088 = vmax.f32 %v888, 0.0
        %v1089 = vmax.f32 %v977, 0.0
        %v1090 = vmax.f32 %v712, 0.0
        %v1091 = vmax.f32 %v801, 0.0
        %v1092 = vmax.f32 %v890, 0.0
        %v1093 = vmax.f32 %v979, 0.0
        %v1094 = vmax.f32 %v715, 0.0
        %v1095 = vmax.f32 %v804, 0.0
        %v1096 = vmax.f32 %v893, 0.0
        %v1097 = vmax.f32 %v982, 0.0
        %v1098 = vmax.f32 %v717, 0.0
        %v1099 = vmax.f32 %v806, 0.0
        %v1100 = vmax.f32 %v895, 0.0
        %v1101 = vmax.f32 %v984, 0.0
        %v1102 = vmax.f32 %v720, 0.0
        %v1103 = vmax.f32 %v809, 0.0
        %v1104 = vmax.f32 %v898, 0.0
        %v1105 = vmax.f32 %v987, 0.0
        %v1106 = vmax.f32 %v722, 0.0
        %v1107 = vmax.f32 %v811, 0.0
        %v1108 = vmax.f32 %v900, 0.0
        %v1109 = vmax.f32 %v989, 0.0
        %v1110 = vmax.f32 %v725, 0.0
        %v1111 = vmax.f32 %v814, 0.0
        %v1112 = vmax.f32 %v903, 0.0
        %v1113 = vmax.f32 %v992, 0.0
        %v1114 = vmax.f32 %v727, 0.0
        %v1115 = vmax.f32 %v816, 0.0
        %v1116 = vmax.f32 %v905, 0.0
        %v1117 = vmax.f32 %v994, 0.0
        %v1118 = vmax.f32 %v730, 0.0
        %v1119 = vmax.f32 %v819, 0.0
        %v1120 = vmax.f32 %v908, 0.0
        %v1121 = vmax.f32 %v997, 0.0
        %v1122 = vmax.f32 %v732, 0.0
        %v1123 = vmax.f32 %v821, 0.0
        %v1124 = vmax.f32 %v910, 0.0
        %v1125 = vmax.f32 %v999, 0.0
        %v1126 = vmax.f32 %v735, 0.0
        %v1127 = vmax.f32 %v824, 0.0
        %v1128 = vmax.f32 %v913, 0.0
        %v1129 = vmax.f32 %v1002, 0.0
        %v1130 = vmax.f32 %v737, 0.0
        %v1131 = vmax.f32 %v826, 0.0
        %v1132 = vmax.f32 %v915, 0.0
        %v1133 = vmax.f32 %v1004, 0.0
        %v1134 = vpack.c.bf16 %v1010, %v1006
        %v1135 = vpack.c.bf16 %v1011, %v1007
        %v1136 = vpack.c.bf16 %v1012, %v1008
        %v1137 = vpack.c.bf16 %v1013, %v1009
        %v1138 = vpack.c.bf16 %v1018, %v1014
        %v1139 = vpack.c.bf16 %v1019, %v1015
        %v1140 = vpack.c.bf16 %v1020, %v1016
        %v1141 = vpack.c.bf16 %v1021, %v1017
        %v1142 = vpack.c.bf16 %v1026, %v1022
        %v1143 = vpack.c.bf16 %v1027, %v1023
        %v1144 = vpack.c.bf16 %v1028, %v1024
        %v1145 = vpack.c.bf16 %v1029, %v1025
        %v1146 = vpack.c.bf16 %v1034, %v1030
        %v1147 = vpack.c.bf16 %v1035, %v1031
        %v1148 = vpack.c.bf16 %v1036, %v1032
        %v1149 = vpack.c.bf16 %v1037, %v1033
        %v1150 = vpack.c.bf16 %v1042, %v1038
        %v1151 = vpack.c.bf16 %v1043, %v1039
        %v1152 = vpack.c.bf16 %v1044, %v1040
        %v1153 = vpack.c.bf16 %v1045, %v1041
        %v1154 = vpack.c.bf16 %v1050, %v1046
        %v1155 = vpack.c.bf16 %v1051, %v1047
        %v1156 = vpack.c.bf16 %v1052, %v1048
        %v1157 = vpack.c.bf16 %v1053, %v1049
        %v1158 = vpack.c.bf16 %v1058, %v1054
        %v1159 = vpack.c.bf16 %v1059, %v1055
        %v1160 = vpack.c.bf16 %v1060, %v1056
        %v1161 = vpack.c.bf16 %v1061, %v1057
        %v1162 = vpack.c.bf16 %v1066, %v1062
        %v1163 = vpack.c.bf16 %v1067, %v1063
        %v1164 = vpack.c.bf16 %v1068, %v1064
        %v1165 = vpack.c.bf16 %v1069, %v1065
        %v1166 = vpack.c.bf16 %v1074, %v1070
        %v1167 = vpack.c.bf16 %v1075, %v1071
        %v1168 = vpack.c.bf16 %v1076, %v1072
        %v1169 = vpack.c.bf16 %v1077, %v1073
        %v1170 = vpack.c.bf16 %v1082, %v1078
        %v1171 = vpack.c.bf16 %v1083, %v1079
        %v1172 = vpack.c.bf16 %v1084, %v1080
        %v1173 = vpack.c.bf16 %v1085, %v1081
        %v1174 = vpack.c.bf16 %v1090, %v1086
        %v1175 = vpack.c.bf16 %v1091, %v1087
        %v1176 = vpack.c.bf16 %v1092, %v1088
        %v1177 = vpack.c.bf16 %v1093, %v1089
        %v1178 = vpack.c.bf16 %v1098, %v1094
        %v1179 = vpack.c.bf16 %v1099, %v1095
        %v1180 = vpack.c.bf16 %v1100, %v1096
        %v1181 = vpack.c.bf16 %v1101, %v1097
        %v1182 = vpack.c.bf16 %v1106, %v1102
        %v1183 = vpack.c.bf16 %v1107, %v1103
        %v1184 = vpack.c.bf16 %v1108, %v1104
        %v1185 = vpack.c.bf16 %v1109, %v1105
        %v1186 = vpack.c.bf16 %v1114, %v1110
        %v1187 = vpack.c.bf16 %v1115, %v1111
        %v1188 = vpack.c.bf16 %v1116, %v1112
        %v1189 = vpack.c.bf16 %v1117, %v1113
        %v1190 = vpack.c.bf16 %v1122, %v1118
        %v1191 = vpack.c.bf16 %v1123, %v1119
        %v1192 = vpack.c.bf16 %v1124, %v1120
        %v1193 = vpack.c.bf16 %v1125, %v1121
        %v1194 = vpack.c.bf16 %v1130, %v1126
        %v1195 = vpack.c.bf16 %v1131, %v1127
        %v1196 = vpack.c.bf16 %v1132, %v1128
        %v1197 = vpack.c.bf16 %v1133, %v1129
        %v1198 = vld [vmem:[%s2] sm:$0xff]
        %v1199 = vld [vmem:[%s2 + $0x8] sm:$0xff]
        %v1200 = vld [vmem:[%s2 + $0x10] sm:$0xff]
        %v1201 = vld [vmem:[%s2 + $0x18] sm:$0xff]
        %v1202 = vld [vmem:[%s2 + $0x20] sm:$0xff]
        %v1203 = vld [vmem:[%s2 + $0x28] sm:$0xff]
        %v1204 = vld [vmem:[%s2 + $0x30] sm:$0xff]
        %v1205 = vld [vmem:[%s2 + $0x38] sm:$0xff]
        %v1206 = vld [vmem:[%s2 + $0x40] sm:$0xff]
        %v1207 = vld [vmem:[%s2 + $0x48] sm:$0xff]
        %v1208 = vld [vmem:[%s2 + $0x50] sm:$0xff]
        %v1209 = vld [vmem:[%s2 + $0x58] sm:$0xff]
        %v1210 = vld [vmem:[%s2 + $0x60] sm:$0xff]
        %v1211 = vld [vmem:[%s2 + $0x68] sm:$0xff]
        %v1212 = vld [vmem:[%s2 + $0x70] sm:$0xff]
        %v1213 = vld [vmem:[%s2 + $0x78] sm:$0xff]
        %v1214 = vld [vmem:[%s2 + $0x80] sm:$0xff]
        %v1215 = vld [vmem:[%s2 + $0x88] sm:$0xff]
        %v1216 = vld [vmem:[%s2 + $0x90] sm:$0xff]
        %v1217 = vld [vmem:[%s2 + $0x98] sm:$0xff]
        %v1218 = vld [vmem:[%s2 + $0xa0] sm:$0xff]
        %v1219 = vld [vmem:[%s2 + $0xa8] sm:$0xff]
        %v1220 = vld [vmem:[%s2 + $0xb0] sm:$0xff]
        %v1221 = vld [vmem:[%s2 + $0xb8] sm:$0xff]
        %v1222 = vld [vmem:[%s2 + $0xc0] sm:$0xff]
        %v1223 = vld [vmem:[%s2 + $0xc8] sm:$0xff]
        %v1224 = vld [vmem:[%s2 + $0xd0] sm:$0xff]
        %v1225 = vld [vmem:[%s2 + $0xd8] sm:$0xff]
        %v1226 = vld [vmem:[%s2 + $0xe0] sm:$0xff]
        %v1227 = vld [vmem:[%s2 + $0xe8] sm:$0xff]
        %v1228 = vld [vmem:[%s2 + $0xf0] sm:$0xff]
        %v1229 = vld [vmem:[%s2 + $0xf8] sm:$0xff]
        %v1230 = vld [vmem:[%s2 + $0x100] sm:$0xff]
        %v1231 = vld [vmem:[%s2 + $0x108] sm:$0xff]
        %v1232 = vld [vmem:[%s2 + $0x110] sm:$0xff]
        %v1233 = vld [vmem:[%s2 + $0x118] sm:$0xff]
        %v1234 = vld [vmem:[%s2 + $0x120] sm:$0xff]
        %v1235 = vld [vmem:[%s2 + $0x128] sm:$0xff]
        %v1236 = vld [vmem:[%s2 + $0x130] sm:$0xff]
        %v1237 = vld [vmem:[%s2 + $0x138] sm:$0xff]
        %v1238 = vld [vmem:[%s2 + $0x140] sm:$0xff]
        %v1239 = vld [vmem:[%s2 + $0x148] sm:$0xff]
        %v1240 = vld [vmem:[%s2 + $0x150] sm:$0xff]
        %v1241 = vld [vmem:[%s2 + $0x158] sm:$0xff]
        %v1242 = vld [vmem:[%s2 + $0x160] sm:$0xff]
        %v1243 = vld [vmem:[%s2 + $0x168] sm:$0xff]
        %v1244 = vld [vmem:[%s2 + $0x170] sm:$0xff]
        %v1245 = vld [vmem:[%s2 + $0x178] sm:$0xff]
        %v1246 = vld [vmem:[%s2 + $0x180] sm:$0xff]
        %v1247 = vld [vmem:[%s2 + $0x188] sm:$0xff]
        %v1248 = vld [vmem:[%s2 + $0x190] sm:$0xff]
        %v1249 = vld [vmem:[%s2 + $0x198] sm:$0xff]
        %v1250 = vld [vmem:[%s2 + $0x1a0] sm:$0xff]
        %v1251 = vld [vmem:[%s2 + $0x1a8] sm:$0xff]
        %v1252 = vld [vmem:[%s2 + $0x1b0] sm:$0xff]
        %v1253 = vld [vmem:[%s2 + $0x1b8] sm:$0xff]
        %v1254 = vld [vmem:[%s2 + $0x1c0] sm:$0xff]
        %v1255 = vld [vmem:[%s2 + $0x1c8] sm:$0xff]
        %v1256 = vld [vmem:[%s2 + $0x1d0] sm:$0xff]
        %v1257 = vld [vmem:[%s2 + $0x1d8] sm:$0xff]
        %v1258 = vld [vmem:[%s2 + $0x1e0] sm:$0xff]
        %v1259 = vld [vmem:[%s2 + $0x1e8] sm:$0xff]
        %v1260 = vld [vmem:[%s2 + $0x1f0] sm:$0xff]
        %v1261 = vld [vmem:[%s2 + $0x1f8] sm:$0xff]
        %v1262 = vld [vmem:[%s2 + $0x200] sm:$0xff]
        %v1263 = vld [vmem:[%s2 + $0x208] sm:$0xff]
        %v1264 = vld [vmem:[%s2 + $0x210] sm:$0xff]
        %v1265 = vld [vmem:[%s2 + $0x218] sm:$0xff]
        %v1266 = vld [vmem:[%s2 + $0x220] sm:$0xff]
        %v1267 = vld [vmem:[%s2 + $0x228] sm:$0xff]
        %v1268 = vld [vmem:[%s2 + $0x230] sm:$0xff]
        %v1269 = vld [vmem:[%s2 + $0x238] sm:$0xff]
        %v1270 = vld [vmem:[%s2 + $0x240] sm:$0xff]
        %v1271 = vld [vmem:[%s2 + $0x248] sm:$0xff]
        %v1272 = vld [vmem:[%s2 + $0x250] sm:$0xff]
        %v1273 = vld [vmem:[%s2 + $0x258] sm:$0xff]
        %v1274 = vld [vmem:[%s2 + $0x260] sm:$0xff]
        %v1275 = vld [vmem:[%s2 + $0x268] sm:$0xff]
        %v1276 = vld [vmem:[%s2 + $0x270] sm:$0xff]
        %v1277 = vld [vmem:[%s2 + $0x278] sm:$0xff]
        %v1278 = vld [vmem:[%s2 + $0x280] sm:$0xff]
        %v1279 = vld [vmem:[%s2 + $0x288] sm:$0xff]
        %v1280 = vld [vmem:[%s2 + $0x290] sm:$0xff]
        %v1281 = vld [vmem:[%s2 + $0x298] sm:$0xff]
        %v1282 = vld [vmem:[%s2 + $0x2a0] sm:$0xff]
        %v1283 = vld [vmem:[%s2 + $0x2a8] sm:$0xff]
        %v1284 = vld [vmem:[%s2 + $0x2b0] sm:$0xff]
        %v1285 = vld [vmem:[%s2 + $0x2b8] sm:$0xff]
        %v1286 = vld [vmem:[%s2 + $0x2c0] sm:$0xff]
        %v1287 = vld [vmem:[%s2 + $0x2c8] sm:$0xff]
        %v1288 = vld [vmem:[%s2 + $0x2d0] sm:$0xff]
        %v1289 = vld [vmem:[%s2 + $0x2d8] sm:$0xff]
        %v1290 = vld [vmem:[%s2 + $0x2e0] sm:$0xff]
        %v1291 = vld [vmem:[%s2 + $0x2e8] sm:$0xff]
        %v1292 = vld [vmem:[%s2 + $0x2f0] sm:$0xff]
        %v1293 = vld [vmem:[%s2 + $0x2f8] sm:$0xff]
        %v1294 = vld [vmem:[%s2 + $0x300] sm:$0xff]
        %v1295 = vld [vmem:[%s2 + $0x308] sm:$0xff]
        %v1296 = vld [vmem:[%s2 + $0x310] sm:$0xff]
        %v1297 = vld [vmem:[%s2 + $0x318] sm:$0xff]
        %v1298 = vld [vmem:[%s2 + $0x320] sm:$0xff]
        %v1299 = vld [vmem:[%s2 + $0x328] sm:$0xff]
        %v1300 = vld [vmem:[%s2 + $0x330] sm:$0xff]
        %v1301 = vld [vmem:[%s2 + $0x338] sm:$0xff]
        %v1302 = vld [vmem:[%s2 + $0x340] sm:$0xff]
        %v1303 = vld [vmem:[%s2 + $0x348] sm:$0xff]
        %v1304 = vld [vmem:[%s2 + $0x350] sm:$0xff]
        %v1305 = vld [vmem:[%s2 + $0x358] sm:$0xff]
        %v1306 = vld [vmem:[%s2 + $0x360] sm:$0xff]
        %v1307 = vld [vmem:[%s2 + $0x368] sm:$0xff]
        %v1308 = vld [vmem:[%s2 + $0x370] sm:$0xff]
        %v1309 = vld [vmem:[%s2 + $0x378] sm:$0xff]
        %v1310 = vld [vmem:[%s2 + $0x380] sm:$0xff]
        %v1311 = vld [vmem:[%s2 + $0x388] sm:$0xff]
        %v1312 = vld [vmem:[%s2 + $0x390] sm:$0xff]
        %v1313 = vld [vmem:[%s2 + $0x398] sm:$0xff]
        %v1314 = vld [vmem:[%s2 + $0x3a0] sm:$0xff]
        %v1315 = vld [vmem:[%s2 + $0x3a8] sm:$0xff]
        %v1316 = vld [vmem:[%s2 + $0x3b0] sm:$0xff]
        %v1317 = vld [vmem:[%s2 + $0x3b8] sm:$0xff]
        %v1318 = vld [vmem:[%s2 + $0x3c0] sm:$0xff]
        %v1319 = vld [vmem:[%s2 + $0x3c8] sm:$0xff]
        %v1320 = vld [vmem:[%s2 + $0x3d0] sm:$0xff]
        %v1321 = vld [vmem:[%s2 + $0x3d8] sm:$0xff]
        %v1322 = vld [vmem:[%s2 + $0x3e0] sm:$0xff]
        %v1323 = vld [vmem:[%s2 + $0x3e8] sm:$0xff]
        %v1324 = vld [vmem:[%s2 + $0x3f0] sm:$0xff]
        %v1325 = vld [vmem:[%s2 + $0x3f8] sm:$0xff]
        %s1326 = scalar_lea.vmem [#allocation7], 1
        %v1327 = vld [vmem:[%s1326] ss:$4 sm:$0xf]
        %v1329 = vperm.slane %v1327, 0
        %v1330 = vperm.slane %v1327, 1
        %v1331 = vperm.slane %v1327, 2
        %v1332 = vperm.slane %v1327, 3
        %v1465 = vunpack.c.l.b16 %v1198
        %v1466 = vunpack.c.h.b16 %v1198
        %v1467 = vunpack.c.l.b16 %v1199
        %v1468 = vunpack.c.h.b16 %v1199
        %v1469 = vunpack.c.l.b16 %v1200
        %v1470 = vunpack.c.h.b16 %v1200
        %v1471 = vunpack.c.l.b16 %v1201
        %v1472 = vunpack.c.h.b16 %v1201
        %v1473 = vunpack.c.l.b16 %v1202
        %v1474 = vunpack.c.h.b16 %v1202
        %v1475 = vunpack.c.l.b16 %v1203
        %v1476 = vunpack.c.h.b16 %v1203
        %v1477 = vunpack.c.l.b16 %v1204
        %v1478 = vunpack.c.h.b16 %v1204
        %v1479 = vunpack.c.l.b16 %v1205
        %v1480 = vunpack.c.h.b16 %v1205
        %v1481 = vunpack.c.l.b16 %v1206
        %v1482 = vunpack.c.h.b16 %v1206
        %v1483 = vunpack.c.l.b16 %v1207
        %v1484 = vunpack.c.h.b16 %v1207
        %v1485 = vunpack.c.l.b16 %v1208
        %v1486 = vunpack.c.h.b16 %v1208
        %v1487 = vunpack.c.l.b16 %v1209
        %v1488 = vunpack.c.h.b16 %v1209
        %v1489 = vunpack.c.l.b16 %v1210
        %v1490 = vunpack.c.h.b16 %v1210
        %v1491 = vunpack.c.l.b16 %v1211
        %v1492 = vunpack.c.h.b16 %v1211
        %v1493 = vunpack.c.l.b16 %v1212
        %v1494 = vunpack.c.h.b16 %v1212
        %v1495 = vunpack.c.l.b16 %v1213
        %v1496 = vunpack.c.h.b16 %v1213
        %v1497 = vunpack.c.l.b16 %v1214
        %v1498 = vunpack.c.h.b16 %v1214
        %v1499 = vunpack.c.l.b16 %v1215
        %v1500 = vunpack.c.h.b16 %v1215
        %v1501 = vunpack.c.l.b16 %v1216
        %v1502 = vunpack.c.h.b16 %v1216
        %v1503 = vunpack.c.l.b16 %v1217
        %v1504 = vunpack.c.h.b16 %v1217
        %v1505 = vunpack.c.l.b16 %v1218
        %v1506 = vunpack.c.h.b16 %v1218
        %v1507 = vunpack.c.l.b16 %v1219
        %v1508 = vunpack.c.h.b16 %v1219
        %v1509 = vunpack.c.l.b16 %v1220
        %v1510 = vunpack.c.h.b16 %v1220
        %v1511 = vunpack.c.l.b16 %v1221
        %v1512 = vunpack.c.h.b16 %v1221
        %v1513 = vunpack.c.l.b16 %v1222
        %v1514 = vunpack.c.h.b16 %v1222
        %v1515 = vunpack.c.l.b16 %v1223
        %v1516 = vunpack.c.h.b16 %v1223
        %v1517 = vunpack.c.l.b16 %v1224
        %v1518 = vunpack.c.h.b16 %v1224
        %v1519 = vunpack.c.l.b16 %v1225
        %v1520 = vunpack.c.h.b16 %v1225
        %v1521 = vunpack.c.l.b16 %v1226
        %v1522 = vunpack.c.h.b16 %v1226
        %v1523 = vunpack.c.l.b16 %v1227
        %v1524 = vunpack.c.h.b16 %v1227
        %v1525 = vunpack.c.l.b16 %v1228
        %v1526 = vunpack.c.h.b16 %v1228
        %v1527 = vunpack.c.l.b16 %v1229
        %v1528 = vunpack.c.h.b16 %v1229
        %v1529 = vunpack.c.l.b16 %v1230
        %v1530 = vunpack.c.h.b16 %v1230
        %v1531 = vunpack.c.l.b16 %v1231
        %v1532 = vunpack.c.h.b16 %v1231
        %v1533 = vunpack.c.l.b16 %v1232
        %v1534 = vunpack.c.h.b16 %v1232
        %v1535 = vunpack.c.l.b16 %v1233
        %v1536 = vunpack.c.h.b16 %v1233
        %v1537 = vunpack.c.l.b16 %v1234
        %v1538 = vunpack.c.h.b16 %v1234
        %v1539 = vunpack.c.l.b16 %v1235
        %v1540 = vunpack.c.h.b16 %v1235
        %v1541 = vunpack.c.l.b16 %v1236
        %v1542 = vunpack.c.h.b16 %v1236
        %v1543 = vunpack.c.l.b16 %v1237
        %v1544 = vunpack.c.h.b16 %v1237
        %v1545 = vunpack.c.l.b16 %v1238
        %v1546 = vunpack.c.h.b16 %v1238
        %v1547 = vunpack.c.l.b16 %v1239
        %v1548 = vunpack.c.h.b16 %v1239
        %v1549 = vunpack.c.l.b16 %v1240
        %v1550 = vunpack.c.h.b16 %v1240
        %v1551 = vunpack.c.l.b16 %v1241
        %v1552 = vunpack.c.h.b16 %v1241
        %v1553 = vunpack.c.l.b16 %v1242
        %v1554 = vunpack.c.h.b16 %v1242
        %v1555 = vunpack.c.l.b16 %v1243
        %v1556 = vunpack.c.h.b16 %v1243
        %v1557 = vunpack.c.l.b16 %v1244
        %v1558 = vunpack.c.h.b16 %v1244
        %v1559 = vunpack.c.l.b16 %v1245
        %v1560 = vunpack.c.h.b16 %v1245
        %v1561 = vunpack.c.l.b16 %v1246
        %v1562 = vunpack.c.h.b16 %v1246
        %v1563 = vunpack.c.l.b16 %v1247
        %v1564 = vunpack.c.h.b16 %v1247
        %v1565 = vunpack.c.l.b16 %v1248
        %v1566 = vunpack.c.h.b16 %v1248
        %v1567 = vunpack.c.l.b16 %v1249
        %v1568 = vunpack.c.h.b16 %v1249
        %v1569 = vunpack.c.l.b16 %v1250
        %v1570 = vunpack.c.h.b16 %v1250
        %v1571 = vunpack.c.l.b16 %v1251
        %v1572 = vunpack.c.h.b16 %v1251
        %v1573 = vunpack.c.l.b16 %v1252
        %v1574 = vunpack.c.h.b16 %v1252
        %v1575 = vunpack.c.l.b16 %v1253
        %v1576 = vunpack.c.h.b16 %v1253
        %v1577 = vunpack.c.l.b16 %v1254
        %v1578 = vunpack.c.h.b16 %v1254
        %v1579 = vunpack.c.l.b16 %v1255
        %v1580 = vunpack.c.h.b16 %v1255
        %v1581 = vunpack.c.l.b16 %v1256
        %v1582 = vunpack.c.h.b16 %v1256
        %v1583 = vunpack.c.l.b16 %v1257
        %v1584 = vunpack.c.h.b16 %v1257
        %v1585 = vunpack.c.l.b16 %v1258
        %v1586 = vunpack.c.h.b16 %v1258
        %v1587 = vunpack.c.l.b16 %v1259
        %v1588 = vunpack.c.h.b16 %v1259
        %v1589 = vunpack.c.l.b16 %v1260
        %v1590 = vunpack.c.h.b16 %v1260
        %v1591 = vunpack.c.l.b16 %v1261
        %v1592 = vunpack.c.h.b16 %v1261
        %v1593 = vunpack.c.l.b16 %v1262
        %v1594 = vunpack.c.h.b16 %v1262
        %v1595 = vunpack.c.l.b16 %v1263
        %v1596 = vunpack.c.h.b16 %v1263
        %v1597 = vunpack.c.l.b16 %v1264
        %v1598 = vunpack.c.h.b16 %v1264
        %v1599 = vunpack.c.l.b16 %v1265
        %v1600 = vunpack.c.h.b16 %v1265
        %v1601 = vunpack.c.l.b16 %v1266
        %v1602 = vunpack.c.h.b16 %v1266
        %v1603 = vunpack.c.l.b16 %v1267
        %v1604 = vunpack.c.h.b16 %v1267
        %v1605 = vunpack.c.l.b16 %v1268
        %v1606 = vunpack.c.h.b16 %v1268
        %v1607 = vunpack.c.l.b16 %v1269
        %v1608 = vunpack.c.h.b16 %v1269
        %v1609 = vunpack.c.l.b16 %v1270
        %v1610 = vunpack.c.h.b16 %v1270
        %v1611 = vunpack.c.l.b16 %v1271
        %v1612 = vunpack.c.h.b16 %v1271
        %v1613 = vunpack.c.l.b16 %v1272
        %v1614 = vunpack.c.h.b16 %v1272
        %v1615 = vunpack.c.l.b16 %v1273
        %v1616 = vunpack.c.h.b16 %v1273
        %v1617 = vunpack.c.l.b16 %v1274
        %v1618 = vunpack.c.h.b16 %v1274
        %v1619 = vunpack.c.l.b16 %v1275
        %v1620 = vunpack.c.h.b16 %v1275
        %v1621 = vunpack.c.l.b16 %v1276
        %v1622 = vunpack.c.h.b16 %v1276
        %v1623 = vunpack.c.l.b16 %v1277
        %v1624 = vunpack.c.h.b16 %v1277
        %v1625 = vunpack.c.l.b16 %v1278
        %v1626 = vunpack.c.h.b16 %v1278
        %v1627 = vunpack.c.l.b16 %v1279
        %v1628 = vunpack.c.h.b16 %v1279
        %v1629 = vunpack.c.l.b16 %v1280
        %v1630 = vunpack.c.h.b16 %v1280
        %v1631 = vunpack.c.l.b16 %v1281
        %v1632 = vunpack.c.h.b16 %v1281
        %v1633 = vunpack.c.l.b16 %v1282
        %v1634 = vunpack.c.h.b16 %v1282
        %v1635 = vunpack.c.l.b16 %v1283
        %v1636 = vunpack.c.h.b16 %v1283
        %v1637 = vunpack.c.l.b16 %v1284
        %v1638 = vunpack.c.h.b16 %v1284
        %v1639 = vunpack.c.l.b16 %v1285
        %v1640 = vunpack.c.h.b16 %v1285
        %v1641 = vunpack.c.l.b16 %v1286
        %v1642 = vunpack.c.h.b16 %v1286
        %v1643 = vunpack.c.l.b16 %v1287
        %v1644 = vunpack.c.h.b16 %v1287
        %v1645 = vunpack.c.l.b16 %v1288
        %v1646 = vunpack.c.h.b16 %v1288
        %v1647 = vunpack.c.l.b16 %v1289
        %v1648 = vunpack.c.h.b16 %v1289
        %v1649 = vunpack.c.l.b16 %v1290
        %v1650 = vunpack.c.h.b16 %v1290
        %v1651 = vunpack.c.l.b16 %v1291
        %v1652 = vunpack.c.h.b16 %v1291
        %v1653 = vunpack.c.l.b16 %v1292
        %v1654 = vunpack.c.h.b16 %v1292
        %v1655 = vunpack.c.l.b16 %v1293
        %v1656 = vunpack.c.h.b16 %v1293
        %v1657 = vunpack.c.l.b16 %v1294
        %v1658 = vunpack.c.h.b16 %v1294
        %v1659 = vunpack.c.l.b16 %v1295
        %v1660 = vunpack.c.h.b16 %v1295
        %v1661 = vunpack.c.l.b16 %v1296
        %v1662 = vunpack.c.h.b16 %v1296
        %v1663 = vunpack.c.l.b16 %v1297
        %v1664 = vunpack.c.h.b16 %v1297
        %v1665 = vunpack.c.l.b16 %v1298
        %v1666 = vunpack.c.h.b16 %v1298
        %v1667 = vunpack.c.l.b16 %v1299
        %v1668 = vunpack.c.h.b16 %v1299
        %v1669 = vunpack.c.l.b16 %v1300
        %v1670 = vunpack.c.h.b16 %v1300
        %v1671 = vunpack.c.l.b16 %v1301
        %v1672 = vunpack.c.h.b16 %v1301
        %v1673 = vunpack.c.l.b16 %v1302
        %v1674 = vunpack.c.h.b16 %v1302
        %v1675 = vunpack.c.l.b16 %v1303
        %v1676 = vunpack.c.h.b16 %v1303
        %v1677 = vunpack.c.l.b16 %v1304
        %v1678 = vunpack.c.h.b16 %v1304
        %v1679 = vunpack.c.l.b16 %v1305
        %v1680 = vunpack.c.h.b16 %v1305
        %v1681 = vunpack.c.l.b16 %v1306
        %v1682 = vunpack.c.h.b16 %v1306
        %v1683 = vunpack.c.l.b16 %v1307
        %v1684 = vunpack.c.h.b16 %v1307
        %v1685 = vunpack.c.l.b16 %v1308
        %v1686 = vunpack.c.h.b16 %v1308
        %v1687 = vunpack.c.l.b16 %v1309
        %v1688 = vunpack.c.h.b16 %v1309
        %v1689 = vunpack.c.l.b16 %v1310
        %v1690 = vunpack.c.h.b16 %v1310
        %v1691 = vunpack.c.l.b16 %v1311
        %v1692 = vunpack.c.h.b16 %v1311
        %v1693 = vunpack.c.l.b16 %v1312
        %v1694 = vunpack.c.h.b16 %v1312
        %v1695 = vunpack.c.l.b16 %v1313
        %v1696 = vunpack.c.h.b16 %v1313
        %v1697 = vunpack.c.l.b16 %v1314
        %v1698 = vunpack.c.h.b16 %v1314
        %v1699 = vunpack.c.l.b16 %v1315
        %v1700 = vunpack.c.h.b16 %v1315
        %v1701 = vunpack.c.l.b16 %v1316
        %v1702 = vunpack.c.h.b16 %v1316
        %v1703 = vunpack.c.l.b16 %v1317
        %v1704 = vunpack.c.h.b16 %v1317
        %v1705 = vunpack.c.l.b16 %v1318
        %v1706 = vunpack.c.h.b16 %v1318
        %v1707 = vunpack.c.l.b16 %v1319
        %v1708 = vunpack.c.h.b16 %v1319
        %v1709 = vunpack.c.l.b16 %v1320
        %v1710 = vunpack.c.h.b16 %v1320
        %v1711 = vunpack.c.l.b16 %v1321
        %v1712 = vunpack.c.h.b16 %v1321
        %v1713 = vunpack.c.l.b16 %v1322
        %v1714 = vunpack.c.h.b16 %v1322
        %v1715 = vunpack.c.l.b16 %v1323
        %v1716 = vunpack.c.h.b16 %v1323
        %v1717 = vunpack.c.l.b16 %v1324
        %v1718 = vunpack.c.h.b16 %v1324
        %v1719 = vunpack.c.l.b16 %v1325
        %v1720 = vunpack.c.h.b16 %v1325
        %v1721 = vpack.c.b16 %v1469, %v1465
        %v1722 = vpack.c.b16 %v1470, %v1466
        %v1723 = vpack.c.b16 %v1471, %v1467
        %v1724 = vpack.c.b16 %v1472, %v1468
        %v1725 = vpack.c.b16 %v1477, %v1473
        %v1726 = vpack.c.b16 %v1478, %v1474
        %v1727 = vpack.c.b16 %v1479, %v1475
        %v1728 = vpack.c.b16 %v1480, %v1476
        %v1729 = vpack.c.b16 %v1485, %v1481
        %v1730 = vpack.c.b16 %v1486, %v1482
        %v1731 = vpack.c.b16 %v1487, %v1483
        %v1732 = vpack.c.b16 %v1488, %v1484
        %v1733 = vpack.c.b16 %v1493, %v1489
        %v1734 = vpack.c.b16 %v1494, %v1490
        %v1735 = vpack.c.b16 %v1495, %v1491
        %v1736 = vpack.c.b16 %v1496, %v1492
        %v1737 = vpack.c.b16 %v1501, %v1497
        %v1738 = vpack.c.b16 %v1502, %v1498
        %v1739 = vpack.c.b16 %v1503, %v1499
        %v1740 = vpack.c.b16 %v1504, %v1500
        %v1741 = vpack.c.b16 %v1509, %v1505
        %v1742 = vpack.c.b16 %v1510, %v1506
        %v1743 = vpack.c.b16 %v1511, %v1507
        %v1744 = vpack.c.b16 %v1512, %v1508
        %v1745 = vpack.c.b16 %v1517, %v1513
        %v1746 = vpack.c.b16 %v1518, %v1514
        %v1747 = vpack.c.b16 %v1519, %v1515
        %v1748 = vpack.c.b16 %v1520, %v1516
        %v1749 = vpack.c.b16 %v1525, %v1521
        %v1750 = vpack.c.b16 %v1526, %v1522
        %v1751 = vpack.c.b16 %v1527, %v1523
        %v1752 = vpack.c.b16 %v1528, %v1524
        %v1753 = vpack.c.b16 %v1533, %v1529
        %v1754 = vpack.c.b16 %v1534, %v1530
        %v1755 = vpack.c.b16 %v1535, %v1531
        %v1756 = vpack.c.b16 %v1536, %v1532
        %v1757 = vpack.c.b16 %v1541, %v1537
        %v1758 = vpack.c.b16 %v1542, %v1538
        %v1759 = vpack.c.b16 %v1543, %v1539
        %v1760 = vpack.c.b16 %v1544, %v1540
        %v1761 = vpack.c.b16 %v1549, %v1545
        %v1762 = vpack.c.b16 %v1550, %v1546
        %v1763 = vpack.c.b16 %v1551, %v1547
        %v1764 = vpack.c.b16 %v1552, %v1548
        %v1765 = vpack.c.b16 %v1557, %v1553
        %v1766 = vpack.c.b16 %v1558, %v1554
        %v1767 = vpack.c.b16 %v1559, %v1555
        %v1768 = vpack.c.b16 %v1560, %v1556
        %v1769 = vpack.c.b16 %v1565, %v1561
        %v1770 = vpack.c.b16 %v1566, %v1562
        %v1771 = vpack.c.b16 %v1567, %v1563
        %v1772 = vpack.c.b16 %v1568, %v1564
        %v1773 = vpack.c.b16 %v1573, %v1569
        %v1774 = vpack.c.b16 %v1574, %v1570
        %v1775 = vpack.c.b16 %v1575, %v1571
        %v1776 = vpack.c.b16 %v1576, %v1572
        %v1777 = vpack.c.b16 %v1581, %v1577
        %v1778 = vpack.c.b16 %v1582, %v1578
        %v1779 = vpack.c.b16 %v1583, %v1579
        %v1780 = vpack.c.b16 %v1584, %v1580
        %v1781 = vpack.c.b16 %v1589, %v1585
        %v1782 = vpack.c.b16 %v1590, %v1586
        %v1783 = vpack.c.b16 %v1591, %v1587
        %v1784 = vpack.c.b16 %v1592, %v1588
        %v1785 = vpack.c.b16 %v1597, %v1593
        %v1786 = vpack.c.b16 %v1598, %v1594
        %v1787 = vpack.c.b16 %v1599, %v1595
        %v1788 = vpack.c.b16 %v1600, %v1596
        %v1789 = vpack.c.b16 %v1605, %v1601
        %v1790 = vpack.c.b16 %v1606, %v1602
        %v1791 = vpack.c.b16 %v1607, %v1603
        %v1792 = vpack.c.b16 %v1608, %v1604
        %v1793 = vpack.c.b16 %v1613, %v1609
        %v1794 = vpack.c.b16 %v1614, %v1610
        %v1795 = vpack.c.b16 %v1615, %v1611
        %v1796 = vpack.c.b16 %v1616, %v1612
        %v1797 = vpack.c.b16 %v1621, %v1617
        %v1798 = vpack.c.b16 %v1622, %v1618
        %v1799 = vpack.c.b16 %v1623, %v1619
        %v1800 = vpack.c.b16 %v1624, %v1620
        %v1801 = vpack.c.b16 %v1629, %v1625
        %v1802 = vpack.c.b16 %v1630, %v1626
        %v1803 = vpack.c.b16 %v1631, %v1627
        %v1804 = vpack.c.b16 %v1632, %v1628
        %v1805 = vpack.c.b16 %v1637, %v1633
        %v1806 = vpack.c.b16 %v1638, %v1634
        %v1807 = vpack.c.b16 %v1639, %v1635
        %v1808 = vpack.c.b16 %v1640, %v1636
        %v1809 = vpack.c.b16 %v1645, %v1641
        %v1810 = vpack.c.b16 %v1646, %v1642
        %v1811 = vpack.c.b16 %v1647, %v1643
        %v1812 = vpack.c.b16 %v1648, %v1644
        %v1813 = vpack.c.b16 %v1653, %v1649
        %v1814 = vpack.c.b16 %v1654, %v1650
        %v1815 = vpack.c.b16 %v1655, %v1651
        %v1816 = vpack.c.b16 %v1656, %v1652
        %v1817 = vpack.c.b16 %v1661, %v1657
        %v1818 = vpack.c.b16 %v1662, %v1658
        %v1819 = vpack.c.b16 %v1663, %v1659
        %v1820 = vpack.c.b16 %v1664, %v1660
        %v1821 = vpack.c.b16 %v1669, %v1665
        %v1822 = vpack.c.b16 %v1670, %v1666
        %v1823 = vpack.c.b16 %v1671, %v1667
        %v1824 = vpack.c.b16 %v1672, %v1668
        %v1825 = vpack.c.b16 %v1677, %v1673
        %v1826 = vpack.c.b16 %v1678, %v1674
        %v1827 = vpack.c.b16 %v1679, %v1675
        %v1828 = vpack.c.b16 %v1680, %v1676
        %v1829 = vpack.c.b16 %v1685, %v1681
        %v1830 = vpack.c.b16 %v1686, %v1682
        %v1831 = vpack.c.b16 %v1687, %v1683
        %v1832 = vpack.c.b16 %v1688, %v1684
        %v1833 = vpack.c.b16 %v1693, %v1689
        %v1834 = vpack.c.b16 %v1694, %v1690
        %v1835 = vpack.c.b16 %v1695, %v1691
        %v1836 = vpack.c.b16 %v1696, %v1692
        %v1837 = vpack.c.b16 %v1701, %v1697
        %v1838 = vpack.c.b16 %v1702, %v1698
        %v1839 = vpack.c.b16 %v1703, %v1699
        %v1840 = vpack.c.b16 %v1704, %v1700
        %v1841 = vpack.c.b16 %v1709, %v1705
        %v1842 = vpack.c.b16 %v1710, %v1706
        %v1843 = vpack.c.b16 %v1711, %v1707
        %v1844 = vpack.c.b16 %v1712, %v1708
        %v1845 = vpack.c.b16 %v1717, %v1713
        %v1846 = vpack.c.b16 %v1718, %v1714
        %v1847 = vpack.c.b16 %v1719, %v1715
        %v1848 = vpack.c.b16 %v1720, %v1716
        %1977 = vmatpush.bf16.msra.mxu0 %v1749
        %1978 = vmatpush.bf16.msra.mxu0 %v1745
        %1979 = vmatpush.bf16.msra.mxu0 %v1741
        %1980 = vmatpush.bf16.msra.mxu0 %v1737
        %1981 = vmatpush.bf16.msra.mxu0 %v1733
        %1982 = vmatpush.bf16.msra.mxu0 %v1729
        %1983 = vmatpush.bf16.msra.mxu0 %v1725
        %1984 = vmatpush.bf16.msra.mxu0 %v1721
        %1985 = vmatmul.bf16.gmra.mxu0 %v1134
        %v1986 = vpop.f32.mrf.mxu0
        %v1987 = vadd.f32 %v1329, %v1986
        %v1988 = vpop.f32.mrf.mxu0
        %v1989 = vadd.f32 %v1329, %v1988
        %1990 = vmatmul.bf16.gmra.mxu0 %v1138
        %v1991 = vpop.f32.mrf.mxu0
        %v1992 = vadd.f32 %v1329, %v1991
        %v1993 = vpop.f32.mrf.mxu0
        %v1994 = vadd.f32 %v1329, %v1993
        %1995 = vmatmul.bf16.gmra.mxu0 %v1142
        %v1996 = vpop.f32.mrf.mxu0
        %v1997 = vadd.f32 %v1329, %v1996
        %v1998 = vpop.f32.mrf.mxu0
        %v1999 = vadd.f32 %v1329, %v1998
        %2000 = vmatmul.bf16.gmra.mxu0 %v1146
        %v2001 = vpop.f32.mrf.mxu0
        %v2002 = vadd.f32 %v1329, %v2001
        %v2003 = vpop.f32.mrf.mxu0
        %v2004 = vadd.f32 %v1329, %v2003
        %2005 = vmatmul.bf16.gmra.mxu0 %v1150
        %v2006 = vpop.f32.mrf.mxu0
        %v2007 = vadd.f32 %v1329, %v2006
        %v2008 = vpop.f32.mrf.mxu0
        %v2009 = vadd.f32 %v1329, %v2008
        %2010 = vmatmul.bf16.gmra.mxu0 %v1154
        %v2011 = vpop.f32.mrf.mxu0
        %v2012 = vadd.f32 %v1329, %v2011
        %v2013 = vpop.f32.mrf.mxu0
        %v2014 = vadd.f32 %v1329, %v2013
        %2015 = vmatmul.bf16.gmra.mxu0 %v1158
        %v2016 = vpop.f32.mrf.mxu0
        %v2017 = vadd.f32 %v1329, %v2016
        %v2018 = vpop.f32.mrf.mxu0
        %v2019 = vadd.f32 %v1329, %v2018
        %2020 = vmatmul.bf16.gmra.mxu0 %v1162
        %v2021 = vpop.f32.mrf.mxu0
        %v2022 = vadd.f32 %v1329, %v2021
        %v2023 = vpop.f32.mrf.mxu0
        %v2024 = vadd.f32 %v1329, %v2023
        %2025 = vmatmul.bf16.gmra.mxu0 %v1166
        %v2026 = vpop.f32.mrf.mxu0
        %v2027 = vadd.f32 %v1329, %v2026
        %v2028 = vpop.f32.mrf.mxu0
        %v2029 = vadd.f32 %v1329, %v2028
        %2030 = vmatmul.bf16.gmra.mxu0 %v1170
        %v2031 = vpop.f32.mrf.mxu0
        %v2032 = vadd.f32 %v1329, %v2031
        %v2033 = vpop.f32.mrf.mxu0
        %v2034 = vadd.f32 %v1329, %v2033
        %2035 = vmatmul.bf16.gmra.mxu0 %v1174
        %v2036 = vpop.f32.mrf.mxu0
        %v2037 = vadd.f32 %v1329, %v2036
        %v2038 = vpop.f32.mrf.mxu0
        %v2039 = vadd.f32 %v1329, %v2038
        %2040 = vmatmul.bf16.gmra.mxu0 %v1178
        %v2041 = vpop.f32.mrf.mxu0
        %v2042 = vadd.f32 %v1329, %v2041
        %v2043 = vpop.f32.mrf.mxu0
        %v2044 = vadd.f32 %v1329, %v2043
        %2045 = vmatmul.bf16.gmra.mxu0 %v1182
        %v2046 = vpop.f32.mrf.mxu0
        %v2047 = vadd.f32 %v1329, %v2046
        %v2048 = vpop.f32.mrf.mxu0
        %v2049 = vadd.f32 %v1329, %v2048
        %2050 = vmatmul.bf16.gmra.mxu0 %v1186
        %v2051 = vpop.f32.mrf.mxu0
        %v2052 = vadd.f32 %v1329, %v2051
        %v2053 = vpop.f32.mrf.mxu0
        %v2054 = vadd.f32 %v1329, %v2053
        %2055 = vmatmul.bf16.gmra.mxu0 %v1190
        %v2056 = vpop.f32.mrf.mxu0
        %v2057 = vadd.f32 %v1329, %v2056
        %v2058 = vpop.f32.mrf.mxu0
        %v2059 = vadd.f32 %v1329, %v2058
        %2060 = vmatmul.bf16.gmra.mxu0 %v1194
        %v2061 = vpop.f32.mrf.mxu0
        %v2062 = vadd.f32 %v1329, %v2061
        %v2063 = vpop.f32.mrf.mxu0
        %v2064 = vadd.f32 %v1329, %v2063
        %2065 = vdwg.mxu0
        %2066 = vmatpush.bf16.msra.mxu0 %v1781
        %2067 = vmatpush.bf16.msra.mxu0 %v1777
        %2068 = vmatpush.bf16.msra.mxu0 %v1773
        %2069 = vmatpush.bf16.msra.mxu0 %v1769
        %2070 = vmatpush.bf16.msra.mxu0 %v1765
        %2071 = vmatpush.bf16.msra.mxu0 %v1761
        %2072 = vmatpush.bf16.msra.mxu0 %v1757
        %2073 = vmatpush.bf16.msra.mxu0 %v1753
        %2074 = vmatmul.bf16.gmra.mxu0 %v1135
        %v2075 = vpop.f32.mrf.mxu0
        %v2076 = vadd.f32 %v1987, %v2075
        %v2077 = vpop.f32.mrf.mxu0
        %v2078 = vadd.f32 %v1989, %v2077
        %2079 = vmatmul.bf16.gmra.mxu0 %v1139
        %v2080 = vpop.f32.mrf.mxu0
        %v2081 = vadd.f32 %v1992, %v2080
        %v2082 = vpop.f32.mrf.mxu0
        %v2083 = vadd.f32 %v1994, %v2082
        %2084 = vmatmul.bf16.gmra.mxu0 %v1143
        %v2085 = vpop.f32.mrf.mxu0
        %v2086 = vadd.f32 %v1997, %v2085
        %v2087 = vpop.f32.mrf.mxu0
        %v2088 = vadd.f32 %v1999, %v2087
        %2089 = vmatmul.bf16.gmra.mxu0 %v1147
        %v2090 = vpop.f32.mrf.mxu0
        %v2091 = vadd.f32 %v2002, %v2090
        %v2092 = vpop.f32.mrf.mxu0
        %v2093 = vadd.f32 %v2004, %v2092
        %2094 = vmatmul.bf16.gmra.mxu0 %v1151
        %v2095 = vpop.f32.mrf.mxu0
        %v2096 = vadd.f32 %v2007, %v2095
        %v2097 = vpop.f32.mrf.mxu0
        %v2098 = vadd.f32 %v2009, %v2097
        %2099 = vmatmul.bf16.gmra.mxu0 %v1155
        %v2100 = vpop.f32.mrf.mxu0
        %v2101 = vadd.f32 %v2012, %v2100
        %v2102 = vpop.f32.mrf.mxu0
        %v2103 = vadd.f32 %v2014, %v2102
        %2104 = vmatmul.bf16.gmra.mxu0 %v1159
        %v2105 = vpop.f32.mrf.mxu0
        %v2106 = vadd.f32 %v2017, %v2105
        %v2107 = vpop.f32.mrf.mxu0
        %v2108 = vadd.f32 %v2019, %v2107
        %2109 = vmatmul.bf16.gmra.mxu0 %v1163
        %v2110 = vpop.f32.mrf.mxu0
        %v2111 = vadd.f32 %v2022, %v2110
        %v2112 = vpop.f32.mrf.mxu0
        %v2113 = vadd.f32 %v2024, %v2112
        %2114 = vmatmul.bf16.gmra.mxu0 %v1167
        %v2115 = vpop.f32.mrf.mxu0
        %v2116 = vadd.f32 %v2027, %v2115
        %v2117 = vpop.f32.mrf.mxu0
        %v2118 = vadd.f32 %v2029, %v2117
        %2119 = vmatmul.bf16.gmra.mxu0 %v1171
        %v2120 = vpop.f32.mrf.mxu0
        %v2121 = vadd.f32 %v2032, %v2120
        %v2122 = vpop.f32.mrf.mxu0
        %v2123 = vadd.f32 %v2034, %v2122
        %2124 = vmatmul.bf16.gmra.mxu0 %v1175
        %v2125 = vpop.f32.mrf.mxu0
        %v2126 = vadd.f32 %v2037, %v2125
        %v2127 = vpop.f32.mrf.mxu0
        %v2128 = vadd.f32 %v2039, %v2127
        %2129 = vmatmul.bf16.gmra.mxu0 %v1179
        %v2130 = vpop.f32.mrf.mxu0
        %v2131 = vadd.f32 %v2042, %v2130
        %v2132 = vpop.f32.mrf.mxu0
        %v2133 = vadd.f32 %v2044, %v2132
        %2134 = vmatmul.bf16.gmra.mxu0 %v1183
        %v2135 = vpop.f32.mrf.mxu0
        %v2136 = vadd.f32 %v2047, %v2135
        %v2137 = vpop.f32.mrf.mxu0
        %v2138 = vadd.f32 %v2049, %v2137
        %2139 = vmatmul.bf16.gmra.mxu0 %v1187
        %v2140 = vpop.f32.mrf.mxu0
        %v2141 = vadd.f32 %v2052, %v2140
        %v2142 = vpop.f32.mrf.mxu0
        %v2143 = vadd.f32 %v2054, %v2142
        %2144 = vmatmul.bf16.gmra.mxu0 %v1191
        %v2145 = vpop.f32.mrf.mxu0
        %v2146 = vadd.f32 %v2057, %v2145
        %v2147 = vpop.f32.mrf.mxu0
        %v2148 = vadd.f32 %v2059, %v2147
        %2149 = vmatmul.bf16.gmra.mxu0 %v1195
        %v2150 = vpop.f32.mrf.mxu0
        %v2151 = vadd.f32 %v2062, %v2150
        %v2152 = vpop.f32.mrf.mxu0
        %v2153 = vadd.f32 %v2064, %v2152
        %2154 = vdwg.mxu0
        %2155 = vmatpush.bf16.msra.mxu0 %v1813
        %2156 = vmatpush.bf16.msra.mxu0 %v1809
        %2157 = vmatpush.bf16.msra.mxu0 %v1805
        %2158 = vmatpush.bf16.msra.mxu0 %v1801
        %2159 = vmatpush.bf16.msra.mxu0 %v1797
        %2160 = vmatpush.bf16.msra.mxu0 %v1793
        %2161 = vmatpush.bf16.msra.mxu0 %v1789
        %2162 = vmatpush.bf16.msra.mxu0 %v1785
        %2163 = vmatmul.bf16.gmra.mxu0 %v1136
        %v2164 = vpop.f32.mrf.mxu0
        %v2165 = vadd.f32 %v2076, %v2164
        %v2166 = vpop.f32.mrf.mxu0
        %v2167 = vadd.f32 %v2078, %v2166
        %2168 = vmatmul.bf16.gmra.mxu0 %v1140
        %v2169 = vpop.f32.mrf.mxu0
        %v2170 = vadd.f32 %v2081, %v2169
        %v2171 = vpop.f32.mrf.mxu0
        %v2172 = vadd.f32 %v2083, %v2171
        %2173 = vmatmul.bf16.gmra.mxu0 %v1144
        %v2174 = vpop.f32.mrf.mxu0
        %v2175 = vadd.f32 %v2086, %v2174
        %v2176 = vpop.f32.mrf.mxu0
        %v2177 = vadd.f32 %v2088, %v2176
        %2178 = vmatmul.bf16.gmra.mxu0 %v1148
        %v2179 = vpop.f32.mrf.mxu0
        %v2180 = vadd.f32 %v2091, %v2179
        %v2181 = vpop.f32.mrf.mxu0
        %v2182 = vadd.f32 %v2093, %v2181
        %2183 = vmatmul.bf16.gmra.mxu0 %v1152
        %v2184 = vpop.f32.mrf.mxu0
        %v2185 = vadd.f32 %v2096, %v2184
        %v2186 = vpop.f32.mrf.mxu0
        %v2187 = vadd.f32 %v2098, %v2186
        %2188 = vmatmul.bf16.gmra.mxu0 %v1156
        %v2189 = vpop.f32.mrf.mxu0
        %v2190 = vadd.f32 %v2101, %v2189
        %v2191 = vpop.f32.mrf.mxu0
        %v2192 = vadd.f32 %v2103, %v2191
        %2193 = vmatmul.bf16.gmra.mxu0 %v1160
        %v2194 = vpop.f32.mrf.mxu0
        %v2195 = vadd.f32 %v2106, %v2194
        %v2196 = vpop.f32.mrf.mxu0
        %v2197 = vadd.f32 %v2108, %v2196
        %2198 = vmatmul.bf16.gmra.mxu0 %v1164
        %v2199 = vpop.f32.mrf.mxu0
        %v2200 = vadd.f32 %v2111, %v2199
        %v2201 = vpop.f32.mrf.mxu0
        %v2202 = vadd.f32 %v2113, %v2201
        %2203 = vmatmul.bf16.gmra.mxu0 %v1168
        %v2204 = vpop.f32.mrf.mxu0
        %v2205 = vadd.f32 %v2116, %v2204
        %v2206 = vpop.f32.mrf.mxu0
        %v2207 = vadd.f32 %v2118, %v2206
        %2208 = vmatmul.bf16.gmra.mxu0 %v1172
        %v2209 = vpop.f32.mrf.mxu0
        %v2210 = vadd.f32 %v2121, %v2209
        %v2211 = vpop.f32.mrf.mxu0
        %v2212 = vadd.f32 %v2123, %v2211
        %2213 = vmatmul.bf16.gmra.mxu0 %v1176
        %v2214 = vpop.f32.mrf.mxu0
        %v2215 = vadd.f32 %v2126, %v2214
        %v2216 = vpop.f32.mrf.mxu0
        %v2217 = vadd.f32 %v2128, %v2216
        %2218 = vmatmul.bf16.gmra.mxu0 %v1180
        %v2219 = vpop.f32.mrf.mxu0
        %v2220 = vadd.f32 %v2131, %v2219
        %v2221 = vpop.f32.mrf.mxu0
        %v2222 = vadd.f32 %v2133, %v2221
        %2223 = vmatmul.bf16.gmra.mxu0 %v1184
        %v2224 = vpop.f32.mrf.mxu0
        %v2225 = vadd.f32 %v2136, %v2224
        %v2226 = vpop.f32.mrf.mxu0
        %v2227 = vadd.f32 %v2138, %v2226
        %2228 = vmatmul.bf16.gmra.mxu0 %v1188
        %v2229 = vpop.f32.mrf.mxu0
        %v2230 = vadd.f32 %v2141, %v2229
        %v2231 = vpop.f32.mrf.mxu0
        %v2232 = vadd.f32 %v2143, %v2231
        %2233 = vmatmul.bf16.gmra.mxu0 %v1192
        %v2234 = vpop.f32.mrf.mxu0
        %v2235 = vadd.f32 %v2146, %v2234
        %v2236 = vpop.f32.mrf.mxu0
        %v2237 = vadd.f32 %v2148, %v2236
        %2238 = vmatmul.bf16.gmra.mxu0 %v1196
        %v2239 = vpop.f32.mrf.mxu0
        %v2240 = vadd.f32 %v2151, %v2239
        %v2241 = vpop.f32.mrf.mxu0
        %v2242 = vadd.f32 %v2153, %v2241
        %2243 = vdwg.mxu0
        %2244 = vmatpush.bf16.msra.mxu0 %v1845
        %2245 = vmatpush.bf16.msra.mxu0 %v1841
        %2246 = vmatpush.bf16.msra.mxu0 %v1837
        %2247 = vmatpush.bf16.msra.mxu0 %v1833
        %2248 = vmatpush.bf16.msra.mxu0 %v1829
        %2249 = vmatpush.bf16.msra.mxu0 %v1825
        %2250 = vmatpush.bf16.msra.mxu0 %v1821
        %2251 = vmatpush.bf16.msra.mxu0 %v1817
        %2252 = vmatmul.bf16.gmra.mxu0 %v1137
        %v2253 = vpop.f32.mrf.mxu0
        %v2254 = vadd.f32 %v2165, %v2253
        %v2255 = vpop.f32.mrf.mxu0
        %v2256 = vadd.f32 %v2167, %v2255
        %2257 = vmatmul.bf16.gmra.mxu0 %v1141
        %v2258 = vpop.f32.mrf.mxu0
        %v2259 = vadd.f32 %v2170, %v2258
        %v2260 = vpop.f32.mrf.mxu0
        %v2261 = vadd.f32 %v2172, %v2260
        %2262 = vmatmul.bf16.gmra.mxu0 %v1145
        %v2263 = vpop.f32.mrf.mxu0
        %v2264 = vadd.f32 %v2175, %v2263
        %v2265 = vpop.f32.mrf.mxu0
        %v2266 = vadd.f32 %v2177, %v2265
        %2267 = vmatmul.bf16.gmra.mxu0 %v1149
        %v2268 = vpop.f32.mrf.mxu0
        %v2269 = vadd.f32 %v2180, %v2268
        %v2270 = vpop.f32.mrf.mxu0
        %v2271 = vadd.f32 %v2182, %v2270
        %2272 = vmatmul.bf16.gmra.mxu0 %v1153
        %v2273 = vpop.f32.mrf.mxu0
        %v2274 = vadd.f32 %v2185, %v2273
        %v2275 = vpop.f32.mrf.mxu0
        %v2276 = vadd.f32 %v2187, %v2275
        %2277 = vmatmul.bf16.gmra.mxu0 %v1157
        %v2278 = vpop.f32.mrf.mxu0
        %v2279 = vadd.f32 %v2190, %v2278
        %v2280 = vpop.f32.mrf.mxu0
        %v2281 = vadd.f32 %v2192, %v2280
        %2282 = vmatmul.bf16.gmra.mxu0 %v1161
        %v2283 = vpop.f32.mrf.mxu0
        %v2284 = vadd.f32 %v2195, %v2283
        %v2285 = vpop.f32.mrf.mxu0
        %v2286 = vadd.f32 %v2197, %v2285
        %2287 = vmatmul.bf16.gmra.mxu0 %v1165
        %v2288 = vpop.f32.mrf.mxu0
        %v2289 = vadd.f32 %v2200, %v2288
        %v2290 = vpop.f32.mrf.mxu0
        %v2291 = vadd.f32 %v2202, %v2290
        %2292 = vmatmul.bf16.gmra.mxu0 %v1169
        %v2293 = vpop.f32.mrf.mxu0
        %v2294 = vadd.f32 %v2205, %v2293
        %v2295 = vpop.f32.mrf.mxu0
        %v2296 = vadd.f32 %v2207, %v2295
        %2297 = vmatmul.bf16.gmra.mxu0 %v1173
        %v2298 = vpop.f32.mrf.mxu0
        %v2299 = vadd.f32 %v2210, %v2298
        %v2300 = vpop.f32.mrf.mxu0
        %v2301 = vadd.f32 %v2212, %v2300
        %2302 = vmatmul.bf16.gmra.mxu0 %v1177
        %v2303 = vpop.f32.mrf.mxu0
        %v2304 = vadd.f32 %v2215, %v2303
        %v2305 = vpop.f32.mrf.mxu0
        %v2306 = vadd.f32 %v2217, %v2305
        %2307 = vmatmul.bf16.gmra.mxu0 %v1181
        %v2308 = vpop.f32.mrf.mxu0
        %v2309 = vadd.f32 %v2220, %v2308
        %v2310 = vpop.f32.mrf.mxu0
        %v2311 = vadd.f32 %v2222, %v2310
        %2312 = vmatmul.bf16.gmra.mxu0 %v1185
        %v2313 = vpop.f32.mrf.mxu0
        %v2314 = vadd.f32 %v2225, %v2313
        %v2315 = vpop.f32.mrf.mxu0
        %v2316 = vadd.f32 %v2227, %v2315
        %2317 = vmatmul.bf16.gmra.mxu0 %v1189
        %v2318 = vpop.f32.mrf.mxu0
        %v2319 = vadd.f32 %v2230, %v2318
        %v2320 = vpop.f32.mrf.mxu0
        %v2321 = vadd.f32 %v2232, %v2320
        %2322 = vmatmul.bf16.gmra.mxu0 %v1193
        %v2323 = vpop.f32.mrf.mxu0
        %v2324 = vadd.f32 %v2235, %v2323
        %v2325 = vpop.f32.mrf.mxu0
        %v2326 = vadd.f32 %v2237, %v2325
        %2327 = vmatmul.bf16.gmra.mxu0 %v1197
        %v2328 = vpop.f32.mrf.mxu0
        %v2329 = vadd.f32 %v2240, %v2328
        %v2330 = vpop.f32.mrf.mxu0
        %v2331 = vadd.f32 %v2242, %v2330
        %2332 = vdwg.mxu0
        %2333 = vmatpush.bf16.msra.mxu0 %v1750
        %2334 = vmatpush.bf16.msra.mxu0 %v1746
        %2335 = vmatpush.bf16.msra.mxu0 %v1742
        %2336 = vmatpush.bf16.msra.mxu0 %v1738
        %2337 = vmatpush.bf16.msra.mxu0 %v1734
        %2338 = vmatpush.bf16.msra.mxu0 %v1730
        %2339 = vmatpush.bf16.msra.mxu0 %v1726
        %2340 = vmatpush.bf16.msra.mxu0 %v1722
        %2341 = vmatmul.bf16.gmra.mxu0 %v1134
        %v2342 = vpop.f32.mrf.mxu0
        %v2343 = vadd.f32 %v1330, %v2342
        %v2344 = vpop.f32.mrf.mxu0
        %v2345 = vadd.f32 %v1330, %v2344
        %2346 = vmatmul.bf16.gmra.mxu0 %v1138
        %v2347 = vpop.f32.mrf.mxu0
        %v2348 = vadd.f32 %v1330, %v2347
        %v2349 = vpop.f32.mrf.mxu0
        %v2350 = vadd.f32 %v1330, %v2349
        %2351 = vmatmul.bf16.gmra.mxu0 %v1142
        %v2352 = vpop.f32.mrf.mxu0
        %v2353 = vadd.f32 %v1330, %v2352
        %v2354 = vpop.f32.mrf.mxu0
        %v2355 = vadd.f32 %v1330, %v2354
        %2356 = vmatmul.bf16.gmra.mxu0 %v1146
        %v2357 = vpop.f32.mrf.mxu0
        %v2358 = vadd.f32 %v1330, %v2357
        %v2359 = vpop.f32.mrf.mxu0
        %v2360 = vadd.f32 %v1330, %v2359
        %2361 = vmatmul.bf16.gmra.mxu0 %v1150
        %v2362 = vpop.f32.mrf.mxu0
        %v2363 = vadd.f32 %v1330, %v2362
        %v2364 = vpop.f32.mrf.mxu0
        %v2365 = vadd.f32 %v1330, %v2364
        %2366 = vmatmul.bf16.gmra.mxu0 %v1154
        %v2367 = vpop.f32.mrf.mxu0
        %v2368 = vadd.f32 %v1330, %v2367
        %v2369 = vpop.f32.mrf.mxu0
        %v2370 = vadd.f32 %v1330, %v2369
        %2371 = vmatmul.bf16.gmra.mxu0 %v1158
        %v2372 = vpop.f32.mrf.mxu0
        %v2373 = vadd.f32 %v1330, %v2372
        %v2374 = vpop.f32.mrf.mxu0
        %v2375 = vadd.f32 %v1330, %v2374
        %2376 = vmatmul.bf16.gmra.mxu0 %v1162
        %v2377 = vpop.f32.mrf.mxu0
        %v2378 = vadd.f32 %v1330, %v2377
        %v2379 = vpop.f32.mrf.mxu0
        %v2380 = vadd.f32 %v1330, %v2379
        %2381 = vmatmul.bf16.gmra.mxu0 %v1166
        %v2382 = vpop.f32.mrf.mxu0
        %v2383 = vadd.f32 %v1330, %v2382
        %v2384 = vpop.f32.mrf.mxu0
        %v2385 = vadd.f32 %v1330, %v2384
        %2386 = vmatmul.bf16.gmra.mxu0 %v1170
        %v2387 = vpop.f32.mrf.mxu0
        %v2388 = vadd.f32 %v1330, %v2387
        %v2389 = vpop.f32.mrf.mxu0
        %v2390 = vadd.f32 %v1330, %v2389
        %2391 = vmatmul.bf16.gmra.mxu0 %v1174
        %v2392 = vpop.f32.mrf.mxu0
        %v2393 = vadd.f32 %v1330, %v2392
        %v2394 = vpop.f32.mrf.mxu0
        %v2395 = vadd.f32 %v1330, %v2394
        %2396 = vmatmul.bf16.gmra.mxu0 %v1178
        %v2397 = vpop.f32.mrf.mxu0
        %v2398 = vadd.f32 %v1330, %v2397
        %v2399 = vpop.f32.mrf.mxu0
        %v2400 = vadd.f32 %v1330, %v2399
        %2401 = vmatmul.bf16.gmra.mxu0 %v1182
        %v2402 = vpop.f32.mrf.mxu0
        %v2403 = vadd.f32 %v1330, %v2402
        %v2404 = vpop.f32.mrf.mxu0
        %v2405 = vadd.f32 %v1330, %v2404
        %2406 = vmatmul.bf16.gmra.mxu0 %v1186
        %v2407 = vpop.f32.mrf.mxu0
        %v2408 = vadd.f32 %v1330, %v2407
        %v2409 = vpop.f32.mrf.mxu0
        %v2410 = vadd.f32 %v1330, %v2409
        %2411 = vmatmul.bf16.gmra.mxu0 %v1190
        %v2412 = vpop.f32.mrf.mxu0
        %v2413 = vadd.f32 %v1330, %v2412
        %v2414 = vpop.f32.mrf.mxu0
        %v2415 = vadd.f32 %v1330, %v2414
        %2416 = vmatmul.bf16.gmra.mxu0 %v1194
        %v2417 = vpop.f32.mrf.mxu0
        %v2418 = vadd.f32 %v1330, %v2417
        %v2419 = vpop.f32.mrf.mxu0
        %v2420 = vadd.f32 %v1330, %v2419
        %2421 = vdwg.mxu0
        %2422 = vmatpush.bf16.msra.mxu0 %v1782
        %2423 = vmatpush.bf16.msra.mxu0 %v1778
        %2424 = vmatpush.bf16.msra.mxu0 %v1774
        %2425 = vmatpush.bf16.msra.mxu0 %v1770
        %2426 = vmatpush.bf16.msra.mxu0 %v1766
        %2427 = vmatpush.bf16.msra.mxu0 %v1762
        %2428 = vmatpush.bf16.msra.mxu0 %v1758
        %2429 = vmatpush.bf16.msra.mxu0 %v1754
        %2430 = vmatmul.bf16.gmra.mxu0 %v1135
        %v2431 = vpop.f32.mrf.mxu0
        %v2432 = vadd.f32 %v2343, %v2431
        %v2433 = vpop.f32.mrf.mxu0
        %v2434 = vadd.f32 %v2345, %v2433
        %2435 = vmatmul.bf16.gmra.mxu0 %v1139
        %v2436 = vpop.f32.mrf.mxu0
        %v2437 = vadd.f32 %v2348, %v2436
        %v2438 = vpop.f32.mrf.mxu0
        %v2439 = vadd.f32 %v2350, %v2438
        %2440 = vmatmul.bf16.gmra.mxu0 %v1143
        %v2441 = vpop.f32.mrf.mxu0
        %v2442 = vadd.f32 %v2353, %v2441
        %v2443 = vpop.f32.mrf.mxu0
        %v2444 = vadd.f32 %v2355, %v2443
        %2445 = vmatmul.bf16.gmra.mxu0 %v1147
        %v2446 = vpop.f32.mrf.mxu0
        %v2447 = vadd.f32 %v2358, %v2446
        %v2448 = vpop.f32.mrf.mxu0
        %v2449 = vadd.f32 %v2360, %v2448
        %2450 = vmatmul.bf16.gmra.mxu0 %v1151
        %v2451 = vpop.f32.mrf.mxu0
        %v2452 = vadd.f32 %v2363, %v2451
        %v2453 = vpop.f32.mrf.mxu0
        %v2454 = vadd.f32 %v2365, %v2453
        %2455 = vmatmul.bf16.gmra.mxu0 %v1155
        %v2456 = vpop.f32.mrf.mxu0
        %v2457 = vadd.f32 %v2368, %v2456
        %v2458 = vpop.f32.mrf.mxu0
        %v2459 = vadd.f32 %v2370, %v2458
        %2460 = vmatmul.bf16.gmra.mxu0 %v1159
        %v2461 = vpop.f32.mrf.mxu0
        %v2462 = vadd.f32 %v2373, %v2461
        %v2463 = vpop.f32.mrf.mxu0
        %v2464 = vadd.f32 %v2375, %v2463
        %2465 = vmatmul.bf16.gmra.mxu0 %v1163
        %v2466 = vpop.f32.mrf.mxu0
        %v2467 = vadd.f32 %v2378, %v2466
        %v2468 = vpop.f32.mrf.mxu0
        %v2469 = vadd.f32 %v2380, %v2468
        %2470 = vmatmul.bf16.gmra.mxu0 %v1167
        %v2471 = vpop.f32.mrf.mxu0
        %v2472 = vadd.f32 %v2383, %v2471
        %v2473 = vpop.f32.mrf.mxu0
        %v2474 = vadd.f32 %v2385, %v2473
        %2475 = vmatmul.bf16.gmra.mxu0 %v1171
        %v2476 = vpop.f32.mrf.mxu0
        %v2477 = vadd.f32 %v2388, %v2476
        %v2478 = vpop.f32.mrf.mxu0
        %v2479 = vadd.f32 %v2390, %v2478
        %2480 = vmatmul.bf16.gmra.mxu0 %v1175
        %v2481 = vpop.f32.mrf.mxu0
        %v2482 = vadd.f32 %v2393, %v2481
        %v2483 = vpop.f32.mrf.mxu0
        %v2484 = vadd.f32 %v2395, %v2483
        %2485 = vmatmul.bf16.gmra.mxu0 %v1179
        %v2486 = vpop.f32.mrf.mxu0
        %v2487 = vadd.f32 %v2398, %v2486
        %v2488 = vpop.f32.mrf.mxu0
        %v2489 = vadd.f32 %v2400, %v2488
        %2490 = vmatmul.bf16.gmra.mxu0 %v1183
        %v2491 = vpop.f32.mrf.mxu0
        %v2492 = vadd.f32 %v2403, %v2491
        %v2493 = vpop.f32.mrf.mxu0
        %v2494 = vadd.f32 %v2405, %v2493
        %2495 = vmatmul.bf16.gmra.mxu0 %v1187
        %v2496 = vpop.f32.mrf.mxu0
        %v2497 = vadd.f32 %v2408, %v2496
        %v2498 = vpop.f32.mrf.mxu0
        %v2499 = vadd.f32 %v2410, %v2498
        %2500 = vmatmul.bf16.gmra.mxu0 %v1191
        %v2501 = vpop.f32.mrf.mxu0
        %v2502 = vadd.f32 %v2413, %v2501
        %v2503 = vpop.f32.mrf.mxu0
        %v2504 = vadd.f32 %v2415, %v2503
        %2505 = vmatmul.bf16.gmra.mxu0 %v1195
        %v2506 = vpop.f32.mrf.mxu0
        %v2507 = vadd.f32 %v2418, %v2506
        %v2508 = vpop.f32.mrf.mxu0
        %v2509 = vadd.f32 %v2420, %v2508
        %2510 = vdwg.mxu0
        %2511 = vmatpush.bf16.msra.mxu0 %v1814
        %2512 = vmatpush.bf16.msra.mxu0 %v1810
        %2513 = vmatpush.bf16.msra.mxu0 %v1806
        %2514 = vmatpush.bf16.msra.mxu0 %v1802
        %2515 = vmatpush.bf16.msra.mxu0 %v1798
        %2516 = vmatpush.bf16.msra.mxu0 %v1794
        %2517 = vmatpush.bf16.msra.mxu0 %v1790
        %2518 = vmatpush.bf16.msra.mxu0 %v1786
        %2519 = vmatmul.bf16.gmra.mxu0 %v1136
        %v2520 = vpop.f32.mrf.mxu0
        %v2521 = vadd.f32 %v2432, %v2520
        %v2522 = vpop.f32.mrf.mxu0
        %v2523 = vadd.f32 %v2434, %v2522
        %2524 = vmatmul.bf16.gmra.mxu0 %v1140
        %v2525 = vpop.f32.mrf.mxu0
        %v2526 = vadd.f32 %v2437, %v2525
        %v2527 = vpop.f32.mrf.mxu0
        %v2528 = vadd.f32 %v2439, %v2527
        %2529 = vmatmul.bf16.gmra.mxu0 %v1144
        %v2530 = vpop.f32.mrf.mxu0
        %v2531 = vadd.f32 %v2442, %v2530
        %v2532 = vpop.f32.mrf.mxu0
        %v2533 = vadd.f32 %v2444, %v2532
        %2534 = vmatmul.bf16.gmra.mxu0 %v1148
        %v2535 = vpop.f32.mrf.mxu0
        %v2536 = vadd.f32 %v2447, %v2535
        %v2537 = vpop.f32.mrf.mxu0
        %v2538 = vadd.f32 %v2449, %v2537
        %2539 = vmatmul.bf16.gmra.mxu0 %v1152
        %v2540 = vpop.f32.mrf.mxu0
        %v2541 = vadd.f32 %v2452, %v2540
        %v2542 = vpop.f32.mrf.mxu0
        %v2543 = vadd.f32 %v2454, %v2542
        %2544 = vmatmul.bf16.gmra.mxu0 %v1156
        %v2545 = vpop.f32.mrf.mxu0
        %v2546 = vadd.f32 %v2457, %v2545
        %v2547 = vpop.f32.mrf.mxu0
        %v2548 = vadd.f32 %v2459, %v2547
        %2549 = vmatmul.bf16.gmra.mxu0 %v1160
        %v2550 = vpop.f32.mrf.mxu0
        %v2551 = vadd.f32 %v2462, %v2550
        %v2552 = vpop.f32.mrf.mxu0
        %v2553 = vadd.f32 %v2464, %v2552
        %2554 = vmatmul.bf16.gmra.mxu0 %v1164
        %v2555 = vpop.f32.mrf.mxu0
        %v2556 = vadd.f32 %v2467, %v2555
        %v2557 = vpop.f32.mrf.mxu0
        %v2558 = vadd.f32 %v2469, %v2557
        %2559 = vmatmul.bf16.gmra.mxu0 %v1168
        %v2560 = vpop.f32.mrf.mxu0
        %v2561 = vadd.f32 %v2472, %v2560
        %v2562 = vpop.f32.mrf.mxu0
        %v2563 = vadd.f32 %v2474, %v2562
        %2564 = vmatmul.bf16.gmra.mxu0 %v1172
        %v2565 = vpop.f32.mrf.mxu0
        %v2566 = vadd.f32 %v2477, %v2565
        %v2567 = vpop.f32.mrf.mxu0
        %v2568 = vadd.f32 %v2479, %v2567
        %2569 = vmatmul.bf16.gmra.mxu0 %v1176
        %v2570 = vpop.f32.mrf.mxu0
        %v2571 = vadd.f32 %v2482, %v2570
        %v2572 = vpop.f32.mrf.mxu0
        %v2573 = vadd.f32 %v2484, %v2572
        %2574 = vmatmul.bf16.gmra.mxu0 %v1180
        %v2575 = vpop.f32.mrf.mxu0
        %v2576 = vadd.f32 %v2487, %v2575
        %v2577 = vpop.f32.mrf.mxu0
        %v2578 = vadd.f32 %v2489, %v2577
        %2579 = vmatmul.bf16.gmra.mxu0 %v1184
        %v2580 = vpop.f32.mrf.mxu0
        %v2581 = vadd.f32 %v2492, %v2580
        %v2582 = vpop.f32.mrf.mxu0
        %v2583 = vadd.f32 %v2494, %v2582
        %2584 = vmatmul.bf16.gmra.mxu0 %v1188
        %v2585 = vpop.f32.mrf.mxu0
        %v2586 = vadd.f32 %v2497, %v2585
        %v2587 = vpop.f32.mrf.mxu0
        %v2588 = vadd.f32 %v2499, %v2587
        %2589 = vmatmul.bf16.gmra.mxu0 %v1192
        %v2590 = vpop.f32.mrf.mxu0
        %v2591 = vadd.f32 %v2502, %v2590
        %v2592 = vpop.f32.mrf.mxu0
        %v2593 = vadd.f32 %v2504, %v2592
        %2594 = vmatmul.bf16.gmra.mxu0 %v1196
        %v2595 = vpop.f32.mrf.mxu0
        %v2596 = vadd.f32 %v2507, %v2595
        %v2597 = vpop.f32.mrf.mxu0
        %v2598 = vadd.f32 %v2509, %v2597
        %2599 = vdwg.mxu0
        %2600 = vmatpush.bf16.msra.mxu0 %v1846
        %2601 = vmatpush.bf16.msra.mxu0 %v1842
        %2602 = vmatpush.bf16.msra.mxu0 %v1838
        %2603 = vmatpush.bf16.msra.mxu0 %v1834
        %2604 = vmatpush.bf16.msra.mxu0 %v1830
        %2605 = vmatpush.bf16.msra.mxu0 %v1826
        %2606 = vmatpush.bf16.msra.mxu0 %v1822
        %2607 = vmatpush.bf16.msra.mxu0 %v1818
        %2608 = vmatmul.bf16.gmra.mxu0 %v1137
        %v2609 = vpop.f32.mrf.mxu0
        %v2610 = vadd.f32 %v2521, %v2609
        %v2611 = vpop.f32.mrf.mxu0
        %v2612 = vadd.f32 %v2523, %v2611
        %2613 = vmatmul.bf16.gmra.mxu0 %v1141
        %v2614 = vpop.f32.mrf.mxu0
        %v2615 = vadd.f32 %v2526, %v2614
        %v2616 = vpop.f32.mrf.mxu0
        %v2617 = vadd.f32 %v2528, %v2616
        %2618 = vmatmul.bf16.gmra.mxu0 %v1145
        %v2619 = vpop.f32.mrf.mxu0
        %v2620 = vadd.f32 %v2531, %v2619
        %v2621 = vpop.f32.mrf.mxu0
        %v2622 = vadd.f32 %v2533, %v2621
        %2623 = vmatmul.bf16.gmra.mxu0 %v1149
        %v2624 = vpop.f32.mrf.mxu0
        %v2625 = vadd.f32 %v2536, %v2624
        %v2626 = vpop.f32.mrf.mxu0
        %v2627 = vadd.f32 %v2538, %v2626
        %2628 = vmatmul.bf16.gmra.mxu0 %v1153
        %v2629 = vpop.f32.mrf.mxu0
        %v2630 = vadd.f32 %v2541, %v2629
        %v2631 = vpop.f32.mrf.mxu0
        %v2632 = vadd.f32 %v2543, %v2631
        %2633 = vmatmul.bf16.gmra.mxu0 %v1157
        %v2634 = vpop.f32.mrf.mxu0
        %v2635 = vadd.f32 %v2546, %v2634
        %v2636 = vpop.f32.mrf.mxu0
        %v2637 = vadd.f32 %v2548, %v2636
        %2638 = vmatmul.bf16.gmra.mxu0 %v1161
        %v2639 = vpop.f32.mrf.mxu0
        %v2640 = vadd.f32 %v2551, %v2639
        %v2641 = vpop.f32.mrf.mxu0
        %v2642 = vadd.f32 %v2553, %v2641
        %2643 = vmatmul.bf16.gmra.mxu0 %v1165
        %v2644 = vpop.f32.mrf.mxu0
        %v2645 = vadd.f32 %v2556, %v2644
        %v2646 = vpop.f32.mrf.mxu0
        %v2647 = vadd.f32 %v2558, %v2646
        %2648 = vmatmul.bf16.gmra.mxu0 %v1169
        %v2649 = vpop.f32.mrf.mxu0
        %v2650 = vadd.f32 %v2561, %v2649
        %v2651 = vpop.f32.mrf.mxu0
        %v2652 = vadd.f32 %v2563, %v2651
        %2653 = vmatmul.bf16.gmra.mxu0 %v1173
        %v2654 = vpop.f32.mrf.mxu0
        %v2655 = vadd.f32 %v2566, %v2654
        %v2656 = vpop.f32.mrf.mxu0
        %v2657 = vadd.f32 %v2568, %v2656
        %2658 = vmatmul.bf16.gmra.mxu0 %v1177
        %v2659 = vpop.f32.mrf.mxu0
        %v2660 = vadd.f32 %v2571, %v2659
        %v2661 = vpop.f32.mrf.mxu0
        %v2662 = vadd.f32 %v2573, %v2661
        %2663 = vmatmul.bf16.gmra.mxu0 %v1181
        %v2664 = vpop.f32.mrf.mxu0
        %v2665 = vadd.f32 %v2576, %v2664
        %v2666 = vpop.f32.mrf.mxu0
        %v2667 = vadd.f32 %v2578, %v2666
        %2668 = vmatmul.bf16.gmra.mxu0 %v1185
        %v2669 = vpop.f32.mrf.mxu0
        %v2670 = vadd.f32 %v2581, %v2669
        %v2671 = vpop.f32.mrf.mxu0
        %v2672 = vadd.f32 %v2583, %v2671
        %2673 = vmatmul.bf16.gmra.mxu0 %v1189
        %v2674 = vpop.f32.mrf.mxu0
        %v2675 = vadd.f32 %v2586, %v2674
        %v2676 = vpop.f32.mrf.mxu0
        %v2677 = vadd.f32 %v2588, %v2676
        %2678 = vmatmul.bf16.gmra.mxu0 %v1193
        %v2679 = vpop.f32.mrf.mxu0
        %v2680 = vadd.f32 %v2591, %v2679
        %v2681 = vpop.f32.mrf.mxu0
        %v2682 = vadd.f32 %v2593, %v2681
        %2683 = vmatmul.bf16.gmra.mxu0 %v1197
        %v2684 = vpop.f32.mrf.mxu0
        %v2685 = vadd.f32 %v2596, %v2684
        %v2686 = vpop.f32.mrf.mxu0
        %v2687 = vadd.f32 %v2598, %v2686
        %2688 = vdwg.mxu0
        %2689 = vmatpush.bf16.msra.mxu0 %v1751
        %2690 = vmatpush.bf16.msra.mxu0 %v1747
        %2691 = vmatpush.bf16.msra.mxu0 %v1743
        %2692 = vmatpush.bf16.msra.mxu0 %v1739
        %2693 = vmatpush.bf16.msra.mxu0 %v1735
        %2694 = vmatpush.bf16.msra.mxu0 %v1731
        %2695 = vmatpush.bf16.msra.mxu0 %v1727
        %2696 = vmatpush.bf16.msra.mxu0 %v1723
        %2697 = vmatmul.bf16.gmra.mxu0 %v1134
        %v2698 = vpop.f32.mrf.mxu0
        %v2699 = vadd.f32 %v1331, %v2698
        %v2700 = vpop.f32.mrf.mxu0
        %v2701 = vadd.f32 %v1331, %v2700
        %2702 = vmatmul.bf16.gmra.mxu0 %v1138
        %v2703 = vpop.f32.mrf.mxu0
        %v2704 = vadd.f32 %v1331, %v2703
        %v2705 = vpop.f32.mrf.mxu0
        %v2706 = vadd.f32 %v1331, %v2705
        %2707 = vmatmul.bf16.gmra.mxu0 %v1142
        %v2708 = vpop.f32.mrf.mxu0
        %v2709 = vadd.f32 %v1331, %v2708
        %v2710 = vpop.f32.mrf.mxu0
        %v2711 = vadd.f32 %v1331, %v2710
        %2712 = vmatmul.bf16.gmra.mxu0 %v1146
        %v2713 = vpop.f32.mrf.mxu0
        %v2714 = vadd.f32 %v1331, %v2713
        %v2715 = vpop.f32.mrf.mxu0
        %v2716 = vadd.f32 %v1331, %v2715
        %2717 = vmatmul.bf16.gmra.mxu0 %v1150
        %v2718 = vpop.f32.mrf.mxu0
        %v2719 = vadd.f32 %v1331, %v2718
        %v2720 = vpop.f32.mrf.mxu0
        %v2721 = vadd.f32 %v1331, %v2720
        %2722 = vmatmul.bf16.gmra.mxu0 %v1154
        %v2723 = vpop.f32.mrf.mxu0
        %v2724 = vadd.f32 %v1331, %v2723
        %v2725 = vpop.f32.mrf.mxu0
        %v2726 = vadd.f32 %v1331, %v2725
        %2727 = vmatmul.bf16.gmra.mxu0 %v1158
        %v2728 = vpop.f32.mrf.mxu0
        %v2729 = vadd.f32 %v1331, %v2728
        %v2730 = vpop.f32.mrf.mxu0
        %v2731 = vadd.f32 %v1331, %v2730
        %2732 = vmatmul.bf16.gmra.mxu0 %v1162
        %v2733 = vpop.f32.mrf.mxu0
        %v2734 = vadd.f32 %v1331, %v2733
        %v2735 = vpop.f32.mrf.mxu0
        %v2736 = vadd.f32 %v1331, %v2735
        %2737 = vmatmul.bf16.gmra.mxu0 %v1166
        %v2738 = vpop.f32.mrf.mxu0
        %v2739 = vadd.f32 %v1331, %v2738
        %v2740 = vpop.f32.mrf.mxu0
        %v2741 = vadd.f32 %v1331, %v2740
        %2742 = vmatmul.bf16.gmra.mxu0 %v1170
        %v2743 = vpop.f32.mrf.mxu0
        %v2744 = vadd.f32 %v1331, %v2743
        %v2745 = vpop.f32.mrf.mxu0
        %v2746 = vadd.f32 %v1331, %v2745
        %2747 = vmatmul.bf16.gmra.mxu0 %v1174
        %v2748 = vpop.f32.mrf.mxu0
        %v2749 = vadd.f32 %v1331, %v2748
        %v2750 = vpop.f32.mrf.mxu0
        %v2751 = vadd.f32 %v1331, %v2750
        %2752 = vmatmul.bf16.gmra.mxu0 %v1178
        %v2753 = vpop.f32.mrf.mxu0
        %v2754 = vadd.f32 %v1331, %v2753
        %v2755 = vpop.f32.mrf.mxu0
        %v2756 = vadd.f32 %v1331, %v2755
        %2757 = vmatmul.bf16.gmra.mxu0 %v1182
        %v2758 = vpop.f32.mrf.mxu0
        %v2759 = vadd.f32 %v1331, %v2758
        %v2760 = vpop.f32.mrf.mxu0
        %v2761 = vadd.f32 %v1331, %v2760
        %2762 = vmatmul.bf16.gmra.mxu0 %v1186
        %v2763 = vpop.f32.mrf.mxu0
        %v2764 = vadd.f32 %v1331, %v2763
        %v2765 = vpop.f32.mrf.mxu0
        %v2766 = vadd.f32 %v1331, %v2765
        %2767 = vmatmul.bf16.gmra.mxu0 %v1190
        %v2768 = vpop.f32.mrf.mxu0
        %v2769 = vadd.f32 %v1331, %v2768
        %v2770 = vpop.f32.mrf.mxu0
        %v2771 = vadd.f32 %v1331, %v2770
        %2772 = vmatmul.bf16.gmra.mxu0 %v1194
        %v2773 = vpop.f32.mrf.mxu0
        %v2774 = vadd.f32 %v1331, %v2773
        %v2775 = vpop.f32.mrf.mxu0
        %v2776 = vadd.f32 %v1331, %v2775
        %2777 = vdwg.mxu0
        %2778 = vmatpush.bf16.msra.mxu0 %v1783
        %2779 = vmatpush.bf16.msra.mxu0 %v1779
        %2780 = vmatpush.bf16.msra.mxu0 %v1775
        %2781 = vmatpush.bf16.msra.mxu0 %v1771
        %2782 = vmatpush.bf16.msra.mxu0 %v1767
        %2783 = vmatpush.bf16.msra.mxu0 %v1763
        %2784 = vmatpush.bf16.msra.mxu0 %v1759
        %2785 = vmatpush.bf16.msra.mxu0 %v1755
        %2786 = vmatmul.bf16.gmra.mxu0 %v1135
        %v2787 = vpop.f32.mrf.mxu0
        %v2788 = vadd.f32 %v2699, %v2787
        %v2789 = vpop.f32.mrf.mxu0
        %v2790 = vadd.f32 %v2701, %v2789
        %2791 = vmatmul.bf16.gmra.mxu0 %v1139
        %v2792 = vpop.f32.mrf.mxu0
        %v2793 = vadd.f32 %v2704, %v2792
        %v2794 = vpop.f32.mrf.mxu0
        %v2795 = vadd.f32 %v2706, %v2794
        %2796 = vmatmul.bf16.gmra.mxu0 %v1143
        %v2797 = vpop.f32.mrf.mxu0
        %v2798 = vadd.f32 %v2709, %v2797
        %v2799 = vpop.f32.mrf.mxu0
        %v2800 = vadd.f32 %v2711, %v2799
        %2801 = vmatmul.bf16.gmra.mxu0 %v1147
        %v2802 = vpop.f32.mrf.mxu0
        %v2803 = vadd.f32 %v2714, %v2802
        %v2804 = vpop.f32.mrf.mxu0
        %v2805 = vadd.f32 %v2716, %v2804
        %2806 = vmatmul.bf16.gmra.mxu0 %v1151
        %v2807 = vpop.f32.mrf.mxu0
        %v2808 = vadd.f32 %v2719, %v2807
        %v2809 = vpop.f32.mrf.mxu0
        %v2810 = vadd.f32 %v2721, %v2809
        %2811 = vmatmul.bf16.gmra.mxu0 %v1155
        %v2812 = vpop.f32.mrf.mxu0
        %v2813 = vadd.f32 %v2724, %v2812
        %v2814 = vpop.f32.mrf.mxu0
        %v2815 = vadd.f32 %v2726, %v2814
        %2816 = vmatmul.bf16.gmra.mxu0 %v1159
        %v2817 = vpop.f32.mrf.mxu0
        %v2818 = vadd.f32 %v2729, %v2817
        %v2819 = vpop.f32.mrf.mxu0
        %v2820 = vadd.f32 %v2731, %v2819
        %2821 = vmatmul.bf16.gmra.mxu0 %v1163
        %v2822 = vpop.f32.mrf.mxu0
        %v2823 = vadd.f32 %v2734, %v2822
        %v2824 = vpop.f32.mrf.mxu0
        %v2825 = vadd.f32 %v2736, %v2824
        %2826 = vmatmul.bf16.gmra.mxu0 %v1167
        %v2827 = vpop.f32.mrf.mxu0
        %v2828 = vadd.f32 %v2739, %v2827
        %v2829 = vpop.f32.mrf.mxu0
        %v2830 = vadd.f32 %v2741, %v2829
        %2831 = vmatmul.bf16.gmra.mxu0 %v1171
        %v2832 = vpop.f32.mrf.mxu0
        %v2833 = vadd.f32 %v2744, %v2832
        %v2834 = vpop.f32.mrf.mxu0
        %v2835 = vadd.f32 %v2746, %v2834
        %2836 = vmatmul.bf16.gmra.mxu0 %v1175
        %v2837 = vpop.f32.mrf.mxu0
        %v2838 = vadd.f32 %v2749, %v2837
        %v2839 = vpop.f32.mrf.mxu0
        %v2840 = vadd.f32 %v2751, %v2839
        %2841 = vmatmul.bf16.gmra.mxu0 %v1179
        %v2842 = vpop.f32.mrf.mxu0
        %v2843 = vadd.f32 %v2754, %v2842
        %v2844 = vpop.f32.mrf.mxu0
        %v2845 = vadd.f32 %v2756, %v2844
        %2846 = vmatmul.bf16.gmra.mxu0 %v1183
        %v2847 = vpop.f32.mrf.mxu0
        %v2848 = vadd.f32 %v2759, %v2847
        %v2849 = vpop.f32.mrf.mxu0
        %v2850 = vadd.f32 %v2761, %v2849
        %2851 = vmatmul.bf16.gmra.mxu0 %v1187
        %v2852 = vpop.f32.mrf.mxu0
        %v2853 = vadd.f32 %v2764, %v2852
        %v2854 = vpop.f32.mrf.mxu0
        %v2855 = vadd.f32 %v2766, %v2854
        %2856 = vmatmul.bf16.gmra.mxu0 %v1191
        %v2857 = vpop.f32.mrf.mxu0
        %v2858 = vadd.f32 %v2769, %v2857
        %v2859 = vpop.f32.mrf.mxu0
        %v2860 = vadd.f32 %v2771, %v2859
        %2861 = vmatmul.bf16.gmra.mxu0 %v1195
        %v2862 = vpop.f32.mrf.mxu0
        %v2863 = vadd.f32 %v2774, %v2862
        %v2864 = vpop.f32.mrf.mxu0
        %v2865 = vadd.f32 %v2776, %v2864
        %2866 = vdwg.mxu0
        %2867 = vmatpush.bf16.msra.mxu0 %v1815
        %2868 = vmatpush.bf16.msra.mxu0 %v1811
        %2869 = vmatpush.bf16.msra.mxu0 %v1807
        %2870 = vmatpush.bf16.msra.mxu0 %v1803
        %2871 = vmatpush.bf16.msra.mxu0 %v1799
        %2872 = vmatpush.bf16.msra.mxu0 %v1795
        %2873 = vmatpush.bf16.msra.mxu0 %v1791
        %2874 = vmatpush.bf16.msra.mxu0 %v1787
        %2875 = vmatmul.bf16.gmra.mxu0 %v1136
        %v2876 = vpop.f32.mrf.mxu0
        %v2877 = vadd.f32 %v2788, %v2876
        %v2878 = vpop.f32.mrf.mxu0
        %v2879 = vadd.f32 %v2790, %v2878
        %2880 = vmatmul.bf16.gmra.mxu0 %v1140
        %v2881 = vpop.f32.mrf.mxu0
        %v2882 = vadd.f32 %v2793, %v2881
        %v2883 = vpop.f32.mrf.mxu0
        %v2884 = vadd.f32 %v2795, %v2883
        %2885 = vmatmul.bf16.gmra.mxu0 %v1144
        %v2886 = vpop.f32.mrf.mxu0
        %v2887 = vadd.f32 %v2798, %v2886
        %v2888 = vpop.f32.mrf.mxu0
        %v2889 = vadd.f32 %v2800, %v2888
        %2890 = vmatmul.bf16.gmra.mxu0 %v1148
        %v2891 = vpop.f32.mrf.mxu0
        %v2892 = vadd.f32 %v2803, %v2891
        %v2893 = vpop.f32.mrf.mxu0
        %v2894 = vadd.f32 %v2805, %v2893
        %2895 = vmatmul.bf16.gmra.mxu0 %v1152
        %v2896 = vpop.f32.mrf.mxu0
        %v2897 = vadd.f32 %v2808, %v2896
        %v2898 = vpop.f32.mrf.mxu0
        %v2899 = vadd.f32 %v2810, %v2898
        %2900 = vmatmul.bf16.gmra.mxu0 %v1156
        %v2901 = vpop.f32.mrf.mxu0
        %v2902 = vadd.f32 %v2813, %v2901
        %v2903 = vpop.f32.mrf.mxu0
        %v2904 = vadd.f32 %v2815, %v2903
        %2905 = vmatmul.bf16.gmra.mxu0 %v1160
        %v2906 = vpop.f32.mrf.mxu0
        %v2907 = vadd.f32 %v2818, %v2906
        %v2908 = vpop.f32.mrf.mxu0
        %v2909 = vadd.f32 %v2820, %v2908
        %2910 = vmatmul.bf16.gmra.mxu0 %v1164
        %v2911 = vpop.f32.mrf.mxu0
        %v2912 = vadd.f32 %v2823, %v2911
        %v2913 = vpop.f32.mrf.mxu0
        %v2914 = vadd.f32 %v2825, %v2913
        %2915 = vmatmul.bf16.gmra.mxu0 %v1168
        %v2916 = vpop.f32.mrf.mxu0
        %v2917 = vadd.f32 %v2828, %v2916
        %v2918 = vpop.f32.mrf.mxu0
        %v2919 = vadd.f32 %v2830, %v2918
        %2920 = vmatmul.bf16.gmra.mxu0 %v1172
        %v2921 = vpop.f32.mrf.mxu0
        %v2922 = vadd.f32 %v2833, %v2921
        %v2923 = vpop.f32.mrf.mxu0
        %v2924 = vadd.f32 %v2835, %v2923
        %2925 = vmatmul.bf16.gmra.mxu0 %v1176
        %v2926 = vpop.f32.mrf.mxu0
        %v2927 = vadd.f32 %v2838, %v2926
        %v2928 = vpop.f32.mrf.mxu0
        %v2929 = vadd.f32 %v2840, %v2928
        %2930 = vmatmul.bf16.gmra.mxu0 %v1180
        %v2931 = vpop.f32.mrf.mxu0
        %v2932 = vadd.f32 %v2843, %v2931
        %v2933 = vpop.f32.mrf.mxu0
        %v2934 = vadd.f32 %v2845, %v2933
        %2935 = vmatmul.bf16.gmra.mxu0 %v1184
        %v2936 = vpop.f32.mrf.mxu0
        %v2937 = vadd.f32 %v2848, %v2936
        %v2938 = vpop.f32.mrf.mxu0
        %v2939 = vadd.f32 %v2850, %v2938
        %2940 = vmatmul.bf16.gmra.mxu0 %v1188
        %v2941 = vpop.f32.mrf.mxu0
        %v2942 = vadd.f32 %v2853, %v2941
        %v2943 = vpop.f32.mrf.mxu0
        %v2944 = vadd.f32 %v2855, %v2943
        %2945 = vmatmul.bf16.gmra.mxu0 %v1192
        %v2946 = vpop.f32.mrf.mxu0
        %v2947 = vadd.f32 %v2858, %v2946
        %v2948 = vpop.f32.mrf.mxu0
        %v2949 = vadd.f32 %v2860, %v2948
        %2950 = vmatmul.bf16.gmra.mxu0 %v1196
        %v2951 = vpop.f32.mrf.mxu0
        %v2952 = vadd.f32 %v2863, %v2951
        %v2953 = vpop.f32.mrf.mxu0
        %v2954 = vadd.f32 %v2865, %v2953
        %2955 = vdwg.mxu0
        %2956 = vmatpush.bf16.msra.mxu0 %v1847
        %2957 = vmatpush.bf16.msra.mxu0 %v1843
        %2958 = vmatpush.bf16.msra.mxu0 %v1839
        %2959 = vmatpush.bf16.msra.mxu0 %v1835
        %2960 = vmatpush.bf16.msra.mxu0 %v1831
        %2961 = vmatpush.bf16.msra.mxu0 %v1827
        %2962 = vmatpush.bf16.msra.mxu0 %v1823
        %2963 = vmatpush.bf16.msra.mxu0 %v1819
        %2964 = vmatmul.bf16.gmra.mxu0 %v1137
        %v2965 = vpop.f32.mrf.mxu0
        %v2966 = vadd.f32 %v2877, %v2965
        %v2967 = vpop.f32.mrf.mxu0
        %v2968 = vadd.f32 %v2879, %v2967
        %2969 = vmatmul.bf16.gmra.mxu0 %v1141
        %v2970 = vpop.f32.mrf.mxu0
        %v2971 = vadd.f32 %v2882, %v2970
        %v2972 = vpop.f32.mrf.mxu0
        %v2973 = vadd.f32 %v2884, %v2972
        %2974 = vmatmul.bf16.gmra.mxu0 %v1145
        %v2975 = vpop.f32.mrf.mxu0
        %v2976 = vadd.f32 %v2887, %v2975
        %v2977 = vpop.f32.mrf.mxu0
        %v2978 = vadd.f32 %v2889, %v2977
        %2979 = vmatmul.bf16.gmra.mxu0 %v1149
        %v2980 = vpop.f32.mrf.mxu0
        %v2981 = vadd.f32 %v2892, %v2980
        %v2982 = vpop.f32.mrf.mxu0
        %v2983 = vadd.f32 %v2894, %v2982
        %2984 = vmatmul.bf16.gmra.mxu0 %v1153
        %v2985 = vpop.f32.mrf.mxu0
        %v2986 = vadd.f32 %v2897, %v2985
        %v2987 = vpop.f32.mrf.mxu0
        %v2988 = vadd.f32 %v2899, %v2987
        %2989 = vmatmul.bf16.gmra.mxu0 %v1157
        %v2990 = vpop.f32.mrf.mxu0
        %v2991 = vadd.f32 %v2902, %v2990
        %v2992 = vpop.f32.mrf.mxu0
        %v2993 = vadd.f32 %v2904, %v2992
        %2994 = vmatmul.bf16.gmra.mxu0 %v1161
        %v2995 = vpop.f32.mrf.mxu0
        %v2996 = vadd.f32 %v2907, %v2995
        %v2997 = vpop.f32.mrf.mxu0
        %v2998 = vadd.f32 %v2909, %v2997
        %2999 = vmatmul.bf16.gmra.mxu0 %v1165
        %v3000 = vpop.f32.mrf.mxu0
        %v3001 = vadd.f32 %v2912, %v3000
        %v3002 = vpop.f32.mrf.mxu0
        %v3003 = vadd.f32 %v2914, %v3002
        %3004 = vmatmul.bf16.gmra.mxu0 %v1169
        %v3005 = vpop.f32.mrf.mxu0
        %v3006 = vadd.f32 %v2917, %v3005
        %v3007 = vpop.f32.mrf.mxu0
        %v3008 = vadd.f32 %v2919, %v3007
        %3009 = vmatmul.bf16.gmra.mxu0 %v1173
        %v3010 = vpop.f32.mrf.mxu0
        %v3011 = vadd.f32 %v2922, %v3010
        %v3012 = vpop.f32.mrf.mxu0
        %v3013 = vadd.f32 %v2924, %v3012
        %3014 = vmatmul.bf16.gmra.mxu0 %v1177
        %v3015 = vpop.f32.mrf.mxu0
        %v3016 = vadd.f32 %v2927, %v3015
        %v3017 = vpop.f32.mrf.mxu0
        %v3018 = vadd.f32 %v2929, %v3017
        %3019 = vmatmul.bf16.gmra.mxu0 %v1181
        %v3020 = vpop.f32.mrf.mxu0
        %v3021 = vadd.f32 %v2932, %v3020
        %v3022 = vpop.f32.mrf.mxu0
        %v3023 = vadd.f32 %v2934, %v3022
        %3024 = vmatmul.bf16.gmra.mxu0 %v1185
        %v3025 = vpop.f32.mrf.mxu0
        %v3026 = vadd.f32 %v2937, %v3025
        %v3027 = vpop.f32.mrf.mxu0
        %v3028 = vadd.f32 %v2939, %v3027
        %3029 = vmatmul.bf16.gmra.mxu0 %v1189
        %v3030 = vpop.f32.mrf.mxu0
        %v3031 = vadd.f32 %v2942, %v3030
        %v3032 = vpop.f32.mrf.mxu0
        %v3033 = vadd.f32 %v2944, %v3032
        %3034 = vmatmul.bf16.gmra.mxu0 %v1193
        %v3035 = vpop.f32.mrf.mxu0
        %v3036 = vadd.f32 %v2947, %v3035
        %v3037 = vpop.f32.mrf.mxu0
        %v3038 = vadd.f32 %v2949, %v3037
        %3039 = vmatmul.bf16.gmra.mxu0 %v1197
        %v3040 = vpop.f32.mrf.mxu0
        %v3041 = vadd.f32 %v2952, %v3040
        %v3042 = vpop.f32.mrf.mxu0
        %v3043 = vadd.f32 %v2954, %v3042
        %3044 = vdwg.mxu0
        %3045 = vmatpush.bf16.msra.mxu0 %v1752
        %3046 = vmatpush.bf16.msra.mxu0 %v1748
        %3047 = vmatpush.bf16.msra.mxu0 %v1744
        %3048 = vmatpush.bf16.msra.mxu0 %v1740
        %3049 = vmatpush.bf16.msra.mxu0 %v1736
        %3050 = vmatpush.bf16.msra.mxu0 %v1732
        %3051 = vmatpush.bf16.msra.mxu0 %v1728
        %3052 = vmatpush.bf16.msra.mxu0 %v1724
        %3053 = vmatmul.bf16.gmra.mxu0 %v1134
        %v3054 = vpop.f32.mrf.mxu0
        %v3055 = vadd.f32 %v1332, %v3054
        %v3056 = vpop.f32.mrf.mxu0
        %v3057 = vadd.f32 %v1332, %v3056
        %3058 = vmatmul.bf16.gmra.mxu0 %v1138
        %v3059 = vpop.f32.mrf.mxu0
        %v3060 = vadd.f32 %v1332, %v3059
        %v3061 = vpop.f32.mrf.mxu0
        %v3062 = vadd.f32 %v1332, %v3061
        %3063 = vmatmul.bf16.gmra.mxu0 %v1142
        %v3064 = vpop.f32.mrf.mxu0
        %v3065 = vadd.f32 %v1332, %v3064
        %v3066 = vpop.f32.mrf.mxu0
        %v3067 = vadd.f32 %v1332, %v3066
        %3068 = vmatmul.bf16.gmra.mxu0 %v1146
        %v3069 = vpop.f32.mrf.mxu0
        %v3070 = vadd.f32 %v1332, %v3069
        %v3071 = vpop.f32.mrf.mxu0
        %v3072 = vadd.f32 %v1332, %v3071
        %3073 = vmatmul.bf16.gmra.mxu0 %v1150
        %v3074 = vpop.f32.mrf.mxu0
        %v3075 = vadd.f32 %v1332, %v3074
        %v3076 = vpop.f32.mrf.mxu0
        %v3077 = vadd.f32 %v1332, %v3076
        %3078 = vmatmul.bf16.gmra.mxu0 %v1154
        %v3079 = vpop.f32.mrf.mxu0
        %v3080 = vadd.f32 %v1332, %v3079
        %v3081 = vpop.f32.mrf.mxu0
        %v3082 = vadd.f32 %v1332, %v3081
        %3083 = vmatmul.bf16.gmra.mxu0 %v1158
        %v3084 = vpop.f32.mrf.mxu0
        %v3085 = vadd.f32 %v1332, %v3084
        %v3086 = vpop.f32.mrf.mxu0
        %v3087 = vadd.f32 %v1332, %v3086
        %3088 = vmatmul.bf16.gmra.mxu0 %v1162
        %v3089 = vpop.f32.mrf.mxu0
        %v3090 = vadd.f32 %v1332, %v3089
        %v3091 = vpop.f32.mrf.mxu0
        %v3092 = vadd.f32 %v1332, %v3091
        %3093 = vmatmul.bf16.gmra.mxu0 %v1166
        %v3094 = vpop.f32.mrf.mxu0
        %v3095 = vadd.f32 %v1332, %v3094
        %v3096 = vpop.f32.mrf.mxu0
        %v3097 = vadd.f32 %v1332, %v3096
        %3098 = vmatmul.bf16.gmra.mxu0 %v1170
        %v3099 = vpop.f32.mrf.mxu0
        %v3100 = vadd.f32 %v1332, %v3099
        %v3101 = vpop.f32.mrf.mxu0
        %v3102 = vadd.f32 %v1332, %v3101
        %3103 = vmatmul.bf16.gmra.mxu0 %v1174
        %v3104 = vpop.f32.mrf.mxu0
        %v3105 = vadd.f32 %v1332, %v3104
        %v3106 = vpop.f32.mrf.mxu0
        %v3107 = vadd.f32 %v1332, %v3106
        %3108 = vmatmul.bf16.gmra.mxu0 %v1178
        %v3109 = vpop.f32.mrf.mxu0
        %v3110 = vadd.f32 %v1332, %v3109
        %v3111 = vpop.f32.mrf.mxu0
        %v3112 = vadd.f32 %v1332, %v3111
        %3113 = vmatmul.bf16.gmra.mxu0 %v1182
        %v3114 = vpop.f32.mrf.mxu0
        %v3115 = vadd.f32 %v1332, %v3114
        %v3116 = vpop.f32.mrf.mxu0
        %v3117 = vadd.f32 %v1332, %v3116
        %3118 = vmatmul.bf16.gmra.mxu0 %v1186
        %v3119 = vpop.f32.mrf.mxu0
        %v3120 = vadd.f32 %v1332, %v3119
        %v3121 = vpop.f32.mrf.mxu0
        %v3122 = vadd.f32 %v1332, %v3121
        %3123 = vmatmul.bf16.gmra.mxu0 %v1190
        %v3124 = vpop.f32.mrf.mxu0
        %v3125 = vadd.f32 %v1332, %v3124
        %v3126 = vpop.f32.mrf.mxu0
        %v3127 = vadd.f32 %v1332, %v3126
        %3128 = vmatmul.bf16.gmra.mxu0 %v1194
        %v3129 = vpop.f32.mrf.mxu0
        %v3130 = vadd.f32 %v1332, %v3129
        %v3131 = vpop.f32.mrf.mxu0
        %v3132 = vadd.f32 %v1332, %v3131
        %3133 = vdwg.mxu0
        %3134 = vmatpush.bf16.msra.mxu0 %v1784
        %3135 = vmatpush.bf16.msra.mxu0 %v1780
        %3136 = vmatpush.bf16.msra.mxu0 %v1776
        %3137 = vmatpush.bf16.msra.mxu0 %v1772
        %3138 = vmatpush.bf16.msra.mxu0 %v1768
        %3139 = vmatpush.bf16.msra.mxu0 %v1764
        %3140 = vmatpush.bf16.msra.mxu0 %v1760
        %3141 = vmatpush.bf16.msra.mxu0 %v1756
        %3142 = vmatmul.bf16.gmra.mxu0 %v1135
        %v3143 = vpop.f32.mrf.mxu0
        %v3144 = vadd.f32 %v3055, %v3143
        %v3145 = vpop.f32.mrf.mxu0
        %v3146 = vadd.f32 %v3057, %v3145
        %3147 = vmatmul.bf16.gmra.mxu0 %v1139
        %v3148 = vpop.f32.mrf.mxu0
        %v3149 = vadd.f32 %v3060, %v3148
        %v3150 = vpop.f32.mrf.mxu0
        %v3151 = vadd.f32 %v3062, %v3150
        %3152 = vmatmul.bf16.gmra.mxu0 %v1143
        %v3153 = vpop.f32.mrf.mxu0
        %v3154 = vadd.f32 %v3065, %v3153
        %v3155 = vpop.f32.mrf.mxu0
        %v3156 = vadd.f32 %v3067, %v3155
        %3157 = vmatmul.bf16.gmra.mxu0 %v1147
        %v3158 = vpop.f32.mrf.mxu0
        %v3159 = vadd.f32 %v3070, %v3158
        %v3160 = vpop.f32.mrf.mxu0
        %v3161 = vadd.f32 %v3072, %v3160
        %3162 = vmatmul.bf16.gmra.mxu0 %v1151
        %v3163 = vpop.f32.mrf.mxu0
        %v3164 = vadd.f32 %v3075, %v3163
        %v3165 = vpop.f32.mrf.mxu0
        %v3166 = vadd.f32 %v3077, %v3165
        %3167 = vmatmul.bf16.gmra.mxu0 %v1155
        %v3168 = vpop.f32.mrf.mxu0
        %v3169 = vadd.f32 %v3080, %v3168
        %v3170 = vpop.f32.mrf.mxu0
        %v3171 = vadd.f32 %v3082, %v3170
        %3172 = vmatmul.bf16.gmra.mxu0 %v1159
        %v3173 = vpop.f32.mrf.mxu0
        %v3174 = vadd.f32 %v3085, %v3173
        %v3175 = vpop.f32.mrf.mxu0
        %v3176 = vadd.f32 %v3087, %v3175
        %3177 = vmatmul.bf16.gmra.mxu0 %v1163
        %v3178 = vpop.f32.mrf.mxu0
        %v3179 = vadd.f32 %v3090, %v3178
        %v3180 = vpop.f32.mrf.mxu0
        %v3181 = vadd.f32 %v3092, %v3180
        %3182 = vmatmul.bf16.gmra.mxu0 %v1167
        %v3183 = vpop.f32.mrf.mxu0
        %v3184 = vadd.f32 %v3095, %v3183
        %v3185 = vpop.f32.mrf.mxu0
        %v3186 = vadd.f32 %v3097, %v3185
        %3187 = vmatmul.bf16.gmra.mxu0 %v1171
        %v3188 = vpop.f32.mrf.mxu0
        %v3189 = vadd.f32 %v3100, %v3188
        %v3190 = vpop.f32.mrf.mxu0
        %v3191 = vadd.f32 %v3102, %v3190
        %3192 = vmatmul.bf16.gmra.mxu0 %v1175
        %v3193 = vpop.f32.mrf.mxu0
        %v3194 = vadd.f32 %v3105, %v3193
        %v3195 = vpop.f32.mrf.mxu0
        %v3196 = vadd.f32 %v3107, %v3195
        %3197 = vmatmul.bf16.gmra.mxu0 %v1179
        %v3198 = vpop.f32.mrf.mxu0
        %v3199 = vadd.f32 %v3110, %v3198
        %v3200 = vpop.f32.mrf.mxu0
        %v3201 = vadd.f32 %v3112, %v3200
        %3202 = vmatmul.bf16.gmra.mxu0 %v1183
        %v3203 = vpop.f32.mrf.mxu0
        %v3204 = vadd.f32 %v3115, %v3203
        %v3205 = vpop.f32.mrf.mxu0
        %v3206 = vadd.f32 %v3117, %v3205
        %3207 = vmatmul.bf16.gmra.mxu0 %v1187
        %v3208 = vpop.f32.mrf.mxu0
        %v3209 = vadd.f32 %v3120, %v3208
        %v3210 = vpop.f32.mrf.mxu0
        %v3211 = vadd.f32 %v3122, %v3210
        %3212 = vmatmul.bf16.gmra.mxu0 %v1191
        %v3213 = vpop.f32.mrf.mxu0
        %v3214 = vadd.f32 %v3125, %v3213
        %v3215 = vpop.f32.mrf.mxu0
        %v3216 = vadd.f32 %v3127, %v3215
        %3217 = vmatmul.bf16.gmra.mxu0 %v1195
        %v3218 = vpop.f32.mrf.mxu0
        %v3219 = vadd.f32 %v3130, %v3218
        %v3220 = vpop.f32.mrf.mxu0
        %v3221 = vadd.f32 %v3132, %v3220
        %3222 = vdwg.mxu0
        %3223 = vmatpush.bf16.msra.mxu0 %v1816
        %3224 = vmatpush.bf16.msra.mxu0 %v1812
        %3225 = vmatpush.bf16.msra.mxu0 %v1808
        %3226 = vmatpush.bf16.msra.mxu0 %v1804
        %3227 = vmatpush.bf16.msra.mxu0 %v1800
        %3228 = vmatpush.bf16.msra.mxu0 %v1796
        %3229 = vmatpush.bf16.msra.mxu0 %v1792
        %3230 = vmatpush.bf16.msra.mxu0 %v1788
        %3231 = vmatmul.bf16.gmra.mxu0 %v1136
        %v3232 = vpop.f32.mrf.mxu0
        %v3233 = vadd.f32 %v3144, %v3232
        %v3234 = vpop.f32.mrf.mxu0
        %v3235 = vadd.f32 %v3146, %v3234
        %3236 = vmatmul.bf16.gmra.mxu0 %v1140
        %v3237 = vpop.f32.mrf.mxu0
        %v3238 = vadd.f32 %v3149, %v3237
        %v3239 = vpop.f32.mrf.mxu0
        %v3240 = vadd.f32 %v3151, %v3239
        %3241 = vmatmul.bf16.gmra.mxu0 %v1144
        %v3242 = vpop.f32.mrf.mxu0
        %v3243 = vadd.f32 %v3154, %v3242
        %v3244 = vpop.f32.mrf.mxu0
        %v3245 = vadd.f32 %v3156, %v3244
        %3246 = vmatmul.bf16.gmra.mxu0 %v1148
        %v3247 = vpop.f32.mrf.mxu0
        %v3248 = vadd.f32 %v3159, %v3247
        %v3249 = vpop.f32.mrf.mxu0
        %v3250 = vadd.f32 %v3161, %v3249
        %3251 = vmatmul.bf16.gmra.mxu0 %v1152
        %v3252 = vpop.f32.mrf.mxu0
        %v3253 = vadd.f32 %v3164, %v3252
        %v3254 = vpop.f32.mrf.mxu0
        %v3255 = vadd.f32 %v3166, %v3254
        %3256 = vmatmul.bf16.gmra.mxu0 %v1156
        %v3257 = vpop.f32.mrf.mxu0
        %v3258 = vadd.f32 %v3169, %v3257
        %v3259 = vpop.f32.mrf.mxu0
        %v3260 = vadd.f32 %v3171, %v3259
        %3261 = vmatmul.bf16.gmra.mxu0 %v1160
        %v3262 = vpop.f32.mrf.mxu0
        %v3263 = vadd.f32 %v3174, %v3262
        %v3264 = vpop.f32.mrf.mxu0
        %v3265 = vadd.f32 %v3176, %v3264
        %3266 = vmatmul.bf16.gmra.mxu0 %v1164
        %v3267 = vpop.f32.mrf.mxu0
        %v3268 = vadd.f32 %v3179, %v3267
        %v3269 = vpop.f32.mrf.mxu0
        %v3270 = vadd.f32 %v3181, %v3269
        %3271 = vmatmul.bf16.gmra.mxu0 %v1168
        %v3272 = vpop.f32.mrf.mxu0
        %v3273 = vadd.f32 %v3184, %v3272
        %v3274 = vpop.f32.mrf.mxu0
        %v3275 = vadd.f32 %v3186, %v3274
        %3276 = vmatmul.bf16.gmra.mxu0 %v1172
        %v3277 = vpop.f32.mrf.mxu0
        %v3278 = vadd.f32 %v3189, %v3277
        %v3279 = vpop.f32.mrf.mxu0
        %v3280 = vadd.f32 %v3191, %v3279
        %3281 = vmatmul.bf16.gmra.mxu0 %v1176
        %v3282 = vpop.f32.mrf.mxu0
        %v3283 = vadd.f32 %v3194, %v3282
        %v3284 = vpop.f32.mrf.mxu0
        %v3285 = vadd.f32 %v3196, %v3284
        %3286 = vmatmul.bf16.gmra.mxu0 %v1180
        %v3287 = vpop.f32.mrf.mxu0
        %v3288 = vadd.f32 %v3199, %v3287
        %v3289 = vpop.f32.mrf.mxu0
        %v3290 = vadd.f32 %v3201, %v3289
        %3291 = vmatmul.bf16.gmra.mxu0 %v1184
        %v3292 = vpop.f32.mrf.mxu0
        %v3293 = vadd.f32 %v3204, %v3292
        %v3294 = vpop.f32.mrf.mxu0
        %v3295 = vadd.f32 %v3206, %v3294
        %3296 = vmatmul.bf16.gmra.mxu0 %v1188
        %v3297 = vpop.f32.mrf.mxu0
        %v3298 = vadd.f32 %v3209, %v3297
        %v3299 = vpop.f32.mrf.mxu0
        %v3300 = vadd.f32 %v3211, %v3299
        %3301 = vmatmul.bf16.gmra.mxu0 %v1192
        %v3302 = vpop.f32.mrf.mxu0
        %v3303 = vadd.f32 %v3214, %v3302
        %v3304 = vpop.f32.mrf.mxu0
        %v3305 = vadd.f32 %v3216, %v3304
        %3306 = vmatmul.bf16.gmra.mxu0 %v1196
        %v3307 = vpop.f32.mrf.mxu0
        %v3308 = vadd.f32 %v3219, %v3307
        %v3309 = vpop.f32.mrf.mxu0
        %v3310 = vadd.f32 %v3221, %v3309
        %3311 = vdwg.mxu0
        %3312 = vmatpush.bf16.msra.mxu0 %v1848
        %3313 = vmatpush.bf16.msra.mxu0 %v1844
        %3314 = vmatpush.bf16.msra.mxu0 %v1840
        %3315 = vmatpush.bf16.msra.mxu0 %v1836
        %3316 = vmatpush.bf16.msra.mxu0 %v1832
        %3317 = vmatpush.bf16.msra.mxu0 %v1828
        %3318 = vmatpush.bf16.msra.mxu0 %v1824
        %3319 = vmatpush.bf16.msra.mxu0 %v1820
        %3320 = vmatmul.bf16.gmra.mxu0 %v1137
        %v3321 = vpop.f32.mrf.mxu0
        %v3322 = vadd.f32 %v3233, %v3321
        %v3323 = vpop.f32.mrf.mxu0
        %v3324 = vadd.f32 %v3235, %v3323
        %3325 = vmatmul.bf16.gmra.mxu0 %v1141
        %v3326 = vpop.f32.mrf.mxu0
        %v3327 = vadd.f32 %v3238, %v3326
        %v3328 = vpop.f32.mrf.mxu0
        %v3329 = vadd.f32 %v3240, %v3328
        %3330 = vmatmul.bf16.gmra.mxu0 %v1145
        %v3331 = vpop.f32.mrf.mxu0
        %v3332 = vadd.f32 %v3243, %v3331
        %v3333 = vpop.f32.mrf.mxu0
        %v3334 = vadd.f32 %v3245, %v3333
        %3335 = vmatmul.bf16.gmra.mxu0 %v1149
        %v3336 = vpop.f32.mrf.mxu0
        %v3337 = vadd.f32 %v3248, %v3336
        %v3338 = vpop.f32.mrf.mxu0
        %v3339 = vadd.f32 %v3250, %v3338
        %3340 = vmatmul.bf16.gmra.mxu0 %v1153
        %v3341 = vpop.f32.mrf.mxu0
        %v3342 = vadd.f32 %v3253, %v3341
        %v3343 = vpop.f32.mrf.mxu0
        %v3344 = vadd.f32 %v3255, %v3343
        %3345 = vmatmul.bf16.gmra.mxu0 %v1157
        %v3346 = vpop.f32.mrf.mxu0
        %v3347 = vadd.f32 %v3258, %v3346
        %v3348 = vpop.f32.mrf.mxu0
        %v3349 = vadd.f32 %v3260, %v3348
        %3350 = vmatmul.bf16.gmra.mxu0 %v1161
        %v3351 = vpop.f32.mrf.mxu0
        %v3352 = vadd.f32 %v3263, %v3351
        %v3353 = vpop.f32.mrf.mxu0
        %v3354 = vadd.f32 %v3265, %v3353
        %3355 = vmatmul.bf16.gmra.mxu0 %v1165
        %v3356 = vpop.f32.mrf.mxu0
        %v3357 = vadd.f32 %v3268, %v3356
        %v3358 = vpop.f32.mrf.mxu0
        %v3359 = vadd.f32 %v3270, %v3358
        %3360 = vmatmul.bf16.gmra.mxu0 %v1169
        %v3361 = vpop.f32.mrf.mxu0
        %v3362 = vadd.f32 %v3273, %v3361
        %v3363 = vpop.f32.mrf.mxu0
        %v3364 = vadd.f32 %v3275, %v3363
        %3365 = vmatmul.bf16.gmra.mxu0 %v1173
        %v3366 = vpop.f32.mrf.mxu0
        %v3367 = vadd.f32 %v3278, %v3366
        %v3368 = vpop.f32.mrf.mxu0
        %v3369 = vadd.f32 %v3280, %v3368
        %3370 = vmatmul.bf16.gmra.mxu0 %v1177
        %v3371 = vpop.f32.mrf.mxu0
        %v3372 = vadd.f32 %v3283, %v3371
        %v3373 = vpop.f32.mrf.mxu0
        %v3374 = vadd.f32 %v3285, %v3373
        %3375 = vmatmul.bf16.gmra.mxu0 %v1181
        %v3376 = vpop.f32.mrf.mxu0
        %v3377 = vadd.f32 %v3288, %v3376
        %v3378 = vpop.f32.mrf.mxu0
        %v3379 = vadd.f32 %v3290, %v3378
        %3380 = vmatmul.bf16.gmra.mxu0 %v1185
        %v3381 = vpop.f32.mrf.mxu0
        %v3382 = vadd.f32 %v3293, %v3381
        %v3383 = vpop.f32.mrf.mxu0
        %v3384 = vadd.f32 %v3295, %v3383
        %3385 = vmatmul.bf16.gmra.mxu0 %v1189
        %v3386 = vpop.f32.mrf.mxu0
        %v3387 = vadd.f32 %v3298, %v3386
        %v3388 = vpop.f32.mrf.mxu0
        %v3389 = vadd.f32 %v3300, %v3388
        %3390 = vmatmul.bf16.gmra.mxu0 %v1193
        %v3391 = vpop.f32.mrf.mxu0
        %v3392 = vadd.f32 %v3303, %v3391
        %v3393 = vpop.f32.mrf.mxu0
        %v3394 = vadd.f32 %v3305, %v3393
        %3395 = vmatmul.bf16.gmra.mxu0 %v1197
        %v3396 = vpop.f32.mrf.mxu0
        %v3397 = vadd.f32 %v3308, %v3396
        %v3398 = vpop.f32.mrf.mxu0
        %v3399 = vadd.f32 %v3310, %v3398
        %3400 = vdwg.mxu0
        %v3401 = vmax.f32 %v2254, 0.0
        %v3402 = vmax.f32 %v2610, 0.0
        %v3403 = vmax.f32 %v2966, 0.0
        %v3404 = vmax.f32 %v3322, 0.0
        %v3405 = vmax.f32 %v2256, 0.0
        %v3406 = vmax.f32 %v2612, 0.0
        %v3407 = vmax.f32 %v2968, 0.0
        %v3408 = vmax.f32 %v3324, 0.0
        %v3409 = vmax.f32 %v2259, 0.0
        %v3410 = vmax.f32 %v2615, 0.0
        %v3411 = vmax.f32 %v2971, 0.0
        %v3412 = vmax.f32 %v3327, 0.0
        %v3413 = vmax.f32 %v2261, 0.0
        %v3414 = vmax.f32 %v2617, 0.0
        %v3415 = vmax.f32 %v2973, 0.0
        %v3416 = vmax.f32 %v3329, 0.0
        %v3417 = vmax.f32 %v2264, 0.0
        %v3418 = vmax.f32 %v2620, 0.0
        %v3419 = vmax.f32 %v2976, 0.0
        %v3420 = vmax.f32 %v3332, 0.0
        %v3421 = vmax.f32 %v2266, 0.0
        %v3422 = vmax.f32 %v2622, 0.0
        %v3423 = vmax.f32 %v2978, 0.0
        %v3424 = vmax.f32 %v3334, 0.0
        %v3425 = vmax.f32 %v2269, 0.0
        %v3426 = vmax.f32 %v2625, 0.0
        %v3427 = vmax.f32 %v2981, 0.0
        %v3428 = vmax.f32 %v3337, 0.0
        %v3429 = vmax.f32 %v2271, 0.0
        %v3430 = vmax.f32 %v2627, 0.0
        %v3431 = vmax.f32 %v2983, 0.0
        %v3432 = vmax.f32 %v3339, 0.0
        %v3433 = vmax.f32 %v2274, 0.0
        %v3434 = vmax.f32 %v2630, 0.0
        %v3435 = vmax.f32 %v2986, 0.0
        %v3436 = vmax.f32 %v3342, 0.0
        %v3437 = vmax.f32 %v2276, 0.0
        %v3438 = vmax.f32 %v2632, 0.0
        %v3439 = vmax.f32 %v2988, 0.0
        %v3440 = vmax.f32 %v3344, 0.0
        %v3441 = vmax.f32 %v2279, 0.0
        %v3442 = vmax.f32 %v2635, 0.0
        %v3443 = vmax.f32 %v2991, 0.0
        %v3444 = vmax.f32 %v3347, 0.0
        %v3445 = vmax.f32 %v2281, 0.0
        %v3446 = vmax.f32 %v2637, 0.0
        %v3447 = vmax.f32 %v2993, 0.0
        %v3448 = vmax.f32 %v3349, 0.0
        %v3449 = vmax.f32 %v2284, 0.0
        %v3450 = vmax.f32 %v2640, 0.0
        %v3451 = vmax.f32 %v2996, 0.0
        %v3452 = vmax.f32 %v3352, 0.0
        %v3453 = vmax.f32 %v2286, 0.0
        %v3454 = vmax.f32 %v2642, 0.0
        %v3455 = vmax.f32 %v2998, 0.0
        %v3456 = vmax.f32 %v3354, 0.0
        %v3457 = vmax.f32 %v2289, 0.0
        %v3458 = vmax.f32 %v2645, 0.0
        %v3459 = vmax.f32 %v3001, 0.0
        %v3460 = vmax.f32 %v3357, 0.0
        %v3461 = vmax.f32 %v2291, 0.0
        %v3462 = vmax.f32 %v2647, 0.0
        %v3463 = vmax.f32 %v3003, 0.0
        %v3464 = vmax.f32 %v3359, 0.0
        %v3465 = vmax.f32 %v2294, 0.0
        %v3466 = vmax.f32 %v2650, 0.0
        %v3467 = vmax.f32 %v3006, 0.0
        %v3468 = vmax.f32 %v3362, 0.0
        %v3469 = vmax.f32 %v2296, 0.0
        %v3470 = vmax.f32 %v2652, 0.0
        %v3471 = vmax.f32 %v3008, 0.0
        %v3472 = vmax.f32 %v3364, 0.0
        %v3473 = vmax.f32 %v2299, 0.0
        %v3474 = vmax.f32 %v2655, 0.0
        %v3475 = vmax.f32 %v3011, 0.0
        %v3476 = vmax.f32 %v3367, 0.0
        %v3477 = vmax.f32 %v2301, 0.0
        %v3478 = vmax.f32 %v2657, 0.0
        %v3479 = vmax.f32 %v3013, 0.0
        %v3480 = vmax.f32 %v3369, 0.0
        %v3481 = vmax.f32 %v2304, 0.0
        %v3482 = vmax.f32 %v2660, 0.0
        %v3483 = vmax.f32 %v3016, 0.0
        %v3484 = vmax.f32 %v3372, 0.0
        %v3485 = vmax.f32 %v2306, 0.0
        %v3486 = vmax.f32 %v2662, 0.0
        %v3487 = vmax.f32 %v3018, 0.0
        %v3488 = vmax.f32 %v3374, 0.0
        %v3489 = vmax.f32 %v2309, 0.0
        %v3490 = vmax.f32 %v2665, 0.0
        %v3491 = vmax.f32 %v3021, 0.0
        %v3492 = vmax.f32 %v3377, 0.0
        %v3493 = vmax.f32 %v2311, 0.0
        %v3494 = vmax.f32 %v2667, 0.0
        %v3495 = vmax.f32 %v3023, 0.0
        %v3496 = vmax.f32 %v3379, 0.0
        %v3497 = vmax.f32 %v2314, 0.0
        %v3498 = vmax.f32 %v2670, 0.0
        %v3499 = vmax.f32 %v3026, 0.0
        %v3500 = vmax.f32 %v3382, 0.0
        %v3501 = vmax.f32 %v2316, 0.0
        %v3502 = vmax.f32 %v2672, 0.0
        %v3503 = vmax.f32 %v3028, 0.0
        %v3504 = vmax.f32 %v3384, 0.0
        %v3505 = vmax.f32 %v2319, 0.0
        %v3506 = vmax.f32 %v2675, 0.0
        %v3507 = vmax.f32 %v3031, 0.0
        %v3508 = vmax.f32 %v3387, 0.0
        %v3509 = vmax.f32 %v2321, 0.0
        %v3510 = vmax.f32 %v2677, 0.0
        %v3511 = vmax.f32 %v3033, 0.0
        %v3512 = vmax.f32 %v3389, 0.0
        %v3513 = vmax.f32 %v2324, 0.0
        %v3514 = vmax.f32 %v2680, 0.0
        %v3515 = vmax.f32 %v3036, 0.0
        %v3516 = vmax.f32 %v3392, 0.0
        %v3517 = vmax.f32 %v2326, 0.0
        %v3518 = vmax.f32 %v2682, 0.0
        %v3519 = vmax.f32 %v3038, 0.0
        %v3520 = vmax.f32 %v3394, 0.0
        %v3521 = vmax.f32 %v2329, 0.0
        %v3522 = vmax.f32 %v2685, 0.0
        %v3523 = vmax.f32 %v3041, 0.0
        %v3524 = vmax.f32 %v3397, 0.0
        %v3525 = vmax.f32 %v2331, 0.0
        %v3526 = vmax.f32 %v2687, 0.0
        %v3527 = vmax.f32 %v3043, 0.0
        %v3528 = vmax.f32 %v3399, 0.0
        %v3529 = vpack.c.bf16 %v3405, %v3401
        %v3530 = vpack.c.bf16 %v3406, %v3402
        %v3531 = vpack.c.bf16 %v3407, %v3403
        %v3532 = vpack.c.bf16 %v3408, %v3404
        %v3533 = vpack.c.bf16 %v3413, %v3409
        %v3534 = vpack.c.bf16 %v3414, %v3410
        %v3535 = vpack.c.bf16 %v3415, %v3411
        %v3536 = vpack.c.bf16 %v3416, %v3412
        %v3537 = vpack.c.bf16 %v3421, %v3417
        %v3538 = vpack.c.bf16 %v3422, %v3418
        %v3539 = vpack.c.bf16 %v3423, %v3419
        %v3540 = vpack.c.bf16 %v3424, %v3420
        %v3541 = vpack.c.bf16 %v3429, %v3425
        %v3542 = vpack.c.bf16 %v3430, %v3426
        %v3543 = vpack.c.bf16 %v3431, %v3427
        %v3544 = vpack.c.bf16 %v3432, %v3428
        %v3545 = vpack.c.bf16 %v3437, %v3433
        %v3546 = vpack.c.bf16 %v3438, %v3434
        %v3547 = vpack.c.bf16 %v3439, %v3435
        %v3548 = vpack.c.bf16 %v3440, %v3436
        %v3549 = vpack.c.bf16 %v3445, %v3441
        %v3550 = vpack.c.bf16 %v3446, %v3442
        %v3551 = vpack.c.bf16 %v3447, %v3443
        %v3552 = vpack.c.bf16 %v3448, %v3444
        %v3553 = vpack.c.bf16 %v3453, %v3449
        %v3554 = vpack.c.bf16 %v3454, %v3450
        %v3555 = vpack.c.bf16 %v3455, %v3451
        %v3556 = vpack.c.bf16 %v3456, %v3452
        %v3557 = vpack.c.bf16 %v3461, %v3457
        %v3558 = vpack.c.bf16 %v3462, %v3458
        %v3559 = vpack.c.bf16 %v3463, %v3459
        %v3560 = vpack.c.bf16 %v3464, %v3460
        %v3561 = vpack.c.bf16 %v3469, %v3465
        %v3562 = vpack.c.bf16 %v3470, %v3466
        %v3563 = vpack.c.bf16 %v3471, %v3467
        %v3564 = vpack.c.bf16 %v3472, %v3468
        %v3565 = vpack.c.bf16 %v3477, %v3473
        %v3566 = vpack.c.bf16 %v3478, %v3474
        %v3567 = vpack.c.bf16 %v3479, %v3475
        %v3568 = vpack.c.bf16 %v3480, %v3476
        %v3569 = vpack.c.bf16 %v3485, %v3481
        %v3570 = vpack.c.bf16 %v3486, %v3482
        %v3571 = vpack.c.bf16 %v3487, %v3483
        %v3572 = vpack.c.bf16 %v3488, %v3484
        %v3573 = vpack.c.bf16 %v3493, %v3489
        %v3574 = vpack.c.bf16 %v3494, %v3490
        %v3575 = vpack.c.bf16 %v3495, %v3491
        %v3576 = vpack.c.bf16 %v3496, %v3492
        %v3577 = vpack.c.bf16 %v3501, %v3497
        %v3578 = vpack.c.bf16 %v3502, %v3498
        %v3579 = vpack.c.bf16 %v3503, %v3499
        %v3580 = vpack.c.bf16 %v3504, %v3500
        %v3581 = vpack.c.bf16 %v3509, %v3505
        %v3582 = vpack.c.bf16 %v3510, %v3506
        %v3583 = vpack.c.bf16 %v3511, %v3507
        %v3584 = vpack.c.bf16 %v3512, %v3508
        %v3585 = vpack.c.bf16 %v3517, %v3513
        %v3586 = vpack.c.bf16 %v3518, %v3514
        %v3587 = vpack.c.bf16 %v3519, %v3515
        %v3588 = vpack.c.bf16 %v3520, %v3516
        %v3589 = vpack.c.bf16 %v3525, %v3521
        %v3590 = vpack.c.bf16 %v3526, %v3522
        %v3591 = vpack.c.bf16 %v3527, %v3523
        %v3592 = vpack.c.bf16 %v3528, %v3524
        %v3593 = vld [vmem:[#allocation4] sm:$0xff]
        %v3594 = vld [vmem:[#allocation4 + $0x8] sm:$0xff]
        %v3595 = vld [vmem:[#allocation4 + $0x10] sm:$0xff]
        %v3596 = vld [vmem:[#allocation4 + $0x18] sm:$0xff]
        %v3597 = vld [vmem:[#allocation4 + $0x20] sm:$0xff]
        %v3598 = vld [vmem:[#allocation4 + $0x28] sm:$0xff]
        %v3599 = vld [vmem:[#allocation4 + $0x30] sm:$0xff]
        %v3600 = vld [vmem:[#allocation4 + $0x38] sm:$0xff]
        %v3601 = vld [vmem:[#allocation4 + $0x40] sm:$0xff]
        %v3602 = vld [vmem:[#allocation4 + $0x48] sm:$0xff]
        %v3603 = vld [vmem:[#allocation4 + $0x50] sm:$0xff]
        %v3604 = vld [vmem:[#allocation4 + $0x58] sm:$0xff]
        %v3605 = vld [vmem:[#allocation4 + $0x60] sm:$0xff]
        %v3606 = vld [vmem:[#allocation4 + $0x68] sm:$0xff]
        %v3607 = vld [vmem:[#allocation4 + $0x70] sm:$0xff]
        %v3608 = vld [vmem:[#allocation4 + $0x78] sm:$0xff]
        %v3609 = vld [vmem:[#allocation4 + $0x80] sm:$0xff]
        %v3610 = vld [vmem:[#allocation4 + $0x88] sm:$0xff]
        %v3611 = vld [vmem:[#allocation4 + $0x90] sm:$0xff]
        %v3612 = vld [vmem:[#allocation4 + $0x98] sm:$0xff]
        %v3613 = vld [vmem:[#allocation4 + $0xa0] sm:$0xff]
        %v3614 = vld [vmem:[#allocation4 + $0xa8] sm:$0xff]
        %v3615 = vld [vmem:[#allocation4 + $0xb0] sm:$0xff]
        %v3616 = vld [vmem:[#allocation4 + $0xb8] sm:$0xff]
        %v3617 = vld [vmem:[#allocation4 + $0xc0] sm:$0xff]
        %v3618 = vld [vmem:[#allocation4 + $0xc8] sm:$0xff]
        %v3619 = vld [vmem:[#allocation4 + $0xd0] sm:$0xff]
        %v3620 = vld [vmem:[#allocation4 + $0xd8] sm:$0xff]
        %v3621 = vld [vmem:[#allocation4 + $0xe0] sm:$0xff]
        %v3622 = vld [vmem:[#allocation4 + $0xe8] sm:$0xff]
        %v3623 = vld [vmem:[#allocation4 + $0xf0] sm:$0xff]
        %v3624 = vld [vmem:[#allocation4 + $0xf8] sm:$0xff]
        %v3625 = vld [vmem:[#allocation4 + $0x100] sm:$0xff]
        %v3626 = vld [vmem:[#allocation4 + $0x108] sm:$0xff]
        %v3627 = vld [vmem:[#allocation4 + $0x110] sm:$0xff]
        %v3628 = vld [vmem:[#allocation4 + $0x118] sm:$0xff]
        %v3629 = vld [vmem:[#allocation4 + $0x120] sm:$0xff]
        %v3630 = vld [vmem:[#allocation4 + $0x128] sm:$0xff]
        %v3631 = vld [vmem:[#allocation4 + $0x130] sm:$0xff]
        %v3632 = vld [vmem:[#allocation4 + $0x138] sm:$0xff]
        %v3633 = vld [vmem:[#allocation4 + $0x140] sm:$0xff]
        %v3634 = vld [vmem:[#allocation4 + $0x148] sm:$0xff]
        %v3635 = vld [vmem:[#allocation4 + $0x150] sm:$0xff]
        %v3636 = vld [vmem:[#allocation4 + $0x158] sm:$0xff]
        %v3637 = vld [vmem:[#allocation4 + $0x160] sm:$0xff]
        %v3638 = vld [vmem:[#allocation4 + $0x168] sm:$0xff]
        %v3639 = vld [vmem:[#allocation4 + $0x170] sm:$0xff]
        %v3640 = vld [vmem:[#allocation4 + $0x178] sm:$0xff]
        %v3641 = vld [vmem:[#allocation4 + $0x180] sm:$0xff]
        %v3642 = vld [vmem:[#allocation4 + $0x188] sm:$0xff]
        %v3643 = vld [vmem:[#allocation4 + $0x190] sm:$0xff]
        %v3644 = vld [vmem:[#allocation4 + $0x198] sm:$0xff]
        %v3645 = vld [vmem:[#allocation4 + $0x1a0] sm:$0xff]
        %v3646 = vld [vmem:[#allocation4 + $0x1a8] sm:$0xff]
        %v3647 = vld [vmem:[#allocation4 + $0x1b0] sm:$0xff]
        %v3648 = vld [vmem:[#allocation4 + $0x1b8] sm:$0xff]
        %v3649 = vld [vmem:[#allocation4 + $0x1c0] sm:$0xff]
        %v3650 = vld [vmem:[#allocation4 + $0x1c8] sm:$0xff]
        %v3651 = vld [vmem:[#allocation4 + $0x1d0] sm:$0xff]
        %v3652 = vld [vmem:[#allocation4 + $0x1d8] sm:$0xff]
        %v3653 = vld [vmem:[#allocation4 + $0x1e0] sm:$0xff]
        %v3654 = vld [vmem:[#allocation4 + $0x1e8] sm:$0xff]
        %v3655 = vld [vmem:[#allocation4 + $0x1f0] sm:$0xff]
        %v3656 = vld [vmem:[#allocation4 + $0x1f8] sm:$0xff]
        %v3657 = vld [vmem:[#allocation4 + $0x200] sm:$0xff]
        %v3658 = vld [vmem:[#allocation4 + $0x208] sm:$0xff]
        %v3659 = vld [vmem:[#allocation4 + $0x210] sm:$0xff]
        %v3660 = vld [vmem:[#allocation4 + $0x218] sm:$0xff]
        %v3661 = vld [vmem:[#allocation4 + $0x220] sm:$0xff]
        %v3662 = vld [vmem:[#allocation4 + $0x228] sm:$0xff]
        %v3663 = vld [vmem:[#allocation4 + $0x230] sm:$0xff]
        %v3664 = vld [vmem:[#allocation4 + $0x238] sm:$0xff]
        %v3665 = vld [vmem:[#allocation4 + $0x240] sm:$0xff]
        %v3666 = vld [vmem:[#allocation4 + $0x248] sm:$0xff]
        %v3667 = vld [vmem:[#allocation4 + $0x250] sm:$0xff]
        %v3668 = vld [vmem:[#allocation4 + $0x258] sm:$0xff]
        %v3669 = vld [vmem:[#allocation4 + $0x260] sm:$0xff]
        %v3670 = vld [vmem:[#allocation4 + $0x268] sm:$0xff]
        %v3671 = vld [vmem:[#allocation4 + $0x270] sm:$0xff]
        %v3672 = vld [vmem:[#allocation4 + $0x278] sm:$0xff]
        %v3673 = vld [vmem:[#allocation4 + $0x280] sm:$0xff]
        %v3674 = vld [vmem:[#allocation4 + $0x288] sm:$0xff]
        %v3675 = vld [vmem:[#allocation4 + $0x290] sm:$0xff]
        %v3676 = vld [vmem:[#allocation4 + $0x298] sm:$0xff]
        %v3677 = vld [vmem:[#allocation4 + $0x2a0] sm:$0xff]
        %v3678 = vld [vmem:[#allocation4 + $0x2a8] sm:$0xff]
        %v3679 = vld [vmem:[#allocation4 + $0x2b0] sm:$0xff]
        %v3680 = vld [vmem:[#allocation4 + $0x2b8] sm:$0xff]
        %v3681 = vld [vmem:[#allocation4 + $0x2c0] sm:$0xff]
        %v3682 = vld [vmem:[#allocation4 + $0x2c8] sm:$0xff]
        %v3683 = vld [vmem:[#allocation4 + $0x2d0] sm:$0xff]
        %v3684 = vld [vmem:[#allocation4 + $0x2d8] sm:$0xff]
        %v3685 = vld [vmem:[#allocation4 + $0x2e0] sm:$0xff]
        %v3686 = vld [vmem:[#allocation4 + $0x2e8] sm:$0xff]
        %v3687 = vld [vmem:[#allocation4 + $0x2f0] sm:$0xff]
        %v3688 = vld [vmem:[#allocation4 + $0x2f8] sm:$0xff]
        %v3689 = vld [vmem:[#allocation4 + $0x300] sm:$0xff]
        %v3690 = vld [vmem:[#allocation4 + $0x308] sm:$0xff]
        %v3691 = vld [vmem:[#allocation4 + $0x310] sm:$0xff]
        %v3692 = vld [vmem:[#allocation4 + $0x318] sm:$0xff]
        %v3693 = vld [vmem:[#allocation4 + $0x320] sm:$0xff]
        %v3694 = vld [vmem:[#allocation4 + $0x328] sm:$0xff]
        %v3695 = vld [vmem:[#allocation4 + $0x330] sm:$0xff]
        %v3696 = vld [vmem:[#allocation4 + $0x338] sm:$0xff]
        %v3697 = vld [vmem:[#allocation4 + $0x340] sm:$0xff]
        %v3698 = vld [vmem:[#allocation4 + $0x348] sm:$0xff]
        %v3699 = vld [vmem:[#allocation4 + $0x350] sm:$0xff]
        %v3700 = vld [vmem:[#allocation4 + $0x358] sm:$0xff]
        %v3701 = vld [vmem:[#allocation4 + $0x360] sm:$0xff]
        %v3702 = vld [vmem:[#allocation4 + $0x368] sm:$0xff]
        %v3703 = vld [vmem:[#allocation4 + $0x370] sm:$0xff]
        %v3704 = vld [vmem:[#allocation4 + $0x378] sm:$0xff]
        %v3705 = vld [vmem:[#allocation4 + $0x380] sm:$0xff]
        %v3706 = vld [vmem:[#allocation4 + $0x388] sm:$0xff]
        %v3707 = vld [vmem:[#allocation4 + $0x390] sm:$0xff]
        %v3708 = vld [vmem:[#allocation4 + $0x398] sm:$0xff]
        %v3709 = vld [vmem:[#allocation4 + $0x3a0] sm:$0xff]
        %v3710 = vld [vmem:[#allocation4 + $0x3a8] sm:$0xff]
        %v3711 = vld [vmem:[#allocation4 + $0x3b0] sm:$0xff]
        %v3712 = vld [vmem:[#allocation4 + $0x3b8] sm:$0xff]
        %v3713 = vld [vmem:[#allocation4 + $0x3c0] sm:$0xff]
        %v3714 = vld [vmem:[#allocation4 + $0x3c8] sm:$0xff]
        %v3715 = vld [vmem:[#allocation4 + $0x3d0] sm:$0xff]
        %v3716 = vld [vmem:[#allocation4 + $0x3d8] sm:$0xff]
        %v3717 = vld [vmem:[#allocation4 + $0x3e0] sm:$0xff]
        %v3718 = vld [vmem:[#allocation4 + $0x3e8] sm:$0xff]
        %v3719 = vld [vmem:[#allocation4 + $0x3f0] sm:$0xff]
        %v3720 = vld [vmem:[#allocation4 + $0x3f8] sm:$0xff]
        %s3721 = scalar_lea.vmem [#allocation7], 2
        %v3722 = vld [vmem:[%s3721] ss:$4 sm:$0xf]
        %v3724 = vperm.slane %v3722, 0
        %v3725 = vperm.slane %v3722, 1
        %v3726 = vperm.slane %v3722, 2
        %v3727 = vperm.slane %v3722, 3
        %v3860 = vunpack.c.l.b16 %v3593
        %v3861 = vunpack.c.h.b16 %v3593
        %v3862 = vunpack.c.l.b16 %v3594
        %v3863 = vunpack.c.h.b16 %v3594
        %v3864 = vunpack.c.l.b16 %v3595
        %v3865 = vunpack.c.h.b16 %v3595
        %v3866 = vunpack.c.l.b16 %v3596
        %v3867 = vunpack.c.h.b16 %v3596
        %v3868 = vunpack.c.l.b16 %v3597
        %v3869 = vunpack.c.h.b16 %v3597
        %v3870 = vunpack.c.l.b16 %v3598
        %v3871 = vunpack.c.h.b16 %v3598
        %v3872 = vunpack.c.l.b16 %v3599
        %v3873 = vunpack.c.h.b16 %v3599
        %v3874 = vunpack.c.l.b16 %v3600
        %v3875 = vunpack.c.h.b16 %v3600
        %v3876 = vunpack.c.l.b16 %v3601
        %v3877 = vunpack.c.h.b16 %v3601
        %v3878 = vunpack.c.l.b16 %v3602
        %v3879 = vunpack.c.h.b16 %v3602
        %v3880 = vunpack.c.l.b16 %v3603
        %v3881 = vunpack.c.h.b16 %v3603
        %v3882 = vunpack.c.l.b16 %v3604
        %v3883 = vunpack.c.h.b16 %v3604
        %v3884 = vunpack.c.l.b16 %v3605
        %v3885 = vunpack.c.h.b16 %v3605
        %v3886 = vunpack.c.l.b16 %v3606
        %v3887 = vunpack.c.h.b16 %v3606
        %v3888 = vunpack.c.l.b16 %v3607
        %v3889 = vunpack.c.h.b16 %v3607
        %v3890 = vunpack.c.l.b16 %v3608
        %v3891 = vunpack.c.h.b16 %v3608
        %v3892 = vunpack.c.l.b16 %v3609
        %v3893 = vunpack.c.h.b16 %v3609
        %v3894 = vunpack.c.l.b16 %v3610
        %v3895 = vunpack.c.h.b16 %v3610
        %v3896 = vunpack.c.l.b16 %v3611
        %v3897 = vunpack.c.h.b16 %v3611
        %v3898 = vunpack.c.l.b16 %v3612
        %v3899 = vunpack.c.h.b16 %v3612
        %v3900 = vunpack.c.l.b16 %v3613
        %v3901 = vunpack.c.h.b16 %v3613
        %v3902 = vunpack.c.l.b16 %v3614
        %v3903 = vunpack.c.h.b16 %v3614
        %v3904 = vunpack.c.l.b16 %v3615
        %v3905 = vunpack.c.h.b16 %v3615
        %v3906 = vunpack.c.l.b16 %v3616
        %v3907 = vunpack.c.h.b16 %v3616
        %v3908 = vunpack.c.l.b16 %v3617
        %v3909 = vunpack.c.h.b16 %v3617
        %v3910 = vunpack.c.l.b16 %v3618
        %v3911 = vunpack.c.h.b16 %v3618
        %v3912 = vunpack.c.l.b16 %v3619
        %v3913 = vunpack.c.h.b16 %v3619
        %v3914 = vunpack.c.l.b16 %v3620
        %v3915 = vunpack.c.h.b16 %v3620
        %v3916 = vunpack.c.l.b16 %v3621
        %v3917 = vunpack.c.h.b16 %v3621
        %v3918 = vunpack.c.l.b16 %v3622
        %v3919 = vunpack.c.h.b16 %v3622
        %v3920 = vunpack.c.l.b16 %v3623
        %v3921 = vunpack.c.h.b16 %v3623
        %v3922 = vunpack.c.l.b16 %v3624
        %v3923 = vunpack.c.h.b16 %v3624
        %v3924 = vunpack.c.l.b16 %v3625
        %v3925 = vunpack.c.h.b16 %v3625
        %v3926 = vunpack.c.l.b16 %v3626
        %v3927 = vunpack.c.h.b16 %v3626
        %v3928 = vunpack.c.l.b16 %v3627
        %v3929 = vunpack.c.h.b16 %v3627
        %v3930 = vunpack.c.l.b16 %v3628
        %v3931 = vunpack.c.h.b16 %v3628
        %v3932 = vunpack.c.l.b16 %v3629
        %v3933 = vunpack.c.h.b16 %v3629
        %v3934 = vunpack.c.l.b16 %v3630
        %v3935 = vunpack.c.h.b16 %v3630
        %v3936 = vunpack.c.l.b16 %v3631
        %v3937 = vunpack.c.h.b16 %v3631
        %v3938 = vunpack.c.l.b16 %v3632
        %v3939 = vunpack.c.h.b16 %v3632
        %v3940 = vunpack.c.l.b16 %v3633
        %v3941 = vunpack.c.h.b16 %v3633
        %v3942 = vunpack.c.l.b16 %v3634
        %v3943 = vunpack.c.h.b16 %v3634
        %v3944 = vunpack.c.l.b16 %v3635
        %v3945 = vunpack.c.h.b16 %v3635
        %v3946 = vunpack.c.l.b16 %v3636
        %v3947 = vunpack.c.h.b16 %v3636
        %v3948 = vunpack.c.l.b16 %v3637
        %v3949 = vunpack.c.h.b16 %v3637
        %v3950 = vunpack.c.l.b16 %v3638
        %v3951 = vunpack.c.h.b16 %v3638
        %v3952 = vunpack.c.l.b16 %v3639
        %v3953 = vunpack.c.h.b16 %v3639
        %v3954 = vunpack.c.l.b16 %v3640
        %v3955 = vunpack.c.h.b16 %v3640
        %v3956 = vunpack.c.l.b16 %v3641
        %v3957 = vunpack.c.h.b16 %v3641
        %v3958 = vunpack.c.l.b16 %v3642
        %v3959 = vunpack.c.h.b16 %v3642
        %v3960 = vunpack.c.l.b16 %v3643
        %v3961 = vunpack.c.h.b16 %v3643
        %v3962 = vunpack.c.l.b16 %v3644
        %v3963 = vunpack.c.h.b16 %v3644
        %v3964 = vunpack.c.l.b16 %v3645
        %v3965 = vunpack.c.h.b16 %v3645
        %v3966 = vunpack.c.l.b16 %v3646
        %v3967 = vunpack.c.h.b16 %v3646
        %v3968 = vunpack.c.l.b16 %v3647
        %v3969 = vunpack.c.h.b16 %v3647
        %v3970 = vunpack.c.l.b16 %v3648
        %v3971 = vunpack.c.h.b16 %v3648
        %v3972 = vunpack.c.l.b16 %v3649
        %v3973 = vunpack.c.h.b16 %v3649
        %v3974 = vunpack.c.l.b16 %v3650
        %v3975 = vunpack.c.h.b16 %v3650
        %v3976 = vunpack.c.l.b16 %v3651
        %v3977 = vunpack.c.h.b16 %v3651
        %v3978 = vunpack.c.l.b16 %v3652
        %v3979 = vunpack.c.h.b16 %v3652
        %v3980 = vunpack.c.l.b16 %v3653
        %v3981 = vunpack.c.h.b16 %v3653
        %v3982 = vunpack.c.l.b16 %v3654
        %v3983 = vunpack.c.h.b16 %v3654
        %v3984 = vunpack.c.l.b16 %v3655
        %v3985 = vunpack.c.h.b16 %v3655
        %v3986 = vunpack.c.l.b16 %v3656
        %v3987 = vunpack.c.h.b16 %v3656
        %v3988 = vunpack.c.l.b16 %v3657
        %v3989 = vunpack.c.h.b16 %v3657
        %v3990 = vunpack.c.l.b16 %v3658
        %v3991 = vunpack.c.h.b16 %v3658
        %v3992 = vunpack.c.l.b16 %v3659
        %v3993 = vunpack.c.h.b16 %v3659
        %v3994 = vunpack.c.l.b16 %v3660
        %v3995 = vunpack.c.h.b16 %v3660
        %v3996 = vunpack.c.l.b16 %v3661
        %v3997 = vunpack.c.h.b16 %v3661
        %v3998 = vunpack.c.l.b16 %v3662
        %v3999 = vunpack.c.h.b16 %v3662
        %v4000 = vunpack.c.l.b16 %v3663
        %v4001 = vunpack.c.h.b16 %v3663
        %v4002 = vunpack.c.l.b16 %v3664
        %v4003 = vunpack.c.h.b16 %v3664
        %v4004 = vunpack.c.l.b16 %v3665
        %v4005 = vunpack.c.h.b16 %v3665
        %v4006 = vunpack.c.l.b16 %v3666
        %v4007 = vunpack.c.h.b16 %v3666
        %v4008 = vunpack.c.l.b16 %v3667
        %v4009 = vunpack.c.h.b16 %v3667
        %v4010 = vunpack.c.l.b16 %v3668
        %v4011 = vunpack.c.h.b16 %v3668
        %v4012 = vunpack.c.l.b16 %v3669
        %v4013 = vunpack.c.h.b16 %v3669
        %v4014 = vunpack.c.l.b16 %v3670
        %v4015 = vunpack.c.h.b16 %v3670
        %v4016 = vunpack.c.l.b16 %v3671
        %v4017 = vunpack.c.h.b16 %v3671
        %v4018 = vunpack.c.l.b16 %v3672
        %v4019 = vunpack.c.h.b16 %v3672
        %v4020 = vunpack.c.l.b16 %v3673
        %v4021 = vunpack.c.h.b16 %v3673
        %v4022 = vunpack.c.l.b16 %v3674
        %v4023 = vunpack.c.h.b16 %v3674
        %v4024 = vunpack.c.l.b16 %v3675
        %v4025 = vunpack.c.h.b16 %v3675
        %v4026 = vunpack.c.l.b16 %v3676
        %v4027 = vunpack.c.h.b16 %v3676
        %v4028 = vunpack.c.l.b16 %v3677
        %v4029 = vunpack.c.h.b16 %v3677
        %v4030 = vunpack.c.l.b16 %v3678
        %v4031 = vunpack.c.h.b16 %v3678
        %v4032 = vunpack.c.l.b16 %v3679
        %v4033 = vunpack.c.h.b16 %v3679
        %v4034 = vunpack.c.l.b16 %v3680
        %v4035 = vunpack.c.h.b16 %v3680
        %v4036 = vunpack.c.l.b16 %v3681
        %v4037 = vunpack.c.h.b16 %v3681
        %v4038 = vunpack.c.l.b16 %v3682
        %v4039 = vunpack.c.h.b16 %v3682
        %v4040 = vunpack.c.l.b16 %v3683
        %v4041 = vunpack.c.h.b16 %v3683
        %v4042 = vunpack.c.l.b16 %v3684
        %v4043 = vunpack.c.h.b16 %v3684
        %v4044 = vunpack.c.l.b16 %v3685
        %v4045 = vunpack.c.h.b16 %v3685
        %v4046 = vunpack.c.l.b16 %v3686
        %v4047 = vunpack.c.h.b16 %v3686
        %v4048 = vunpack.c.l.b16 %v3687
        %v4049 = vunpack.c.h.b16 %v3687
        %v4050 = vunpack.c.l.b16 %v3688
        %v4051 = vunpack.c.h.b16 %v3688
        %v4052 = vunpack.c.l.b16 %v3689
        %v4053 = vunpack.c.h.b16 %v3689
        %v4054 = vunpack.c.l.b16 %v3690
        %v4055 = vunpack.c.h.b16 %v3690
        %v4056 = vunpack.c.l.b16 %v3691
        %v4057 = vunpack.c.h.b16 %v3691
        %v4058 = vunpack.c.l.b16 %v3692
        %v4059 = vunpack.c.h.b16 %v3692
        %v4060 = vunpack.c.l.b16 %v3693
        %v4061 = vunpack.c.h.b16 %v3693
        %v4062 = vunpack.c.l.b16 %v3694
        %v4063 = vunpack.c.h.b16 %v3694
        %v4064 = vunpack.c.l.b16 %v3695
        %v4065 = vunpack.c.h.b16 %v3695
        %v4066 = vunpack.c.l.b16 %v3696
        %v4067 = vunpack.c.h.b16 %v3696
        %v4068 = vunpack.c.l.b16 %v3697
        %v4069 = vunpack.c.h.b16 %v3697
        %v4070 = vunpack.c.l.b16 %v3698
        %v4071 = vunpack.c.h.b16 %v3698
        %v4072 = vunpack.c.l.b16 %v3699
        %v4073 = vunpack.c.h.b16 %v3699
        %v4074 = vunpack.c.l.b16 %v3700
        %v4075 = vunpack.c.h.b16 %v3700
        %v4076 = vunpack.c.l.b16 %v3701
        %v4077 = vunpack.c.h.b16 %v3701
        %v4078 = vunpack.c.l.b16 %v3702
        %v4079 = vunpack.c.h.b16 %v3702
        %v4080 = vunpack.c.l.b16 %v3703
        %v4081 = vunpack.c.h.b16 %v3703
        %v4082 = vunpack.c.l.b16 %v3704
        %v4083 = vunpack.c.h.b16 %v3704
        %v4084 = vunpack.c.l.b16 %v3705
        %v4085 = vunpack.c.h.b16 %v3705
        %v4086 = vunpack.c.l.b16 %v3706
        %v4087 = vunpack.c.h.b16 %v3706
        %v4088 = vunpack.c.l.b16 %v3707
        %v4089 = vunpack.c.h.b16 %v3707
        %v4090 = vunpack.c.l.b16 %v3708
        %v4091 = vunpack.c.h.b16 %v3708
        %v4092 = vunpack.c.l.b16 %v3709
        %v4093 = vunpack.c.h.b16 %v3709
        %v4094 = vunpack.c.l.b16 %v3710
        %v4095 = vunpack.c.h.b16 %v3710
        %v4096 = vunpack.c.l.b16 %v3711
        %v4097 = vunpack.c.h.b16 %v3711
        %v4098 = vunpack.c.l.b16 %v3712
        %v4099 = vunpack.c.h.b16 %v3712
        %v4100 = vunpack.c.l.b16 %v3713
        %v4101 = vunpack.c.h.b16 %v3713
        %v4102 = vunpack.c.l.b16 %v3714
        %v4103 = vunpack.c.h.b16 %v3714
        %v4104 = vunpack.c.l.b16 %v3715
        %v4105 = vunpack.c.h.b16 %v3715
        %v4106 = vunpack.c.l.b16 %v3716
        %v4107 = vunpack.c.h.b16 %v3716
        %v4108 = vunpack.c.l.b16 %v3717
        %v4109 = vunpack.c.h.b16 %v3717
        %v4110 = vunpack.c.l.b16 %v3718
        %v4111 = vunpack.c.h.b16 %v3718
        %v4112 = vunpack.c.l.b16 %v3719
        %v4113 = vunpack.c.h.b16 %v3719
        %v4114 = vunpack.c.l.b16 %v3720
        %v4115 = vunpack.c.h.b16 %v3720
        %v4116 = vpack.c.b16 %v3864, %v3860
        %v4117 = vpack.c.b16 %v3865, %v3861
        %v4118 = vpack.c.b16 %v3866, %v3862
        %v4119 = vpack.c.b16 %v3867, %v3863
        %v4120 = vpack.c.b16 %v3872, %v3868
        %v4121 = vpack.c.b16 %v3873, %v3869
        %v4122 = vpack.c.b16 %v3874, %v3870
        %v4123 = vpack.c.b16 %v3875, %v3871
        %v4124 = vpack.c.b16 %v3880, %v3876
        %v4125 = vpack.c.b16 %v3881, %v3877
        %v4126 = vpack.c.b16 %v3882, %v3878
        %v4127 = vpack.c.b16 %v3883, %v3879
        %v4128 = vpack.c.b16 %v3888, %v3884
        %v4129 = vpack.c.b16 %v3889, %v3885
        %v4130 = vpack.c.b16 %v3890, %v3886
        %v4131 = vpack.c.b16 %v3891, %v3887
        %v4132 = vpack.c.b16 %v3896, %v3892
        %v4133 = vpack.c.b16 %v3897, %v3893
        %v4134 = vpack.c.b16 %v3898, %v3894
        %v4135 = vpack.c.b16 %v3899, %v3895
        %v4136 = vpack.c.b16 %v3904, %v3900
        %v4137 = vpack.c.b16 %v3905, %v3901
        %v4138 = vpack.c.b16 %v3906, %v3902
        %v4139 = vpack.c.b16 %v3907, %v3903
        %v4140 = vpack.c.b16 %v3912, %v3908
        %v4141 = vpack.c.b16 %v3913, %v3909
        %v4142 = vpack.c.b16 %v3914, %v3910
        %v4143 = vpack.c.b16 %v3915, %v3911
        %v4144 = vpack.c.b16 %v3920, %v3916
        %v4145 = vpack.c.b16 %v3921, %v3917
        %v4146 = vpack.c.b16 %v3922, %v3918
        %v4147 = vpack.c.b16 %v3923, %v3919
        %v4148 = vpack.c.b16 %v3928, %v3924
        %v4149 = vpack.c.b16 %v3929, %v3925
        %v4150 = vpack.c.b16 %v3930, %v3926
        %v4151 = vpack.c.b16 %v3931, %v3927
        %v4152 = vpack.c.b16 %v3936, %v3932
        %v4153 = vpack.c.b16 %v3937, %v3933
        %v4154 = vpack.c.b16 %v3938, %v3934
        %v4155 = vpack.c.b16 %v3939, %v3935
        %v4156 = vpack.c.b16 %v3944, %v3940
        %v4157 = vpack.c.b16 %v3945, %v3941
        %v4158 = vpack.c.b16 %v3946, %v3942
        %v4159 = vpack.c.b16 %v3947, %v3943
        %v4160 = vpack.c.b16 %v3952, %v3948
        %v4161 = vpack.c.b16 %v3953, %v3949
        %v4162 = vpack.c.b16 %v3954, %v3950
        %v4163 = vpack.c.b16 %v3955, %v3951
        %v4164 = vpack.c.b16 %v3960, %v3956
        %v4165 = vpack.c.b16 %v3961, %v3957
        %v4166 = vpack.c.b16 %v3962, %v3958
        %v4167 = vpack.c.b16 %v3963, %v3959
        %v4168 = vpack.c.b16 %v3968, %v3964
        %v4169 = vpack.c.b16 %v3969, %v3965
        %v4170 = vpack.c.b16 %v3970, %v3966
        %v4171 = vpack.c.b16 %v3971, %v3967
        %v4172 = vpack.c.b16 %v3976, %v3972
        %v4173 = vpack.c.b16 %v3977, %v3973
        %v4174 = vpack.c.b16 %v3978, %v3974
        %v4175 = vpack.c.b16 %v3979, %v3975
        %v4176 = vpack.c.b16 %v3984, %v3980
        %v4177 = vpack.c.b16 %v3985, %v3981
        %v4178 = vpack.c.b16 %v3986, %v3982
        %v4179 = vpack.c.b16 %v3987, %v3983
        %v4180 = vpack.c.b16 %v3992, %v3988
        %v4181 = vpack.c.b16 %v3993, %v3989
        %v4182 = vpack.c.b16 %v3994, %v3990
        %v4183 = vpack.c.b16 %v3995, %v3991
        %v4184 = vpack.c.b16 %v4000, %v3996
        %v4185 = vpack.c.b16 %v4001, %v3997
        %v4186 = vpack.c.b16 %v4002, %v3998
        %v4187 = vpack.c.b16 %v4003, %v3999
        %v4188 = vpack.c.b16 %v4008, %v4004
        %v4189 = vpack.c.b16 %v4009, %v4005
        %v4190 = vpack.c.b16 %v4010, %v4006
        %v4191 = vpack.c.b16 %v4011, %v4007
        %v4192 = vpack.c.b16 %v4016, %v4012
        %v4193 = vpack.c.b16 %v4017, %v4013
        %v4194 = vpack.c.b16 %v4018, %v4014
        %v4195 = vpack.c.b16 %v4019, %v4015
        %v4196 = vpack.c.b16 %v4024, %v4020
        %v4197 = vpack.c.b16 %v4025, %v4021
        %v4198 = vpack.c.b16 %v4026, %v4022
        %v4199 = vpack.c.b16 %v4027, %v4023
        %v4200 = vpack.c.b16 %v4032, %v4028
        %v4201 = vpack.c.b16 %v4033, %v4029
        %v4202 = vpack.c.b16 %v4034, %v4030
        %v4203 = vpack.c.b16 %v4035, %v4031
        %v4204 = vpack.c.b16 %v4040, %v4036
        %v4205 = vpack.c.b16 %v4041, %v4037
        %v4206 = vpack.c.b16 %v4042, %v4038
        %v4207 = vpack.c.b16 %v4043, %v4039
        %v4208 = vpack.c.b16 %v4048, %v4044
        %v4209 = vpack.c.b16 %v4049, %v4045
        %v4210 = vpack.c.b16 %v4050, %v4046
        %v4211 = vpack.c.b16 %v4051, %v4047
        %v4212 = vpack.c.b16 %v4056, %v4052
        %v4213 = vpack.c.b16 %v4057, %v4053
        %v4214 = vpack.c.b16 %v4058, %v4054
        %v4215 = vpack.c.b16 %v4059, %v4055
        %v4216 = vpack.c.b16 %v4064, %v4060
        %v4217 = vpack.c.b16 %v4065, %v4061
        %v4218 = vpack.c.b16 %v4066, %v4062
        %v4219 = vpack.c.b16 %v4067, %v4063
        %v4220 = vpack.c.b16 %v4072, %v4068
        %v4221 = vpack.c.b16 %v4073, %v4069
        %v4222 = vpack.c.b16 %v4074, %v4070
        %v4223 = vpack.c.b16 %v4075, %v4071
        %v4224 = vpack.c.b16 %v4080, %v4076
        %v4225 = vpack.c.b16 %v4081, %v4077
        %v4226 = vpack.c.b16 %v4082, %v4078
        %v4227 = vpack.c.b16 %v4083, %v4079
        %v4228 = vpack.c.b16 %v4088, %v4084
        %v4229 = vpack.c.b16 %v4089, %v4085
        %v4230 = vpack.c.b16 %v4090, %v4086
        %v4231 = vpack.c.b16 %v4091, %v4087
        %v4232 = vpack.c.b16 %v4096, %v4092
        %v4233 = vpack.c.b16 %v4097, %v4093
        %v4234 = vpack.c.b16 %v4098, %v4094
        %v4235 = vpack.c.b16 %v4099, %v4095
        %v4236 = vpack.c.b16 %v4104, %v4100
        %v4237 = vpack.c.b16 %v4105, %v4101
        %v4238 = vpack.c.b16 %v4106, %v4102
        %v4239 = vpack.c.b16 %v4107, %v4103
        %v4240 = vpack.c.b16 %v4112, %v4108
        %v4241 = vpack.c.b16 %v4113, %v4109
        %v4242 = vpack.c.b16 %v4114, %v4110
        %v4243 = vpack.c.b16 %v4115, %v4111
        %4372 = vmatpush.bf16.msra.mxu0 %v4144
        %4373 = vmatpush.bf16.msra.mxu0 %v4140
        %4374 = vmatpush.bf16.msra.mxu0 %v4136
        %4375 = vmatpush.bf16.msra.mxu0 %v4132
        %4376 = vmatpush.bf16.msra.mxu0 %v4128
        %4377 = vmatpush.bf16.msra.mxu0 %v4124
        %4378 = vmatpush.bf16.msra.mxu0 %v4120
        %4379 = vmatpush.bf16.msra.mxu0 %v4116
        %4380 = vmatmul.bf16.gmra.mxu0 %v3529
        %v4381 = vpop.f32.mrf.mxu0
        %v4382 = vadd.f32 %v3724, %v4381
        %v4383 = vpop.f32.mrf.mxu0
        %v4384 = vadd.f32 %v3724, %v4383
        %4385 = vmatmul.bf16.gmra.mxu0 %v3533
        %v4386 = vpop.f32.mrf.mxu0
        %v4387 = vadd.f32 %v3724, %v4386
        %v4388 = vpop.f32.mrf.mxu0
        %v4389 = vadd.f32 %v3724, %v4388
        %4390 = vmatmul.bf16.gmra.mxu0 %v3537
        %v4391 = vpop.f32.mrf.mxu0
        %v4392 = vadd.f32 %v3724, %v4391
        %v4393 = vpop.f32.mrf.mxu0
        %v4394 = vadd.f32 %v3724, %v4393
        %4395 = vmatmul.bf16.gmra.mxu0 %v3541
        %v4396 = vpop.f32.mrf.mxu0
        %v4397 = vadd.f32 %v3724, %v4396
        %v4398 = vpop.f32.mrf.mxu0
        %v4399 = vadd.f32 %v3724, %v4398
        %4400 = vmatmul.bf16.gmra.mxu0 %v3545
        %v4401 = vpop.f32.mrf.mxu0
        %v4402 = vadd.f32 %v3724, %v4401
        %v4403 = vpop.f32.mrf.mxu0
        %v4404 = vadd.f32 %v3724, %v4403
        %4405 = vmatmul.bf16.gmra.mxu0 %v3549
        %v4406 = vpop.f32.mrf.mxu0
        %v4407 = vadd.f32 %v3724, %v4406
        %v4408 = vpop.f32.mrf.mxu0
        %v4409 = vadd.f32 %v3724, %v4408
        %4410 = vmatmul.bf16.gmra.mxu0 %v3553
        %v4411 = vpop.f32.mrf.mxu0
        %v4412 = vadd.f32 %v3724, %v4411
        %v4413 = vpop.f32.mrf.mxu0
        %v4414 = vadd.f32 %v3724, %v4413
        %4415 = vmatmul.bf16.gmra.mxu0 %v3557
        %v4416 = vpop.f32.mrf.mxu0
        %v4417 = vadd.f32 %v3724, %v4416
        %v4418 = vpop.f32.mrf.mxu0
        %v4419 = vadd.f32 %v3724, %v4418
        %4420 = vmatmul.bf16.gmra.mxu0 %v3561
        %v4421 = vpop.f32.mrf.mxu0
        %v4422 = vadd.f32 %v3724, %v4421
        %v4423 = vpop.f32.mrf.mxu0
        %v4424 = vadd.f32 %v3724, %v4423
        %4425 = vmatmul.bf16.gmra.mxu0 %v3565
        %v4426 = vpop.f32.mrf.mxu0
        %v4427 = vadd.f32 %v3724, %v4426
        %v4428 = vpop.f32.mrf.mxu0
        %v4429 = vadd.f32 %v3724, %v4428
        %4430 = vmatmul.bf16.gmra.mxu0 %v3569
        %v4431 = vpop.f32.mrf.mxu0
        %v4432 = vadd.f32 %v3724, %v4431
        %v4433 = vpop.f32.mrf.mxu0
        %v4434 = vadd.f32 %v3724, %v4433
        %4435 = vmatmul.bf16.gmra.mxu0 %v3573
        %v4436 = vpop.f32.mrf.mxu0
        %v4437 = vadd.f32 %v3724, %v4436
        %v4438 = vpop.f32.mrf.mxu0
        %v4439 = vadd.f32 %v3724, %v4438
        %4440 = vmatmul.bf16.gmra.mxu0 %v3577
        %v4441 = vpop.f32.mrf.mxu0
        %v4442 = vadd.f32 %v3724, %v4441
        %v4443 = vpop.f32.mrf.mxu0
        %v4444 = vadd.f32 %v3724, %v4443
        %4445 = vmatmul.bf16.gmra.mxu0 %v3581
        %v4446 = vpop.f32.mrf.mxu0
        %v4447 = vadd.f32 %v3724, %v4446
        %v4448 = vpop.f32.mrf.mxu0
        %v4449 = vadd.f32 %v3724, %v4448
        %4450 = vmatmul.bf16.gmra.mxu0 %v3585
        %v4451 = vpop.f32.mrf.mxu0
        %v4452 = vadd.f32 %v3724, %v4451
        %v4453 = vpop.f32.mrf.mxu0
        %v4454 = vadd.f32 %v3724, %v4453
        %4455 = vmatmul.bf16.gmra.mxu0 %v3589
        %v4456 = vpop.f32.mrf.mxu0
        %v4457 = vadd.f32 %v3724, %v4456
        %v4458 = vpop.f32.mrf.mxu0
        %v4459 = vadd.f32 %v3724, %v4458
        %4460 = vdwg.mxu0
        %4461 = vmatpush.bf16.msra.mxu0 %v4176
        %4462 = vmatpush.bf16.msra.mxu0 %v4172
        %4463 = vmatpush.bf16.msra.mxu0 %v4168
        %4464 = vmatpush.bf16.msra.mxu0 %v4164
        %4465 = vmatpush.bf16.msra.mxu0 %v4160
        %4466 = vmatpush.bf16.msra.mxu0 %v4156
        %4467 = vmatpush.bf16.msra.mxu0 %v4152
        %4468 = vmatpush.bf16.msra.mxu0 %v4148
        %4469 = vmatmul.bf16.gmra.mxu0 %v3530
        %v4470 = vpop.f32.mrf.mxu0
        %v4471 = vadd.f32 %v4382, %v4470
        %v4472 = vpop.f32.mrf.mxu0
        %v4473 = vadd.f32 %v4384, %v4472
        %4474 = vmatmul.bf16.gmra.mxu0 %v3534
        %v4475 = vpop.f32.mrf.mxu0
        %v4476 = vadd.f32 %v4387, %v4475
        %v4477 = vpop.f32.mrf.mxu0
        %v4478 = vadd.f32 %v4389, %v4477
        %4479 = vmatmul.bf16.gmra.mxu0 %v3538
        %v4480 = vpop.f32.mrf.mxu0
        %v4481 = vadd.f32 %v4392, %v4480
        %v4482 = vpop.f32.mrf.mxu0
        %v4483 = vadd.f32 %v4394, %v4482
        %4484 = vmatmul.bf16.gmra.mxu0 %v3542
        %v4485 = vpop.f32.mrf.mxu0
        %v4486 = vadd.f32 %v4397, %v4485
        %v4487 = vpop.f32.mrf.mxu0
        %v4488 = vadd.f32 %v4399, %v4487
        %4489 = vmatmul.bf16.gmra.mxu0 %v3546
        %v4490 = vpop.f32.mrf.mxu0
        %v4491 = vadd.f32 %v4402, %v4490
        %v4492 = vpop.f32.mrf.mxu0
        %v4493 = vadd.f32 %v4404, %v4492
        %4494 = vmatmul.bf16.gmra.mxu0 %v3550
        %v4495 = vpop.f32.mrf.mxu0
        %v4496 = vadd.f32 %v4407, %v4495
        %v4497 = vpop.f32.mrf.mxu0
        %v4498 = vadd.f32 %v4409, %v4497
        %4499 = vmatmul.bf16.gmra.mxu0 %v3554
        %v4500 = vpop.f32.mrf.mxu0
        %v4501 = vadd.f32 %v4412, %v4500
        %v4502 = vpop.f32.mrf.mxu0
        %v4503 = vadd.f32 %v4414, %v4502
        %4504 = vmatmul.bf16.gmra.mxu0 %v3558
        %v4505 = vpop.f32.mrf.mxu0
        %v4506 = vadd.f32 %v4417, %v4505
        %v4507 = vpop.f32.mrf.mxu0
        %v4508 = vadd.f32 %v4419, %v4507
        %4509 = vmatmul.bf16.gmra.mxu0 %v3562
        %v4510 = vpop.f32.mrf.mxu0
        %v4511 = vadd.f32 %v4422, %v4510
        %v4512 = vpop.f32.mrf.mxu0
        %v4513 = vadd.f32 %v4424, %v4512
        %4514 = vmatmul.bf16.gmra.mxu0 %v3566
        %v4515 = vpop.f32.mrf.mxu0
        %v4516 = vadd.f32 %v4427, %v4515
        %v4517 = vpop.f32.mrf.mxu0
        %v4518 = vadd.f32 %v4429, %v4517
        %4519 = vmatmul.bf16.gmra.mxu0 %v3570
        %v4520 = vpop.f32.mrf.mxu0
        %v4521 = vadd.f32 %v4432, %v4520
        %v4522 = vpop.f32.mrf.mxu0
        %v4523 = vadd.f32 %v4434, %v4522
        %4524 = vmatmul.bf16.gmra.mxu0 %v3574
        %v4525 = vpop.f32.mrf.mxu0
        %v4526 = vadd.f32 %v4437, %v4525
        %v4527 = vpop.f32.mrf.mxu0
        %v4528 = vadd.f32 %v4439, %v4527
        %4529 = vmatmul.bf16.gmra.mxu0 %v3578
        %v4530 = vpop.f32.mrf.mxu0
        %v4531 = vadd.f32 %v4442, %v4530
        %v4532 = vpop.f32.mrf.mxu0
        %v4533 = vadd.f32 %v4444, %v4532
        %4534 = vmatmul.bf16.gmra.mxu0 %v3582
        %v4535 = vpop.f32.mrf.mxu0
        %v4536 = vadd.f32 %v4447, %v4535
        %v4537 = vpop.f32.mrf.mxu0
        %v4538 = vadd.f32 %v4449, %v4537
        %4539 = vmatmul.bf16.gmra.mxu0 %v3586
        %v4540 = vpop.f32.mrf.mxu0
        %v4541 = vadd.f32 %v4452, %v4540
        %v4542 = vpop.f32.mrf.mxu0
        %v4543 = vadd.f32 %v4454, %v4542
        %4544 = vmatmul.bf16.gmra.mxu0 %v3590
        %v4545 = vpop.f32.mrf.mxu0
        %v4546 = vadd.f32 %v4457, %v4545
        %v4547 = vpop.f32.mrf.mxu0
        %v4548 = vadd.f32 %v4459, %v4547
        %4549 = vdwg.mxu0
        %4550 = vmatpush.bf16.msra.mxu0 %v4208
        %4551 = vmatpush.bf16.msra.mxu0 %v4204
        %4552 = vmatpush.bf16.msra.mxu0 %v4200
        %4553 = vmatpush.bf16.msra.mxu0 %v4196
        %4554 = vmatpush.bf16.msra.mxu0 %v4192
        %4555 = vmatpush.bf16.msra.mxu0 %v4188
        %4556 = vmatpush.bf16.msra.mxu0 %v4184
        %4557 = vmatpush.bf16.msra.mxu0 %v4180
        %4558 = vmatmul.bf16.gmra.mxu0 %v3531
        %v4559 = vpop.f32.mrf.mxu0
        %v4560 = vadd.f32 %v4471, %v4559
        %v4561 = vpop.f32.mrf.mxu0
        %v4562 = vadd.f32 %v4473, %v4561
        %4563 = vmatmul.bf16.gmra.mxu0 %v3535
        %v4564 = vpop.f32.mrf.mxu0
        %v4565 = vadd.f32 %v4476, %v4564
        %v4566 = vpop.f32.mrf.mxu0
        %v4567 = vadd.f32 %v4478, %v4566
        %4568 = vmatmul.bf16.gmra.mxu0 %v3539
        %v4569 = vpop.f32.mrf.mxu0
        %v4570 = vadd.f32 %v4481, %v4569
        %v4571 = vpop.f32.mrf.mxu0
        %v4572 = vadd.f32 %v4483, %v4571
        %4573 = vmatmul.bf16.gmra.mxu0 %v3543
        %v4574 = vpop.f32.mrf.mxu0
        %v4575 = vadd.f32 %v4486, %v4574
        %v4576 = vpop.f32.mrf.mxu0
        %v4577 = vadd.f32 %v4488, %v4576
        %4578 = vmatmul.bf16.gmra.mxu0 %v3547
        %v4579 = vpop.f32.mrf.mxu0
        %v4580 = vadd.f32 %v4491, %v4579
        %v4581 = vpop.f32.mrf.mxu0
        %v4582 = vadd.f32 %v4493, %v4581
        %4583 = vmatmul.bf16.gmra.mxu0 %v3551
        %v4584 = vpop.f32.mrf.mxu0
        %v4585 = vadd.f32 %v4496, %v4584
        %v4586 = vpop.f32.mrf.mxu0
        %v4587 = vadd.f32 %v4498, %v4586
        %4588 = vmatmul.bf16.gmra.mxu0 %v3555
        %v4589 = vpop.f32.mrf.mxu0
        %v4590 = vadd.f32 %v4501, %v4589
        %v4591 = vpop.f32.mrf.mxu0
        %v4592 = vadd.f32 %v4503, %v4591
        %4593 = vmatmul.bf16.gmra.mxu0 %v3559
        %v4594 = vpop.f32.mrf.mxu0
        %v4595 = vadd.f32 %v4506, %v4594
        %v4596 = vpop.f32.mrf.mxu0
        %v4597 = vadd.f32 %v4508, %v4596
        %4598 = vmatmul.bf16.gmra.mxu0 %v3563
        %v4599 = vpop.f32.mrf.mxu0
        %v4600 = vadd.f32 %v4511, %v4599
        %v4601 = vpop.f32.mrf.mxu0
        %v4602 = vadd.f32 %v4513, %v4601
        %4603 = vmatmul.bf16.gmra.mxu0 %v3567
        %v4604 = vpop.f32.mrf.mxu0
        %v4605 = vadd.f32 %v4516, %v4604
        %v4606 = vpop.f32.mrf.mxu0
        %v4607 = vadd.f32 %v4518, %v4606
        %4608 = vmatmul.bf16.gmra.mxu0 %v3571
        %v4609 = vpop.f32.mrf.mxu0
        %v4610 = vadd.f32 %v4521, %v4609
        %v4611 = vpop.f32.mrf.mxu0
        %v4612 = vadd.f32 %v4523, %v4611
        %4613 = vmatmul.bf16.gmra.mxu0 %v3575
        %v4614 = vpop.f32.mrf.mxu0
        %v4615 = vadd.f32 %v4526, %v4614
        %v4616 = vpop.f32.mrf.mxu0
        %v4617 = vadd.f32 %v4528, %v4616
        %4618 = vmatmul.bf16.gmra.mxu0 %v3579
        %v4619 = vpop.f32.mrf.mxu0
        %v4620 = vadd.f32 %v4531, %v4619
        %v4621 = vpop.f32.mrf.mxu0
        %v4622 = vadd.f32 %v4533, %v4621
        %4623 = vmatmul.bf16.gmra.mxu0 %v3583
        %v4624 = vpop.f32.mrf.mxu0
        %v4625 = vadd.f32 %v4536, %v4624
        %v4626 = vpop.f32.mrf.mxu0
        %v4627 = vadd.f32 %v4538, %v4626
        %4628 = vmatmul.bf16.gmra.mxu0 %v3587
        %v4629 = vpop.f32.mrf.mxu0
        %v4630 = vadd.f32 %v4541, %v4629
        %v4631 = vpop.f32.mrf.mxu0
        %v4632 = vadd.f32 %v4543, %v4631
        %4633 = vmatmul.bf16.gmra.mxu0 %v3591
        %v4634 = vpop.f32.mrf.mxu0
        %v4635 = vadd.f32 %v4546, %v4634
        %v4636 = vpop.f32.mrf.mxu0
        %v4637 = vadd.f32 %v4548, %v4636
        %4638 = vdwg.mxu0
        %4639 = vmatpush.bf16.msra.mxu0 %v4240
        %4640 = vmatpush.bf16.msra.mxu0 %v4236
        %4641 = vmatpush.bf16.msra.mxu0 %v4232
        %4642 = vmatpush.bf16.msra.mxu0 %v4228
        %4643 = vmatpush.bf16.msra.mxu0 %v4224
        %4644 = vmatpush.bf16.msra.mxu0 %v4220
        %4645 = vmatpush.bf16.msra.mxu0 %v4216
        %4646 = vmatpush.bf16.msra.mxu0 %v4212
        %4647 = vmatmul.bf16.gmra.mxu0 %v3532
        %v4648 = vpop.f32.mrf.mxu0
        %v4649 = vadd.f32 %v4560, %v4648
        %v4650 = vpop.f32.mrf.mxu0
        %v4651 = vadd.f32 %v4562, %v4650
        %4652 = vmatmul.bf16.gmra.mxu0 %v3536
        %v4653 = vpop.f32.mrf.mxu0
        %v4654 = vadd.f32 %v4565, %v4653
        %v4655 = vpop.f32.mrf.mxu0
        %v4656 = vadd.f32 %v4567, %v4655
        %4657 = vmatmul.bf16.gmra.mxu0 %v3540
        %v4658 = vpop.f32.mrf.mxu0
        %v4659 = vadd.f32 %v4570, %v4658
        %v4660 = vpop.f32.mrf.mxu0
        %v4661 = vadd.f32 %v4572, %v4660
        %4662 = vmatmul.bf16.gmra.mxu0 %v3544
        %v4663 = vpop.f32.mrf.mxu0
        %v4664 = vadd.f32 %v4575, %v4663
        %v4665 = vpop.f32.mrf.mxu0
        %v4666 = vadd.f32 %v4577, %v4665
        %4667 = vmatmul.bf16.gmra.mxu0 %v3548
        %v4668 = vpop.f32.mrf.mxu0
        %v4669 = vadd.f32 %v4580, %v4668
        %v4670 = vpop.f32.mrf.mxu0
        %v4671 = vadd.f32 %v4582, %v4670
        %4672 = vmatmul.bf16.gmra.mxu0 %v3552
        %v4673 = vpop.f32.mrf.mxu0
        %v4674 = vadd.f32 %v4585, %v4673
        %v4675 = vpop.f32.mrf.mxu0
        %v4676 = vadd.f32 %v4587, %v4675
        %4677 = vmatmul.bf16.gmra.mxu0 %v3556
        %v4678 = vpop.f32.mrf.mxu0
        %v4679 = vadd.f32 %v4590, %v4678
        %v4680 = vpop.f32.mrf.mxu0
        %v4681 = vadd.f32 %v4592, %v4680
        %4682 = vmatmul.bf16.gmra.mxu0 %v3560
        %v4683 = vpop.f32.mrf.mxu0
        %v4684 = vadd.f32 %v4595, %v4683
        %v4685 = vpop.f32.mrf.mxu0
        %v4686 = vadd.f32 %v4597, %v4685
        %4687 = vmatmul.bf16.gmra.mxu0 %v3564
        %v4688 = vpop.f32.mrf.mxu0
        %v4689 = vadd.f32 %v4600, %v4688
        %v4690 = vpop.f32.mrf.mxu0
        %v4691 = vadd.f32 %v4602, %v4690
        %4692 = vmatmul.bf16.gmra.mxu0 %v3568
        %v4693 = vpop.f32.mrf.mxu0
        %v4694 = vadd.f32 %v4605, %v4693
        %v4695 = vpop.f32.mrf.mxu0
        %v4696 = vadd.f32 %v4607, %v4695
        %4697 = vmatmul.bf16.gmra.mxu0 %v3572
        %v4698 = vpop.f32.mrf.mxu0
        %v4699 = vadd.f32 %v4610, %v4698
        %v4700 = vpop.f32.mrf.mxu0
        %v4701 = vadd.f32 %v4612, %v4700
        %4702 = vmatmul.bf16.gmra.mxu0 %v3576
        %v4703 = vpop.f32.mrf.mxu0
        %v4704 = vadd.f32 %v4615, %v4703
        %v4705 = vpop.f32.mrf.mxu0
        %v4706 = vadd.f32 %v4617, %v4705
        %4707 = vmatmul.bf16.gmra.mxu0 %v3580
        %v4708 = vpop.f32.mrf.mxu0
        %v4709 = vadd.f32 %v4620, %v4708
        %v4710 = vpop.f32.mrf.mxu0
        %v4711 = vadd.f32 %v4622, %v4710
        %4712 = vmatmul.bf16.gmra.mxu0 %v3584
        %v4713 = vpop.f32.mrf.mxu0
        %v4714 = vadd.f32 %v4625, %v4713
        %v4715 = vpop.f32.mrf.mxu0
        %v4716 = vadd.f32 %v4627, %v4715
        %4717 = vmatmul.bf16.gmra.mxu0 %v3588
        %v4718 = vpop.f32.mrf.mxu0
        %v4719 = vadd.f32 %v4630, %v4718
        %v4720 = vpop.f32.mrf.mxu0
        %v4721 = vadd.f32 %v4632, %v4720
        %4722 = vmatmul.bf16.gmra.mxu0 %v3592
        %v4723 = vpop.f32.mrf.mxu0
        %v4724 = vadd.f32 %v4635, %v4723
        %v4725 = vpop.f32.mrf.mxu0
        %v4726 = vadd.f32 %v4637, %v4725
        %4727 = vdwg.mxu0
        %4728 = vmatpush.bf16.msra.mxu0 %v4145
        %4729 = vmatpush.bf16.msra.mxu0 %v4141
        %4730 = vmatpush.bf16.msra.mxu0 %v4137
        %4731 = vmatpush.bf16.msra.mxu0 %v4133
        %4732 = vmatpush.bf16.msra.mxu0 %v4129
        %4733 = vmatpush.bf16.msra.mxu0 %v4125
        %4734 = vmatpush.bf16.msra.mxu0 %v4121
        %4735 = vmatpush.bf16.msra.mxu0 %v4117
        %4736 = vmatmul.bf16.gmra.mxu0 %v3529
        %v4737 = vpop.f32.mrf.mxu0
        %v4738 = vadd.f32 %v3725, %v4737
        %v4739 = vpop.f32.mrf.mxu0
        %v4740 = vadd.f32 %v3725, %v4739
        %4741 = vmatmul.bf16.gmra.mxu0 %v3533
        %v4742 = vpop.f32.mrf.mxu0
        %v4743 = vadd.f32 %v3725, %v4742
        %v4744 = vpop.f32.mrf.mxu0
        %v4745 = vadd.f32 %v3725, %v4744
        %4746 = vmatmul.bf16.gmra.mxu0 %v3537
        %v4747 = vpop.f32.mrf.mxu0
        %v4748 = vadd.f32 %v3725, %v4747
        %v4749 = vpop.f32.mrf.mxu0
        %v4750 = vadd.f32 %v3725, %v4749
        %4751 = vmatmul.bf16.gmra.mxu0 %v3541
        %v4752 = vpop.f32.mrf.mxu0
        %v4753 = vadd.f32 %v3725, %v4752
        %v4754 = vpop.f32.mrf.mxu0
        %v4755 = vadd.f32 %v3725, %v4754
        %4756 = vmatmul.bf16.gmra.mxu0 %v3545
        %v4757 = vpop.f32.mrf.mxu0
        %v4758 = vadd.f32 %v3725, %v4757
        %v4759 = vpop.f32.mrf.mxu0
        %v4760 = vadd.f32 %v3725, %v4759
        %4761 = vmatmul.bf16.gmra.mxu0 %v3549
        %v4762 = vpop.f32.mrf.mxu0
        %v4763 = vadd.f32 %v3725, %v4762
        %v4764 = vpop.f32.mrf.mxu0
        %v4765 = vadd.f32 %v3725, %v4764
        %4766 = vmatmul.bf16.gmra.mxu0 %v3553
        %v4767 = vpop.f32.mrf.mxu0
        %v4768 = vadd.f32 %v3725, %v4767
        %v4769 = vpop.f32.mrf.mxu0
        %v4770 = vadd.f32 %v3725, %v4769
        %4771 = vmatmul.bf16.gmra.mxu0 %v3557
        %v4772 = vpop.f32.mrf.mxu0
        %v4773 = vadd.f32 %v3725, %v4772
        %v4774 = vpop.f32.mrf.mxu0
        %v4775 = vadd.f32 %v3725, %v4774
        %4776 = vmatmul.bf16.gmra.mxu0 %v3561
        %v4777 = vpop.f32.mrf.mxu0
        %v4778 = vadd.f32 %v3725, %v4777
        %v4779 = vpop.f32.mrf.mxu0
        %v4780 = vadd.f32 %v3725, %v4779
        %4781 = vmatmul.bf16.gmra.mxu0 %v3565
        %v4782 = vpop.f32.mrf.mxu0
        %v4783 = vadd.f32 %v3725, %v4782
        %v4784 = vpop.f32.mrf.mxu0
        %v4785 = vadd.f32 %v3725, %v4784
        %4786 = vmatmul.bf16.gmra.mxu0 %v3569
        %v4787 = vpop.f32.mrf.mxu0
        %v4788 = vadd.f32 %v3725, %v4787
        %v4789 = vpop.f32.mrf.mxu0
        %v4790 = vadd.f32 %v3725, %v4789
        %4791 = vmatmul.bf16.gmra.mxu0 %v3573
        %v4792 = vpop.f32.mrf.mxu0
        %v4793 = vadd.f32 %v3725, %v4792
        %v4794 = vpop.f32.mrf.mxu0
        %v4795 = vadd.f32 %v3725, %v4794
        %4796 = vmatmul.bf16.gmra.mxu0 %v3577
        %v4797 = vpop.f32.mrf.mxu0
        %v4798 = vadd.f32 %v3725, %v4797
        %v4799 = vpop.f32.mrf.mxu0
        %v4800 = vadd.f32 %v3725, %v4799
        %4801 = vmatmul.bf16.gmra.mxu0 %v3581
        %v4802 = vpop.f32.mrf.mxu0
        %v4803 = vadd.f32 %v3725, %v4802
        %v4804 = vpop.f32.mrf.mxu0
        %v4805 = vadd.f32 %v3725, %v4804
        %4806 = vmatmul.bf16.gmra.mxu0 %v3585
        %v4807 = vpop.f32.mrf.mxu0
        %v4808 = vadd.f32 %v3725, %v4807
        %v4809 = vpop.f32.mrf.mxu0
        %v4810 = vadd.f32 %v3725, %v4809
        %4811 = vmatmul.bf16.gmra.mxu0 %v3589
        %v4812 = vpop.f32.mrf.mxu0
        %v4813 = vadd.f32 %v3725, %v4812
        %v4814 = vpop.f32.mrf.mxu0
        %v4815 = vadd.f32 %v3725, %v4814
        %4816 = vdwg.mxu0
        %4817 = vmatpush.bf16.msra.mxu0 %v4177
        %4818 = vmatpush.bf16.msra.mxu0 %v4173
        %4819 = vmatpush.bf16.msra.mxu0 %v4169
        %4820 = vmatpush.bf16.msra.mxu0 %v4165
        %4821 = vmatpush.bf16.msra.mxu0 %v4161
        %4822 = vmatpush.bf16.msra.mxu0 %v4157
        %4823 = vmatpush.bf16.msra.mxu0 %v4153
        %4824 = vmatpush.bf16.msra.mxu0 %v4149
        %4825 = vmatmul.bf16.gmra.mxu0 %v3530
        %v4826 = vpop.f32.mrf.mxu0
        %v4827 = vadd.f32 %v4738, %v4826
        %v4828 = vpop.f32.mrf.mxu0
        %v4829 = vadd.f32 %v4740, %v4828
        %4830 = vmatmul.bf16.gmra.mxu0 %v3534
        %v4831 = vpop.f32.mrf.mxu0
        %v4832 = vadd.f32 %v4743, %v4831
        %v4833 = vpop.f32.mrf.mxu0
        %v4834 = vadd.f32 %v4745, %v4833
        %4835 = vmatmul.bf16.gmra.mxu0 %v3538
        %v4836 = vpop.f32.mrf.mxu0
        %v4837 = vadd.f32 %v4748, %v4836
        %v4838 = vpop.f32.mrf.mxu0
        %v4839 = vadd.f32 %v4750, %v4838
        %4840 = vmatmul.bf16.gmra.mxu0 %v3542
        %v4841 = vpop.f32.mrf.mxu0
        %v4842 = vadd.f32 %v4753, %v4841
        %v4843 = vpop.f32.mrf.mxu0
        %v4844 = vadd.f32 %v4755, %v4843
        %4845 = vmatmul.bf16.gmra.mxu0 %v3546
        %v4846 = vpop.f32.mrf.mxu0
        %v4847 = vadd.f32 %v4758, %v4846
        %v4848 = vpop.f32.mrf.mxu0
        %v4849 = vadd.f32 %v4760, %v4848
        %4850 = vmatmul.bf16.gmra.mxu0 %v3550
        %v4851 = vpop.f32.mrf.mxu0
        %v4852 = vadd.f32 %v4763, %v4851
        %v4853 = vpop.f32.mrf.mxu0
        %v4854 = vadd.f32 %v4765, %v4853
        %4855 = vmatmul.bf16.gmra.mxu0 %v3554
        %v4856 = vpop.f32.mrf.mxu0
        %v4857 = vadd.f32 %v4768, %v4856
        %v4858 = vpop.f32.mrf.mxu0
        %v4859 = vadd.f32 %v4770, %v4858
        %4860 = vmatmul.bf16.gmra.mxu0 %v3558
        %v4861 = vpop.f32.mrf.mxu0
        %v4862 = vadd.f32 %v4773, %v4861
        %v4863 = vpop.f32.mrf.mxu0
        %v4864 = vadd.f32 %v4775, %v4863
        %4865 = vmatmul.bf16.gmra.mxu0 %v3562
        %v4866 = vpop.f32.mrf.mxu0
        %v4867 = vadd.f32 %v4778, %v4866
        %v4868 = vpop.f32.mrf.mxu0
        %v4869 = vadd.f32 %v4780, %v4868
        %4870 = vmatmul.bf16.gmra.mxu0 %v3566
        %v4871 = vpop.f32.mrf.mxu0
        %v4872 = vadd.f32 %v4783, %v4871
        %v4873 = vpop.f32.mrf.mxu0
        %v4874 = vadd.f32 %v4785, %v4873
        %4875 = vmatmul.bf16.gmra.mxu0 %v3570
        %v4876 = vpop.f32.mrf.mxu0
        %v4877 = vadd.f32 %v4788, %v4876
        %v4878 = vpop.f32.mrf.mxu0
        %v4879 = vadd.f32 %v4790, %v4878
        %4880 = vmatmul.bf16.gmra.mxu0 %v3574
        %v4881 = vpop.f32.mrf.mxu0
        %v4882 = vadd.f32 %v4793, %v4881
        %v4883 = vpop.f32.mrf.mxu0
        %v4884 = vadd.f32 %v4795, %v4883
        %4885 = vmatmul.bf16.gmra.mxu0 %v3578
        %v4886 = vpop.f32.mrf.mxu0
        %v4887 = vadd.f32 %v4798, %v4886
        %v4888 = vpop.f32.mrf.mxu0
        %v4889 = vadd.f32 %v4800, %v4888
        %4890 = vmatmul.bf16.gmra.mxu0 %v3582
        %v4891 = vpop.f32.mrf.mxu0
        %v4892 = vadd.f32 %v4803, %v4891
        %v4893 = vpop.f32.mrf.mxu0
        %v4894 = vadd.f32 %v4805, %v4893
        %4895 = vmatmul.bf16.gmra.mxu0 %v3586
        %v4896 = vpop.f32.mrf.mxu0
        %v4897 = vadd.f32 %v4808, %v4896
        %v4898 = vpop.f32.mrf.mxu0
        %v4899 = vadd.f32 %v4810, %v4898
        %4900 = vmatmul.bf16.gmra.mxu0 %v3590
        %v4901 = vpop.f32.mrf.mxu0
        %v4902 = vadd.f32 %v4813, %v4901
        %v4903 = vpop.f32.mrf.mxu0
        %v4904 = vadd.f32 %v4815, %v4903
        %4905 = vdwg.mxu0
        %4906 = vmatpush.bf16.msra.mxu0 %v4209
        %4907 = vmatpush.bf16.msra.mxu0 %v4205
        %4908 = vmatpush.bf16.msra.mxu0 %v4201
        %4909 = vmatpush.bf16.msra.mxu0 %v4197
        %4910 = vmatpush.bf16.msra.mxu0 %v4193
        %4911 = vmatpush.bf16.msra.mxu0 %v4189
        %4912 = vmatpush.bf16.msra.mxu0 %v4185
        %4913 = vmatpush.bf16.msra.mxu0 %v4181
        %4914 = vmatmul.bf16.gmra.mxu0 %v3531
        %v4915 = vpop.f32.mrf.mxu0
        %v4916 = vadd.f32 %v4827, %v4915
        %v4917 = vpop.f32.mrf.mxu0
        %v4918 = vadd.f32 %v4829, %v4917
        %4919 = vmatmul.bf16.gmra.mxu0 %v3535
        %v4920 = vpop.f32.mrf.mxu0
        %v4921 = vadd.f32 %v4832, %v4920
        %v4922 = vpop.f32.mrf.mxu0
        %v4923 = vadd.f32 %v4834, %v4922
        %4924 = vmatmul.bf16.gmra.mxu0 %v3539
        %v4925 = vpop.f32.mrf.mxu0
        %v4926 = vadd.f32 %v4837, %v4925
        %v4927 = vpop.f32.mrf.mxu0
        %v4928 = vadd.f32 %v4839, %v4927
        %4929 = vmatmul.bf16.gmra.mxu0 %v3543
        %v4930 = vpop.f32.mrf.mxu0
        %v4931 = vadd.f32 %v4842, %v4930
        %v4932 = vpop.f32.mrf.mxu0
        %v4933 = vadd.f32 %v4844, %v4932
        %4934 = vmatmul.bf16.gmra.mxu0 %v3547
        %v4935 = vpop.f32.mrf.mxu0
        %v4936 = vadd.f32 %v4847, %v4935
        %v4937 = vpop.f32.mrf.mxu0
        %v4938 = vadd.f32 %v4849, %v4937
        %4939 = vmatmul.bf16.gmra.mxu0 %v3551
        %v4940 = vpop.f32.mrf.mxu0
        %v4941 = vadd.f32 %v4852, %v4940
        %v4942 = vpop.f32.mrf.mxu0
        %v4943 = vadd.f32 %v4854, %v4942
        %4944 = vmatmul.bf16.gmra.mxu0 %v3555
        %v4945 = vpop.f32.mrf.mxu0
        %v4946 = vadd.f32 %v4857, %v4945
        %v4947 = vpop.f32.mrf.mxu0
        %v4948 = vadd.f32 %v4859, %v4947
        %4949 = vmatmul.bf16.gmra.mxu0 %v3559
        %v4950 = vpop.f32.mrf.mxu0
        %v4951 = vadd.f32 %v4862, %v4950
        %v4952 = vpop.f32.mrf.mxu0
        %v4953 = vadd.f32 %v4864, %v4952
        %4954 = vmatmul.bf16.gmra.mxu0 %v3563
        %v4955 = vpop.f32.mrf.mxu0
        %v4956 = vadd.f32 %v4867, %v4955
        %v4957 = vpop.f32.mrf.mxu0
        %v4958 = vadd.f32 %v4869, %v4957
        %4959 = vmatmul.bf16.gmra.mxu0 %v3567
        %v4960 = vpop.f32.mrf.mxu0
        %v4961 = vadd.f32 %v4872, %v4960
        %v4962 = vpop.f32.mrf.mxu0
        %v4963 = vadd.f32 %v4874, %v4962
        %4964 = vmatmul.bf16.gmra.mxu0 %v3571
        %v4965 = vpop.f32.mrf.mxu0
        %v4966 = vadd.f32 %v4877, %v4965
        %v4967 = vpop.f32.mrf.mxu0
        %v4968 = vadd.f32 %v4879, %v4967
        %4969 = vmatmul.bf16.gmra.mxu0 %v3575
        %v4970 = vpop.f32.mrf.mxu0
        %v4971 = vadd.f32 %v4882, %v4970
        %v4972 = vpop.f32.mrf.mxu0
        %v4973 = vadd.f32 %v4884, %v4972
        %4974 = vmatmul.bf16.gmra.mxu0 %v3579
        %v4975 = vpop.f32.mrf.mxu0
        %v4976 = vadd.f32 %v4887, %v4975
        %v4977 = vpop.f32.mrf.mxu0
        %v4978 = vadd.f32 %v4889, %v4977
        %4979 = vmatmul.bf16.gmra.mxu0 %v3583
        %v4980 = vpop.f32.mrf.mxu0
        %v4981 = vadd.f32 %v4892, %v4980
        %v4982 = vpop.f32.mrf.mxu0
        %v4983 = vadd.f32 %v4894, %v4982
        %4984 = vmatmul.bf16.gmra.mxu0 %v3587
        %v4985 = vpop.f32.mrf.mxu0
        %v4986 = vadd.f32 %v4897, %v4985
        %v4987 = vpop.f32.mrf.mxu0
        %v4988 = vadd.f32 %v4899, %v4987
        %4989 = vmatmul.bf16.gmra.mxu0 %v3591
        %v4990 = vpop.f32.mrf.mxu0
        %v4991 = vadd.f32 %v4902, %v4990
        %v4992 = vpop.f32.mrf.mxu0
        %v4993 = vadd.f32 %v4904, %v4992
        %4994 = vdwg.mxu0
        %4995 = vmatpush.bf16.msra.mxu0 %v4241
        %4996 = vmatpush.bf16.msra.mxu0 %v4237
        %4997 = vmatpush.bf16.msra.mxu0 %v4233
        %4998 = vmatpush.bf16.msra.mxu0 %v4229
        %4999 = vmatpush.bf16.msra.mxu0 %v4225
        %5000 = vmatpush.bf16.msra.mxu0 %v4221
        %5001 = vmatpush.bf16.msra.mxu0 %v4217
        %5002 = vmatpush.bf16.msra.mxu0 %v4213
        %5003 = vmatmul.bf16.gmra.mxu0 %v3532
        %v5004 = vpop.f32.mrf.mxu0
        %v5005 = vadd.f32 %v4916, %v5004
        %v5006 = vpop.f32.mrf.mxu0
        %v5007 = vadd.f32 %v4918, %v5006
        %5008 = vmatmul.bf16.gmra.mxu0 %v3536
        %v5009 = vpop.f32.mrf.mxu0
        %v5010 = vadd.f32 %v4921, %v5009
        %v5011 = vpop.f32.mrf.mxu0
        %v5012 = vadd.f32 %v4923, %v5011
        %5013 = vmatmul.bf16.gmra.mxu0 %v3540
        %v5014 = vpop.f32.mrf.mxu0
        %v5015 = vadd.f32 %v4926, %v5014
        %v5016 = vpop.f32.mrf.mxu0
        %v5017 = vadd.f32 %v4928, %v5016
        %5018 = vmatmul.bf16.gmra.mxu0 %v3544
        %v5019 = vpop.f32.mrf.mxu0
        %v5020 = vadd.f32 %v4931, %v5019
        %v5021 = vpop.f32.mrf.mxu0
        %v5022 = vadd.f32 %v4933, %v5021
        %5023 = vmatmul.bf16.gmra.mxu0 %v3548
        %v5024 = vpop.f32.mrf.mxu0
        %v5025 = vadd.f32 %v4936, %v5024
        %v5026 = vpop.f32.mrf.mxu0
        %v5027 = vadd.f32 %v4938, %v5026
        %5028 = vmatmul.bf16.gmra.mxu0 %v3552
        %v5029 = vpop.f32.mrf.mxu0
        %v5030 = vadd.f32 %v4941, %v5029
        %v5031 = vpop.f32.mrf.mxu0
        %v5032 = vadd.f32 %v4943, %v5031
        %5033 = vmatmul.bf16.gmra.mxu0 %v3556
        %v5034 = vpop.f32.mrf.mxu0
        %v5035 = vadd.f32 %v4946, %v5034
        %v5036 = vpop.f32.mrf.mxu0
        %v5037 = vadd.f32 %v4948, %v5036
        %5038 = vmatmul.bf16.gmra.mxu0 %v3560
        %v5039 = vpop.f32.mrf.mxu0
        %v5040 = vadd.f32 %v4951, %v5039
        %v5041 = vpop.f32.mrf.mxu0
        %v5042 = vadd.f32 %v4953, %v5041
        %5043 = vmatmul.bf16.gmra.mxu0 %v3564
        %v5044 = vpop.f32.mrf.mxu0
        %v5045 = vadd.f32 %v4956, %v5044
        %v5046 = vpop.f32.mrf.mxu0
        %v5047 = vadd.f32 %v4958, %v5046
        %5048 = vmatmul.bf16.gmra.mxu0 %v3568
        %v5049 = vpop.f32.mrf.mxu0
        %v5050 = vadd.f32 %v4961, %v5049
        %v5051 = vpop.f32.mrf.mxu0
        %v5052 = vadd.f32 %v4963, %v5051
        %5053 = vmatmul.bf16.gmra.mxu0 %v3572
        %v5054 = vpop.f32.mrf.mxu0
        %v5055 = vadd.f32 %v4966, %v5054
        %v5056 = vpop.f32.mrf.mxu0
        %v5057 = vadd.f32 %v4968, %v5056
        %5058 = vmatmul.bf16.gmra.mxu0 %v3576
        %v5059 = vpop.f32.mrf.mxu0
        %v5060 = vadd.f32 %v4971, %v5059
        %v5061 = vpop.f32.mrf.mxu0
        %v5062 = vadd.f32 %v4973, %v5061
        %5063 = vmatmul.bf16.gmra.mxu0 %v3580
        %v5064 = vpop.f32.mrf.mxu0
        %v5065 = vadd.f32 %v4976, %v5064
        %v5066 = vpop.f32.mrf.mxu0
        %v5067 = vadd.f32 %v4978, %v5066
        %5068 = vmatmul.bf16.gmra.mxu0 %v3584
        %v5069 = vpop.f32.mrf.mxu0
        %v5070 = vadd.f32 %v4981, %v5069
        %v5071 = vpop.f32.mrf.mxu0
        %v5072 = vadd.f32 %v4983, %v5071
        %5073 = vmatmul.bf16.gmra.mxu0 %v3588
        %v5074 = vpop.f32.mrf.mxu0
        %v5075 = vadd.f32 %v4986, %v5074
        %v5076 = vpop.f32.mrf.mxu0
        %v5077 = vadd.f32 %v4988, %v5076
        %5078 = vmatmul.bf16.gmra.mxu0 %v3592
        %v5079 = vpop.f32.mrf.mxu0
        %v5080 = vadd.f32 %v4991, %v5079
        %v5081 = vpop.f32.mrf.mxu0
        %v5082 = vadd.f32 %v4993, %v5081
        %5083 = vdwg.mxu0
        %5084 = vmatpush.bf16.msra.mxu0 %v4146
        %5085 = vmatpush.bf16.msra.mxu0 %v4142
        %5086 = vmatpush.bf16.msra.mxu0 %v4138
        %5087 = vmatpush.bf16.msra.mxu0 %v4134
        %5088 = vmatpush.bf16.msra.mxu0 %v4130
        %5089 = vmatpush.bf16.msra.mxu0 %v4126
        %5090 = vmatpush.bf16.msra.mxu0 %v4122
        %5091 = vmatpush.bf16.msra.mxu0 %v4118
        %5092 = vmatmul.bf16.gmra.mxu0 %v3529
        %v5093 = vpop.f32.mrf.mxu0
        %v5094 = vadd.f32 %v3726, %v5093
        %v5095 = vpop.f32.mrf.mxu0
        %v5096 = vadd.f32 %v3726, %v5095
        %5097 = vmatmul.bf16.gmra.mxu0 %v3533
        %v5098 = vpop.f32.mrf.mxu0
        %v5099 = vadd.f32 %v3726, %v5098
        %v5100 = vpop.f32.mrf.mxu0
        %v5101 = vadd.f32 %v3726, %v5100
        %5102 = vmatmul.bf16.gmra.mxu0 %v3537
        %v5103 = vpop.f32.mrf.mxu0
        %v5104 = vadd.f32 %v3726, %v5103
        %v5105 = vpop.f32.mrf.mxu0
        %v5106 = vadd.f32 %v3726, %v5105
        %5107 = vmatmul.bf16.gmra.mxu0 %v3541
        %v5108 = vpop.f32.mrf.mxu0
        %v5109 = vadd.f32 %v3726, %v5108
        %v5110 = vpop.f32.mrf.mxu0
        %v5111 = vadd.f32 %v3726, %v5110
        %5112 = vmatmul.bf16.gmra.mxu0 %v3545
        %v5113 = vpop.f32.mrf.mxu0
        %v5114 = vadd.f32 %v3726, %v5113
        %v5115 = vpop.f32.mrf.mxu0
        %v5116 = vadd.f32 %v3726, %v5115
        %5117 = vmatmul.bf16.gmra.mxu0 %v3549
        %v5118 = vpop.f32.mrf.mxu0
        %v5119 = vadd.f32 %v3726, %v5118
        %v5120 = vpop.f32.mrf.mxu0
        %v5121 = vadd.f32 %v3726, %v5120
        %5122 = vmatmul.bf16.gmra.mxu0 %v3553
        %v5123 = vpop.f32.mrf.mxu0
        %v5124 = vadd.f32 %v3726, %v5123
        %v5125 = vpop.f32.mrf.mxu0
        %v5126 = vadd.f32 %v3726, %v5125
        %5127 = vmatmul.bf16.gmra.mxu0 %v3557
        %v5128 = vpop.f32.mrf.mxu0
        %v5129 = vadd.f32 %v3726, %v5128
        %v5130 = vpop.f32.mrf.mxu0
        %v5131 = vadd.f32 %v3726, %v5130
        %5132 = vmatmul.bf16.gmra.mxu0 %v3561
        %v5133 = vpop.f32.mrf.mxu0
        %v5134 = vadd.f32 %v3726, %v5133
        %v5135 = vpop.f32.mrf.mxu0
        %v5136 = vadd.f32 %v3726, %v5135
        %5137 = vmatmul.bf16.gmra.mxu0 %v3565
        %v5138 = vpop.f32.mrf.mxu0
        %v5139 = vadd.f32 %v3726, %v5138
        %v5140 = vpop.f32.mrf.mxu0
        %v5141 = vadd.f32 %v3726, %v5140
        %5142 = vmatmul.bf16.gmra.mxu0 %v3569
        %v5143 = vpop.f32.mrf.mxu0
        %v5144 = vadd.f32 %v3726, %v5143
        %v5145 = vpop.f32.mrf.mxu0
        %v5146 = vadd.f32 %v3726, %v5145
        %5147 = vmatmul.bf16.gmra.mxu0 %v3573
        %v5148 = vpop.f32.mrf.mxu0
        %v5149 = vadd.f32 %v3726, %v5148
        %v5150 = vpop.f32.mrf.mxu0
        %v5151 = vadd.f32 %v3726, %v5150
        %5152 = vmatmul.bf16.gmra.mxu0 %v3577
        %v5153 = vpop.f32.mrf.mxu0
        %v5154 = vadd.f32 %v3726, %v5153
        %v5155 = vpop.f32.mrf.mxu0
        %v5156 = vadd.f32 %v3726, %v5155
        %5157 = vmatmul.bf16.gmra.mxu0 %v3581
        %v5158 = vpop.f32.mrf.mxu0
        %v5159 = vadd.f32 %v3726, %v5158
        %v5160 = vpop.f32.mrf.mxu0
        %v5161 = vadd.f32 %v3726, %v5160
        %5162 = vmatmul.bf16.gmra.mxu0 %v3585
        %v5163 = vpop.f32.mrf.mxu0
        %v5164 = vadd.f32 %v3726, %v5163
        %v5165 = vpop.f32.mrf.mxu0
        %v5166 = vadd.f32 %v3726, %v5165
        %5167 = vmatmul.bf16.gmra.mxu0 %v3589
        %v5168 = vpop.f32.mrf.mxu0
        %v5169 = vadd.f32 %v3726, %v5168
        %v5170 = vpop.f32.mrf.mxu0
        %v5171 = vadd.f32 %v3726, %v5170
        %5172 = vdwg.mxu0
        %5173 = vmatpush.bf16.msra.mxu0 %v4178
        %5174 = vmatpush.bf16.msra.mxu0 %v4174
        %5175 = vmatpush.bf16.msra.mxu0 %v4170
        %5176 = vmatpush.bf16.msra.mxu0 %v4166
        %5177 = vmatpush.bf16.msra.mxu0 %v4162
        %5178 = vmatpush.bf16.msra.mxu0 %v4158
        %5179 = vmatpush.bf16.msra.mxu0 %v4154
        %5180 = vmatpush.bf16.msra.mxu0 %v4150
        %5181 = vmatmul.bf16.gmra.mxu0 %v3530
        %v5182 = vpop.f32.mrf.mxu0
        %v5183 = vadd.f32 %v5094, %v5182
        %v5184 = vpop.f32.mrf.mxu0
        %v5185 = vadd.f32 %v5096, %v5184
        %5186 = vmatmul.bf16.gmra.mxu0 %v3534
        %v5187 = vpop.f32.mrf.mxu0
        %v5188 = vadd.f32 %v5099, %v5187
        %v5189 = vpop.f32.mrf.mxu0
        %v5190 = vadd.f32 %v5101, %v5189
        %5191 = vmatmul.bf16.gmra.mxu0 %v3538
        %v5192 = vpop.f32.mrf.mxu0
        %v5193 = vadd.f32 %v5104, %v5192
        %v5194 = vpop.f32.mrf.mxu0
        %v5195 = vadd.f32 %v5106, %v5194
        %5196 = vmatmul.bf16.gmra.mxu0 %v3542
        %v5197 = vpop.f32.mrf.mxu0
        %v5198 = vadd.f32 %v5109, %v5197
        %v5199 = vpop.f32.mrf.mxu0
        %v5200 = vadd.f32 %v5111, %v5199
        %5201 = vmatmul.bf16.gmra.mxu0 %v3546
        %v5202 = vpop.f32.mrf.mxu0
        %v5203 = vadd.f32 %v5114, %v5202
        %v5204 = vpop.f32.mrf.mxu0
        %v5205 = vadd.f32 %v5116, %v5204
        %5206 = vmatmul.bf16.gmra.mxu0 %v3550
        %v5207 = vpop.f32.mrf.mxu0
        %v5208 = vadd.f32 %v5119, %v5207
        %v5209 = vpop.f32.mrf.mxu0
        %v5210 = vadd.f32 %v5121, %v5209
        %5211 = vmatmul.bf16.gmra.mxu0 %v3554
        %v5212 = vpop.f32.mrf.mxu0
        %v5213 = vadd.f32 %v5124, %v5212
        %v5214 = vpop.f32.mrf.mxu0
        %v5215 = vadd.f32 %v5126, %v5214
        %5216 = vmatmul.bf16.gmra.mxu0 %v3558
        %v5217 = vpop.f32.mrf.mxu0
        %v5218 = vadd.f32 %v5129, %v5217
        %v5219 = vpop.f32.mrf.mxu0
        %v5220 = vadd.f32 %v5131, %v5219
        %5221 = vmatmul.bf16.gmra.mxu0 %v3562
        %v5222 = vpop.f32.mrf.mxu0
        %v5223 = vadd.f32 %v5134, %v5222
        %v5224 = vpop.f32.mrf.mxu0
        %v5225 = vadd.f32 %v5136, %v5224
        %5226 = vmatmul.bf16.gmra.mxu0 %v3566
        %v5227 = vpop.f32.mrf.mxu0
        %v5228 = vadd.f32 %v5139, %v5227
        %v5229 = vpop.f32.mrf.mxu0
        %v5230 = vadd.f32 %v5141, %v5229
        %5231 = vmatmul.bf16.gmra.mxu0 %v3570
        %v5232 = vpop.f32.mrf.mxu0
        %v5233 = vadd.f32 %v5144, %v5232
        %v5234 = vpop.f32.mrf.mxu0
        %v5235 = vadd.f32 %v5146, %v5234
        %5236 = vmatmul.bf16.gmra.mxu0 %v3574
        %v5237 = vpop.f32.mrf.mxu0
        %v5238 = vadd.f32 %v5149, %v5237
        %v5239 = vpop.f32.mrf.mxu0
        %v5240 = vadd.f32 %v5151, %v5239
        %5241 = vmatmul.bf16.gmra.mxu0 %v3578
        %v5242 = vpop.f32.mrf.mxu0
        %v5243 = vadd.f32 %v5154, %v5242
        %v5244 = vpop.f32.mrf.mxu0
        %v5245 = vadd.f32 %v5156, %v5244
        %5246 = vmatmul.bf16.gmra.mxu0 %v3582
        %v5247 = vpop.f32.mrf.mxu0
        %v5248 = vadd.f32 %v5159, %v5247
        %v5249 = vpop.f32.mrf.mxu0
        %v5250 = vadd.f32 %v5161, %v5249
        %5251 = vmatmul.bf16.gmra.mxu0 %v3586
        %v5252 = vpop.f32.mrf.mxu0
        %v5253 = vadd.f32 %v5164, %v5252
        %v5254 = vpop.f32.mrf.mxu0
        %v5255 = vadd.f32 %v5166, %v5254
        %5256 = vmatmul.bf16.gmra.mxu0 %v3590
        %v5257 = vpop.f32.mrf.mxu0
        %v5258 = vadd.f32 %v5169, %v5257
        %v5259 = vpop.f32.mrf.mxu0
        %v5260 = vadd.f32 %v5171, %v5259
        %5261 = vdwg.mxu0
        %5262 = vmatpush.bf16.msra.mxu0 %v4210
        %5263 = vmatpush.bf16.msra.mxu0 %v4206
        %5264 = vmatpush.bf16.msra.mxu0 %v4202
        %5265 = vmatpush.bf16.msra.mxu0 %v4198
        %5266 = vmatpush.bf16.msra.mxu0 %v4194
        %5267 = vmatpush.bf16.msra.mxu0 %v4190
        %5268 = vmatpush.bf16.msra.mxu0 %v4186
        %5269 = vmatpush.bf16.msra.mxu0 %v4182
        %5270 = vmatmul.bf16.gmra.mxu0 %v3531
        %v5271 = vpop.f32.mrf.mxu0
        %v5272 = vadd.f32 %v5183, %v5271
        %v5273 = vpop.f32.mrf.mxu0
        %v5274 = vadd.f32 %v5185, %v5273
        %5275 = vmatmul.bf16.gmra.mxu0 %v3535
        %v5276 = vpop.f32.mrf.mxu0
        %v5277 = vadd.f32 %v5188, %v5276
        %v5278 = vpop.f32.mrf.mxu0
        %v5279 = vadd.f32 %v5190, %v5278
        %5280 = vmatmul.bf16.gmra.mxu0 %v3539
        %v5281 = vpop.f32.mrf.mxu0
        %v5282 = vadd.f32 %v5193, %v5281
        %v5283 = vpop.f32.mrf.mxu0
        %v5284 = vadd.f32 %v5195, %v5283
        %5285 = vmatmul.bf16.gmra.mxu0 %v3543
        %v5286 = vpop.f32.mrf.mxu0
        %v5287 = vadd.f32 %v5198, %v5286
        %v5288 = vpop.f32.mrf.mxu0
        %v5289 = vadd.f32 %v5200, %v5288
        %5290 = vmatmul.bf16.gmra.mxu0 %v3547
        %v5291 = vpop.f32.mrf.mxu0
        %v5292 = vadd.f32 %v5203, %v5291
        %v5293 = vpop.f32.mrf.mxu0
        %v5294 = vadd.f32 %v5205, %v5293
        %5295 = vmatmul.bf16.gmra.mxu0 %v3551
        %v5296 = vpop.f32.mrf.mxu0
        %v5297 = vadd.f32 %v5208, %v5296
        %v5298 = vpop.f32.mrf.mxu0
        %v5299 = vadd.f32 %v5210, %v5298
        %5300 = vmatmul.bf16.gmra.mxu0 %v3555
        %v5301 = vpop.f32.mrf.mxu0
        %v5302 = vadd.f32 %v5213, %v5301
        %v5303 = vpop.f32.mrf.mxu0
        %v5304 = vadd.f32 %v5215, %v5303
        %5305 = vmatmul.bf16.gmra.mxu0 %v3559
        %v5306 = vpop.f32.mrf.mxu0
        %v5307 = vadd.f32 %v5218, %v5306
        %v5308 = vpop.f32.mrf.mxu0
        %v5309 = vadd.f32 %v5220, %v5308
        %5310 = vmatmul.bf16.gmra.mxu0 %v3563
        %v5311 = vpop.f32.mrf.mxu0
        %v5312 = vadd.f32 %v5223, %v5311
        %v5313 = vpop.f32.mrf.mxu0
        %v5314 = vadd.f32 %v5225, %v5313
        %5315 = vmatmul.bf16.gmra.mxu0 %v3567
        %v5316 = vpop.f32.mrf.mxu0
        %v5317 = vadd.f32 %v5228, %v5316
        %v5318 = vpop.f32.mrf.mxu0
        %v5319 = vadd.f32 %v5230, %v5318
        %5320 = vmatmul.bf16.gmra.mxu0 %v3571
        %v5321 = vpop.f32.mrf.mxu0
        %v5322 = vadd.f32 %v5233, %v5321
        %v5323 = vpop.f32.mrf.mxu0
        %v5324 = vadd.f32 %v5235, %v5323
        %5325 = vmatmul.bf16.gmra.mxu0 %v3575
        %v5326 = vpop.f32.mrf.mxu0
        %v5327 = vadd.f32 %v5238, %v5326
        %v5328 = vpop.f32.mrf.mxu0
        %v5329 = vadd.f32 %v5240, %v5328
        %5330 = vmatmul.bf16.gmra.mxu0 %v3579
        %v5331 = vpop.f32.mrf.mxu0
        %v5332 = vadd.f32 %v5243, %v5331
        %v5333 = vpop.f32.mrf.mxu0
        %v5334 = vadd.f32 %v5245, %v5333
        %5335 = vmatmul.bf16.gmra.mxu0 %v3583
        %v5336 = vpop.f32.mrf.mxu0
        %v5337 = vadd.f32 %v5248, %v5336
        %v5338 = vpop.f32.mrf.mxu0
        %v5339 = vadd.f32 %v5250, %v5338
        %5340 = vmatmul.bf16.gmra.mxu0 %v3587
        %v5341 = vpop.f32.mrf.mxu0
        %v5342 = vadd.f32 %v5253, %v5341
        %v5343 = vpop.f32.mrf.mxu0
        %v5344 = vadd.f32 %v5255, %v5343
        %5345 = vmatmul.bf16.gmra.mxu0 %v3591
        %v5346 = vpop.f32.mrf.mxu0
        %v5347 = vadd.f32 %v5258, %v5346
        %v5348 = vpop.f32.mrf.mxu0
        %v5349 = vadd.f32 %v5260, %v5348
        %5350 = vdwg.mxu0
        %5351 = vmatpush.bf16.msra.mxu0 %v4242
        %5352 = vmatpush.bf16.msra.mxu0 %v4238
        %5353 = vmatpush.bf16.msra.mxu0 %v4234
        %5354 = vmatpush.bf16.msra.mxu0 %v4230
        %5355 = vmatpush.bf16.msra.mxu0 %v4226
        %5356 = vmatpush.bf16.msra.mxu0 %v4222
        %5357 = vmatpush.bf16.msra.mxu0 %v4218
        %5358 = vmatpush.bf16.msra.mxu0 %v4214
        %5359 = vmatmul.bf16.gmra.mxu0 %v3532
        %v5360 = vpop.f32.mrf.mxu0
        %v5361 = vadd.f32 %v5272, %v5360
        %v5362 = vpop.f32.mrf.mxu0
        %v5363 = vadd.f32 %v5274, %v5362
        %5364 = vmatmul.bf16.gmra.mxu0 %v3536
        %v5365 = vpop.f32.mrf.mxu0
        %v5366 = vadd.f32 %v5277, %v5365
        %v5367 = vpop.f32.mrf.mxu0
        %v5368 = vadd.f32 %v5279, %v5367
        %5369 = vmatmul.bf16.gmra.mxu0 %v3540
        %v5370 = vpop.f32.mrf.mxu0
        %v5371 = vadd.f32 %v5282, %v5370
        %v5372 = vpop.f32.mrf.mxu0
        %v5373 = vadd.f32 %v5284, %v5372
        %5374 = vmatmul.bf16.gmra.mxu0 %v3544
        %v5375 = vpop.f32.mrf.mxu0
        %v5376 = vadd.f32 %v5287, %v5375
        %v5377 = vpop.f32.mrf.mxu0
        %v5378 = vadd.f32 %v5289, %v5377
        %5379 = vmatmul.bf16.gmra.mxu0 %v3548
        %v5380 = vpop.f32.mrf.mxu0
        %v5381 = vadd.f32 %v5292, %v5380
        %v5382 = vpop.f32.mrf.mxu0
        %v5383 = vadd.f32 %v5294, %v5382
        %5384 = vmatmul.bf16.gmra.mxu0 %v3552
        %v5385 = vpop.f32.mrf.mxu0
        %v5386 = vadd.f32 %v5297, %v5385
        %v5387 = vpop.f32.mrf.mxu0
        %v5388 = vadd.f32 %v5299, %v5387
        %5389 = vmatmul.bf16.gmra.mxu0 %v3556
        %v5390 = vpop.f32.mrf.mxu0
        %v5391 = vadd.f32 %v5302, %v5390
        %v5392 = vpop.f32.mrf.mxu0
        %v5393 = vadd.f32 %v5304, %v5392
        %5394 = vmatmul.bf16.gmra.mxu0 %v3560
        %v5395 = vpop.f32.mrf.mxu0
        %v5396 = vadd.f32 %v5307, %v5395
        %v5397 = vpop.f32.mrf.mxu0
        %v5398 = vadd.f32 %v5309, %v5397
        %5399 = vmatmul.bf16.gmra.mxu0 %v3564
        %v5400 = vpop.f32.mrf.mxu0
        %v5401 = vadd.f32 %v5312, %v5400
        %v5402 = vpop.f32.mrf.mxu0
        %v5403 = vadd.f32 %v5314, %v5402
        %5404 = vmatmul.bf16.gmra.mxu0 %v3568
        %v5405 = vpop.f32.mrf.mxu0
        %v5406 = vadd.f32 %v5317, %v5405
        %v5407 = vpop.f32.mrf.mxu0
        %v5408 = vadd.f32 %v5319, %v5407
        %5409 = vmatmul.bf16.gmra.mxu0 %v3572
        %v5410 = vpop.f32.mrf.mxu0
        %v5411 = vadd.f32 %v5322, %v5410
        %v5412 = vpop.f32.mrf.mxu0
        %v5413 = vadd.f32 %v5324, %v5412
        %5414 = vmatmul.bf16.gmra.mxu0 %v3576
        %v5415 = vpop.f32.mrf.mxu0
        %v5416 = vadd.f32 %v5327, %v5415
        %v5417 = vpop.f32.mrf.mxu0
        %v5418 = vadd.f32 %v5329, %v5417
        %5419 = vmatmul.bf16.gmra.mxu0 %v3580
        %v5420 = vpop.f32.mrf.mxu0
        %v5421 = vadd.f32 %v5332, %v5420
        %v5422 = vpop.f32.mrf.mxu0
        %v5423 = vadd.f32 %v5334, %v5422
        %5424 = vmatmul.bf16.gmra.mxu0 %v3584
        %v5425 = vpop.f32.mrf.mxu0
        %v5426 = vadd.f32 %v5337, %v5425
        %v5427 = vpop.f32.mrf.mxu0
        %v5428 = vadd.f32 %v5339, %v5427
        %5429 = vmatmul.bf16.gmra.mxu0 %v3588
        %v5430 = vpop.f32.mrf.mxu0
        %v5431 = vadd.f32 %v5342, %v5430
        %v5432 = vpop.f32.mrf.mxu0
        %v5433 = vadd.f32 %v5344, %v5432
        %5434 = vmatmul.bf16.gmra.mxu0 %v3592
        %v5435 = vpop.f32.mrf.mxu0
        %v5436 = vadd.f32 %v5347, %v5435
        %v5437 = vpop.f32.mrf.mxu0
        %v5438 = vadd.f32 %v5349, %v5437
        %5439 = vdwg.mxu0
        %5440 = vmatpush.bf16.msra.mxu0 %v4147
        %5441 = vmatpush.bf16.msra.mxu0 %v4143
        %5442 = vmatpush.bf16.msra.mxu0 %v4139
        %5443 = vmatpush.bf16.msra.mxu0 %v4135
        %5444 = vmatpush.bf16.msra.mxu0 %v4131
        %5445 = vmatpush.bf16.msra.mxu0 %v4127
        %5446 = vmatpush.bf16.msra.mxu0 %v4123
        %5447 = vmatpush.bf16.msra.mxu0 %v4119
        %5448 = vmatmul.bf16.gmra.mxu0 %v3529
        %v5449 = vpop.f32.mrf.mxu0
        %v5450 = vadd.f32 %v3727, %v5449
        %v5451 = vpop.f32.mrf.mxu0
        %v5452 = vadd.f32 %v3727, %v5451
        %5453 = vmatmul.bf16.gmra.mxu0 %v3533
        %v5454 = vpop.f32.mrf.mxu0
        %v5455 = vadd.f32 %v3727, %v5454
        %v5456 = vpop.f32.mrf.mxu0
        %v5457 = vadd.f32 %v3727, %v5456
        %5458 = vmatmul.bf16.gmra.mxu0 %v3537
        %v5459 = vpop.f32.mrf.mxu0
        %v5460 = vadd.f32 %v3727, %v5459
        %v5461 = vpop.f32.mrf.mxu0
        %v5462 = vadd.f32 %v3727, %v5461
        %5463 = vmatmul.bf16.gmra.mxu0 %v3541
        %v5464 = vpop.f32.mrf.mxu0
        %v5465 = vadd.f32 %v3727, %v5464
        %v5466 = vpop.f32.mrf.mxu0
        %v5467 = vadd.f32 %v3727, %v5466
        %5468 = vmatmul.bf16.gmra.mxu0 %v3545
        %v5469 = vpop.f32.mrf.mxu0
        %v5470 = vadd.f32 %v3727, %v5469
        %v5471 = vpop.f32.mrf.mxu0
        %v5472 = vadd.f32 %v3727, %v5471
        %5473 = vmatmul.bf16.gmra.mxu0 %v3549
        %v5474 = vpop.f32.mrf.mxu0
        %v5475 = vadd.f32 %v3727, %v5474
        %v5476 = vpop.f32.mrf.mxu0
        %v5477 = vadd.f32 %v3727, %v5476
        %5478 = vmatmul.bf16.gmra.mxu0 %v3553
        %v5479 = vpop.f32.mrf.mxu0
        %v5480 = vadd.f32 %v3727, %v5479
        %v5481 = vpop.f32.mrf.mxu0
        %v5482 = vadd.f32 %v3727, %v5481
        %5483 = vmatmul.bf16.gmra.mxu0 %v3557
        %v5484 = vpop.f32.mrf.mxu0
        %v5485 = vadd.f32 %v3727, %v5484
        %v5486 = vpop.f32.mrf.mxu0
        %v5487 = vadd.f32 %v3727, %v5486
        %5488 = vmatmul.bf16.gmra.mxu0 %v3561
        %v5489 = vpop.f32.mrf.mxu0
        %v5490 = vadd.f32 %v3727, %v5489
        %v5491 = vpop.f32.mrf.mxu0
        %v5492 = vadd.f32 %v3727, %v5491
        %5493 = vmatmul.bf16.gmra.mxu0 %v3565
        %v5494 = vpop.f32.mrf.mxu0
        %v5495 = vadd.f32 %v3727, %v5494
        %v5496 = vpop.f32.mrf.mxu0
        %v5497 = vadd.f32 %v3727, %v5496
        %5498 = vmatmul.bf16.gmra.mxu0 %v3569
        %v5499 = vpop.f32.mrf.mxu0
        %v5500 = vadd.f32 %v3727, %v5499
        %v5501 = vpop.f32.mrf.mxu0
        %v5502 = vadd.f32 %v3727, %v5501
        %5503 = vmatmul.bf16.gmra.mxu0 %v3573
        %v5504 = vpop.f32.mrf.mxu0
        %v5505 = vadd.f32 %v3727, %v5504
        %v5506 = vpop.f32.mrf.mxu0
        %v5507 = vadd.f32 %v3727, %v5506
        %5508 = vmatmul.bf16.gmra.mxu0 %v3577
        %v5509 = vpop.f32.mrf.mxu0
        %v5510 = vadd.f32 %v3727, %v5509
        %v5511 = vpop.f32.mrf.mxu0
        %v5512 = vadd.f32 %v3727, %v5511
        %5513 = vmatmul.bf16.gmra.mxu0 %v3581
        %v5514 = vpop.f32.mrf.mxu0
        %v5515 = vadd.f32 %v3727, %v5514
        %v5516 = vpop.f32.mrf.mxu0
        %v5517 = vadd.f32 %v3727, %v5516
        %5518 = vmatmul.bf16.gmra.mxu0 %v3585
        %v5519 = vpop.f32.mrf.mxu0
        %v5520 = vadd.f32 %v3727, %v5519
        %v5521 = vpop.f32.mrf.mxu0
        %v5522 = vadd.f32 %v3727, %v5521
        %5523 = vmatmul.bf16.gmra.mxu0 %v3589
        %v5524 = vpop.f32.mrf.mxu0
        %v5525 = vadd.f32 %v3727, %v5524
        %v5526 = vpop.f32.mrf.mxu0
        %v5527 = vadd.f32 %v3727, %v5526
        %5528 = vdwg.mxu0
        %5529 = vmatpush.bf16.msra.mxu0 %v4179
        %5530 = vmatpush.bf16.msra.mxu0 %v4175
        %5531 = vmatpush.bf16.msra.mxu0 %v4171
        %5532 = vmatpush.bf16.msra.mxu0 %v4167
        %5533 = vmatpush.bf16.msra.mxu0 %v4163
        %5534 = vmatpush.bf16.msra.mxu0 %v4159
        %5535 = vmatpush.bf16.msra.mxu0 %v4155
        %5536 = vmatpush.bf16.msra.mxu0 %v4151
        %5537 = vmatmul.bf16.gmra.mxu0 %v3530
        %v5538 = vpop.f32.mrf.mxu0
        %v5539 = vadd.f32 %v5450, %v5538
        %v5540 = vpop.f32.mrf.mxu0
        %v5541 = vadd.f32 %v5452, %v5540
        %5542 = vmatmul.bf16.gmra.mxu0 %v3534
        %v5543 = vpop.f32.mrf.mxu0
        %v5544 = vadd.f32 %v5455, %v5543
        %v5545 = vpop.f32.mrf.mxu0
        %v5546 = vadd.f32 %v5457, %v5545
        %5547 = vmatmul.bf16.gmra.mxu0 %v3538
        %v5548 = vpop.f32.mrf.mxu0
        %v5549 = vadd.f32 %v5460, %v5548
        %v5550 = vpop.f32.mrf.mxu0
        %v5551 = vadd.f32 %v5462, %v5550
        %5552 = vmatmul.bf16.gmra.mxu0 %v3542
        %v5553 = vpop.f32.mrf.mxu0
        %v5554 = vadd.f32 %v5465, %v5553
        %v5555 = vpop.f32.mrf.mxu0
        %v5556 = vadd.f32 %v5467, %v5555
        %5557 = vmatmul.bf16.gmra.mxu0 %v3546
        %v5558 = vpop.f32.mrf.mxu0
        %v5559 = vadd.f32 %v5470, %v5558
        %v5560 = vpop.f32.mrf.mxu0
        %v5561 = vadd.f32 %v5472, %v5560
        %5562 = vmatmul.bf16.gmra.mxu0 %v3550
        %v5563 = vpop.f32.mrf.mxu0
        %v5564 = vadd.f32 %v5475, %v5563
        %v5565 = vpop.f32.mrf.mxu0
        %v5566 = vadd.f32 %v5477, %v5565
        %5567 = vmatmul.bf16.gmra.mxu0 %v3554
        %v5568 = vpop.f32.mrf.mxu0
        %v5569 = vadd.f32 %v5480, %v5568
        %v5570 = vpop.f32.mrf.mxu0
        %v5571 = vadd.f32 %v5482, %v5570
        %5572 = vmatmul.bf16.gmra.mxu0 %v3558
        %v5573 = vpop.f32.mrf.mxu0
        %v5574 = vadd.f32 %v5485, %v5573
        %v5575 = vpop.f32.mrf.mxu0
        %v5576 = vadd.f32 %v5487, %v5575
        %5577 = vmatmul.bf16.gmra.mxu0 %v3562
        %v5578 = vpop.f32.mrf.mxu0
        %v5579 = vadd.f32 %v5490, %v5578
        %v5580 = vpop.f32.mrf.mxu0
        %v5581 = vadd.f32 %v5492, %v5580
        %5582 = vmatmul.bf16.gmra.mxu0 %v3566
        %v5583 = vpop.f32.mrf.mxu0
        %v5584 = vadd.f32 %v5495, %v5583
        %v5585 = vpop.f32.mrf.mxu0
        %v5586 = vadd.f32 %v5497, %v5585
        %5587 = vmatmul.bf16.gmra.mxu0 %v3570
        %v5588 = vpop.f32.mrf.mxu0
        %v5589 = vadd.f32 %v5500, %v5588
        %v5590 = vpop.f32.mrf.mxu0
        %v5591 = vadd.f32 %v5502, %v5590
        %5592 = vmatmul.bf16.gmra.mxu0 %v3574
        %v5593 = vpop.f32.mrf.mxu0
        %v5594 = vadd.f32 %v5505, %v5593
        %v5595 = vpop.f32.mrf.mxu0
        %v5596 = vadd.f32 %v5507, %v5595
        %5597 = vmatmul.bf16.gmra.mxu0 %v3578
        %v5598 = vpop.f32.mrf.mxu0
        %v5599 = vadd.f32 %v5510, %v5598
        %v5600 = vpop.f32.mrf.mxu0
        %v5601 = vadd.f32 %v5512, %v5600
        %5602 = vmatmul.bf16.gmra.mxu0 %v3582
        %v5603 = vpop.f32.mrf.mxu0
        %v5604 = vadd.f32 %v5515, %v5603
        %v5605 = vpop.f32.mrf.mxu0
        %v5606 = vadd.f32 %v5517, %v5605
        %5607 = vmatmul.bf16.gmra.mxu0 %v3586
        %v5608 = vpop.f32.mrf.mxu0
        %v5609 = vadd.f32 %v5520, %v5608
        %v5610 = vpop.f32.mrf.mxu0
        %v5611 = vadd.f32 %v5522, %v5610
        %5612 = vmatmul.bf16.gmra.mxu0 %v3590
        %v5613 = vpop.f32.mrf.mxu0
        %v5614 = vadd.f32 %v5525, %v5613
        %v5615 = vpop.f32.mrf.mxu0
        %v5616 = vadd.f32 %v5527, %v5615
        %5617 = vdwg.mxu0
        %5618 = vmatpush.bf16.msra.mxu0 %v4211
        %5619 = vmatpush.bf16.msra.mxu0 %v4207
        %5620 = vmatpush.bf16.msra.mxu0 %v4203
        %5621 = vmatpush.bf16.msra.mxu0 %v4199
        %5622 = vmatpush.bf16.msra.mxu0 %v4195
        %5623 = vmatpush.bf16.msra.mxu0 %v4191
        %5624 = vmatpush.bf16.msra.mxu0 %v4187
        %5625 = vmatpush.bf16.msra.mxu0 %v4183
        %5626 = vmatmul.bf16.gmra.mxu0 %v3531
        %v5627 = vpop.f32.mrf.mxu0
        %v5628 = vadd.f32 %v5539, %v5627
        %v5629 = vpop.f32.mrf.mxu0
        %v5630 = vadd.f32 %v5541, %v5629
        %5631 = vmatmul.bf16.gmra.mxu0 %v3535
        %v5632 = vpop.f32.mrf.mxu0
        %v5633 = vadd.f32 %v5544, %v5632
        %v5634 = vpop.f32.mrf.mxu0
        %v5635 = vadd.f32 %v5546, %v5634
        %5636 = vmatmul.bf16.gmra.mxu0 %v3539
        %v5637 = vpop.f32.mrf.mxu0
        %v5638 = vadd.f32 %v5549, %v5637
        %v5639 = vpop.f32.mrf.mxu0
        %v5640 = vadd.f32 %v5551, %v5639
        %5641 = vmatmul.bf16.gmra.mxu0 %v3543
        %v5642 = vpop.f32.mrf.mxu0
        %v5643 = vadd.f32 %v5554, %v5642
        %v5644 = vpop.f32.mrf.mxu0
        %v5645 = vadd.f32 %v5556, %v5644
        %5646 = vmatmul.bf16.gmra.mxu0 %v3547
        %v5647 = vpop.f32.mrf.mxu0
        %v5648 = vadd.f32 %v5559, %v5647
        %v5649 = vpop.f32.mrf.mxu0
        %v5650 = vadd.f32 %v5561, %v5649
        %5651 = vmatmul.bf16.gmra.mxu0 %v3551
        %v5652 = vpop.f32.mrf.mxu0
        %v5653 = vadd.f32 %v5564, %v5652
        %v5654 = vpop.f32.mrf.mxu0
        %v5655 = vadd.f32 %v5566, %v5654
        %5656 = vmatmul.bf16.gmra.mxu0 %v3555
        %v5657 = vpop.f32.mrf.mxu0
        %v5658 = vadd.f32 %v5569, %v5657
        %v5659 = vpop.f32.mrf.mxu0
        %v5660 = vadd.f32 %v5571, %v5659
        %5661 = vmatmul.bf16.gmra.mxu0 %v3559
        %v5662 = vpop.f32.mrf.mxu0
        %v5663 = vadd.f32 %v5574, %v5662
        %v5664 = vpop.f32.mrf.mxu0
        %v5665 = vadd.f32 %v5576, %v5664
        %5666 = vmatmul.bf16.gmra.mxu0 %v3563
        %v5667 = vpop.f32.mrf.mxu0
        %v5668 = vadd.f32 %v5579, %v5667
        %v5669 = vpop.f32.mrf.mxu0
        %v5670 = vadd.f32 %v5581, %v5669
        %5671 = vmatmul.bf16.gmra.mxu0 %v3567
        %v5672 = vpop.f32.mrf.mxu0
        %v5673 = vadd.f32 %v5584, %v5672
        %v5674 = vpop.f32.mrf.mxu0
        %v5675 = vadd.f32 %v5586, %v5674
        %5676 = vmatmul.bf16.gmra.mxu0 %v3571
        %v5677 = vpop.f32.mrf.mxu0
        %v5678 = vadd.f32 %v5589, %v5677
        %v5679 = vpop.f32.mrf.mxu0
        %v5680 = vadd.f32 %v5591, %v5679
        %5681 = vmatmul.bf16.gmra.mxu0 %v3575
        %v5682 = vpop.f32.mrf.mxu0
        %v5683 = vadd.f32 %v5594, %v5682
        %v5684 = vpop.f32.mrf.mxu0
        %v5685 = vadd.f32 %v5596, %v5684
        %5686 = vmatmul.bf16.gmra.mxu0 %v3579
        %v5687 = vpop.f32.mrf.mxu0
        %v5688 = vadd.f32 %v5599, %v5687
        %v5689 = vpop.f32.mrf.mxu0
        %v5690 = vadd.f32 %v5601, %v5689
        %5691 = vmatmul.bf16.gmra.mxu0 %v3583
        %v5692 = vpop.f32.mrf.mxu0
        %v5693 = vadd.f32 %v5604, %v5692
        %v5694 = vpop.f32.mrf.mxu0
        %v5695 = vadd.f32 %v5606, %v5694
        %5696 = vmatmul.bf16.gmra.mxu0 %v3587
        %v5697 = vpop.f32.mrf.mxu0
        %v5698 = vadd.f32 %v5609, %v5697
        %v5699 = vpop.f32.mrf.mxu0
        %v5700 = vadd.f32 %v5611, %v5699
        %5701 = vmatmul.bf16.gmra.mxu0 %v3591
        %v5702 = vpop.f32.mrf.mxu0
        %v5703 = vadd.f32 %v5614, %v5702
        %v5704 = vpop.f32.mrf.mxu0
        %v5705 = vadd.f32 %v5616, %v5704
        %5706 = vdwg.mxu0
        %5707 = vmatpush.bf16.msra.mxu0 %v4243
        %5708 = vmatpush.bf16.msra.mxu0 %v4239
        %5709 = vmatpush.bf16.msra.mxu0 %v4235
        %5710 = vmatpush.bf16.msra.mxu0 %v4231
        %5711 = vmatpush.bf16.msra.mxu0 %v4227
        %5712 = vmatpush.bf16.msra.mxu0 %v4223
        %5713 = vmatpush.bf16.msra.mxu0 %v4219
        %5714 = vmatpush.bf16.msra.mxu0 %v4215
        %5715 = vmatmul.bf16.gmra.mxu0 %v3532
        %v5716 = vpop.f32.mrf.mxu0
        %v5717 = vadd.f32 %v5628, %v5716
        %v5718 = vpop.f32.mrf.mxu0
        %v5719 = vadd.f32 %v5630, %v5718
        %5720 = vmatmul.bf16.gmra.mxu0 %v3536
        %v5721 = vpop.f32.mrf.mxu0
        %v5722 = vadd.f32 %v5633, %v5721
        %v5723 = vpop.f32.mrf.mxu0
        %v5724 = vadd.f32 %v5635, %v5723
        %5725 = vmatmul.bf16.gmra.mxu0 %v3540
        %v5726 = vpop.f32.mrf.mxu0
        %v5727 = vadd.f32 %v5638, %v5726
        %v5728 = vpop.f32.mrf.mxu0
        %v5729 = vadd.f32 %v5640, %v5728
        %5730 = vmatmul.bf16.gmra.mxu0 %v3544
        %v5731 = vpop.f32.mrf.mxu0
        %v5732 = vadd.f32 %v5643, %v5731
        %v5733 = vpop.f32.mrf.mxu0
        %v5734 = vadd.f32 %v5645, %v5733
        %5735 = vmatmul.bf16.gmra.mxu0 %v3548
        %v5736 = vpop.f32.mrf.mxu0
        %v5737 = vadd.f32 %v5648, %v5736
        %v5738 = vpop.f32.mrf.mxu0
        %v5739 = vadd.f32 %v5650, %v5738
        %5740 = vmatmul.bf16.gmra.mxu0 %v3552
        %v5741 = vpop.f32.mrf.mxu0
        %v5742 = vadd.f32 %v5653, %v5741
        %v5743 = vpop.f32.mrf.mxu0
        %v5744 = vadd.f32 %v5655, %v5743
        %5745 = vmatmul.bf16.gmra.mxu0 %v3556
        %v5746 = vpop.f32.mrf.mxu0
        %v5747 = vadd.f32 %v5658, %v5746
        %v5748 = vpop.f32.mrf.mxu0
        %v5749 = vadd.f32 %v5660, %v5748
        %5750 = vmatmul.bf16.gmra.mxu0 %v3560
        %v5751 = vpop.f32.mrf.mxu0
        %v5752 = vadd.f32 %v5663, %v5751
        %v5753 = vpop.f32.mrf.mxu0
        %v5754 = vadd.f32 %v5665, %v5753
        %5755 = vmatmul.bf16.gmra.mxu0 %v3564
        %v5756 = vpop.f32.mrf.mxu0
        %v5757 = vadd.f32 %v5668, %v5756
        %v5758 = vpop.f32.mrf.mxu0
        %v5759 = vadd.f32 %v5670, %v5758
        %5760 = vmatmul.bf16.gmra.mxu0 %v3568
        %v5761 = vpop.f32.mrf.mxu0
        %v5762 = vadd.f32 %v5673, %v5761
        %v5763 = vpop.f32.mrf.mxu0
        %v5764 = vadd.f32 %v5675, %v5763
        %5765 = vmatmul.bf16.gmra.mxu0 %v3572
        %v5766 = vpop.f32.mrf.mxu0
        %v5767 = vadd.f32 %v5678, %v5766
        %v5768 = vpop.f32.mrf.mxu0
        %v5769 = vadd.f32 %v5680, %v5768
        %5770 = vmatmul.bf16.gmra.mxu0 %v3576
        %v5771 = vpop.f32.mrf.mxu0
        %v5772 = vadd.f32 %v5683, %v5771
        %v5773 = vpop.f32.mrf.mxu0
        %v5774 = vadd.f32 %v5685, %v5773
        %5775 = vmatmul.bf16.gmra.mxu0 %v3580
        %v5776 = vpop.f32.mrf.mxu0
        %v5777 = vadd.f32 %v5688, %v5776
        %v5778 = vpop.f32.mrf.mxu0
        %v5779 = vadd.f32 %v5690, %v5778
        %5780 = vmatmul.bf16.gmra.mxu0 %v3584
        %v5781 = vpop.f32.mrf.mxu0
        %v5782 = vadd.f32 %v5693, %v5781
        %v5783 = vpop.f32.mrf.mxu0
        %v5784 = vadd.f32 %v5695, %v5783
        %5785 = vmatmul.bf16.gmra.mxu0 %v3588
        %v5786 = vpop.f32.mrf.mxu0
        %v5787 = vadd.f32 %v5698, %v5786
        %v5788 = vpop.f32.mrf.mxu0
        %v5789 = vadd.f32 %v5700, %v5788
        %5790 = vmatmul.bf16.gmra.mxu0 %v3592
        %v5791 = vpop.f32.mrf.mxu0
        %v5792 = vadd.f32 %v5703, %v5791
        %v5793 = vpop.f32.mrf.mxu0
        %v5794 = vadd.f32 %v5705, %v5793
        %5795 = vdwg.mxu0
        %v5796 = vmax.f32 %v4649, 0.0
        %v5797 = vmax.f32 %v5005, 0.0
        %v5798 = vmax.f32 %v5361, 0.0
        %v5799 = vmax.f32 %v5717, 0.0
        %v5800 = vmax.f32 %v4651, 0.0
        %v5801 = vmax.f32 %v5007, 0.0
        %v5802 = vmax.f32 %v5363, 0.0
        %v5803 = vmax.f32 %v5719, 0.0
        %v5804 = vmax.f32 %v4654, 0.0
        %v5805 = vmax.f32 %v5010, 0.0
        %v5806 = vmax.f32 %v5366, 0.0
        %v5807 = vmax.f32 %v5722, 0.0
        %v5808 = vmax.f32 %v4656, 0.0
        %v5809 = vmax.f32 %v5012, 0.0
        %v5810 = vmax.f32 %v5368, 0.0
        %v5811 = vmax.f32 %v5724, 0.0
        %v5812 = vmax.f32 %v4659, 0.0
        %v5813 = vmax.f32 %v5015, 0.0
        %v5814 = vmax.f32 %v5371, 0.0
        %v5815 = vmax.f32 %v5727, 0.0
        %v5816 = vmax.f32 %v4661, 0.0
        %v5817 = vmax.f32 %v5017, 0.0
        %v5818 = vmax.f32 %v5373, 0.0
        %v5819 = vmax.f32 %v5729, 0.0
        %v5820 = vmax.f32 %v4664, 0.0
        %v5821 = vmax.f32 %v5020, 0.0
        %v5822 = vmax.f32 %v5376, 0.0
        %v5823 = vmax.f32 %v5732, 0.0
        %v5824 = vmax.f32 %v4666, 0.0
        %v5825 = vmax.f32 %v5022, 0.0
        %v5826 = vmax.f32 %v5378, 0.0
        %v5827 = vmax.f32 %v5734, 0.0
        %v5828 = vmax.f32 %v4669, 0.0
        %v5829 = vmax.f32 %v5025, 0.0
        %v5830 = vmax.f32 %v5381, 0.0
        %v5831 = vmax.f32 %v5737, 0.0
        %v5832 = vmax.f32 %v4671, 0.0
        %v5833 = vmax.f32 %v5027, 0.0
        %v5834 = vmax.f32 %v5383, 0.0
        %v5835 = vmax.f32 %v5739, 0.0
        %v5836 = vmax.f32 %v4674, 0.0
        %v5837 = vmax.f32 %v5030, 0.0
        %v5838 = vmax.f32 %v5386, 0.0
        %v5839 = vmax.f32 %v5742, 0.0
        %v5840 = vmax.f32 %v4676, 0.0
        %v5841 = vmax.f32 %v5032, 0.0
        %v5842 = vmax.f32 %v5388, 0.0
        %v5843 = vmax.f32 %v5744, 0.0
        %v5844 = vmax.f32 %v4679, 0.0
        %v5845 = vmax.f32 %v5035, 0.0
        %v5846 = vmax.f32 %v5391, 0.0
        %v5847 = vmax.f32 %v5747, 0.0
        %v5848 = vmax.f32 %v4681, 0.0
        %v5849 = vmax.f32 %v5037, 0.0
        %v5850 = vmax.f32 %v5393, 0.0
        %v5851 = vmax.f32 %v5749, 0.0
        %v5852 = vmax.f32 %v4684, 0.0
        %v5853 = vmax.f32 %v5040, 0.0
        %v5854 = vmax.f32 %v5396, 0.0
        %v5855 = vmax.f32 %v5752, 0.0
        %v5856 = vmax.f32 %v4686, 0.0
        %v5857 = vmax.f32 %v5042, 0.0
        %v5858 = vmax.f32 %v5398, 0.0
        %v5859 = vmax.f32 %v5754, 0.0
        %v5860 = vmax.f32 %v4689, 0.0
        %v5861 = vmax.f32 %v5045, 0.0
        %v5862 = vmax.f32 %v5401, 0.0
        %v5863 = vmax.f32 %v5757, 0.0
        %v5864 = vmax.f32 %v4691, 0.0
        %v5865 = vmax.f32 %v5047, 0.0
        %v5866 = vmax.f32 %v5403, 0.0
        %v5867 = vmax.f32 %v5759, 0.0
        %v5868 = vmax.f32 %v4694, 0.0
        %v5869 = vmax.f32 %v5050, 0.0
        %v5870 = vmax.f32 %v5406, 0.0
        %v5871 = vmax.f32 %v5762, 0.0
        %v5872 = vmax.f32 %v4696, 0.0
        %v5873 = vmax.f32 %v5052, 0.0
        %v5874 = vmax.f32 %v5408, 0.0
        %v5875 = vmax.f32 %v5764, 0.0
        %v5876 = vmax.f32 %v4699, 0.0
        %v5877 = vmax.f32 %v5055, 0.0
        %v5878 = vmax.f32 %v5411, 0.0
        %v5879 = vmax.f32 %v5767, 0.0
        %v5880 = vmax.f32 %v4701, 0.0
        %v5881 = vmax.f32 %v5057, 0.0
        %v5882 = vmax.f32 %v5413, 0.0
        %v5883 = vmax.f32 %v5769, 0.0
        %v5884 = vmax.f32 %v4704, 0.0
        %v5885 = vmax.f32 %v5060, 0.0
        %v5886 = vmax.f32 %v5416, 0.0
        %v5887 = vmax.f32 %v5772, 0.0
        %v5888 = vmax.f32 %v4706, 0.0
        %v5889 = vmax.f32 %v5062, 0.0
        %v5890 = vmax.f32 %v5418, 0.0
        %v5891 = vmax.f32 %v5774, 0.0
        %v5892 = vmax.f32 %v4709, 0.0
        %v5893 = vmax.f32 %v5065, 0.0
        %v5894 = vmax.f32 %v5421, 0.0
        %v5895 = vmax.f32 %v5777, 0.0
        %v5896 = vmax.f32 %v4711, 0.0
        %v5897 = vmax.f32 %v5067, 0.0
        %v5898 = vmax.f32 %v5423, 0.0
        %v5899 = vmax.f32 %v5779, 0.0
        %v5900 = vmax.f32 %v4714, 0.0
        %v5901 = vmax.f32 %v5070, 0.0
        %v5902 = vmax.f32 %v5426, 0.0
        %v5903 = vmax.f32 %v5782, 0.0
        %v5904 = vmax.f32 %v4716, 0.0
        %v5905 = vmax.f32 %v5072, 0.0
        %v5906 = vmax.f32 %v5428, 0.0
        %v5907 = vmax.f32 %v5784, 0.0
        %v5908 = vmax.f32 %v4719, 0.0
        %v5909 = vmax.f32 %v5075, 0.0
        %v5910 = vmax.f32 %v5431, 0.0
        %v5911 = vmax.f32 %v5787, 0.0
        %v5912 = vmax.f32 %v4721, 0.0
        %v5913 = vmax.f32 %v5077, 0.0
        %v5914 = vmax.f32 %v5433, 0.0
        %v5915 = vmax.f32 %v5789, 0.0
        %v5916 = vmax.f32 %v4724, 0.0
        %v5917 = vmax.f32 %v5080, 0.0
        %v5918 = vmax.f32 %v5436, 0.0
        %v5919 = vmax.f32 %v5792, 0.0
        %v5920 = vmax.f32 %v4726, 0.0
        %v5921 = vmax.f32 %v5082, 0.0
        %v5922 = vmax.f32 %v5438, 0.0
        %v5923 = vmax.f32 %v5794, 0.0
        %v5924 = vpack.c.bf16 %v5800, %v5796
        %v5925 = vpack.c.bf16 %v5801, %v5797
        %v5926 = vpack.c.bf16 %v5802, %v5798
        %v5927 = vpack.c.bf16 %v5803, %v5799
        %v5928 = vpack.c.bf16 %v5808, %v5804
        %v5929 = vpack.c.bf16 %v5809, %v5805
        %v5930 = vpack.c.bf16 %v5810, %v5806
        %v5931 = vpack.c.bf16 %v5811, %v5807
        %v5932 = vpack.c.bf16 %v5816, %v5812
        %v5933 = vpack.c.bf16 %v5817, %v5813
        %v5934 = vpack.c.bf16 %v5818, %v5814
        %v5935 = vpack.c.bf16 %v5819, %v5815
        %v5936 = vpack.c.bf16 %v5824, %v5820
        %v5937 = vpack.c.bf16 %v5825, %v5821
        %v5938 = vpack.c.bf16 %v5826, %v5822
        %v5939 = vpack.c.bf16 %v5827, %v5823
        %v5940 = vpack.c.bf16 %v5832, %v5828
        %v5941 = vpack.c.bf16 %v5833, %v5829
        %v5942 = vpack.c.bf16 %v5834, %v5830
        %v5943 = vpack.c.bf16 %v5835, %v5831
        %v5944 = vpack.c.bf16 %v5840, %v5836
        %v5945 = vpack.c.bf16 %v5841, %v5837
        %v5946 = vpack.c.bf16 %v5842, %v5838
        %v5947 = vpack.c.bf16 %v5843, %v5839
        %v5948 = vpack.c.bf16 %v5848, %v5844
        %v5949 = vpack.c.bf16 %v5849, %v5845
        %v5950 = vpack.c.bf16 %v5850, %v5846
        %v5951 = vpack.c.bf16 %v5851, %v5847
        %v5952 = vpack.c.bf16 %v5856, %v5852
        %v5953 = vpack.c.bf16 %v5857, %v5853
        %v5954 = vpack.c.bf16 %v5858, %v5854
        %v5955 = vpack.c.bf16 %v5859, %v5855
        %v5956 = vpack.c.bf16 %v5864, %v5860
        %v5957 = vpack.c.bf16 %v5865, %v5861
        %v5958 = vpack.c.bf16 %v5866, %v5862
        %v5959 = vpack.c.bf16 %v5867, %v5863
        %v5960 = vpack.c.bf16 %v5872, %v5868
        %v5961 = vpack.c.bf16 %v5873, %v5869
        %v5962 = vpack.c.bf16 %v5874, %v5870
        %v5963 = vpack.c.bf16 %v5875, %v5871
        %v5964 = vpack.c.bf16 %v5880, %v5876
        %v5965 = vpack.c.bf16 %v5881, %v5877
        %v5966 = vpack.c.bf16 %v5882, %v5878
        %v5967 = vpack.c.bf16 %v5883, %v5879
        %v5968 = vpack.c.bf16 %v5888, %v5884
        %v5969 = vpack.c.bf16 %v5889, %v5885
        %v5970 = vpack.c.bf16 %v5890, %v5886
        %v5971 = vpack.c.bf16 %v5891, %v5887
        %v5972 = vpack.c.bf16 %v5896, %v5892
        %v5973 = vpack.c.bf16 %v5897, %v5893
        %v5974 = vpack.c.bf16 %v5898, %v5894
        %v5975 = vpack.c.bf16 %v5899, %v5895
        %v5976 = vpack.c.bf16 %v5904, %v5900
        %v5977 = vpack.c.bf16 %v5905, %v5901
        %v5978 = vpack.c.bf16 %v5906, %v5902
        %v5979 = vpack.c.bf16 %v5907, %v5903
        %v5980 = vpack.c.bf16 %v5912, %v5908
        %v5981 = vpack.c.bf16 %v5913, %v5909
        %v5982 = vpack.c.bf16 %v5914, %v5910
        %v5983 = vpack.c.bf16 %v5915, %v5911
        %v5984 = vpack.c.bf16 %v5920, %v5916
        %v5985 = vpack.c.bf16 %v5921, %v5917
        %v5986 = vpack.c.bf16 %v5922, %v5918
        %v5987 = vpack.c.bf16 %v5923, %v5919
        %v5988 = vld [vmem:[#allocation6] sm:$0xf]
        %v5989 = vld [vmem:[#allocation6 + $0x4] sm:$0xf]
        %v5990 = vld [vmem:[#allocation6 + $0x8] sm:$0xf]
        %v5991 = vld [vmem:[#allocation6 + $0xc] sm:$0xf]
        %v5992 = vld [vmem:[#allocation6 + $0x10] sm:$0xf]
        %v5993 = vld [vmem:[#allocation6 + $0x14] sm:$0xf]
        %v5994 = vld [vmem:[#allocation6 + $0x18] sm:$0xf]
        %v5995 = vld [vmem:[#allocation6 + $0x1c] sm:$0xf]
        %v5996 = vld [vmem:[#allocation6 + $0x20] sm:$0xf]
        %v5997 = vld [vmem:[#allocation6 + $0x24] sm:$0xf]
        %v5998 = vld [vmem:[#allocation6 + $0x28] sm:$0xf]
        %v5999 = vld [vmem:[#allocation6 + $0x2c] sm:$0xf]
        %v6000 = vld [vmem:[#allocation6 + $0x30] sm:$0xf]
        %v6001 = vld [vmem:[#allocation6 + $0x34] sm:$0xf]
        %v6002 = vld [vmem:[#allocation6 + $0x38] sm:$0xf]
        %v6003 = vld [vmem:[#allocation6 + $0x3c] sm:$0xf]
        %v6004 = vld [vmem:[#allocation6 + $0x40] sm:$0xf]
        %v6005 = vld [vmem:[#allocation6 + $0x44] sm:$0xf]
        %v6006 = vld [vmem:[#allocation6 + $0x48] sm:$0xf]
        %v6007 = vld [vmem:[#allocation6 + $0x4c] sm:$0xf]
        %v6008 = vld [vmem:[#allocation6 + $0x50] sm:$0xf]
        %v6009 = vld [vmem:[#allocation6 + $0x54] sm:$0xf]
        %v6010 = vld [vmem:[#allocation6 + $0x58] sm:$0xf]
        %v6011 = vld [vmem:[#allocation6 + $0x5c] sm:$0xf]
        %v6012 = vld [vmem:[#allocation6 + $0x60] sm:$0xf]
        %v6013 = vld [vmem:[#allocation6 + $0x64] sm:$0xf]
        %v6014 = vld [vmem:[#allocation6 + $0x68] sm:$0xf]
        %v6015 = vld [vmem:[#allocation6 + $0x6c] sm:$0xf]
        %v6016 = vld [vmem:[#allocation6 + $0x70] sm:$0xf]
        %v6017 = vld [vmem:[#allocation6 + $0x74] sm:$0xf]
        %v6018 = vld [vmem:[#allocation6 + $0x78] sm:$0xf]
        %v6019 = vld [vmem:[#allocation6 + $0x7c] sm:$0xf]
        %v6020 = vld [vmem:[#allocation6 + $0x80] sm:$0xf]
        %v6021 = vld [vmem:[#allocation6 + $0x84] sm:$0xf]
        %v6022 = vld [vmem:[#allocation6 + $0x88] sm:$0xf]
        %v6023 = vld [vmem:[#allocation6 + $0x8c] sm:$0xf]
        %v6024 = vld [vmem:[#allocation6 + $0x90] sm:$0xf]
        %v6025 = vld [vmem:[#allocation6 + $0x94] sm:$0xf]
        %v6026 = vld [vmem:[#allocation6 + $0x98] sm:$0xf]
        %v6027 = vld [vmem:[#allocation6 + $0x9c] sm:$0xf]
        %v6028 = vld [vmem:[#allocation6 + $0xa0] sm:$0xf]
        %v6029 = vld [vmem:[#allocation6 + $0xa4] sm:$0xf]
        %v6030 = vld [vmem:[#allocation6 + $0xa8] sm:$0xf]
        %v6031 = vld [vmem:[#allocation6 + $0xac] sm:$0xf]
        %v6032 = vld [vmem:[#allocation6 + $0xb0] sm:$0xf]
        %v6033 = vld [vmem:[#allocation6 + $0xb4] sm:$0xf]
        %v6034 = vld [vmem:[#allocation6 + $0xb8] sm:$0xf]
        %v6035 = vld [vmem:[#allocation6 + $0xbc] sm:$0xf]
        %v6036 = vld [vmem:[#allocation6 + $0xc0] sm:$0xf]
        %v6037 = vld [vmem:[#allocation6 + $0xc4] sm:$0xf]
        %v6038 = vld [vmem:[#allocation6 + $0xc8] sm:$0xf]
        %v6039 = vld [vmem:[#allocation6 + $0xcc] sm:$0xf]
        %v6040 = vld [vmem:[#allocation6 + $0xd0] sm:$0xf]
        %v6041 = vld [vmem:[#allocation6 + $0xd4] sm:$0xf]
        %v6042 = vld [vmem:[#allocation6 + $0xd8] sm:$0xf]
        %v6043 = vld [vmem:[#allocation6 + $0xdc] sm:$0xf]
        %v6044 = vld [vmem:[#allocation6 + $0xe0] sm:$0xf]
        %v6045 = vld [vmem:[#allocation6 + $0xe4] sm:$0xf]
        %v6046 = vld [vmem:[#allocation6 + $0xe8] sm:$0xf]
        %v6047 = vld [vmem:[#allocation6 + $0xec] sm:$0xf]
        %v6048 = vld [vmem:[#allocation6 + $0xf0] sm:$0xf]
        %v6049 = vld [vmem:[#allocation6 + $0xf4] sm:$0xf]
        %v6050 = vld [vmem:[#allocation6 + $0xf8] sm:$0xf]
        %v6051 = vld [vmem:[#allocation6 + $0xfc] sm:$0xf]
        %v6052 = vld [vmem:[#allocation7 + $0x3] sm:$0x1]
        %v6053 = vperm.slane %v6052, 0
        %v6118 = vunpack.c.l.b16 %v5988
        %v6119 = vunpack.c.l.b16 %v5989
        %v6120 = vunpack.c.l.b16 %v5990
        %v6121 = vunpack.c.l.b16 %v5991
        %v6122 = vunpack.c.l.b16 %v5992
        %v6123 = vunpack.c.l.b16 %v5993
        %v6124 = vunpack.c.l.b16 %v5994
        %v6125 = vunpack.c.l.b16 %v5995
        %v6126 = vunpack.c.l.b16 %v5996
        %v6127 = vunpack.c.l.b16 %v5997
        %v6128 = vunpack.c.l.b16 %v5998
        %v6129 = vunpack.c.l.b16 %v5999
        %v6130 = vunpack.c.l.b16 %v6000
        %v6131 = vunpack.c.l.b16 %v6001
        %v6132 = vunpack.c.l.b16 %v6002
        %v6133 = vunpack.c.l.b16 %v6003
        %v6134 = vunpack.c.l.b16 %v6004
        %v6135 = vunpack.c.l.b16 %v6005
        %v6136 = vunpack.c.l.b16 %v6006
        %v6137 = vunpack.c.l.b16 %v6007
        %v6138 = vunpack.c.l.b16 %v6008
        %v6139 = vunpack.c.l.b16 %v6009
        %v6140 = vunpack.c.l.b16 %v6010
        %v6141 = vunpack.c.l.b16 %v6011
        %v6142 = vunpack.c.l.b16 %v6012
        %v6143 = vunpack.c.l.b16 %v6013
        %v6144 = vunpack.c.l.b16 %v6014
        %v6145 = vunpack.c.l.b16 %v6015
        %v6146 = vunpack.c.l.b16 %v6016
        %v6147 = vunpack.c.l.b16 %v6017
        %v6148 = vunpack.c.l.b16 %v6018
        %v6149 = vunpack.c.l.b16 %v6019
        %v6150 = vunpack.c.l.b16 %v6020
        %v6151 = vunpack.c.l.b16 %v6021
        %v6152 = vunpack.c.l.b16 %v6022
        %v6153 = vunpack.c.l.b16 %v6023
        %v6154 = vunpack.c.l.b16 %v6024
        %v6155 = vunpack.c.l.b16 %v6025
        %v6156 = vunpack.c.l.b16 %v6026
        %v6157 = vunpack.c.l.b16 %v6027
        %v6158 = vunpack.c.l.b16 %v6028
        %v6159 = vunpack.c.l.b16 %v6029
        %v6160 = vunpack.c.l.b16 %v6030
        %v6161 = vunpack.c.l.b16 %v6031
        %v6162 = vunpack.c.l.b16 %v6032
        %v6163 = vunpack.c.l.b16 %v6033
        %v6164 = vunpack.c.l.b16 %v6034
        %v6165 = vunpack.c.l.b16 %v6035
        %v6166 = vunpack.c.l.b16 %v6036
        %v6167 = vunpack.c.l.b16 %v6037
        %v6168 = vunpack.c.l.b16 %v6038
        %v6169 = vunpack.c.l.b16 %v6039
        %v6170 = vunpack.c.l.b16 %v6040
        %v6171 = vunpack.c.l.b16 %v6041
        %v6172 = vunpack.c.l.b16 %v6042
        %v6173 = vunpack.c.l.b16 %v6043
        %v6174 = vunpack.c.l.b16 %v6044
        %v6175 = vunpack.c.l.b16 %v6045
        %v6176 = vunpack.c.l.b16 %v6046
        %v6177 = vunpack.c.l.b16 %v6047
        %v6178 = vunpack.c.l.b16 %v6048
        %v6179 = vunpack.c.l.b16 %v6049
        %v6180 = vunpack.c.l.b16 %v6050
        %v6181 = vunpack.c.l.b16 %v6051
        %v6182 = vpack.c.b16 %v6119, %v6118
        %v6183 = vpack.c.b16 %v6121, %v6120
        %v6184 = vpack.c.b16 %v6123, %v6122
        %v6185 = vpack.c.b16 %v6125, %v6124
        %v6186 = vpack.c.b16 %v6127, %v6126
        %v6187 = vpack.c.b16 %v6129, %v6128
        %v6188 = vpack.c.b16 %v6131, %v6130
        %v6189 = vpack.c.b16 %v6133, %v6132
        %v6190 = vpack.c.b16 %v6135, %v6134
        %v6191 = vpack.c.b16 %v6137, %v6136
        %v6192 = vpack.c.b16 %v6139, %v6138
        %v6193 = vpack.c.b16 %v6141, %v6140
        %v6194 = vpack.c.b16 %v6143, %v6142
        %v6195 = vpack.c.b16 %v6145, %v6144
        %v6196 = vpack.c.b16 %v6147, %v6146
        %v6197 = vpack.c.b16 %v6149, %v6148
        %v6198 = vpack.c.b16 %v6151, %v6150
        %v6199 = vpack.c.b16 %v6153, %v6152
        %v6200 = vpack.c.b16 %v6155, %v6154
        %v6201 = vpack.c.b16 %v6157, %v6156
        %v6202 = vpack.c.b16 %v6159, %v6158
        %v6203 = vpack.c.b16 %v6161, %v6160
        %v6204 = vpack.c.b16 %v6163, %v6162
        %v6205 = vpack.c.b16 %v6165, %v6164
        %v6206 = vpack.c.b16 %v6167, %v6166
        %v6207 = vpack.c.b16 %v6169, %v6168
        %v6208 = vpack.c.b16 %v6171, %v6170
        %v6209 = vpack.c.b16 %v6173, %v6172
        %v6210 = vpack.c.b16 %v6175, %v6174
        %v6211 = vpack.c.b16 %v6177, %v6176
        %v6212 = vpack.c.b16 %v6179, %v6178
        %v6213 = vpack.c.b16 %v6181, %v6180
        %6246 = vmatpush.bf16.msra.mxu0 %v6189
        %6247 = vmatpush.bf16.msra.mxu0 %v6188
        %6248 = vmatpush.bf16.msra.mxu0 %v6187
        %6249 = vmatpush.bf16.msra.mxu0 %v6186
        %6250 = vmatpush.bf16.msra.mxu0 %v6185
        %6251 = vmatpush.bf16.msra.mxu0 %v6184
        %6252 = vmatpush.bf16.msra.mxu0 %v6183
        %6253 = vmatpush.bf16.msra.mxu0 %v6182
        %6254 = vmatmul.bf16.gmra.mxu0 %v5924
        %v6255 = vpop.f32.mrf.mxu0
        %v6256 = vadd.f32 %v6053, %v6255
        %v6257 = vpop.f32.mrf.mxu0
        %v6258 = vadd.f32 %v6053, %v6257
        %6259 = vmatmul.bf16.gmra.mxu0 %v5928
        %v6260 = vpop.f32.mrf.mxu0
        %v6261 = vadd.f32 %v6053, %v6260
        %v6262 = vpop.f32.mrf.mxu0
        %v6263 = vadd.f32 %v6053, %v6262
        %6264 = vmatmul.bf16.gmra.mxu0 %v5932
        %v6265 = vpop.f32.mrf.mxu0
        %v6266 = vadd.f32 %v6053, %v6265
        %v6267 = vpop.f32.mrf.mxu0
        %v6268 = vadd.f32 %v6053, %v6267
        %6269 = vmatmul.bf16.gmra.mxu0 %v5936
        %v6270 = vpop.f32.mrf.mxu0
        %v6271 = vadd.f32 %v6053, %v6270
        %v6272 = vpop.f32.mrf.mxu0
        %v6273 = vadd.f32 %v6053, %v6272
        %6274 = vmatmul.bf16.gmra.mxu0 %v5940
        %v6275 = vpop.f32.mrf.mxu0
        %v6276 = vadd.f32 %v6053, %v6275
        %v6277 = vpop.f32.mrf.mxu0
        %v6278 = vadd.f32 %v6053, %v6277
        %6279 = vmatmul.bf16.gmra.mxu0 %v5944
        %v6280 = vpop.f32.mrf.mxu0
        %v6281 = vadd.f32 %v6053, %v6280
        %v6282 = vpop.f32.mrf.mxu0
        %v6283 = vadd.f32 %v6053, %v6282
        %6284 = vmatmul.bf16.gmra.mxu0 %v5948
        %v6285 = vpop.f32.mrf.mxu0
        %v6286 = vadd.f32 %v6053, %v6285
        %v6287 = vpop.f32.mrf.mxu0
        %v6288 = vadd.f32 %v6053, %v6287
        %6289 = vmatmul.bf16.gmra.mxu0 %v5952
        %v6290 = vpop.f32.mrf.mxu0
        %v6291 = vadd.f32 %v6053, %v6290
        %v6292 = vpop.f32.mrf.mxu0
        %v6293 = vadd.f32 %v6053, %v6292
        %6294 = vmatmul.bf16.gmra.mxu0 %v5956
        %v6295 = vpop.f32.mrf.mxu0
        %v6296 = vadd.f32 %v6053, %v6295
        %v6297 = vpop.f32.mrf.mxu0
        %v6298 = vadd.f32 %v6053, %v6297
        %6299 = vmatmul.bf16.gmra.mxu0 %v5960
        %v6300 = vpop.f32.mrf.mxu0
        %v6301 = vadd.f32 %v6053, %v6300
        %v6302 = vpop.f32.mrf.mxu0
        %v6303 = vadd.f32 %v6053, %v6302
        %6304 = vmatmul.bf16.gmra.mxu0 %v5964
        %v6305 = vpop.f32.mrf.mxu0
        %v6306 = vadd.f32 %v6053, %v6305
        %v6307 = vpop.f32.mrf.mxu0
        %v6308 = vadd.f32 %v6053, %v6307
        %6309 = vmatmul.bf16.gmra.mxu0 %v5968
        %v6310 = vpop.f32.mrf.mxu0
        %v6311 = vadd.f32 %v6053, %v6310
        %v6312 = vpop.f32.mrf.mxu0
        %v6313 = vadd.f32 %v6053, %v6312
        %6314 = vmatmul.bf16.gmra.mxu0 %v5972
        %v6315 = vpop.f32.mrf.mxu0
        %v6316 = vadd.f32 %v6053, %v6315
        %v6317 = vpop.f32.mrf.mxu0
        %v6318 = vadd.f32 %v6053, %v6317
        %6319 = vmatmul.bf16.gmra.mxu0 %v5976
        %v6320 = vpop.f32.mrf.mxu0
        %v6321 = vadd.f32 %v6053, %v6320
        %v6322 = vpop.f32.mrf.mxu0
        %v6323 = vadd.f32 %v6053, %v6322
        %6324 = vmatmul.bf16.gmra.mxu0 %v5980
        %v6325 = vpop.f32.mrf.mxu0
        %v6326 = vadd.f32 %v6053, %v6325
        %v6327 = vpop.f32.mrf.mxu0
        %v6328 = vadd.f32 %v6053, %v6327
        %6329 = vmatmul.bf16.gmra.mxu0 %v5984
        %v6330 = vpop.f32.mrf.mxu0
        %v6331 = vadd.f32 %v6053, %v6330
        %v6332 = vpop.f32.mrf.mxu0
        %v6333 = vadd.f32 %v6053, %v6332
        %6334 = vdwg.mxu0
        %6335 = vmatpush.bf16.msra.mxu0 %v6197
        %6336 = vmatpush.bf16.msra.mxu0 %v6196
        %6337 = vmatpush.bf16.msra.mxu0 %v6195
        %6338 = vmatpush.bf16.msra.mxu0 %v6194
        %6339 = vmatpush.bf16.msra.mxu0 %v6193
        %6340 = vmatpush.bf16.msra.mxu0 %v6192
        %6341 = vmatpush.bf16.msra.mxu0 %v6191
        %6342 = vmatpush.bf16.msra.mxu0 %v6190
        %6343 = vmatmul.bf16.gmra.mxu0 %v5925
        %v6344 = vpop.f32.mrf.mxu0
        %v6345 = vadd.f32 %v6256, %v6344
        %v6346 = vpop.f32.mrf.mxu0
        %v6347 = vadd.f32 %v6258, %v6346
        %6348 = vmatmul.bf16.gmra.mxu0 %v5929
        %v6349 = vpop.f32.mrf.mxu0
        %v6350 = vadd.f32 %v6261, %v6349
        %v6351 = vpop.f32.mrf.mxu0
        %v6352 = vadd.f32 %v6263, %v6351
        %6353 = vmatmul.bf16.gmra.mxu0 %v5933
        %v6354 = vpop.f32.mrf.mxu0
        %v6355 = vadd.f32 %v6266, %v6354
        %v6356 = vpop.f32.mrf.mxu0
        %v6357 = vadd.f32 %v6268, %v6356
        %6358 = vmatmul.bf16.gmra.mxu0 %v5937
        %v6359 = vpop.f32.mrf.mxu0
        %v6360 = vadd.f32 %v6271, %v6359
        %v6361 = vpop.f32.mrf.mxu0
        %v6362 = vadd.f32 %v6273, %v6361
        %6363 = vmatmul.bf16.gmra.mxu0 %v5941
        %v6364 = vpop.f32.mrf.mxu0
        %v6365 = vadd.f32 %v6276, %v6364
        %v6366 = vpop.f32.mrf.mxu0
        %v6367 = vadd.f32 %v6278, %v6366
        %6368 = vmatmul.bf16.gmra.mxu0 %v5945
        %v6369 = vpop.f32.mrf.mxu0
        %v6370 = vadd.f32 %v6281, %v6369
        %v6371 = vpop.f32.mrf.mxu0
        %v6372 = vadd.f32 %v6283, %v6371
        %6373 = vmatmul.bf16.gmra.mxu0 %v5949
        %v6374 = vpop.f32.mrf.mxu0
        %v6375 = vadd.f32 %v6286, %v6374
        %v6376 = vpop.f32.mrf.mxu0
        %v6377 = vadd.f32 %v6288, %v6376
        %6378 = vmatmul.bf16.gmra.mxu0 %v5953
        %v6379 = vpop.f32.mrf.mxu0
        %v6380 = vadd.f32 %v6291, %v6379
        %v6381 = vpop.f32.mrf.mxu0
        %v6382 = vadd.f32 %v6293, %v6381
        %6383 = vmatmul.bf16.gmra.mxu0 %v5957
        %v6384 = vpop.f32.mrf.mxu0
        %v6385 = vadd.f32 %v6296, %v6384
        %v6386 = vpop.f32.mrf.mxu0
        %v6387 = vadd.f32 %v6298, %v6386
        %6388 = vmatmul.bf16.gmra.mxu0 %v5961
        %v6389 = vpop.f32.mrf.mxu0
        %v6390 = vadd.f32 %v6301, %v6389
        %v6391 = vpop.f32.mrf.mxu0
        %v6392 = vadd.f32 %v6303, %v6391
        %6393 = vmatmul.bf16.gmra.mxu0 %v5965
        %v6394 = vpop.f32.mrf.mxu0
        %v6395 = vadd.f32 %v6306, %v6394
        %v6396 = vpop.f32.mrf.mxu0
        %v6397 = vadd.f32 %v6308, %v6396
        %6398 = vmatmul.bf16.gmra.mxu0 %v5969
        %v6399 = vpop.f32.mrf.mxu0
        %v6400 = vadd.f32 %v6311, %v6399
        %v6401 = vpop.f32.mrf.mxu0
        %v6402 = vadd.f32 %v6313, %v6401
        %6403 = vmatmul.bf16.gmra.mxu0 %v5973
        %v6404 = vpop.f32.mrf.mxu0
        %v6405 = vadd.f32 %v6316, %v6404
        %v6406 = vpop.f32.mrf.mxu0
        %v6407 = vadd.f32 %v6318, %v6406
        %6408 = vmatmul.bf16.gmra.mxu0 %v5977
        %v6409 = vpop.f32.mrf.mxu0
        %v6410 = vadd.f32 %v6321, %v6409
        %v6411 = vpop.f32.mrf.mxu0
        %v6412 = vadd.f32 %v6323, %v6411
        %6413 = vmatmul.bf16.gmra.mxu0 %v5981
        %v6414 = vpop.f32.mrf.mxu0
        %v6415 = vadd.f32 %v6326, %v6414
        %v6416 = vpop.f32.mrf.mxu0
        %v6417 = vadd.f32 %v6328, %v6416
        %6418 = vmatmul.bf16.gmra.mxu0 %v5985
        %v6419 = vpop.f32.mrf.mxu0
        %v6420 = vadd.f32 %v6331, %v6419
        %v6421 = vpop.f32.mrf.mxu0
        %v6422 = vadd.f32 %v6333, %v6421
        %6423 = vdwg.mxu0
        %6424 = vmatpush.bf16.msra.mxu0 %v6205
        %6425 = vmatpush.bf16.msra.mxu0 %v6204
        %6426 = vmatpush.bf16.msra.mxu0 %v6203
        %6427 = vmatpush.bf16.msra.mxu0 %v6202
        %6428 = vmatpush.bf16.msra.mxu0 %v6201
        %6429 = vmatpush.bf16.msra.mxu0 %v6200
        %6430 = vmatpush.bf16.msra.mxu0 %v6199
        %6431 = vmatpush.bf16.msra.mxu0 %v6198
        %6432 = vmatmul.bf16.gmra.mxu0 %v5926
        %v6433 = vpop.f32.mrf.mxu0
        %v6434 = vadd.f32 %v6345, %v6433
        %v6435 = vpop.f32.mrf.mxu0
        %v6436 = vadd.f32 %v6347, %v6435
        %6437 = vmatmul.bf16.gmra.mxu0 %v5930
        %v6438 = vpop.f32.mrf.mxu0
        %v6439 = vadd.f32 %v6350, %v6438
        %v6440 = vpop.f32.mrf.mxu0
        %v6441 = vadd.f32 %v6352, %v6440
        %6442 = vmatmul.bf16.gmra.mxu0 %v5934
        %v6443 = vpop.f32.mrf.mxu0
        %v6444 = vadd.f32 %v6355, %v6443
        %v6445 = vpop.f32.mrf.mxu0
        %v6446 = vadd.f32 %v6357, %v6445
        %6447 = vmatmul.bf16.gmra.mxu0 %v5938
        %v6448 = vpop.f32.mrf.mxu0
        %v6449 = vadd.f32 %v6360, %v6448
        %v6450 = vpop.f32.mrf.mxu0
        %v6451 = vadd.f32 %v6362, %v6450
        %6452 = vmatmul.bf16.gmra.mxu0 %v5942
        %v6453 = vpop.f32.mrf.mxu0
        %v6454 = vadd.f32 %v6365, %v6453
        %v6455 = vpop.f32.mrf.mxu0
        %v6456 = vadd.f32 %v6367, %v6455
        %6457 = vmatmul.bf16.gmra.mxu0 %v5946
        %v6458 = vpop.f32.mrf.mxu0
        %v6459 = vadd.f32 %v6370, %v6458
        %v6460 = vpop.f32.mrf.mxu0
        %v6461 = vadd.f32 %v6372, %v6460
        %6462 = vmatmul.bf16.gmra.mxu0 %v5950
        %v6463 = vpop.f32.mrf.mxu0
        %v6464 = vadd.f32 %v6375, %v6463
        %v6465 = vpop.f32.mrf.mxu0
        %v6466 = vadd.f32 %v6377, %v6465
        %6467 = vmatmul.bf16.gmra.mxu0 %v5954
        %v6468 = vpop.f32.mrf.mxu0
        %v6469 = vadd.f32 %v6380, %v6468
        %v6470 = vpop.f32.mrf.mxu0
        %v6471 = vadd.f32 %v6382, %v6470
        %6472 = vmatmul.bf16.gmra.mxu0 %v5958
        %v6473 = vpop.f32.mrf.mxu0
        %v6474 = vadd.f32 %v6385, %v6473
        %v6475 = vpop.f32.mrf.mxu0
        %v6476 = vadd.f32 %v6387, %v6475
        %6477 = vmatmul.bf16.gmra.mxu0 %v5962
        %v6478 = vpop.f32.mrf.mxu0
        %v6479 = vadd.f32 %v6390, %v6478
        %v6480 = vpop.f32.mrf.mxu0
        %v6481 = vadd.f32 %v6392, %v6480
        %6482 = vmatmul.bf16.gmra.mxu0 %v5966
        %v6483 = vpop.f32.mrf.mxu0
        %v6484 = vadd.f32 %v6395, %v6483
        %v6485 = vpop.f32.mrf.mxu0
        %v6486 = vadd.f32 %v6397, %v6485
        %6487 = vmatmul.bf16.gmra.mxu0 %v5970
        %v6488 = vpop.f32.mrf.mxu0
        %v6489 = vadd.f32 %v6400, %v6488
        %v6490 = vpop.f32.mrf.mxu0
        %v6491 = vadd.f32 %v6402, %v6490
        %6492 = vmatmul.bf16.gmra.mxu0 %v5974
        %v6493 = vpop.f32.mrf.mxu0
        %v6494 = vadd.f32 %v6405, %v6493
        %v6495 = vpop.f32.mrf.mxu0
        %v6496 = vadd.f32 %v6407, %v6495
        %6497 = vmatmul.bf16.gmra.mxu0 %v5978
        %v6498 = vpop.f32.mrf.mxu0
        %v6499 = vadd.f32 %v6410, %v6498
        %v6500 = vpop.f32.mrf.mxu0
        %v6501 = vadd.f32 %v6412, %v6500
        %6502 = vmatmul.bf16.gmra.mxu0 %v5982
        %v6503 = vpop.f32.mrf.mxu0
        %v6504 = vadd.f32 %v6415, %v6503
        %v6505 = vpop.f32.mrf.mxu0
        %v6506 = vadd.f32 %v6417, %v6505
        %6507 = vmatmul.bf16.gmra.mxu0 %v5986
        %v6508 = vpop.f32.mrf.mxu0
        %v6509 = vadd.f32 %v6420, %v6508
        %v6510 = vpop.f32.mrf.mxu0
        %v6511 = vadd.f32 %v6422, %v6510
        %6512 = vdwg.mxu0
        %6513 = vmatpush.bf16.msra.mxu0 %v6213
        %6514 = vmatpush.bf16.msra.mxu0 %v6212
        %6515 = vmatpush.bf16.msra.mxu0 %v6211
        %6516 = vmatpush.bf16.msra.mxu0 %v6210
        %6517 = vmatpush.bf16.msra.mxu0 %v6209
        %6518 = vmatpush.bf16.msra.mxu0 %v6208
        %6519 = vmatpush.bf16.msra.mxu0 %v6207
        %6520 = vmatpush.bf16.msra.mxu0 %v6206
        %6521 = vmatmul.bf16.gmra.mxu0 %v5927
        %v6522 = vpop.f32.mrf.mxu0
        %v6523 = vadd.f32 %v6434, %v6522
        %v6524 = vpop.f32.mrf.mxu0
        %v6525 = vadd.f32 %v6436, %v6524
        %6526 = vmatmul.bf16.gmra.mxu0 %v5931
        %v6527 = vpop.f32.mrf.mxu0
        %v6528 = vadd.f32 %v6439, %v6527
        %v6529 = vpop.f32.mrf.mxu0
        %v6530 = vadd.f32 %v6441, %v6529
        %6531 = vmatmul.bf16.gmra.mxu0 %v5935
        %v6532 = vpop.f32.mrf.mxu0
        %v6533 = vadd.f32 %v6444, %v6532
        %v6534 = vpop.f32.mrf.mxu0
        %v6535 = vadd.f32 %v6446, %v6534
        %6536 = vmatmul.bf16.gmra.mxu0 %v5939
        %v6537 = vpop.f32.mrf.mxu0
        %v6538 = vadd.f32 %v6449, %v6537
        %v6539 = vpop.f32.mrf.mxu0
        %v6540 = vadd.f32 %v6451, %v6539
        %6541 = vmatmul.bf16.gmra.mxu0 %v5943
        %v6542 = vpop.f32.mrf.mxu0
        %v6543 = vadd.f32 %v6454, %v6542
        %v6544 = vpop.f32.mrf.mxu0
        %v6545 = vadd.f32 %v6456, %v6544
        %6546 = vmatmul.bf16.gmra.mxu0 %v5947
        %v6547 = vpop.f32.mrf.mxu0
        %v6548 = vadd.f32 %v6459, %v6547
        %v6549 = vpop.f32.mrf.mxu0
        %v6550 = vadd.f32 %v6461, %v6549
        %6551 = vmatmul.bf16.gmra.mxu0 %v5951
        %v6552 = vpop.f32.mrf.mxu0
        %v6553 = vadd.f32 %v6464, %v6552
        %v6554 = vpop.f32.mrf.mxu0
        %v6555 = vadd.f32 %v6466, %v6554
        %6556 = vmatmul.bf16.gmra.mxu0 %v5955
        %v6557 = vpop.f32.mrf.mxu0
        %v6558 = vadd.f32 %v6469, %v6557
        %v6559 = vpop.f32.mrf.mxu0
        %v6560 = vadd.f32 %v6471, %v6559
        %6561 = vmatmul.bf16.gmra.mxu0 %v5959
        %v6562 = vpop.f32.mrf.mxu0
        %v6563 = vadd.f32 %v6474, %v6562
        %v6564 = vpop.f32.mrf.mxu0
        %v6565 = vadd.f32 %v6476, %v6564
        %6566 = vmatmul.bf16.gmra.mxu0 %v5963
        %v6567 = vpop.f32.mrf.mxu0
        %v6568 = vadd.f32 %v6479, %v6567
        %v6569 = vpop.f32.mrf.mxu0
        %v6570 = vadd.f32 %v6481, %v6569
        %6571 = vmatmul.bf16.gmra.mxu0 %v5967
        %v6572 = vpop.f32.mrf.mxu0
        %v6573 = vadd.f32 %v6484, %v6572
        %v6574 = vpop.f32.mrf.mxu0
        %v6575 = vadd.f32 %v6486, %v6574
        %6576 = vmatmul.bf16.gmra.mxu0 %v5971
        %v6577 = vpop.f32.mrf.mxu0
        %v6578 = vadd.f32 %v6489, %v6577
        %v6579 = vpop.f32.mrf.mxu0
        %v6580 = vadd.f32 %v6491, %v6579
        %6581 = vmatmul.bf16.gmra.mxu0 %v5975
        %v6582 = vpop.f32.mrf.mxu0
        %v6583 = vadd.f32 %v6494, %v6582
        %v6584 = vpop.f32.mrf.mxu0
        %v6585 = vadd.f32 %v6496, %v6584
        %6586 = vmatmul.bf16.gmra.mxu0 %v5979
        %v6587 = vpop.f32.mrf.mxu0
        %v6588 = vadd.f32 %v6499, %v6587
        %v6589 = vpop.f32.mrf.mxu0
        %v6590 = vadd.f32 %v6501, %v6589
        %6591 = vmatmul.bf16.gmra.mxu0 %v5983
        %v6592 = vpop.f32.mrf.mxu0
        %v6593 = vadd.f32 %v6504, %v6592
        %v6594 = vpop.f32.mrf.mxu0
        %v6595 = vadd.f32 %v6506, %v6594
        %6596 = vmatmul.bf16.gmra.mxu0 %v5987
        %v6597 = vpop.f32.mrf.mxu0
        %v6598 = vadd.f32 %v6509, %v6597
        %v6599 = vpop.f32.mrf.mxu0
        %v6600 = vadd.f32 %v6511, %v6599
        %6601 = vdwg.mxu0
        %v6602 = vxor.u32 %v6523, 2147483648
        %v6603 = vxor.u32 %v6525, 2147483648
        %v6604 = vxor.u32 %v6528, 2147483648
        %v6605 = vxor.u32 %v6530, 2147483648
        %v6606 = vxor.u32 %v6533, 2147483648
        %v6607 = vxor.u32 %v6535, 2147483648
        %v6608 = vxor.u32 %v6538, 2147483648
        %v6609 = vxor.u32 %v6540, 2147483648
        %v6610 = vxor.u32 %v6543, 2147483648
        %v6611 = vxor.u32 %v6545, 2147483648
        %v6612 = vxor.u32 %v6548, 2147483648
        %v6613 = vxor.u32 %v6550, 2147483648
        %v6614 = vxor.u32 %v6553, 2147483648
        %v6615 = vxor.u32 %v6555, 2147483648
        %v6616 = vxor.u32 %v6558, 2147483648
        %v6617 = vxor.u32 %v6560, 2147483648
        %v6618 = vxor.u32 %v6563, 2147483648
        %v6619 = vxor.u32 %v6565, 2147483648
        %v6620 = vxor.u32 %v6568, 2147483648
        %v6621 = vxor.u32 %v6570, 2147483648
        %v6622 = vxor.u32 %v6573, 2147483648
        %v6623 = vxor.u32 %v6575, 2147483648
        %v6624 = vxor.u32 %v6578, 2147483648
        %v6625 = vxor.u32 %v6580, 2147483648
        %v6626 = vxor.u32 %v6583, 2147483648
        %v6627 = vxor.u32 %v6585, 2147483648
        %v6628 = vxor.u32 %v6588, 2147483648
        %v6629 = vxor.u32 %v6590, 2147483648
        %v6630 = vxor.u32 %v6593, 2147483648
        %v6631 = vxor.u32 %v6595, 2147483648
        %v6632 = vxor.u32 %v6598, 2147483648
        %v6633 = vxor.u32 %v6600, 2147483648
        %v6634 = vmul.f32 %v6602, 1.442695
        %v6635 = vpow.pop %v6634
        %v6636 = vmul.f32 %v6603, 1.442695
        %v6637 = vpow.pop %v6636
        %v6638 = vmul.f32 %v6604, 1.442695
        %v6639 = vpow.pop %v6638
        %v6640 = vmul.f32 %v6605, 1.442695
        %v6641 = vpow.pop %v6640
        %v6642 = vmul.f32 %v6606, 1.442695
        %v6643 = vpow.pop %v6642
        %v6644 = vmul.f32 %v6607, 1.442695
        %v6645 = vpow.pop %v6644
        %v6646 = vmul.f32 %v6608, 1.442695
        %v6647 = vpow.pop %v6646
        %v6648 = vmul.f32 %v6609, 1.442695
        %v6649 = vpow.pop %v6648
        %v6650 = vmul.f32 %v6610, 1.442695
        %v6651 = vpow.pop %v6650
        %v6652 = vmul.f32 %v6611, 1.442695
        %v6653 = vpow.pop %v6652
        %v6654 = vmul.f32 %v6612, 1.442695
        %v6655 = vpow.pop %v6654
        %v6656 = vmul.f32 %v6613, 1.442695
        %v6657 = vpow.pop %v6656
        %v6658 = vmul.f32 %v6614, 1.442695
        %v6659 = vpow.pop %v6658
        %v6660 = vmul.f32 %v6615, 1.442695
        %v6661 = vpow.pop %v6660
        %v6662 = vmul.f32 %v6616, 1.442695
        %v6663 = vpow.pop %v6662
        %v6664 = vmul.f32 %v6617, 1.442695
        %v6665 = vpow.pop %v6664
        %v6666 = vmul.f32 %v6618, 1.442695
        %v6667 = vpow.pop %v6666
        %v6668 = vmul.f32 %v6619, 1.442695
        %v6669 = vpow.pop %v6668
        %v6670 = vmul.f32 %v6620, 1.442695
        %v6671 = vpow.pop %v6670
        %v6672 = vmul.f32 %v6621, 1.442695
        %v6673 = vpow.pop %v6672
        %v6674 = vmul.f32 %v6622, 1.442695
        %v6675 = vpow.pop %v6674
        %v6676 = vmul.f32 %v6623, 1.442695
        %v6677 = vpow.pop %v6676
        %v6678 = vmul.f32 %v6624, 1.442695
        %v6679 = vpow.pop %v6678
        %v6680 = vmul.f32 %v6625, 1.442695
        %v6681 = vpow.pop %v6680
        %v6682 = vmul.f32 %v6626, 1.442695
        %v6683 = vpow.pop %v6682
        %v6684 = vmul.f32 %v6627, 1.442695
        %v6685 = vpow.pop %v6684
        %v6686 = vmul.f32 %v6628, 1.442695
        %v6687 = vpow.pop %v6686
        %v6688 = vmul.f32 %v6629, 1.442695
        %v6689 = vpow.pop %v6688
        %v6690 = vmul.f32 %v6630, 1.442695
        %v6691 = vpow.pop %v6690
        %v6692 = vmul.f32 %v6631, 1.442695
        %v6693 = vpow.pop %v6692
        %v6694 = vmul.f32 %v6632, 1.442695
        %v6695 = vpow.pop %v6694
        %v6696 = vmul.f32 %v6633, 1.442695
        %v6697 = vpow.pop %v6696
        %v6698 = vadd.f32 %v6635, 1.0
        %v6699 = vadd.f32 %v6637, 1.0
        %v6700 = vadd.f32 %v6639, 1.0
        %v6701 = vadd.f32 %v6641, 1.0
        %v6702 = vadd.f32 %v6643, 1.0
        %v6703 = vadd.f32 %v6645, 1.0
        %v6704 = vadd.f32 %v6647, 1.0
        %v6705 = vadd.f32 %v6649, 1.0
        %v6706 = vadd.f32 %v6651, 1.0
        %v6707 = vadd.f32 %v6653, 1.0
        %v6708 = vadd.f32 %v6655, 1.0
        %v6709 = vadd.f32 %v6657, 1.0
        %v6710 = vadd.f32 %v6659, 1.0
        %v6711 = vadd.f32 %v6661, 1.0
        %v6712 = vadd.f32 %v6663, 1.0
        %v6713 = vadd.f32 %v6665, 1.0
        %v6714 = vadd.f32 %v6667, 1.0
        %v6715 = vadd.f32 %v6669, 1.0
        %v6716 = vadd.f32 %v6671, 1.0
        %v6717 = vadd.f32 %v6673, 1.0
        %v6718 = vadd.f32 %v6675, 1.0
        %v6719 = vadd.f32 %v6677, 1.0
        %v6720 = vadd.f32 %v6679, 1.0
        %v6721 = vadd.f32 %v6681, 1.0
        %v6722 = vadd.f32 %v6683, 1.0
        %v6723 = vadd.f32 %v6685, 1.0
        %v6724 = vadd.f32 %v6687, 1.0
        %v6725 = vadd.f32 %v6689, 1.0
        %v6726 = vadd.f32 %v6691, 1.0
        %v6727 = vadd.f32 %v6693, 1.0
        %v6728 = vadd.f32 %v6695, 1.0
        %v6729 = vadd.f32 %v6697, 1.0
        %v6730 = vrcp.pop %v6698
        %v6731 = vmul.f32 %v6698, %v6730
        %v6732 = vsub.f32 1.0, %v6731
        %v6733 = vmul.f32 %v6730, %v6732
        %v6734 = vadd.f32 %v6730, %v6733
        %vm6735 = vweird.f32 %v6698
        %vm6736 = vweird.f32 %v6730
        %vm6737 = vmor %vm6735, %vm6736
        %v6738 = vsel %vm6737, %v6730, %v6734
        %v6739 = vand.u32 2147483647, %v6698
        %vm6740 = vcmp.eq.f32.partialorder %v6739, 8.507059e+37
        %v6741 = vand.u32 %v6698, 2147483648
        %v6742 = vor.u32 1.1754944e-38, %v6741
        %v6743 = vsel %vm6740, %v6742, %v6738
        %v6744 = vmul.f32 1.0, %v6743
        %v6745 = vrcp.pop %v6699
        %v6746 = vmul.f32 %v6699, %v6745
        %v6747 = vsub.f32 1.0, %v6746
        %v6748 = vmul.f32 %v6745, %v6747
        %v6749 = vadd.f32 %v6745, %v6748
        %vm6750 = vweird.f32 %v6699
        %vm6751 = vweird.f32 %v6745
        %vm6752 = vmor %vm6750, %vm6751
        %v6753 = vsel %vm6752, %v6745, %v6749
        %v6754 = vand.u32 2147483647, %v6699
        %vm6755 = vcmp.eq.f32.partialorder %v6754, 8.507059e+37
        %v6756 = vand.u32 %v6699, 2147483648
        %v6757 = vor.u32 1.1754944e-38, %v6756
        %v6758 = vsel %vm6755, %v6757, %v6753
        %v6759 = vmul.f32 1.0, %v6758
        %v6760 = vrcp.pop %v6700
        %v6761 = vmul.f32 %v6700, %v6760
        %v6762 = vsub.f32 1.0, %v6761
        %v6763 = vmul.f32 %v6760, %v6762
        %v6764 = vadd.f32 %v6760, %v6763
        %vm6765 = vweird.f32 %v6700
        %vm6766 = vweird.f32 %v6760
        %vm6767 = vmor %vm6765, %vm6766
        %v6768 = vsel %vm6767, %v6760, %v6764
        %v6769 = vand.u32 2147483647, %v6700
        %vm6770 = vcmp.eq.f32.partialorder %v6769, 8.507059e+37
        %v6771 = vand.u32 %v6700, 2147483648
        %v6772 = vor.u32 1.1754944e-38, %v6771
        %v6773 = vsel %vm6770, %v6772, %v6768
        %v6774 = vmul.f32 1.0, %v6773
        %v6775 = vrcp.pop %v6701
        %v6776 = vmul.f32 %v6701, %v6775
        %v6777 = vsub.f32 1.0, %v6776
        %v6778 = vmul.f32 %v6775, %v6777
        %v6779 = vadd.f32 %v6775, %v6778
        %vm6780 = vweird.f32 %v6701
        %vm6781 = vweird.f32 %v6775
        %vm6782 = vmor %vm6780, %vm6781
        %v6783 = vsel %vm6782, %v6775, %v6779
        %v6784 = vand.u32 2147483647, %v6701
        %vm6785 = vcmp.eq.f32.partialorder %v6784, 8.507059e+37
        %v6786 = vand.u32 %v6701, 2147483648
        %v6787 = vor.u32 1.1754944e-38, %v6786
        %v6788 = vsel %vm6785, %v6787, %v6783
        %v6789 = vmul.f32 1.0, %v6788
        %v6790 = vrcp.pop %v6702
        %v6791 = vmul.f32 %v6702, %v6790
        %v6792 = vsub.f32 1.0, %v6791
        %v6793 = vmul.f32 %v6790, %v6792
        %v6794 = vadd.f32 %v6790, %v6793
        %vm6795 = vweird.f32 %v6702
        %vm6796 = vweird.f32 %v6790
        %vm6797 = vmor %vm6795, %vm6796
        %v6798 = vsel %vm6797, %v6790, %v6794
        %v6799 = vand.u32 2147483647, %v6702
        %vm6800 = vcmp.eq.f32.partialorder %v6799, 8.507059e+37
        %v6801 = vand.u32 %v6702, 2147483648
        %v6802 = vor.u32 1.1754944e-38, %v6801
        %v6803 = vsel %vm6800, %v6802, %v6798
        %v6804 = vmul.f32 1.0, %v6803
        %v6805 = vrcp.pop %v6703
        %v6806 = vmul.f32 %v6703, %v6805
        %v6807 = vsub.f32 1.0, %v6806
        %v6808 = vmul.f32 %v6805, %v6807
        %v6809 = vadd.f32 %v6805, %v6808
        %vm6810 = vweird.f32 %v6703
        %vm6811 = vweird.f32 %v6805
        %vm6812 = vmor %vm6810, %vm6811
        %v6813 = vsel %vm6812, %v6805, %v6809
        %v6814 = vand.u32 2147483647, %v6703
        %vm6815 = vcmp.eq.f32.partialorder %v6814, 8.507059e+37
        %v6816 = vand.u32 %v6703, 2147483648
        %v6817 = vor.u32 1.1754944e-38, %v6816
        %v6818 = vsel %vm6815, %v6817, %v6813
        %v6819 = vmul.f32 1.0, %v6818
        %v6820 = vrcp.pop %v6704
        %v6821 = vmul.f32 %v6704, %v6820
        %v6822 = vsub.f32 1.0, %v6821
        %v6823 = vmul.f32 %v6820, %v6822
        %v6824 = vadd.f32 %v6820, %v6823
        %vm6825 = vweird.f32 %v6704
        %vm6826 = vweird.f32 %v6820
        %vm6827 = vmor %vm6825, %vm6826
        %v6828 = vsel %vm6827, %v6820, %v6824
        %v6829 = vand.u32 2147483647, %v6704
        %vm6830 = vcmp.eq.f32.partialorder %v6829, 8.507059e+37
        %v6831 = vand.u32 %v6704, 2147483648
        %v6832 = vor.u32 1.1754944e-38, %v6831
        %v6833 = vsel %vm6830, %v6832, %v6828
        %v6834 = vmul.f32 1.0, %v6833
        %v6835 = vrcp.pop %v6705
        %v6836 = vmul.f32 %v6705, %v6835
        %v6837 = vsub.f32 1.0, %v6836
        %v6838 = vmul.f32 %v6835, %v6837
        %v6839 = vadd.f32 %v6835, %v6838
        %vm6840 = vweird.f32 %v6705
        %vm6841 = vweird.f32 %v6835
        %vm6842 = vmor %vm6840, %vm6841
        %v6843 = vsel %vm6842, %v6835, %v6839
        %v6844 = vand.u32 2147483647, %v6705
        %vm6845 = vcmp.eq.f32.partialorder %v6844, 8.507059e+37
        %v6846 = vand.u32 %v6705, 2147483648
        %v6847 = vor.u32 1.1754944e-38, %v6846
        %v6848 = vsel %vm6845, %v6847, %v6843
        %v6849 = vmul.f32 1.0, %v6848
        %v6850 = vrcp.pop %v6706
        %v6851 = vmul.f32 %v6706, %v6850
        %v6852 = vsub.f32 1.0, %v6851
        %v6853 = vmul.f32 %v6850, %v6852
        %v6854 = vadd.f32 %v6850, %v6853
        %vm6855 = vweird.f32 %v6706
        %vm6856 = vweird.f32 %v6850
        %vm6857 = vmor %vm6855, %vm6856
        %v6858 = vsel %vm6857, %v6850, %v6854
        %v6859 = vand.u32 2147483647, %v6706
        %vm6860 = vcmp.eq.f32.partialorder %v6859, 8.507059e+37
        %v6861 = vand.u32 %v6706, 2147483648
        %v6862 = vor.u32 1.1754944e-38, %v6861
        %v6863 = vsel %vm6860, %v6862, %v6858
        %v6864 = vmul.f32 1.0, %v6863
        %v6865 = vrcp.pop %v6707
        %v6866 = vmul.f32 %v6707, %v6865
        %v6867 = vsub.f32 1.0, %v6866
        %v6868 = vmul.f32 %v6865, %v6867
        %v6869 = vadd.f32 %v6865, %v6868
        %vm6870 = vweird.f32 %v6707
        %vm6871 = vweird.f32 %v6865
        %vm6872 = vmor %vm6870, %vm6871
        %v6873 = vsel %vm6872, %v6865, %v6869
        %v6874 = vand.u32 2147483647, %v6707
        %vm6875 = vcmp.eq.f32.partialorder %v6874, 8.507059e+37
        %v6876 = vand.u32 %v6707, 2147483648
        %v6877 = vor.u32 1.1754944e-38, %v6876
        %v6878 = vsel %vm6875, %v6877, %v6873
        %v6879 = vmul.f32 1.0, %v6878
        %v6880 = vrcp.pop %v6708
        %v6881 = vmul.f32 %v6708, %v6880
        %v6882 = vsub.f32 1.0, %v6881
        %v6883 = vmul.f32 %v6880, %v6882
        %v6884 = vadd.f32 %v6880, %v6883
        %vm6885 = vweird.f32 %v6708
        %vm6886 = vweird.f32 %v6880
        %vm6887 = vmor %vm6885, %vm6886
        %v6888 = vsel %vm6887, %v6880, %v6884
        %v6889 = vand.u32 2147483647, %v6708
        %vm6890 = vcmp.eq.f32.partialorder %v6889, 8.507059e+37
        %v6891 = vand.u32 %v6708, 2147483648
        %v6892 = vor.u32 1.1754944e-38, %v6891
        %v6893 = vsel %vm6890, %v6892, %v6888
        %v6894 = vmul.f32 1.0, %v6893
        %v6895 = vrcp.pop %v6709
        %v6896 = vmul.f32 %v6709, %v6895
        %v6897 = vsub.f32 1.0, %v6896
        %v6898 = vmul.f32 %v6895, %v6897
        %v6899 = vadd.f32 %v6895, %v6898
        %vm6900 = vweird.f32 %v6709
        %vm6901 = vweird.f32 %v6895
        %vm6902 = vmor %vm6900, %vm6901
        %v6903 = vsel %vm6902, %v6895, %v6899
        %v6904 = vand.u32 2147483647, %v6709
        %vm6905 = vcmp.eq.f32.partialorder %v6904, 8.507059e+37
        %v6906 = vand.u32 %v6709, 2147483648
        %v6907 = vor.u32 1.1754944e-38, %v6906
        %v6908 = vsel %vm6905, %v6907, %v6903
        %v6909 = vmul.f32 1.0, %v6908
        %v6910 = vrcp.pop %v6710
        %v6911 = vmul.f32 %v6710, %v6910
        %v6912 = vsub.f32 1.0, %v6911
        %v6913 = vmul.f32 %v6910, %v6912
        %v6914 = vadd.f32 %v6910, %v6913
        %vm6915 = vweird.f32 %v6710
        %vm6916 = vweird.f32 %v6910
        %vm6917 = vmor %vm6915, %vm6916
        %v6918 = vsel %vm6917, %v6910, %v6914
        %v6919 = vand.u32 2147483647, %v6710
        %vm6920 = vcmp.eq.f32.partialorder %v6919, 8.507059e+37
        %v6921 = vand.u32 %v6710, 2147483648
        %v6922 = vor.u32 1.1754944e-38, %v6921
        %v6923 = vsel %vm6920, %v6922, %v6918
        %v6924 = vmul.f32 1.0, %v6923
        %v6925 = vrcp.pop %v6711
        %v6926 = vmul.f32 %v6711, %v6925
        %v6927 = vsub.f32 1.0, %v6926
        %v6928 = vmul.f32 %v6925, %v6927
        %v6929 = vadd.f32 %v6925, %v6928
        %vm6930 = vweird.f32 %v6711
        %vm6931 = vweird.f32 %v6925
        %vm6932 = vmor %vm6930, %vm6931
        %v6933 = vsel %vm6932, %v6925, %v6929
        %v6934 = vand.u32 2147483647, %v6711
        %vm6935 = vcmp.eq.f32.partialorder %v6934, 8.507059e+37
        %v6936 = vand.u32 %v6711, 2147483648
        %v6937 = vor.u32 1.1754944e-38, %v6936
        %v6938 = vsel %vm6935, %v6937, %v6933
        %v6939 = vmul.f32 1.0, %v6938
        %v6940 = vrcp.pop %v6712
        %v6941 = vmul.f32 %v6712, %v6940
        %v6942 = vsub.f32 1.0, %v6941
        %v6943 = vmul.f32 %v6940, %v6942
        %v6944 = vadd.f32 %v6940, %v6943
        %vm6945 = vweird.f32 %v6712
        %vm6946 = vweird.f32 %v6940
        %vm6947 = vmor %vm6945, %vm6946
        %v6948 = vsel %vm6947, %v6940, %v6944
        %v6949 = vand.u32 2147483647, %v6712
        %vm6950 = vcmp.eq.f32.partialorder %v6949, 8.507059e+37
        %v6951 = vand.u32 %v6712, 2147483648
        %v6952 = vor.u32 1.1754944e-38, %v6951
        %v6953 = vsel %vm6950, %v6952, %v6948
        %v6954 = vmul.f32 1.0, %v6953
        %v6955 = vrcp.pop %v6713
        %v6956 = vmul.f32 %v6713, %v6955
        %v6957 = vsub.f32 1.0, %v6956
        %v6958 = vmul.f32 %v6955, %v6957
        %v6959 = vadd.f32 %v6955, %v6958
        %vm6960 = vweird.f32 %v6713
        %vm6961 = vweird.f32 %v6955
        %vm6962 = vmor %vm6960, %vm6961
        %v6963 = vsel %vm6962, %v6955, %v6959
        %v6964 = vand.u32 2147483647, %v6713
        %vm6965 = vcmp.eq.f32.partialorder %v6964, 8.507059e+37
        %v6966 = vand.u32 %v6713, 2147483648
        %v6967 = vor.u32 1.1754944e-38, %v6966
        %v6968 = vsel %vm6965, %v6967, %v6963
        %v6969 = vmul.f32 1.0, %v6968
        %v6970 = vrcp.pop %v6714
        %v6971 = vmul.f32 %v6714, %v6970
        %v6972 = vsub.f32 1.0, %v6971
        %v6973 = vmul.f32 %v6970, %v6972
        %v6974 = vadd.f32 %v6970, %v6973
        %vm6975 = vweird.f32 %v6714
        %vm6976 = vweird.f32 %v6970
        %vm6977 = vmor %vm6975, %vm6976
        %v6978 = vsel %vm6977, %v6970, %v6974
        %v6979 = vand.u32 2147483647, %v6714
        %vm6980 = vcmp.eq.f32.partialorder %v6979, 8.507059e+37
        %v6981 = vand.u32 %v6714, 2147483648
        %v6982 = vor.u32 1.1754944e-38, %v6981
        %v6983 = vsel %vm6980, %v6982, %v6978
        %v6984 = vmul.f32 1.0, %v6983
        %v6985 = vrcp.pop %v6715
        %v6986 = vmul.f32 %v6715, %v6985
        %v6987 = vsub.f32 1.0, %v6986
        %v6988 = vmul.f32 %v6985, %v6987
        %v6989 = vadd.f32 %v6985, %v6988
        %vm6990 = vweird.f32 %v6715
        %vm6991 = vweird.f32 %v6985
        %vm6992 = vmor %vm6990, %vm6991
        %v6993 = vsel %vm6992, %v6985, %v6989
        %v6994 = vand.u32 2147483647, %v6715
        %vm6995 = vcmp.eq.f32.partialorder %v6994, 8.507059e+37
        %v6996 = vand.u32 %v6715, 2147483648
        %v6997 = vor.u32 1.1754944e-38, %v6996
        %v6998 = vsel %vm6995, %v6997, %v6993
        %v6999 = vmul.f32 1.0, %v6998
        %v7000 = vrcp.pop %v6716
        %v7001 = vmul.f32 %v6716, %v7000
        %v7002 = vsub.f32 1.0, %v7001
        %v7003 = vmul.f32 %v7000, %v7002
        %v7004 = vadd.f32 %v7000, %v7003
        %vm7005 = vweird.f32 %v6716
        %vm7006 = vweird.f32 %v7000
        %vm7007 = vmor %vm7005, %vm7006
        %v7008 = vsel %vm7007, %v7000, %v7004
        %v7009 = vand.u32 2147483647, %v6716
        %vm7010 = vcmp.eq.f32.partialorder %v7009, 8.507059e+37
        %v7011 = vand.u32 %v6716, 2147483648
        %v7012 = vor.u32 1.1754944e-38, %v7011
        %v7013 = vsel %vm7010, %v7012, %v7008
        %v7014 = vmul.f32 1.0, %v7013
        %v7015 = vrcp.pop %v6717
        %v7016 = vmul.f32 %v6717, %v7015
        %v7017 = vsub.f32 1.0, %v7016
        %v7018 = vmul.f32 %v7015, %v7017
        %v7019 = vadd.f32 %v7015, %v7018
        %vm7020 = vweird.f32 %v6717
        %vm7021 = vweird.f32 %v7015
        %vm7022 = vmor %vm7020, %vm7021
        %v7023 = vsel %vm7022, %v7015, %v7019
        %v7024 = vand.u32 2147483647, %v6717
        %vm7025 = vcmp.eq.f32.partialorder %v7024, 8.507059e+37
        %v7026 = vand.u32 %v6717, 2147483648
        %v7027 = vor.u32 1.1754944e-38, %v7026
        %v7028 = vsel %vm7025, %v7027, %v7023
        %v7029 = vmul.f32 1.0, %v7028
        %v7030 = vrcp.pop %v6718
        %v7031 = vmul.f32 %v6718, %v7030
        %v7032 = vsub.f32 1.0, %v7031
        %v7033 = vmul.f32 %v7030, %v7032
        %v7034 = vadd.f32 %v7030, %v7033
        %vm7035 = vweird.f32 %v6718
        %vm7036 = vweird.f32 %v7030
        %vm7037 = vmor %vm7035, %vm7036
        %v7038 = vsel %vm7037, %v7030, %v7034
        %v7039 = vand.u32 2147483647, %v6718
        %vm7040 = vcmp.eq.f32.partialorder %v7039, 8.507059e+37
        %v7041 = vand.u32 %v6718, 2147483648
        %v7042 = vor.u32 1.1754944e-38, %v7041
        %v7043 = vsel %vm7040, %v7042, %v7038
        %v7044 = vmul.f32 1.0, %v7043
        %v7045 = vrcp.pop %v6719
        %v7046 = vmul.f32 %v6719, %v7045
        %v7047 = vsub.f32 1.0, %v7046
        %v7048 = vmul.f32 %v7045, %v7047
        %v7049 = vadd.f32 %v7045, %v7048
        %vm7050 = vweird.f32 %v6719
        %vm7051 = vweird.f32 %v7045
        %vm7052 = vmor %vm7050, %vm7051
        %v7053 = vsel %vm7052, %v7045, %v7049
        %v7054 = vand.u32 2147483647, %v6719
        %vm7055 = vcmp.eq.f32.partialorder %v7054, 8.507059e+37
        %v7056 = vand.u32 %v6719, 2147483648
        %v7057 = vor.u32 1.1754944e-38, %v7056
        %v7058 = vsel %vm7055, %v7057, %v7053
        %v7059 = vmul.f32 1.0, %v7058
        %v7060 = vrcp.pop %v6720
        %v7061 = vmul.f32 %v6720, %v7060
        %v7062 = vsub.f32 1.0, %v7061
        %v7063 = vmul.f32 %v7060, %v7062
        %v7064 = vadd.f32 %v7060, %v7063
        %vm7065 = vweird.f32 %v6720
        %vm7066 = vweird.f32 %v7060
        %vm7067 = vmor %vm7065, %vm7066
        %v7068 = vsel %vm7067, %v7060, %v7064
        %v7069 = vand.u32 2147483647, %v6720
        %vm7070 = vcmp.eq.f32.partialorder %v7069, 8.507059e+37
        %v7071 = vand.u32 %v6720, 2147483648
        %v7072 = vor.u32 1.1754944e-38, %v7071
        %v7073 = vsel %vm7070, %v7072, %v7068
        %v7074 = vmul.f32 1.0, %v7073
        %v7075 = vrcp.pop %v6721
        %v7076 = vmul.f32 %v6721, %v7075
        %v7077 = vsub.f32 1.0, %v7076
        %v7078 = vmul.f32 %v7075, %v7077
        %v7079 = vadd.f32 %v7075, %v7078
        %vm7080 = vweird.f32 %v6721
        %vm7081 = vweird.f32 %v7075
        %vm7082 = vmor %vm7080, %vm7081
        %v7083 = vsel %vm7082, %v7075, %v7079
        %v7084 = vand.u32 2147483647, %v6721
        %vm7085 = vcmp.eq.f32.partialorder %v7084, 8.507059e+37
        %v7086 = vand.u32 %v6721, 2147483648
        %v7087 = vor.u32 1.1754944e-38, %v7086
        %v7088 = vsel %vm7085, %v7087, %v7083
        %v7089 = vmul.f32 1.0, %v7088
        %v7090 = vrcp.pop %v6722
        %v7091 = vmul.f32 %v6722, %v7090
        %v7092 = vsub.f32 1.0, %v7091
        %v7093 = vmul.f32 %v7090, %v7092
        %v7094 = vadd.f32 %v7090, %v7093
        %vm7095 = vweird.f32 %v6722
        %vm7096 = vweird.f32 %v7090
        %vm7097 = vmor %vm7095, %vm7096
        %v7098 = vsel %vm7097, %v7090, %v7094
        %v7099 = vand.u32 2147483647, %v6722
        %vm7100 = vcmp.eq.f32.partialorder %v7099, 8.507059e+37
        %v7101 = vand.u32 %v6722, 2147483648
        %v7102 = vor.u32 1.1754944e-38, %v7101
        %v7103 = vsel %vm7100, %v7102, %v7098
        %v7104 = vmul.f32 1.0, %v7103
        %v7105 = vrcp.pop %v6723
        %v7106 = vmul.f32 %v6723, %v7105
        %v7107 = vsub.f32 1.0, %v7106
        %v7108 = vmul.f32 %v7105, %v7107
        %v7109 = vadd.f32 %v7105, %v7108
        %vm7110 = vweird.f32 %v6723
        %vm7111 = vweird.f32 %v7105
        %vm7112 = vmor %vm7110, %vm7111
        %v7113 = vsel %vm7112, %v7105, %v7109
        %v7114 = vand.u32 2147483647, %v6723
        %vm7115 = vcmp.eq.f32.partialorder %v7114, 8.507059e+37
        %v7116 = vand.u32 %v6723, 2147483648
        %v7117 = vor.u32 1.1754944e-38, %v7116
        %v7118 = vsel %vm7115, %v7117, %v7113
        %v7119 = vmul.f32 1.0, %v7118
        %v7120 = vrcp.pop %v6724
        %v7121 = vmul.f32 %v6724, %v7120
        %v7122 = vsub.f32 1.0, %v7121
        %v7123 = vmul.f32 %v7120, %v7122
        %v7124 = vadd.f32 %v7120, %v7123
        %vm7125 = vweird.f32 %v6724
        %vm7126 = vweird.f32 %v7120
        %vm7127 = vmor %vm7125, %vm7126
        %v7128 = vsel %vm7127, %v7120, %v7124
        %v7129 = vand.u32 2147483647, %v6724
        %vm7130 = vcmp.eq.f32.partialorder %v7129, 8.507059e+37
        %v7131 = vand.u32 %v6724, 2147483648
        %v7132 = vor.u32 1.1754944e-38, %v7131
        %v7133 = vsel %vm7130, %v7132, %v7128
        %v7134 = vmul.f32 1.0, %v7133
        %v7135 = vrcp.pop %v6725
        %v7136 = vmul.f32 %v6725, %v7135
        %v7137 = vsub.f32 1.0, %v7136
        %v7138 = vmul.f32 %v7135, %v7137
        %v7139 = vadd.f32 %v7135, %v7138
        %vm7140 = vweird.f32 %v6725
        %vm7141 = vweird.f32 %v7135
        %vm7142 = vmor %vm7140, %vm7141
        %v7143 = vsel %vm7142, %v7135, %v7139
        %v7144 = vand.u32 2147483647, %v6725
        %vm7145 = vcmp.eq.f32.partialorder %v7144, 8.507059e+37
        %v7146 = vand.u32 %v6725, 2147483648
        %v7147 = vor.u32 1.1754944e-38, %v7146
        %v7148 = vsel %vm7145, %v7147, %v7143
        %v7149 = vmul.f32 1.0, %v7148
        %v7150 = vrcp.pop %v6726
        %v7151 = vmul.f32 %v6726, %v7150
        %v7152 = vsub.f32 1.0, %v7151
        %v7153 = vmul.f32 %v7150, %v7152
        %v7154 = vadd.f32 %v7150, %v7153
        %vm7155 = vweird.f32 %v6726
        %vm7156 = vweird.f32 %v7150
        %vm7157 = vmor %vm7155, %vm7156
        %v7158 = vsel %vm7157, %v7150, %v7154
        %v7159 = vand.u32 2147483647, %v6726
        %vm7160 = vcmp.eq.f32.partialorder %v7159, 8.507059e+37
        %v7161 = vand.u32 %v6726, 2147483648
        %v7162 = vor.u32 1.1754944e-38, %v7161
        %v7163 = vsel %vm7160, %v7162, %v7158
        %v7164 = vmul.f32 1.0, %v7163
        %v7165 = vrcp.pop %v6727
        %v7166 = vmul.f32 %v6727, %v7165
        %v7167 = vsub.f32 1.0, %v7166
        %v7168 = vmul.f32 %v7165, %v7167
        %v7169 = vadd.f32 %v7165, %v7168
        %vm7170 = vweird.f32 %v6727
        %vm7171 = vweird.f32 %v7165
        %vm7172 = vmor %vm7170, %vm7171
        %v7173 = vsel %vm7172, %v7165, %v7169
        %v7174 = vand.u32 2147483647, %v6727
        %vm7175 = vcmp.eq.f32.partialorder %v7174, 8.507059e+37
        %v7176 = vand.u32 %v6727, 2147483648
        %v7177 = vor.u32 1.1754944e-38, %v7176
        %v7178 = vsel %vm7175, %v7177, %v7173
        %v7179 = vmul.f32 1.0, %v7178
        %v7180 = vrcp.pop %v6728
        %v7181 = vmul.f32 %v6728, %v7180
        %v7182 = vsub.f32 1.0, %v7181
        %v7183 = vmul.f32 %v7180, %v7182
        %v7184 = vadd.f32 %v7180, %v7183
        %vm7185 = vweird.f32 %v6728
        %vm7186 = vweird.f32 %v7180
        %vm7187 = vmor %vm7185, %vm7186
        %v7188 = vsel %vm7187, %v7180, %v7184
        %v7189 = vand.u32 2147483647, %v6728
        %vm7190 = vcmp.eq.f32.partialorder %v7189, 8.507059e+37
        %v7191 = vand.u32 %v6728, 2147483648
        %v7192 = vor.u32 1.1754944e-38, %v7191
        %v7193 = vsel %vm7190, %v7192, %v7188
        %v7194 = vmul.f32 1.0, %v7193
        %v7195 = vrcp.pop %v6729
        %v7196 = vmul.f32 %v6729, %v7195
        %v7197 = vsub.f32 1.0, %v7196
        %v7198 = vmul.f32 %v7195, %v7197
        %v7199 = vadd.f32 %v7195, %v7198
        %vm7200 = vweird.f32 %v6729
        %vm7201 = vweird.f32 %v7195
        %vm7202 = vmor %vm7200, %vm7201
        %v7203 = vsel %vm7202, %v7195, %v7199
        %v7204 = vand.u32 2147483647, %v6729
        %vm7205 = vcmp.eq.f32.partialorder %v7204, 8.507059e+37
        %v7206 = vand.u32 %v6729, 2147483648
        %v7207 = vor.u32 1.1754944e-38, %v7206
        %v7208 = vsel %vm7205, %v7207, %v7203
        %v7209 = vmul.f32 1.0, %v7208
        %7210 = vst [vmem:[%s318] sm:$0xff] %v6744
        %7211 = vst [vmem:[%s318 + $0x8] sm:$0xff] %v6759
        %7212 = vst [vmem:[%s318 + $0x10] sm:$0xff] %v6774
        %7213 = vst [vmem:[%s318 + $0x18] sm:$0xff] %v6789
        %7214 = vst [vmem:[%s318 + $0x20] sm:$0xff] %v6804
        %7215 = vst [vmem:[%s318 + $0x28] sm:$0xff] %v6819
        %7216 = vst [vmem:[%s318 + $0x30] sm:$0xff] %v6834
        %7217 = vst [vmem:[%s318 + $0x38] sm:$0xff] %v6849
        %7218 = vst [vmem:[%s318 + $0x40] sm:$0xff] %v6864
        %7219 = vst [vmem:[%s318 + $0x48] sm:$0xff] %v6879
        %7220 = vst [vmem:[%s318 + $0x50] sm:$0xff] %v6894
        %7221 = vst [vmem:[%s318 + $0x58] sm:$0xff] %v6909
        %7222 = vst [vmem:[%s318 + $0x60] sm:$0xff] %v6924
        %7223 = vst [vmem:[%s318 + $0x68] sm:$0xff] %v6939
        %7224 = vst [vmem:[%s318 + $0x70] sm:$0xff] %v6954
        %7225 = vst [vmem:[%s318 + $0x78] sm:$0xff] %v6969
        %7226 = vst [vmem:[%s318 + $0x80] sm:$0xff] %v6984
        %7227 = vst [vmem:[%s318 + $0x88] sm:$0xff] %v6999
        %7228 = vst [vmem:[%s318 + $0x90] sm:$0xff] %v7014
        %7229 = vst [vmem:[%s318 + $0x98] sm:$0xff] %v7029
        %7230 = vst [vmem:[%s318 + $0xa0] sm:$0xff] %v7044
        %7231 = vst [vmem:[%s318 + $0xa8] sm:$0xff] %v7059
        %7232 = vst [vmem:[%s318 + $0xb0] sm:$0xff] %v7074
        %7233 = vst [vmem:[%s318 + $0xb8] sm:$0xff] %v7089
        %7234 = vst [vmem:[%s318 + $0xc0] sm:$0xff] %v7104
        %7235 = vst [vmem:[%s318 + $0xc8] sm:$0xff] %v7119
        %7236 = vst [vmem:[%s318 + $0xd0] sm:$0xff] %v7134
        %7237 = vst [vmem:[%s318 + $0xd8] sm:$0xff] %v7149
        %7238 = vst [vmem:[%s318 + $0xe0] sm:$0xff] %v7164
        %7239 = vst [vmem:[%s318 + $0xe8] sm:$0xff] %v7179
        %7240 = vst [vmem:[%s318 + $0xf0] sm:$0xff] %v7194
        %7241 = vst [vmem:[%s318 + $0xf8] sm:$0xff] %v7209
        %s7242 = smul.u32 32, %s20
        %p7243 = scmp.lt.s32.totalorder %s7242, 63
        %s7244 = scalar_select %p7243, %s7242, 63
        %s7245 = smul.addr %s7244, 8
        %s7246 = scalar_lea.vmem %s6, %s7245
        // Predicated region
        $region61: #{conditional_generator_forward.1} parent=43 // pred_check
          %p7247 = pneg %p169
        $region62: #{conditional_generator_forward.1} parent=43 // pred_check_branch
          %7249 = sbr.rel (%p7247) target = $region64
        $region63: #{conditional_generator_forward.1} parent=43 // pred_region
          %s7250 = smul.u32 32, %s20
        $region64: #{conditional_generator_forward.1} parent=43 // pred_fallthru
          _
      $region44: #{conditional_generator_forward.1} parent=5 // pred_fallthru
        _
      %p7251 = scmp.le.s32.totalorder 2, %s15
      // Predicated region
      $region65: #{conditional_generator_forward.1} parent=5 // pred_check
        %p7252 = pneg %p7251
      $region66: #{conditional_generator_forward.1} parent=5 // pred_check_branch
        %7254 = sbr.rel (%p7252) target = $region68
      $region67: #{conditional_generator_forward.1} parent=5 // pred_region
        %s7255 = ssub.s32 %s15, 2
        // Predicated region
        $region69: #{conditional_generator_forward.1} parent=67 // pred_check
          %p7256 = pneg %p175
        $region70: #{conditional_generator_forward.1} parent=67 // pred_check_branch
          %7258 = sbr.rel (%p7256) target = $region72
        $region71: #{conditional_generator_forward.1} parent=67 // pred_region
          %s7259 = smul.u32 32, %s21
          %p7260 = scmp.lt.s32.totalorder %s7259, 63
          %s7261 = scalar_select %p7260, %s7259, 63
          %s7262 = smul.addr %s7261, 8
          %s7263 = scalar_lea.vmem %s6, %s7262
        $region72: #{conditional_generator_forward.1} parent=67 // pred_fallthru
          _
      $region68: #{conditional_generator_forward.1} parent=5 // pred_fallthru
        _
    $region6: #{conditional_generator_forward.1} parent=1 // loop_footer
      %s19 = sadd.s32 1, %s15
    $region7: #{conditional_generator_forward.1} parent=1 // loop_footer_branch
      %14 = sbr.rel target = $region3
    $region8: #{conditional_generator_forward.1} parent=1 // loop_exit
      _
    %7264 = vsyncpa [#allocation3], 1
    %s7265 = scalar_lea.sflag [#allocation3], 1
    %7266 = vsyncpa %s7265, 1
    %7267 = vsyncpa [#allocation5], 1
    %7268 = vsyncpa [#allocation8], 1

</llo_original>
